<compile_context>
chip_gen: v5e
topology: v5e:2x2
jax: 0.10.0
libtpu: 0.0.40
codegen_flags: <defaults>
</compile_context>

<pallas_src>
import functools

import numpy as np
import jax
import jax.numpy as jnp
from jax import lax
from jax.experimental import pallas as pl
from jax.experimental.pallas import tpu as pltpu

BN_EPS = 1e-5
VMEM_LIMIT = 32 * 1024 * 1024


# ----------------------------------------------------------------------------- kernels

def _convT_kernel(w_ref, p_ref, b_ref, o_ref, *, n_relu):
    # w: (R, Kd) bf16, p: (Kd, TN) bf16, b: (R, 1) f32, o: (R, TN) f32
    acc = jnp.dot(w_ref[...], p_ref[...], preferred_element_type=jnp.float32)
    acc = acc + b_ref[...]
    rows = o_ref.shape[0]
    if n_relu >= rows:                       # relu on all rows
        acc = jnp.maximum(acc, 0.0)
    elif n_relu > 0:                         # relu only on the first n_relu rows (fused shortcut)
        row = lax.broadcasted_iota(jnp.int32, acc.shape, 0)
        acc = jnp.where(row < n_relu, jnp.maximum(acc, 0.0), acc)
    o_ref[...] = acc


def _convT_res_kernel(w_ref, p_ref, b_ref, r_ref, o_ref, *, n_relu):
    acc = jnp.dot(w_ref[...], p_ref[...], preferred_element_type=jnp.float32)
    acc = acc + b_ref[...] + r_ref[...]
    rows = o_ref.shape[0]
    if n_relu >= rows:
        acc = jnp.maximum(acc, 0.0)
    elif n_relu > 0:
        row = lax.broadcasted_iota(jnp.int32, acc.shape, 0)
        acc = jnp.where(row < n_relu, jnp.maximum(acc, 0.0), acc)
    o_ref[...] = acc


def _window_max_kernel(p_ref, o_ref, *, win):
    # p: (win, TR, 128) -> max over window axis
    acc = p_ref[0]
    for i in range(1, win):
        acc = jnp.maximum(acc, p_ref[i])
    o_ref[...] = acc


def _window_mean_kernel(p_ref, o_ref, *, win):
    # p: (win, R, 128) -> mean over window axis
    acc = p_ref[0]
    for i in range(1, win):
        acc = acc + p_ref[i]
    o_ref[...] = acc * (1.0 / win)


# ----------------------------------------------------------------------------- conv glue

def _pick_tn(M):
    """Pixel (lane) tile: big tiles for big layers, >=2 grid blocks when possible."""
    if M >= 4096:
        return 2048
    if M >= 256:
        return max(128, (M // 2) // 128 * 128)
    return 128


def _im2colT(x, k, stride, pad):
    """x: (C, N, H, W) f32 -> P^T (C*k*k, N*OH*OW) bf16, rows ordered (c, di, dj)."""
    C, N, H, W = x.shape
    xb = x.astype(jnp.bfloat16)
    if pad:
        xb = jnp.pad(xb, ((0, 0), (0, 0), (pad, pad), (pad, pad)))
    OH = (H + 2 * pad - k) // stride + 1
    OW = (W + 2 * pad - k) // stride + 1
    taps = []
    for di in range(k):
        for dj in range(k):
            taps.append(lax.slice(
                xb, (0, 0, di, dj),
                (C, N, di + (OH - 1) * stride + 1, dj + (OW - 1) * stride + 1),
                (1, 1, stride, stride)))
    pt = jnp.stack(taps, axis=1)                       # (C, k*k, N, OH, OW)
    return pt.reshape(C * k * k, N * OH * OW), OH, OW


def _run_convT(wm, pt, bias, residual, n_relu):
    """wm: (R, Kd) bf16, pt: (Kd, M) bf16, bias: (R,1) f32, residual: (R,M) f32 or None."""
    R, Kd = wm.shape
    M = pt.shape[1]
    TN = _pick_tn(M)
    Mp = pl.cdiv(M, TN) * TN
    if Mp != M:                                        # only the tiny layer4 tiles pad
        pt = jnp.pad(pt, ((0, 0), (0, Mp - M)))
        if residual is not None:
            residual = jnp.pad(residual, ((0, 0), (0, Mp - M)))

    in_specs = [
        pl.BlockSpec((R, Kd), lambda i: (0, 0)),       # folded weights, resident
        pl.BlockSpec((Kd, TN), lambda i: (0, i)),      # patches, pixels on lanes
        pl.BlockSpec((R, 1), lambda i: (0, 0)),        # bias
    ]
    args = [wm, pt, bias]
    if residual is not None:
        in_specs.append(pl.BlockSpec((R, TN), lambda i: (0, i)))
        args.append(residual)
        kernel = functools.partial(_convT_res_kernel, n_relu=n_relu)
    else:
        kernel = functools.partial(_convT_kernel, n_relu=n_relu)

    out = pl.pallas_call(
        kernel,
        out_shape=jax.ShapeDtypeStruct((R, Mp), jnp.float32),
        grid=(Mp // TN,),
        in_specs=in_specs,
        out_specs=pl.BlockSpec((R, TN), lambda i: (0, i)),
        compiler_params=pltpu.CompilerParams(
            dimension_semantics=("parallel",),
            vmem_limit_bytes=VMEM_LIMIT),
    )(*args)
    if Mp != M:
        out = out[:, :M]
    return out


def _fold_w(p):
    return p["w"] * p["scale"][:, None, None, None]


def conv_bn(x, p, *, stride, pad, relu=True, residual=None, shortcut_p=None):
    """Fused conv + folded-BN (+ residual) (+ ReLU) on channels-first x: (Cin,N,H,W) f32.

    If shortcut_p is given (1x1, same stride, pad=0), its output is computed inside the
    same matmul (its patch rows coincide with the 3x3 center tap); relu is applied only
    to the main conv rows and the flat (Cout, M) shortcut output is returned as well.
    """
    Cout, Cin, k, _ = p["w"].shape
    N = x.shape[1]
    pt, OH, OW = _im2colT(x, k, stride, pad)
    M = N * OH * OW

    wm = _fold_w(p).reshape(Cout, Cin * k * k)
    bias = p["bias"].reshape(Cout, 1).astype(jnp.float32)
    n_relu = Cout if relu else 0

    if shortcut_p is not None:
        assert k == 3 and pad == 1
        csc = shortcut_p["w"].shape[0]
        wsc = _fold_w(shortcut_p).reshape(csc, Cin)
        wsc_exp = jnp.zeros((csc, Cin, k * k), jnp.float32).at[:, :, (k * k) // 2].set(wsc)
        wm = jnp.concatenate([wm, wsc_exp.reshape(csc, Cin * k * k)], axis=0)
        bias = jnp.concatenate([bias, shortcut_p["bias"].reshape(csc, 1).astype(jnp.float32)], axis=0)

    res_flat = None
    if residual is not None:
        res_flat = residual.reshape(residual.shape[0], -1).astype(jnp.float32)

    out = _run_convT(wm.astype(jnp.bfloat16), pt, bias, res_flat, n_relu)

    if shortcut_p is not None:
        return out[:Cout].reshape(Cout, N, OH, OW), out[Cout:]
    return out.reshape(Cout, N, OH, OW)


# ----------------------------------------------------------------------------- pooling

def maxpool3x3_s2(x):
    """MaxPool2d(kernel=3, stride=2, padding=1) on (C, N, H, W) f32."""
    C, N, H, W = x.shape
    xp = jnp.pad(x, ((0, 0), (0, 0), (1, 1), (1, 1)), constant_values=-jnp.inf)
    OH = (H - 1) // 2 + 1
    OW = (W - 1) // 2 + 1
    taps = []
    for di in range(3):
        for dj in range(3):
            taps.append(lax.slice(
                xp, (0, 0, di, dj),
                (C, N, di + (OH - 1) * 2 + 1, dj + (OW - 1) * 2 + 1),
                (1, 1, 2, 2)))
    t = jnp.stack(taps, axis=0)                        # (9, C, N, OH, OW)

    P = C * N * OH * OW
    LANE, SUB = 128, 64
    tile = SUB * LANE
    Pp = pl.cdiv(P, tile) * tile
    t = t.reshape(9, P)
    if Pp != P:
        t = jnp.pad(t, ((0, 0), (0, Pp - P)), constant_values=-jnp.inf)
    t = t.reshape(9, Pp // LANE, LANE)                 # lane-dense: 128 lanes used
    R = Pp // LANE

    out = pl.pallas_call(
        functools.partial(_window_max_kernel, win=9),
        out_shape=jax.ShapeDtypeStruct((R, LANE), jnp.float32),
        grid=(R // SUB,),
        in_specs=[pl.BlockSpec((9, SUB, LANE), lambda i: (0, i, 0))],
        out_specs=pl.BlockSpec((SUB, LANE), lambda i: (i, 0)),
        compiler_params=pltpu.CompilerParams(
            dimension_semantics=("parallel",),
            vmem_limit_bytes=VMEM_LIMIT),
    )(t)
    return out.reshape(Pp)[:P].reshape(C, N, OH, OW)


def avgpool_full(x):
    """avg_pool2d(x, 4) where the spatial map is exactly 4x4; (C, N, 4, 4) -> (N, C)."""
    C, N, H, W = x.shape
    assert H == 4 and W == 4, "final feature map must be 4x4 (as in the reference net)"
    win = H * W
    xr = jnp.transpose(x.reshape(C * N, win), (1, 0))  # (16, C*N)
    P = C * N
    LANE = 128
    Pp = pl.cdiv(P, LANE) * LANE
    if Pp != P:
        xr = jnp.pad(xr, ((0, 0), (0, Pp - P)))
    xr = xr.reshape(win, Pp // LANE, LANE)
    out = pl.pallas_call(
        functools.partial(_window_mean_kernel, win=win),
        out_shape=jax.ShapeDtypeStruct((Pp // LANE, LANE), jnp.float32),
    )(xr)
    feats = out.reshape(Pp)[:P].reshape(C, N)
    return jnp.transpose(feats, (1, 0))


# ----------------------------------------------------------------------------- params

def _init_conv_bn(key, cout, cin, k):
    kw_, kg, kb, km, kv = jax.random.split(key, 5)
    w = jax.random.normal(kw_, (cout, cin, k, k), jnp.float32) * 0.05
    gamma = jax.random.uniform(kg, (cout,), jnp.float32, 0.8, 1.2)
    beta = jax.random.normal(kb, (cout,), jnp.float32) * 0.05
    running_mean = jax.random.normal(km, (cout,), jnp.float32) * 0.05
    running_var = jax.random.uniform(kv, (cout,), jnp.float32, 0.5, 1.5)
    scale = gamma / jnp.sqrt(running_var + BN_EPS)     # folded inference-mode BN
    bias = beta - running_mean * scale
    return {"w": w, "scale": scale, "bias": bias}


def init_resnet18_params(key, nf=8, in_ch=3):
    keys = iter(jax.random.split(key, 64))
    params = {"stem": _init_conv_bn(next(keys), nf, in_ch, 7), "layers": []}
    in_planes = nf
    for planes, stride0 in [(nf, 1), (2 * nf, 2), (4 * nf, 2), (8 * nf, 2)]:
        blocks = []
        for b in range(2):                              # ResNet18: [2,2,2,2]
            stride = stride0 if b == 0 else 1
            blk = {
                "conv1": _init_conv_bn(next(keys), planes, in_planes, 3),
                "conv2": _init_conv_bn(next(keys), planes, planes, 3),
                "stride": stride,
            }
            if stride != 1 or in_planes != planes:
                blk["shortcut"] = _init_conv_bn(next(keys), planes, in_planes, 1)
            blocks.append(blk)
            in_planes = planes
        params["layers"].append(blocks)
    return params


# ----------------------------------------------------------------------------- forward

def basic_block(x, blk):
    stride = blk["stride"]
    if "shortcut" in blk:
        h, res = conv_bn(x, blk["conv1"], stride=stride, pad=1, relu=True,
                         shortcut_p=blk["shortcut"])
    else:
        h = conv_bn(x, blk["conv1"], stride=stride, pad=1, relu=True)
        res = x
    return conv_bn(h, blk["conv2"], stride=1, pad=1, relu=True, residual=res)


def ocm_resnet_forward(x_nchw, params):
    """ImageNet_OCMResnet.forward(x): encoder features (N, 8*nf)."""
    x = jnp.transpose(x_nchw, (1, 0, 2, 3)).astype(jnp.float32)  # NCHW -> (C, N, H, W)
    st = params["stem"]
    x = conv_bn(x, st, stride=2, pad=3, relu=True)
    x = maxpool3x3_s2(x)
    for blocks in params["layers"]:
        for blk in blocks:
            x = basic_block(x, blk)
    return avgpool_full(x)                              # (N, C) flattened features


# ----------------------------------------------------------------------------- pure-JAX reference
# Same math (folded BN, bf16 conv operands, f32 accumulation/epilogue) in NHWC via XLA.

def _ref_conv_bn(x, p, stride, pad, relu_out, residual=None):
    w = jnp.transpose(p["w"] * p["scale"][:, None, None, None], (2, 3, 1, 0))  # HWIO
    y = lax.conv_general_dilated(
        x.astype(jnp.bfloat16), w.astype(jnp.bfloat16), (stride, stride),
        [(pad, pad), (pad, pad)],
        dimension_numbers=("NHWC", "HWIO", "NHWC"),
        preferred_element_type=jnp.float32)
    y = y + p["bias"]
    if residual is not None:
        y = y + residual
    if relu_out:
        y = jnp.maximum(y, 0.0)
    return y


def _ref_forward(x_nchw, params):
    x = jnp.transpose(x_nchw, (0, 2, 3, 1)).astype(jnp.float32)
    x = _ref_conv_bn(x, params["stem"], 2, 3, True)
    x = lax.reduce_window(x, -jnp.inf, lax.max, (1, 3, 3, 1), (1, 2, 2, 1),
                          [(0, 0), (1, 1), (1, 1), (0, 0)])
    for blocks in params["layers"]:
        for blk in blocks:
            s = blk["stride"]
            h = _ref_conv_bn(x, blk["conv1"], s, 1, True)
            res = _ref_conv_bn(x, blk["shortcut"], s, 0, False) if "shortcut" in blk else x
            x = _ref_conv_bn(h, blk["conv2"], 1, 1, True, residual=res)
    return jnp.mean(x, axis=(1, 2))


# ----------------------------------------------------------------------------- main

if __name__ == "__main__":
    key = jax.random.PRNGKey(0)
    kx, kp = jax.random.split(key)

    # Small configuration: nf=8 -> dim_in = 8*nf = 64 features.
    # Spatial 128 so the final map is 4x4, matching avg_pool2d(out, 4) -> 1x1.
    N, C_IN, H, W, NF = 2, 3, 128, 128, 8
    x = jax.random.normal(kx, (N, C_IN, H, W), jnp.float32)
    params = init_resnet18_params(kp, nf=NF, in_ch=C_IN)

    fwd = jax.jit(lambda inp: ocm_resnet_forward(inp, params))
    feats = jax.block_until_ready(fwd(x))
    assert feats.shape == (N, 8 * NF), feats.shape

    # sanity check vs pure-JAX reference computing the same (bf16-operand) math
    ref_fwd = jax.jit(lambda inp: _ref_forward(inp, params))
    ref = jax.block_until_ready(ref_fwd(x))
    np.testing.assert_allclose(np.asarray(feats), np.asarray(ref), rtol=2e-2, atol=2e-2)

    print("KERNEL_OK")
</pallas_src>

<mosaic_0001>
module attributes {stable_mosaic.version = 11 : i64} {
  func.func @_convT_kernel(%arg0: i32, %arg1: memref<8x147xbf16, #tpu.memory_space<vmem>>, %arg2: memref<147x2048xbf16, #tpu.memory_space<vmem>>, %arg3: memref<8x1xf32, #tpu.memory_space<vmem>>, %arg4: memref<8x2048xf32, #tpu.memory_space<vmem>>) attributes {dimension_semantics = [#tpu.dimension_semantics<parallel>], iteration_bounds = array<i64: 4>, scalar_prefetch = 0 : i64, scratch_operands = 0 : i64, tpu.core_type = #tpu.core_type<tc>, window_params = [{pipeline_mode = #tpu.pipeline_mode<synchronous>, transform_indices = @transform_0, window_bounds = array<i64: 8, 147>}, {transform_indices = @transform_1, window_bounds = array<i64: 147, 2048>}, {pipeline_mode = #tpu.pipeline_mode<synchronous>, transform_indices = @transform_2, window_bounds = array<i64: 8, 1>}, {transform_indices = @transform_3, window_bounds = array<i64: 8, 2048>}]} {
    %c0 = arith.constant 0 : index
    %c0_0 = arith.constant 0 : index
    %0 = vector.load %arg1[%c0, %c0_0] : memref<8x147xbf16, #tpu.memory_space<vmem>>, vector<8x147xbf16>
    %c0_1 = arith.constant 0 : index
    %c0_2 = arith.constant 0 : index
    %1 = vector.load %arg2[%c0_1, %c0_2] : memref<147x2048xbf16, #tpu.memory_space<vmem>>, vector<147x2048xbf16>
    %cst = arith.constant dense<0.000000e+00> : vector<8x2048xf32>
    %2 = tpu.matmul %0, %1, %cst {dimension_numbers = #tpu.dot_dimension_numbers<[1], [0], [0], [1], [0, 0, 1, 1], [], []>} : vector<8x147xbf16>, vector<147x2048xbf16>, vector<8x2048xf32> -> vector<8x2048xf32>
    %c0_3 = arith.constant 0 : index
    %c0_4 = arith.constant 0 : index
    %3 = vector.load %arg3[%c0_3, %c0_4] : memref<8x1xf32, #tpu.memory_space<vmem>>, vector<8x1xf32>
    %4 = vector.broadcast %3 : vector<8x1xf32> to vector<8x2048xf32>
    %5 = arith.addf %2, %4 : vector<8x2048xf32>
    %cst_5 = arith.constant 0.000000e+00 : f32
    %6 = vector.broadcast %cst_5 : f32 to vector<8x2048xf32>
    %7 = arith.maximumf %5, %6 : vector<8x2048xf32>
    %c0_6 = arith.constant 0 : index
    %c0_7 = arith.constant 0 : index
    %8 = vector.load %arg4[%c0_6, %c0_7] : memref<8x2048xf32, #tpu.memory_space<vmem>>, vector<8x2048xf32>
    tpu.vector_store %arg4[%c0_6, %c0_7], %7 {strides = array<i32>} : memref<8x2048xf32, #tpu.memory_space<vmem>>, vector<8x2048xf32>,
    return
  }
  func.func @transform_0(%arg0: i32) -> (i32, i32) {
    %c0_i32 = arith.constant 0 : i32
    %c0_i32_0 = arith.constant 0 : i32
    %c0_i32_1 = arith.constant 0 : i32
    return %c0_i32, %c0_i32_0 : i32, i32
  }
  func.func @transform_1(%arg0: i32) -> (i32, i32) {
    %c0_i32 = arith.constant 0 : i32
    %c0_i32_0 = arith.constant 0 : i32
    return %c0_i32, %arg0 : i32, i32
  }
  func.func @transform_2(%arg0: i32) -> (i32, i32) {
    %c0_i32 = arith.constant 0 : i32
    %c0_i32_0 = arith.constant 0 : i32
    %c0_i32_1 = arith.constant 0 : i32
    return %c0_i32, %c0_i32_0 : i32, i32
  }
  func.func @transform_3(%arg0: i32) -> (i32, i32) {
    %c0_i32 = arith.constant 0 : i32
    %c0_i32_0 = arith.constant 0 : i32
    return %c0_i32, %arg0 : i32, i32
  }
}

module attributes {stable_mosaic.version = 11 : i64} {
  func.func @_window_max_kernel(%arg0: i32, %arg1: memref<9x64x128xf32, #tpu.memory_space<vmem>>, %arg2: memref<64x128xf32, #tpu.memory_space<vmem>>) attributes {dimension_semantics = [#tpu.dimension_semantics<parallel>], iteration_bounds = array<i64: 2>, scalar_prefetch = 0 : i64, scratch_operands = 0 : i64, tpu.core_type = #tpu.core_type<tc>, window_params = [{transform_indices = @transform_0, window_bounds = array<i64: 9, 64, 128>}, {transform_indices = @transform_1, window_bounds = array<i64: 64, 128>}]} {
    %c0 = arith.constant 0 : index
    %c0_0 = arith.constant 0 : index
    %c0_1 = arith.constant 0 : index
    %0 = vector.load %arg1[%c0, %c0_0, %c0_1] : memref<9x64x128xf32, #tpu.memory_space<vmem>>, vector<1x64x128xf32>
    %1 = vector.shape_cast %0 : vector<1x64x128xf32> to vector<64x128xf32>
    %c1 = arith.constant 1 : index
    %c0_2 = arith.constant 0 : index
    %c0_3 = arith.constant 0 : index
    %2 = vector.load %arg1[%c1, %c0_2, %c0_3] : memref<9x64x128xf32, #tpu.memory_space<vmem>>, vector<1x64x128xf32>
    %3 = vector.shape_cast %2 : vector<1x64x128xf32> to vector<64x128xf32>
    %4 = arith.maximumf %1, %3 : vector<64x128xf32>
    %c2 = arith.constant 2 : index
    %c0_4 = arith.constant 0 : index
    %c0_5 = arith.constant 0 : index
    %5 = vector.load %arg1[%c2, %c0_4, %c0_5] : memref<9x64x128xf32, #tpu.memory_space<vmem>>, vector<1x64x128xf32>
    %6 = vector.shape_cast %5 : vector<1x64x128xf32> to vector<64x128xf32>
    %7 = arith.maximumf %4, %6 : vector<64x128xf32>
    %c3 = arith.constant 3 : index
    %c0_6 = arith.constant 0 : index
    %c0_7 = arith.constant 0 : index
    %8 = vector.load %arg1[%c3, %c0_6, %c0_7] : memref<9x64x128xf32, #tpu.memory_space<vmem>>, vector<1x64x128xf32>
    %9 = vector.shape_cast %8 : vector<1x64x128xf32> to vector<64x128xf32>
    %10 = arith.maximumf %7, %9 : vector<64x128xf32>
    %c4 = arith.constant 4 : index
    %c0_8 = arith.constant 0 : index
    %c0_9 = arith.constant 0 : index
    %11 = vector.load %arg1[%c4, %c0_8, %c0_9] : memref<9x64x128xf32, #tpu.memory_space<vmem>>, vector<1x64x128xf32>
    %12 = vector.shape_cast %11 : vector<1x64x128xf32> to vector<64x128xf32>
    %13 = arith.maximumf %10, %12 : vector<64x128xf32>
    %c5 = arith.constant 5 : index
    %c0_10 = arith.constant 0 : index
    %c0_11 = arith.constant 0 : index
    %14 = vector.load %arg1[%c5, %c0_10, %c0_11] : memref<9x64x128xf32, #tpu.memory_space<vmem>>, vector<1x64x128xf32>
    %15 = vector.shape_cast %14 : vector<1x64x128xf32> to vector<64x128xf32>
    %16 = arith.maximumf %13, %15 : vector<64x128xf32>
    %c6 = arith.constant 6 : index
    %c0_12 = arith.constant 0 : index
    %c0_13 = arith.constant 0 : index
    %17 = vector.load %arg1[%c6, %c0_12, %c0_13] : memref<9x64x128xf32, #tpu.memory_space<vmem>>, vector<1x64x128xf32>
    %18 = vector.shape_cast %17 : vector<1x64x128xf32> to vector<64x128xf32>
    %19 = arith.maximumf %16, %18 : vector<64x128xf32>
    %c7 = arith.constant 7 : index
    %c0_14 = arith.constant 0 : index
    %c0_15 = arith.constant 0 : index
    %20 = vector.load %arg1[%c7, %c0_14, %c0_15] : memref<9x64x128xf32, #tpu.memory_space<vmem>>, vector<1x64x128xf32>
    %21 = vector.shape_cast %20 : vector<1x64x128xf32> to vector<64x128xf32>
    %22 = arith.maximumf %19, %21 : vector<64x128xf32>
    %c8 = arith.constant 8 : index
    %c0_16 = arith.constant 0 : index
    %c0_17 = arith.constant 0 : index
    %23 = vector.load %arg1[%c8, %c0_16, %c0_17] : memref<9x64x128xf32, #tpu.memory_space<vmem>>, vector<1x64x128xf32>
    %24 = vector.shape_cast %23 : vector<1x64x128xf32> to vector<64x128xf32>
    %25 = arith.maximumf %22, %24 : vector<64x128xf32>
    %c0_18 = arith.constant 0 : index
    %c0_19 = arith.constant 0 : index
    %26 = vector.load %arg2[%c0_18, %c0_19] : memref<64x128xf32, #tpu.memory_space<vmem>>, vector<64x128xf32>
    tpu.vector_store %arg2[%c0_18, %c0_19], %25 {strides = array<i32>} : memref<64x128xf32, #tpu.memory_space<vmem>>, vector<64x128xf32>,
    return
  }
  func.func @transform_0(%arg0: i32) -> (i32, i32, i32) {
    %c0_i32 = arith.constant 0 : i32
    %c0_i32_0 = arith.constant 0 : i32
    %c0_i32_1 = arith.constant 0 : i32
    return %c0_i32, %arg0, %c0_i32_0 : i32, i32, i32
  }
  func.func @transform_1(%arg0: i32) -> (i32, i32) {
    %c0_i32 = arith.constant 0 : i32
    %c0_i32_0 = arith.constant 0 : i32
    return %arg0, %c0_i32 : i32, i32
  }
}

module attributes {stable_mosaic.version = 11 : i64} {
  func.func @_convT_kernel(%arg0: i32, %arg1: memref<8x72xbf16, #tpu.memory_space<vmem>>, %arg2: memref<72x1024xbf16, #tpu.memory_space<vmem>>, %arg3: memref<8x1xf32, #tpu.memory_space<vmem>>, %arg4: memref<8x1024xf32, #tpu.memory_space<vmem>>) attributes {dimension_semantics = [#tpu.dimension_semantics<parallel>], iteration_bounds = array<i64: 2>, scalar_prefetch = 0 : i64, scratch_operands = 0 : i64, tpu.core_type = #tpu.core_type<tc>, window_params = [{pipeline_mode = #tpu.pipeline_mode<synchronous>, transform_indices = @transform_0, window_bounds = array<i64: 8, 72>}, {transform_indices = @transform_1, window_bounds = array<i64: 72, 1024>}, {pipeline_mode = #tpu.pipeline_mode<synchronous>, transform_indices = @transform_2, window_bounds = array<i64: 8, 1>}, {transform_indices = @transform_3, window_bounds = array<i64: 8, 1024>}]} {
    %c0 = arith.constant 0 : index
    %c0_0 = arith.constant 0 : index
    %0 = vector.load %arg1[%c0, %c0_0] : memref<8x72xbf16, #tpu.memory_space<vmem>>, vector<8x72xbf16>
    %c0_1 = arith.constant 0 : index
    %c0_2 = arith.constant 0 : index
    %1 = vector.load %arg2[%c0_1, %c0_2] : memref<72x1024xbf16, #tpu.memory_space<vmem>>, vector<72x1024xbf16>
    %cst = arith.constant dense<0.000000e+00> : vector<8x1024xf32>
    %2 = tpu.matmul %0, %1, %cst {dimension_numbers = #tpu.dot_dimension_numbers<[1], [0], [0], [1], [0, 0, 1, 1], [], []>} : vector<8x72xbf16>, vector<72x1024xbf16>, vector<8x1024xf32> -> vector<8x1024xf32>
    %c0_3 = arith.constant 0 : index
    %c0_4 = arith.constant 0 : index
    %3 = vector.load %arg3[%c0_3, %c0_4] : memref<8x1xf32, #tpu.memory_space<vmem>>, vector<8x1xf32>
    %4 = vector.broadcast %3 : vector<8x1xf32> to vector<8x1024xf32>
    %5 = arith.addf %2, %4 : vector<8x1024xf32>
    %cst_5 = arith.constant 0.000000e+00 : f32
    %6 = vector.broadcast %cst_5 : f32 to vector<8x1024xf32>
    %7 = arith.maximumf %5, %6 : vector<8x1024xf32>
    %c0_6 = arith.constant 0 : index
    %c0_7 = arith.constant 0 : index
    %8 = vector.load %arg4[%c0_6, %c0_7] : memref<8x1024xf32, #tpu.memory_space<vmem>>, vector<8x1024xf32>
    tpu.vector_store %arg4[%c0_6, %c0_7], %7 {strides = array<i32>} : memref<8x1024xf32, #tpu.memory_space<vmem>>, vector<8x1024xf32>,
    return
  }
  func.func @transform_0(%arg0: i32) -> (i32, i32) {
    %c0_i32 = arith.constant 0 : i32
    %c0_i32_0 = arith.constant 0 : i32
    %c0_i32_1 = arith.constant 0 : i32
    return %c0_i32, %c0_i32_0 : i32, i32
  }
  func.func @transform_1(%arg0: i32) -> (i32, i32) {
    %c0_i32 = arith.constant 0 : i32
    %c0_i32_0 = arith.constant 0 : i32
    return %c0_i32, %arg0 : i32, i32
  }
  func.func @transform_2(%arg0: i32) -> (i32, i32) {
    %c0_i32 = arith.constant 0 : i32
    %c0_i32_0 = arith.constant 0 : i32
    %c0_i32_1 = arith.constant 0 : i32
    return %c0_i32, %c0_i32_0 : i32, i32
  }
  func.func @transform_3(%arg0: i32) -> (i32, i32) {
    %c0_i32 = arith.constant 0 : i32
    %c0_i32_0 = arith.constant 0 : i32
    return %c0_i32, %arg0 : i32, i32
  }
}

module attributes {stable_mosaic.version = 11 : i64} {
  func.func @_convT_res_kernel(%arg0: i32, %arg1: memref<8x72xbf16, #tpu.memory_space<vmem>>, %arg2: memref<72x1024xbf16, #tpu.memory_space<vmem>>, %arg3: memref<8x1xf32, #tpu.memory_space<vmem>>, %arg4: memref<8x1024xf32, #tpu.memory_space<vmem>>, %arg5: memref<8x1024xf32, #tpu.memory_space<vmem>>) attributes {dimension_semantics = [#tpu.dimension_semantics<parallel>], iteration_bounds = array<i64: 2>, scalar_prefetch = 0 : i64, scratch_operands = 0 : i64, tpu.core_type = #tpu.core_type<tc>, window_params = [{pipeline_mode = #tpu.pipeline_mode<synchronous>, transform_indices = @transform_0, window_bounds = array<i64: 8, 72>}, {transform_indices = @transform_1, window_bounds = array<i64: 72, 1024>}, {pipeline_mode = #tpu.pipeline_mode<synchronous>, transform_indices = @transform_2, window_bounds = array<i64: 8, 1>}, {transform_indices = @transform_3, window_bounds = array<i64: 8, 1024>}, {transform_indices = @transform_4, window_bounds = array<i64: 8, 1024>}]} {
    %c0 = arith.constant 0 : index
    %c0_0 = arith.constant 0 : index
    %0 = vector.load %arg1[%c0, %c0_0] : memref<8x72xbf16, #tpu.memory_space<vmem>>, vector<8x72xbf16>
    %c0_1 = arith.constant 0 : index
    %c0_2 = arith.constant 0 : index
    %1 = vector.load %arg2[%c0_1, %c0_2] : memref<72x1024xbf16, #tpu.memory_space<vmem>>, vector<72x1024xbf16>
    %cst = arith.constant dense<0.000000e+00> : vector<8x1024xf32>
    %2 = tpu.matmul %0, %1, %cst {dimension_numbers = #tpu.dot_dimension_numbers<[1], [0], [0], [1], [0, 0, 1, 1], [], []>} : vector<8x72xbf16>, vector<72x1024xbf16>, vector<8x1024xf32> -> vector<8x1024xf32>
    %c0_3 = arith.constant 0 : index
    %c0_4 = arith.constant 0 : index
    %3 = vector.load %arg3[%c0_3, %c0_4] : memref<8x1xf32, #tpu.memory_space<vmem>>, vector<8x1xf32>
    %4 = vector.broadcast %3 : vector<8x1xf32> to vector<8x1024xf32>
    %5 = arith.addf %2, %4 : vector<8x1024xf32>
    %c0_5 = arith.constant 0 : index
    %c0_6 = arith.constant 0 : index
    %6 = vector.load %arg4[%c0_5, %c0_6] : memref<8x1024xf32, #tpu.memory_space<vmem>>, vector<8x1024xf32>
    %7 = arith.addf %5, %6 : vector<8x1024xf32>
    %cst_7 = arith.constant 0.000000e+00 : f32
    %8 = vector.broadcast %cst_7 : f32 to vector<8x1024xf32>
    %9 = arith.maximumf %7, %8 : vector<8x1024xf32>
    %c0_8 = arith.constant 0 : index
    %c0_9 = arith.constant 0 : index
    %10 = vector.load %arg5[%c0_8, %c0_9] : memref<8x1024xf32, #tpu.memory_space<vmem>>, vector<8x1024xf32>
    tpu.vector_store %arg5[%c0_8, %c0_9], %9 {strides = array<i32>} : memref<8x1024xf32, #tpu.memory_space<vmem>>, vector<8x1024xf32>,
    return
  }
  func.func @transform_0(%arg0: i32) -> (i32, i32) {
    %c0_i32 = arith.constant 0 : i32
    %c0_i32_0 = arith.constant 0 : i32
    %c0_i32_1 = arith.constant 0 : i32
    return %c0_i32, %c0_i32_0 : i32, i32
  }
  func.func @transform_1(%arg0: i32) -> (i32, i32) {
    %c0_i32 = arith.constant 0 : i32
    %c0_i32_0 = arith.constant 0 : i32
    return %c0_i32, %arg0 : i32, i32
  }
  func.func @transform_2(%arg0: i32) -> (i32, i32) {
    %c0_i32 = arith.constant 0 : i32
    %c0_i32_0 = arith.constant 0 : i32
    %c0_i32_1 = arith.constant 0 : i32
    return %c0_i32, %c0_i32_0 : i32, i32
  }
  func.func @transform_3(%arg0: i32) -> (i32, i32) {
    %c0_i32 = arith.constant 0 : i32
    %c0_i32_0 = arith.constant 0 : i32
    return %c0_i32, %arg0 : i32, i32
  }
  func.func @transform_4(%arg0: i32) -> (i32, i32) {
    %c0_i32 = arith.constant 0 : i32
    %c0_i32_0 = arith.constant 0 : i32
    return %c0_i32, %arg0 : i32, i32
  }
}

module attributes {stable_mosaic.version = 11 : i64} {
  func.func @_convT_kernel(%arg0: i32, %arg1: memref<32x72xbf16, #tpu.memory_space<vmem>>, %arg2: memref<72x256xbf16, #tpu.memory_space<vmem>>, %arg3: memref<32x1xf32, #tpu.memory_space<vmem>>, %arg4: memref<32x256xf32, #tpu.memory_space<vmem>>) attributes {dimension_semantics = [#tpu.dimension_semantics<parallel>], iteration_bounds = array<i64: 2>, scalar_prefetch = 0 : i64, scratch_operands = 0 : i64, tpu.core_type = #tpu.core_type<tc>, window_params = [{pipeline_mode = #tpu.pipeline_mode<synchronous>, transform_indices = @transform_0, window_bounds = array<i64: 32, 72>}, {transform_indices = @transform_1, window_bounds = array<i64: 72, 256>}, {pipeline_mode = #tpu.pipeline_mode<synchronous>, transform_indices = @transform_2, window_bounds = array<i64: 32, 1>}, {transform_indices = @transform_3, window_bounds = array<i64: 32, 256>}]} {
    %c0 = arith.constant 0 : index
    %c0_0 = arith.constant 0 : index
    %0 = vector.load %arg1[%c0, %c0_0] : memref<32x72xbf16, #tpu.memory_space<vmem>>, vector<32x72xbf16>
    %c0_1 = arith.constant 0 : index
    %c0_2 = arith.constant 0 : index
    %1 = vector.load %arg2[%c0_1, %c0_2] : memref<72x256xbf16, #tpu.memory_space<vmem>>, vector<72x256xbf16>
    %cst = arith.constant dense<0.000000e+00> : vector<32x256xf32>
    %2 = tpu.matmul %0, %1, %cst {dimension_numbers = #tpu.dot_dimension_numbers<[1], [0], [0], [1], [0, 0, 1, 1], [], []>} : vector<32x72xbf16>, vector<72x256xbf16>, vector<32x256xf32> -> vector<32x256xf32>
    %c0_3 = arith.constant 0 : index
    %c0_4 = arith.constant 0 : index
    %3 = vector.load %arg3[%c0_3, %c0_4] : memref<32x1xf32, #tpu.memory_space<vmem>>, vector<32x1xf32>
    %4 = vector.broadcast %3 : vector<32x1xf32> to vector<32x256xf32>
    %5 = arith.addf %2, %4 : vector<32x256xf32>
    %6 = tpu.iota {dimensions = array<i32: 0>} : vector<32x256xi32>
    %c16_i32 = arith.constant 16 : i32
    %7 = vector.broadcast %c16_i32 : i32 to vector<32x256xi32>
    %8 = arith.cmpi slt, %6, %7 : vector<32x256xi32>
    %cst_5 = arith.constant 0.000000e+00 : f32
    %9 = vector.broadcast %cst_5 : f32 to vector<32x256xf32>
    %10 = arith.maximumf %5, %9 : vector<32x256xf32>
    %11 = arith.select %8, %10, %5 : vector<32x256xi1>, vector<32x256xf32>
    %c0_6 = arith.constant 0 : index
    %c0_7 = arith.constant 0 : index
    %12 = vector.load %arg4[%c0_6, %c0_7] : memref<32x256xf32, #tpu.memory_space<vmem>>, vector<32x256xf32>
    tpu.vector_store %arg4[%c0_6, %c0_7], %11 {strides = array<i32>} : memref<32x256xf32, #tpu.memory_space<vmem>>, vector<32x256xf32>,
    return
  }
  func.func @transform_0(%arg0: i32) -> (i32, i32) {
    %c0_i32 = arith.constant 0 : i32
    %c0_i32_0 = arith.constant 0 : i32
    %c0_i32_1 = arith.constant 0 : i32
    return %c0_i32, %c0_i32_0 : i32, i32
  }
  func.func @transform_1(%arg0: i32) -> (i32, i32) {
    %c0_i32 = arith.constant 0 : i32
    %c0_i32_0 = arith.constant 0 : i32
    return %c0_i32, %arg0 : i32, i32
  }
  func.func @transform_2(%arg0: i32) -> (i32, i32) {
    %c0_i32 = arith.constant 0 : i32
    %c0_i32_0 = arith.constant 0 : i32
    %c0_i32_1 = arith.constant 0 : i32
    return %c0_i32, %c0_i32_0 : i32, i32
  }
  func.func @transform_3(%arg0: i32) -> (i32, i32) {
    %c0_i32 = arith.constant 0 : i32
    %c0_i32_0 = arith.constant 0 : i32
    return %c0_i32, %arg0 : i32, i32
  }
}

module attributes {stable_mosaic.version = 11 : i64} {
  func.func @_convT_res_kernel(%arg0: i32, %arg1: memref<16x144xbf16, #tpu.memory_space<vmem>>, %arg2: memref<144x256xbf16, #tpu.memory_space<vmem>>, %arg3: memref<16x1xf32, #tpu.memory_space<vmem>>, %arg4: memref<16x256xf32, #tpu.memory_space<vmem>>, %arg5: memref<16x256xf32, #tpu.memory_space<vmem>>) attributes {dimension_semantics = [#tpu.dimension_semantics<parallel>], iteration_bounds = array<i64: 2>, scalar_prefetch = 0 : i64, scratch_operands = 0 : i64, tpu.core_type = #tpu.core_type<tc>, window_params = [{pipeline_mode = #tpu.pipeline_mode<synchronous>, transform_indices = @transform_0, window_bounds = array<i64: 16, 144>}, {transform_indices = @transform_1, window_bounds = array<i64: 144, 256>}, {pipeline_mode = #tpu.pipeline_mode<synchronous>, transform_indices = @transform_2, window_bounds = array<i64: 16, 1>}, {transform_indices = @transform_3, window_bounds = array<i64: 16, 256>}, {transform_indices = @transform_4, window_bounds = array<i64: 16, 256>}]} {
    %c0 = arith.constant 0 : index
    %c0_0 = arith.constant 0 : index
    %0 = vector.load %arg1[%c0, %c0_0] : memref<16x144xbf16, #tpu.memory_space<vmem>>, vector<16x144xbf16>
    %c0_1 = arith.constant 0 : index
    %c0_2 = arith.constant 0 : index
    %1 = vector.load %arg2[%c0_1, %c0_2] : memref<144x256xbf16, #tpu.memory_space<vmem>>, vector<144x256xbf16>
    %cst = arith.constant dense<0.000000e+00> : vector<16x256xf32>
    %2 = tpu.matmul %0, %1, %cst {dimension_numbers = #tpu.dot_dimension_numbers<[1], [0], [0], [1], [0, 0, 1, 1], [], []>} : vector<16x144xbf16>, vector<144x256xbf16>, vector<16x256xf32> -> vector<16x256xf32>
    %c0_3 = arith.constant 0 : index
    %c0_4 = arith.constant 0 : index
    %3 = vector.load %arg3[%c0_3, %c0_4] : memref<16x1xf32, #tpu.memory_space<vmem>>, vector<16x1xf32>
    %4 = vector.broadcast %3 : vector<16x1xf32> to vector<16x256xf32>
    %5 = arith.addf %2, %4 : vector<16x256xf32>
    %c0_5 = arith.constant 0 : index
    %c0_6 = arith.constant 0 : index
    %6 = vector.load %arg4[%c0_5, %c0_6] : memref<16x256xf32, #tpu.memory_space<vmem>>, vector<16x256xf32>
    %7 = arith.addf %5, %6 : vector<16x256xf32>
    %cst_7 = arith.constant 0.000000e+00 : f32
    %8 = vector.broadcast %cst_7 : f32 to vector<16x256xf32>
    %9 = arith.maximumf %7, %8 : vector<16x256xf32>
    %c0_8 = arith.constant 0 : index
    %c0_9 = arith.constant 0 : index
    %10 = vector.load %arg5[%c0_8, %c0_9] : memref<16x256xf32, #tpu.memory_space<vmem>>, vector<16x256xf32>
    tpu.vector_store %arg5[%c0_8, %c0_9], %9 {strides = array<i32>} : memref<16x256xf32, #tpu.memory_space<vmem>>, vector<16x256xf32>,
    return
  }
  func.func @transform_0(%arg0: i32) -> (i32, i32) {
    %c0_i32 = arith.constant 0 : i32
    %c0_i32_0 = arith.constant 0 : i32
    %c0_i32_1 = arith.constant 0 : i32
    return %c0_i32, %c0_i32_0 : i32, i32
  }
  func.func @transform_1(%arg0: i32) -> (i32, i32) {
    %c0_i32 = arith.constant 0 : i32
    %c0_i32_0 = arith.constant 0 : i32
    return %c0_i32, %arg0 : i32, i32
  }
  func.func @transform_2(%arg0: i32) -> (i32, i32) {
    %c0_i32 = arith.constant 0 : i32
    %c0_i32_0 = arith.constant 0 : i32
    %c0_i32_1 = arith.constant 0 : i32
    return %c0_i32, %c0_i32_0 : i32, i32
  }
  func.func @transform_3(%arg0: i32) -> (i32, i32) {
    %c0_i32 = arith.constant 0 : i32
    %c0_i32_0 = arith.constant 0 : i32
    return %c0_i32, %arg0 : i32, i32
  }
  func.func @transform_4(%arg0: i32) -> (i32, i32) {
    %c0_i32 = arith.constant 0 : i32
    %c0_i32_0 = arith.constant 0 : i32
    return %c0_i32, %arg0 : i32, i32
  }
}

module attributes {stable_mosaic.version = 11 : i64} {
  func.func @_convT_kernel(%arg0: i32, %arg1: memref<16x144xbf16, #tpu.memory_space<vmem>>, %arg2: memref<144x256xbf16, #tpu.memory_space<vmem>>, %arg3: memref<16x1xf32, #tpu.memory_space<vmem>>, %arg4: memref<16x256xf32, #tpu.memory_space<vmem>>) attributes {dimension_semantics = [#tpu.dimension_semantics<parallel>], iteration_bounds = array<i64: 2>, scalar_prefetch = 0 : i64, scratch_operands = 0 : i64, tpu.core_type = #tpu.core_type<tc>, window_params = [{pipeline_mode = #tpu.pipeline_mode<synchronous>, transform_indices = @transform_0, window_bounds = array<i64: 16, 144>}, {transform_indices = @transform_1, window_bounds = array<i64: 144, 256>}, {pipeline_mode = #tpu.pipeline_mode<synchronous>, transform_indices = @transform_2, window_bounds = array<i64: 16, 1>}, {transform_indices = @transform_3, window_bounds = array<i64: 16, 256>}]} {
    %c0 = arith.constant 0 : index
    %c0_0 = arith.constant 0 : index
    %0 = vector.load %arg1[%c0, %c0_0] : memref<16x144xbf16, #tpu.memory_space<vmem>>, vector<16x144xbf16>
    %c0_1 = arith.constant 0 : index
    %c0_2 = arith.constant 0 : index
    %1 = vector.load %arg2[%c0_1, %c0_2] : memref<144x256xbf16, #tpu.memory_space<vmem>>, vector<144x256xbf16>
    %cst = arith.constant dense<0.000000e+00> : vector<16x256xf32>
    %2 = tpu.matmul %0, %1, %cst {dimension_numbers = #tpu.dot_dimension_numbers<[1], [0], [0], [1], [0, 0, 1, 1], [], []>} : vector<16x144xbf16>, vector<144x256xbf16>, vector<16x256xf32> -> vector<16x256xf32>
    %c0_3 = arith.constant 0 : index
    %c0_4 = arith.constant 0 : index
    %3 = vector.load %arg3[%c0_3, %c0_4] : memref<16x1xf32, #tpu.memory_space<vmem>>, vector<16x1xf32>
    %4 = vector.broadcast %3 : vector<16x1xf32> to vector<16x256xf32>
    %5 = arith.addf %2, %4 : vector<16x256xf32>
    %cst_5 = arith.constant 0.000000e+00 : f32
    %6 = vector.broadcast %cst_5 : f32 to vector<16x256xf32>
    %7 = arith.maximumf %5, %6 : vector<16x256xf32>
    %c0_6 = arith.constant 0 : index
    %c0_7 = arith.constant 0 : index
    %8 = vector.load %arg4[%c0_6, %c0_7] : memref<16x256xf32, #tpu.memory_space<vmem>>, vector<16x256xf32>
    tpu.vector_store %arg4[%c0_6, %c0_7], %7 {strides = array<i32>} : memref<16x256xf32, #tpu.memory_space<vmem>>, vector<16x256xf32>,
    return
  }
  func.func @transform_0(%arg0: i32) -> (i32, i32) {
    %c0_i32 = arith.constant 0 : i32
    %c0_i32_0 = arith.constant 0 : i32
    %c0_i32_1 = arith.constant 0 : i32
    return %c0_i32, %c0_i32_0 : i32, i32
  }
  func.func @transform_1(%arg0: i32) -> (i32, i32) {
    %c0_i32 = arith.constant 0 : i32
    %c0_i32_0 = arith.constant 0 : i32
    return %c0_i32, %arg0 : i32, i32
  }
  func.func @transform_2(%arg0: i32) -> (i32, i32) {
    %c0_i32 = arith.constant 0 : i32
    %c0_i32_0 = arith.constant 0 : i32
    %c0_i32_1 = arith.constant 0 : i32
    return %c0_i32, %c0_i32_0 : i32, i32
  }
  func.func @transform_3(%arg0: i32) -> (i32, i32) {
    %c0_i32 = arith.constant 0 : i32
    %c0_i32_0 = arith.constant 0 : i32
    return %c0_i32, %arg0 : i32, i32
  }
}

module attributes {stable_mosaic.version = 11 : i64} {
  func.func @_convT_kernel(%arg0: i32, %arg1: memref<64x144xbf16, #tpu.memory_space<vmem>>, %arg2: memref<144x128xbf16, #tpu.memory_space<vmem>>, %arg3: memref<64x1xf32, #tpu.memory_space<vmem>>, %arg4: memref<64x128xf32, #tpu.memory_space<vmem>>) attributes {dimension_semantics = [#tpu.dimension_semantics<parallel>], iteration_bounds = array<i64: 1>, scalar_prefetch = 0 : i64, scratch_operands = 0 : i64, tpu.core_type = #tpu.core_type<tc>, window_params = [{pipeline_mode = #tpu.pipeline_mode<synchronous>, transform_indices = @transform_0, window_bounds = array<i64: 64, 144>}, {transform_indices = @transform_1, window_bounds = array<i64: 144, 128>}, {pipeline_mode = #tpu.pipeline_mode<synchronous>, transform_indices = @transform_2, window_bounds = array<i64: 64, 1>}, {transform_indices = @transform_3, window_bounds = array<i64: 64, 128>}]} {
    %c0 = arith.constant 0 : index
    %c0_0 = arith.constant 0 : index
    %0 = vector.load %arg1[%c0, %c0_0] : memref<64x144xbf16, #tpu.memory_space<vmem>>, vector<64x144xbf16>
    %c0_1 = arith.constant 0 : index
    %c0_2 = arith.constant 0 : index
    %1 = vector.load %arg2[%c0_1, %c0_2] : memref<144x128xbf16, #tpu.memory_space<vmem>>, vector<144x128xbf16>
    %cst = arith.constant dense<0.000000e+00> : vector<64x128xf32>
    %2 = tpu.matmul %0, %1, %cst {dimension_numbers = #tpu.dot_dimension_numbers<[1], [0], [0], [1], [0, 0, 1, 1], [], []>} : vector<64x144xbf16>, vector<144x128xbf16>, vector<64x128xf32> -> vector<64x128xf32>
    %c0_3 = arith.constant 0 : index
    %c0_4 = arith.constant 0 : index
    %3 = vector.load %arg3[%c0_3, %c0_4] : memref<64x1xf32, #tpu.memory_space<vmem>>, vector<64x1xf32>
    %4 = vector.broadcast %3 : vector<64x1xf32> to vector<64x128xf32>
    %5 = arith.addf %2, %4 : vector<64x128xf32>
    %6 = tpu.iota {dimensions = array<i32: 0>} : vector<64x128xi32>
    %c32_i32 = arith.constant 32 : i32
    %7 = vector.broadcast %c32_i32 : i32 to vector<64x128xi32>
    %8 = arith.cmpi slt, %6, %7 : vector<64x128xi32>
    %cst_5 = arith.constant 0.000000e+00 : f32
    %9 = vector.broadcast %cst_5 : f32 to vector<64x128xf32>
    %10 = arith.maximumf %5, %9 : vector<64x128xf32>
    %11 = arith.select %8, %10, %5 : vector<64x128xi1>, vector<64x128xf32>
    %c0_6 = arith.constant 0 : index
    %c0_7 = arith.constant 0 : index
    %12 = vector.load %arg4[%c0_6, %c0_7] : memref<64x128xf32, #tpu.memory_space<vmem>>, vector<64x128xf32>
    tpu.vector_store %arg4[%c0_6, %c0_7], %11 {strides = array<i32>} : memref<64x128xf32, #tpu.memory_space<vmem>>, vector<64x128xf32>,
    return
  }
  func.func @transform_0(%arg0: i32) -> (i32, i32) {
    %c0_i32 = arith.constant 0 : i32
    %c0_i32_0 = arith.constant 0 : i32
    %c0_i32_1 = arith.constant 0 : i32
    return %c0_i32, %c0_i32_0 : i32, i32
  }
  func.func @transform_1(%arg0: i32) -> (i32, i32) {
    %c0_i32 = arith.constant 0 : i32
    %c0_i32_0 = arith.constant 0 : i32
    return %c0_i32, %arg0 : i32, i32
  }
  func.func @transform_2(%arg0: i32) -> (i32, i32) {
    %c0_i32 = arith.constant 0 : i32
    %c0_i32_0 = arith.constant 0 : i32
    %c0_i32_1 = arith.constant 0 : i32
    return %c0_i32, %c0_i32_0 : i32, i32
  }
  func.func @transform_3(%arg0: i32) -> (i32, i32) {
    %c0_i32 = arith.constant 0 : i32
    %c0_i32_0 = arith.constant 0 : i32
    return %c0_i32, %arg0 : i32, i32
  }
}

module attributes {stable_mosaic.version = 11 : i64} {
  func.func @_convT_res_kernel(%arg0: i32, %arg1: memref<32x288xbf16, #tpu.memory_space<vmem>>, %arg2: memref<288x128xbf16, #tpu.memory_space<vmem>>, %arg3: memref<32x1xf32, #tpu.memory_space<vmem>>, %arg4: memref<32x128xf32, #tpu.memory_space<vmem>>, %arg5: memref<32x128xf32, #tpu.memory_space<vmem>>) attributes {dimension_semantics = [#tpu.dimension_semantics<parallel>], iteration_bounds = array<i64: 1>, scalar_prefetch = 0 : i64, scratch_operands = 0 : i64, tpu.core_type = #tpu.core_type<tc>, window_params = [{pipeline_mode = #tpu.pipeline_mode<synchronous>, transform_indices = @transform_0, window_bounds = array<i64: 32, 288>}, {transform_indices = @transform_1, window_bounds = array<i64: 288, 128>}, {pipeline_mode = #tpu.pipeline_mode<synchronous>, transform_indices = @transform_2, window_bounds = array<i64: 32, 1>}, {transform_indices = @transform_3, window_bounds = array<i64: 32, 128>}, {transform_indices = @transform_4, window_bounds = array<i64: 32, 128>}]} {
    %c0 = arith.constant 0 : index
    %c0_0 = arith.constant 0 : index
    %0 = vector.load %arg1[%c0, %c0_0] : memref<32x288xbf16, #tpu.memory_space<vmem>>, vector<32x288xbf16>
    %c0_1 = arith.constant 0 : index
    %c0_2 = arith.constant 0 : index
    %1 = vector.load %arg2[%c0_1, %c0_2] : memref<288x128xbf16, #tpu.memory_space<vmem>>, vector<288x128xbf16>
    %cst = arith.constant dense<0.000000e+00> : vector<32x128xf32>
    %2 = tpu.matmul %0, %1, %cst {dimension_numbers = #tpu.dot_dimension_numbers<[1], [0], [0], [1], [0, 0, 1, 1], [], []>} : vector<32x288xbf16>, vector<288x128xbf16>, vector<32x128xf32> -> vector<32x128xf32>
    %c0_3 = arith.constant 0 : index
    %c0_4 = arith.constant 0 : index
    %3 = vector.load %arg3[%c0_3, %c0_4] : memref<32x1xf32, #tpu.memory_space<vmem>>, vector<32x1xf32>
    %4 = vector.broadcast %3 : vector<32x1xf32> to vector<32x128xf32>
    %5 = arith.addf %2, %4 : vector<32x128xf32>
    %c0_5 = arith.constant 0 : index
    %c0_6 = arith.constant 0 : index
    %6 = vector.load %arg4[%c0_5, %c0_6] : memref<32x128xf32, #tpu.memory_space<vmem>>, vector<32x128xf32>
    %7 = arith.addf %5, %6 : vector<32x128xf32>
    %cst_7 = arith.constant 0.000000e+00 : f32
    %8 = vector.broadcast %cst_7 : f32 to vector<32x128xf32>
    %9 = arith.maximumf %7, %8 : vector<32x128xf32>
    %c0_8 = arith.constant 0 : index
    %c0_9 = arith.constant 0 : index
    %10 = vector.load %arg5[%c0_8, %c0_9] : memref<32x128xf32, #tpu.memory_space<vmem>>, vector<32x128xf32>
    tpu.vector_store %arg5[%c0_8, %c0_9], %9 {strides = array<i32>} : memref<32x128xf32, #tpu.memory_space<vmem>>, vector<32x128xf32>,
    return
  }
  func.func @transform_0(%arg0: i32) -> (i32, i32) {
    %c0_i32 = arith.constant 0 : i32
    %c0_i32_0 = arith.constant 0 : i32
    %c0_i32_1 = arith.constant 0 : i32
    return %c0_i32, %c0_i32_0 : i32, i32
  }
  func.func @transform_1(%arg0: i32) -> (i32, i32) {
    %c0_i32 = arith.constant 0 : i32
    %c0_i32_0 = arith.constant 0 : i32
    return %c0_i32, %arg0 : i32, i32
  }
  func.func @transform_2(%arg0: i32) -> (i32, i32) {
    %c0_i32 = arith.constant 0 : i32
    %c0_i32_0 = arith.constant 0 : i32
    %c0_i32_1 = arith.constant 0 : i32
    return %c0_i32, %c0_i32_0 : i32, i32
  }
  func.func @transform_3(%arg0: i32) -> (i32, i32) {
    %c0_i32 = arith.constant 0 : i32
    %c0_i32_0 = arith.constant 0 : i32
    return %c0_i32, %arg0 : i32, i32
  }
  func.func @transform_4(%arg0: i32) -> (i32, i32) {
    %c0_i32 = arith.constant 0 : i32
    %c0_i32_0 = arith.constant 0 : i32
    return %c0_i32, %arg0 : i32, i32
  }
}

module attributes {stable_mosaic.version = 11 : i64} {
  func.func @_convT_kernel(%arg0: i32, %arg1: memref<32x288xbf16, #tpu.memory_space<vmem>>, %arg2: memref<288x128xbf16, #tpu.memory_space<vmem>>, %arg3: memref<32x1xf32, #tpu.memory_space<vmem>>, %arg4: memref<32x128xf32, #tpu.memory_space<vmem>>) attributes {dimension_semantics = [#tpu.dimension_semantics<parallel>], iteration_bounds = array<i64: 1>, scalar_prefetch = 0 : i64, scratch_operands = 0 : i64, tpu.core_type = #tpu.core_type<tc>, window_params = [{pipeline_mode = #tpu.pipeline_mode<synchronous>, transform_indices = @transform_0, window_bounds = array<i64: 32, 288>}, {transform_indices = @transform_1, window_bounds = array<i64: 288, 128>}, {pipeline_mode = #tpu.pipeline_mode<synchronous>, transform_indices = @transform_2, window_bounds = array<i64: 32, 1>}, {transform_indices = @transform_3, window_bounds = array<i64: 32, 128>}]} {
    %c0 = arith.constant 0 : index
    %c0_0 = arith.constant 0 : index
    %0 = vector.load %arg1[%c0, %c0_0] : memref<32x288xbf16, #tpu.memory_space<vmem>>, vector<32x288xbf16>
    %c0_1 = arith.constant 0 : index
    %c0_2 = arith.constant 0 : index
    %1 = vector.load %arg2[%c0_1, %c0_2] : memref<288x128xbf16, #tpu.memory_space<vmem>>, vector<288x128xbf16>
    %cst = arith.constant dense<0.000000e+00> : vector<32x128xf32>
    %2 = tpu.matmul %0, %1, %cst {dimension_numbers = #tpu.dot_dimension_numbers<[1], [0], [0], [1], [0, 0, 1, 1], [], []>} : vector<32x288xbf16>, vector<288x128xbf16>, vector<32x128xf32> -> vector<32x128xf32>
    %c0_3 = arith.constant 0 : index
    %c0_4 = arith.constant 0 : index
    %3 = vector.load %arg3[%c0_3, %c0_4] : memref<32x1xf32, #tpu.memory_space<vmem>>, vector<32x1xf32>
    %4 = vector.broadcast %3 : vector<32x1xf32> to vector<32x128xf32>
    %5 = arith.addf %2, %4 : vector<32x128xf32>
    %cst_5 = arith.constant 0.000000e+00 : f32
    %6 = vector.broadcast %cst_5 : f32 to vector<32x128xf32>
    %7 = arith.maximumf %5, %6 : vector<32x128xf32>
    %c0_6 = arith.constant 0 : index
    %c0_7 = arith.constant 0 : index
    %8 = vector.load %arg4[%c0_6, %c0_7] : memref<32x128xf32, #tpu.memory_space<vmem>>, vector<32x128xf32>
    tpu.vector_store %arg4[%c0_6, %c0_7], %7 {strides = array<i32>} : memref<32x128xf32, #tpu.memory_space<vmem>>, vector<32x128xf32>,
    return
  }
  func.func @transform_0(%arg0: i32) -> (i32, i32) {
    %c0_i32 = arith.constant 0 : i32
    %c0_i32_0 = arith.constant 0 : i32
    %c0_i32_1 = arith.constant 0 : i32
    return %c0_i32, %c0_i32_0 : i32, i32
  }
  func.func @transform_1(%arg0: i32) -> (i32, i32) {
    %c0_i32 = arith.constant 0 : i32
    %c0_i32_0 = arith.constant 0 : i32
    return %c0_i32, %arg0 : i32, i32
  }
  func.func @transform_2(%arg0: i32) -> (i32, i32) {
    %c0_i32 = arith.constant 0 : i32
    %c0_i32_0 = arith.constant 0 : i32
    %c0_i32_1 = arith.constant 0 : i32
    return %c0_i32, %c0_i32_0 : i32, i32
  }
  func.func @transform_3(%arg0: i32) -> (i32, i32) {
    %c0_i32 = arith.constant 0 : i32
    %c0_i32_0 = arith.constant 0 : i32
    return %c0_i32, %arg0 : i32, i32
  }
}

module attributes {stable_mosaic.version = 11 : i64} {
  func.func @_convT_kernel(%arg0: i32, %arg1: memref<128x288xbf16, #tpu.memory_space<vmem>>, %arg2: memref<288x128xbf16, #tpu.memory_space<vmem>>, %arg3: memref<128x1xf32, #tpu.memory_space<vmem>>, %arg4: memref<128x128xf32, #tpu.memory_space<vmem>>) attributes {dimension_semantics = [#tpu.dimension_semantics<parallel>], iteration_bounds = array<i64: 1>, scalar_prefetch = 0 : i64, scratch_operands = 0 : i64, tpu.core_type = #tpu.core_type<tc>, window_params = [{pipeline_mode = #tpu.pipeline_mode<synchronous>, transform_indices = @transform_0, window_bounds = array<i64: 128, 288>}, {transform_indices = @transform_1, window_bounds = array<i64: 288, 128>}, {pipeline_mode = #tpu.pipeline_mode<synchronous>, transform_indices = @transform_2, window_bounds = array<i64: 128, 1>}, {transform_indices = @transform_3, window_bounds = array<i64: 128, 128>}]} {
    %c0 = arith.constant 0 : index
    %c0_0 = arith.constant 0 : index
    %0 = vector.load %arg1[%c0, %c0_0] : memref<128x288xbf16, #tpu.memory_space<vmem>>, vector<128x288xbf16>
    %c0_1 = arith.constant 0 : index
    %c0_2 = arith.constant 0 : index
    %1 = vector.load %arg2[%c0_1, %c0_2] : memref<288x128xbf16, #tpu.memory_space<vmem>>, vector<288x128xbf16>
    %cst = arith.constant dense<0.000000e+00> : vector<128x128xf32>
    %2 = tpu.matmul %0, %1, %cst {dimension_numbers = #tpu.dot_dimension_numbers<[1], [0], [0], [1], [0, 0, 1, 1], [], []>} : vector<128x288xbf16>, vector<288x128xbf16>, vector<128x128xf32> -> vector<128x128xf32>
    %c0_3 = arith.constant 0 : index
    %c0_4 = arith.constant 0 : index
    %3 = vector.load %arg3[%c0_3, %c0_4] : memref<128x1xf32, #tpu.memory_space<vmem>>, vector<128x1xf32>
    %4 = vector.broadcast %3 : vector<128x1xf32> to vector<128x128xf32>
    %5 = arith.addf %2, %4 : vector<128x128xf32>
    %6 = tpu.iota {dimensions = array<i32: 0>} : vector<128x128xi32>
    %c64_i32 = arith.constant 64 : i32
    %7 = vector.broadcast %c64_i32 : i32 to vector<128x128xi32>
    %8 = arith.cmpi slt, %6, %7 : vector<128x128xi32>
    %cst_5 = arith.constant 0.000000e+00 : f32
    %9 = vector.broadcast %cst_5 : f32 to vector<128x128xf32>
    %10 = arith.maximumf %5, %9 : vector<128x128xf32>
    %11 = arith.select %8, %10, %5 : vector<128x128xi1>, vector<128x128xf32>
    %c0_6 = arith.constant 0 : index
    %c0_7 = arith.constant 0 : index
    %12 = vector.load %arg4[%c0_6, %c0_7] : memref<128x128xf32, #tpu.memory_space<vmem>>, vector<128x128xf32>
    tpu.vector_store %arg4[%c0_6, %c0_7], %11 {strides = array<i32>} : memref<128x128xf32, #tpu.memory_space<vmem>>, vector<128x128xf32>,
    return
  }
  func.func @transform_0(%arg0: i32) -> (i32, i32) {
    %c0_i32 = arith.constant 0 : i32
    %c0_i32_0 = arith.constant 0 : i32
    %c0_i32_1 = arith.constant 0 : i32
    return %c0_i32, %c0_i32_0 : i32, i32
  }
  func.func @transform_1(%arg0: i32) -> (i32, i32) {
    %c0_i32 = arith.constant 0 : i32
    %c0_i32_0 = arith.constant 0 : i32
    return %c0_i32, %arg0 : i32, i32
  }
  func.func @transform_2(%arg0: i32) -> (i32, i32) {
    %c0_i32 = arith.constant 0 : i32
    %c0_i32_0 = arith.constant 0 : i32
    %c0_i32_1 = arith.constant 0 : i32
    return %c0_i32, %c0_i32_0 : i32, i32
  }
  func.func @transform_3(%arg0: i32) -> (i32, i32) {
    %c0_i32 = arith.constant 0 : i32
    %c0_i32_0 = arith.constant 0 : i32
    return %c0_i32, %arg0 : i32, i32
  }
}

module attributes {stable_mosaic.version = 11 : i64} {
  func.func @_convT_res_kernel(%arg0: i32, %arg1: memref<64x576xbf16, #tpu.memory_space<vmem>>, %arg2: memref<576x128xbf16, #tpu.memory_space<vmem>>, %arg3: memref<64x1xf32, #tpu.memory_space<vmem>>, %arg4: memref<64x128xf32, #tpu.memory_space<vmem>>, %arg5: memref<64x128xf32, #tpu.memory_space<vmem>>) attributes {dimension_semantics = [#tpu.dimension_semantics<parallel>], iteration_bounds = array<i64: 1>, scalar_prefetch = 0 : i64, scratch_operands = 0 : i64, tpu.core_type = #tpu.core_type<tc>, window_params = [{pipeline_mode = #tpu.pipeline_mode<synchronous>, transform_indices = @transform_0, window_bounds = array<i64: 64, 576>}, {transform_indices = @transform_1, window_bounds = array<i64: 576, 128>}, {pipeline_mode = #tpu.pipeline_mode<synchronous>, transform_indices = @transform_2, window_bounds = array<i64: 64, 1>}, {transform_indices = @transform_3, window_bounds = array<i64: 64, 128>}, {transform_indices = @transform_4, window_bounds = array<i64: 64, 128>}]} {
    %c0 = arith.constant 0 : index
    %c0_0 = arith.constant 0 : index
    %0 = vector.load %arg1[%c0, %c0_0] : memref<64x576xbf16, #tpu.memory_space<vmem>>, vector<64x576xbf16>
    %c0_1 = arith.constant 0 : index
    %c0_2 = arith.constant 0 : index
    %1 = vector.load %arg2[%c0_1, %c0_2] : memref<576x128xbf16, #tpu.memory_space<vmem>>, vector<576x128xbf16>
    %cst = arith.constant dense<0.000000e+00> : vector<64x128xf32>
    %2 = tpu.matmul %0, %1, %cst {dimension_numbers = #tpu.dot_dimension_numbers<[1], [0], [0], [1], [0, 0, 1, 1], [], []>} : vector<64x576xbf16>, vector<576x128xbf16>, vector<64x128xf32> -> vector<64x128xf32>
    %c0_3 = arith.constant 0 : index
    %c0_4 = arith.constant 0 : index
    %3 = vector.load %arg3[%c0_3, %c0_4] : memref<64x1xf32, #tpu.memory_space<vmem>>, vector<64x1xf32>
    %4 = vector.broadcast %3 : vector<64x1xf32> to vector<64x128xf32>
    %5 = arith.addf %2, %4 : vector<64x128xf32>
    %c0_5 = arith.constant 0 : index
    %c0_6 = arith.constant 0 : index
    %6 = vector.load %arg4[%c0_5, %c0_6] : memref<64x128xf32, #tpu.memory_space<vmem>>, vector<64x128xf32>
    %7 = arith.addf %5, %6 : vector<64x128xf32>
    %cst_7 = arith.constant 0.000000e+00 : f32
    %8 = vector.broadcast %cst_7 : f32 to vector<64x128xf32>
    %9 = arith.maximumf %7, %8 : vector<64x128xf32>
    %c0_8 = arith.constant 0 : index
    %c0_9 = arith.constant 0 : index
    %10 = vector.load %arg5[%c0_8, %c0_9] : memref<64x128xf32, #tpu.memory_space<vmem>>, vector<64x128xf32>
    tpu.vector_store %arg5[%c0_8, %c0_9], %9 {strides = array<i32>} : memref<64x128xf32, #tpu.memory_space<vmem>>, vector<64x128xf32>,
    return
  }
  func.func @transform_0(%arg0: i32) -> (i32, i32) {
    %c0_i32 = arith.constant 0 : i32
    %c0_i32_0 = arith.constant 0 : i32
    %c0_i32_1 = arith.constant 0 : i32
    return %c0_i32, %c0_i32_0 : i32, i32
  }
  func.func @transform_1(%arg0: i32) -> (i32, i32) {
    %c0_i32 = arith.constant 0 : i32
    %c0_i32_0 = arith.constant 0 : i32
    return %c0_i32, %arg0 : i32, i32
  }
  func.func @transform_2(%arg0: i32) -> (i32, i32) {
    %c0_i32 = arith.constant 0 : i32
    %c0_i32_0 = arith.constant 0 : i32
    %c0_i32_1 = arith.constant 0 : i32
    return %c0_i32, %c0_i32_0 : i32, i32
  }
  func.func @transform_3(%arg0: i32) -> (i32, i32) {
    %c0_i32 = arith.constant 0 : i32
    %c0_i32_0 = arith.constant 0 : i32
    return %c0_i32, %arg0 : i32, i32
  }
  func.func @transform_4(%arg0: i32) -> (i32, i32) {
    %c0_i32 = arith.constant 0 : i32
    %c0_i32_0 = arith.constant 0 : i32
    return %c0_i32, %arg0 : i32, i32
  }
}

module attributes {stable_mosaic.version = 11 : i64} {
  func.func @_convT_kernel(%arg0: i32, %arg1: memref<64x576xbf16, #tpu.memory_space<vmem>>, %arg2: memref<576x128xbf16, #tpu.memory_space<vmem>>, %arg3: memref<64x1xf32, #tpu.memory_space<vmem>>, %arg4: memref<64x128xf32, #tpu.memory_space<vmem>>) attributes {dimension_semantics = [#tpu.dimension_semantics<parallel>], iteration_bounds = array<i64: 1>, scalar_prefetch = 0 : i64, scratch_operands = 0 : i64, tpu.core_type = #tpu.core_type<tc>, window_params = [{pipeline_mode = #tpu.pipeline_mode<synchronous>, transform_indices = @transform_0, window_bounds = array<i64: 64, 576>}, {transform_indices = @transform_1, window_bounds = array<i64: 576, 128>}, {pipeline_mode = #tpu.pipeline_mode<synchronous>, transform_indices = @transform_2, window_bounds = array<i64: 64, 1>}, {transform_indices = @transform_3, window_bounds = array<i64: 64, 128>}]} {
    %c0 = arith.constant 0 : index
    %c0_0 = arith.constant 0 : index
    %0 = vector.load %arg1[%c0, %c0_0] : memref<64x576xbf16, #tpu.memory_space<vmem>>, vector<64x576xbf16>
    %c0_1 = arith.constant 0 : index
    %c0_2 = arith.constant 0 : index
    %1 = vector.load %arg2[%c0_1, %c0_2] : memref<576x128xbf16, #tpu.memory_space<vmem>>, vector<576x128xbf16>
    %cst = arith.constant dense<0.000000e+00> : vector<64x128xf32>
    %2 = tpu.matmul %0, %1, %cst {dimension_numbers = #tpu.dot_dimension_numbers<[1], [0], [0], [1], [0, 0, 1, 1], [], []>} : vector<64x576xbf16>, vector<576x128xbf16>, vector<64x128xf32> -> vector<64x128xf32>
    %c0_3 = arith.constant 0 : index
    %c0_4 = arith.constant 0 : index
    %3 = vector.load %arg3[%c0_3, %c0_4] : memref<64x1xf32, #tpu.memory_space<vmem>>, vector<64x1xf32>
    %4 = vector.broadcast %3 : vector<64x1xf32> to vector<64x128xf32>
    %5 = arith.addf %2, %4 : vector<64x128xf32>
    %cst_5 = arith.constant 0.000000e+00 : f32
    %6 = vector.broadcast %cst_5 : f32 to vector<64x128xf32>
    %7 = arith.maximumf %5, %6 : vector<64x128xf32>
    %c0_6 = arith.constant 0 : index
    %c0_7 = arith.constant 0 : index
    %8 = vector.load %arg4[%c0_6, %c0_7] : memref<64x128xf32, #tpu.memory_space<vmem>>, vector<64x128xf32>
    tpu.vector_store %arg4[%c0_6, %c0_7], %7 {strides = array<i32>} : memref<64x128xf32, #tpu.memory_space<vmem>>, vector<64x128xf32>,
    return
  }
  func.func @transform_0(%arg0: i32) -> (i32, i32) {
    %c0_i32 = arith.constant 0 : i32
    %c0_i32_0 = arith.constant 0 : i32
    %c0_i32_1 = arith.constant 0 : i32
    return %c0_i32, %c0_i32_0 : i32, i32
  }
  func.func @transform_1(%arg0: i32) -> (i32, i32) {
    %c0_i32 = arith.constant 0 : i32
    %c0_i32_0 = arith.constant 0 : i32
    return %c0_i32, %arg0 : i32, i32
  }
  func.func @transform_2(%arg0: i32) -> (i32, i32) {
    %c0_i32 = arith.constant 0 : i32
    %c0_i32_0 = arith.constant 0 : i32
    %c0_i32_1 = arith.constant 0 : i32
    return %c0_i32, %c0_i32_0 : i32, i32
  }
  func.func @transform_3(%arg0: i32) -> (i32, i32) {
    %c0_i32 = arith.constant 0 : i32
    %c0_i32_0 = arith.constant 0 : i32
    return %c0_i32, %arg0 : i32, i32
  }
}

module attributes {stable_mosaic.version = 11 : i64} {
  func.func @_window_mean_kernel(%arg0: memref<16x1x128xf32, #tpu.memory_space<vmem>>, %arg1: memref<1x128xf32, #tpu.memory_space<vmem>>) attributes {dimension_semantics = [], scalar_prefetch = 0 : i64, scratch_operands = 0 : i64, tpu.core_type = #tpu.core_type<tc>} {
    %c0 = arith.constant 0 : index
    %c0_0 = arith.constant 0 : index
    %c0_1 = arith.constant 0 : index
    %0 = vector.load %arg0[%c0, %c0_0, %c0_1] : memref<16x1x128xf32, #tpu.memory_space<vmem>>, vector<1x1x128xf32>
    %1 = vector.shape_cast %0 : vector<1x1x128xf32> to vector<1x128xf32>
    %c1 = arith.constant 1 : index
    %c0_2 = arith.constant 0 : index
    %c0_3 = arith.constant 0 : index
    %2 = vector.load %arg0[%c1, %c0_2, %c0_3] : memref<16x1x128xf32, #tpu.memory_space<vmem>>, vector<1x1x128xf32>
    %3 = vector.shape_cast %2 : vector<1x1x128xf32> to vector<1x128xf32>
    %4 = arith.addf %1, %3 : vector<1x128xf32>
    %c2 = arith.constant 2 : index
    %c0_4 = arith.constant 0 : index
    %c0_5 = arith.constant 0 : index
    %5 = vector.load %arg0[%c2, %c0_4, %c0_5] : memref<16x1x128xf32, #tpu.memory_space<vmem>>, vector<1x1x128xf32>
    %6 = vector.shape_cast %5 : vector<1x1x128xf32> to vector<1x128xf32>
    %7 = arith.addf %4, %6 : vector<1x128xf32>
    %c3 = arith.constant 3 : index
    %c0_6 = arith.constant 0 : index
    %c0_7 = arith.constant 0 : index
    %8 = vector.load %arg0[%c3, %c0_6, %c0_7] : memref<16x1x128xf32, #tpu.memory_space<vmem>>, vector<1x1x128xf32>
    %9 = vector.shape_cast %8 : vector<1x1x128xf32> to vector<1x128xf32>
    %10 = arith.addf %7, %9 : vector<1x128xf32>
    %c4 = arith.constant 4 : index
    %c0_8 = arith.constant 0 : index
    %c0_9 = arith.constant 0 : index
    %11 = vector.load %arg0[%c4, %c0_8, %c0_9] : memref<16x1x128xf32, #tpu.memory_space<vmem>>, vector<1x1x128xf32>
    %12 = vector.shape_cast %11 : vector<1x1x128xf32> to vector<1x128xf32>
    %13 = arith.addf %10, %12 : vector<1x128xf32>
    %c5 = arith.constant 5 : index
    %c0_10 = arith.constant 0 : index
    %c0_11 = arith.constant 0 : index
    %14 = vector.load %arg0[%c5, %c0_10, %c0_11] : memref<16x1x128xf32, #tpu.memory_space<vmem>>, vector<1x1x128xf32>
    %15 = vector.shape_cast %14 : vector<1x1x128xf32> to vector<1x128xf32>
    %16 = arith.addf %13, %15 : vector<1x128xf32>
    %c6 = arith.constant 6 : index
    %c0_12 = arith.constant 0 : index
    %c0_13 = arith.constant 0 : index
    %17 = vector.load %arg0[%c6, %c0_12, %c0_13] : memref<16x1x128xf32, #tpu.memory_space<vmem>>, vector<1x1x128xf32>
    %18 = vector.shape_cast %17 : vector<1x1x128xf32> to vector<1x128xf32>
    %19 = arith.addf %16, %18 : vector<1x128xf32>
    %c7 = arith.constant 7 : index
    %c0_14 = arith.constant 0 : index
    %c0_15 = arith.constant 0 : index
    %20 = vector.load %arg0[%c7, %c0_14, %c0_15] : memref<16x1x128xf32, #tpu.memory_space<vmem>>, vector<1x1x128xf32>
    %21 = vector.shape_cast %20 : vector<1x1x128xf32> to vector<1x128xf32>
    %22 = arith.addf %19, %21 : vector<1x128xf32>
    %c8 = arith.constant 8 : index
    %c0_16 = arith.constant 0 : index
    %c0_17 = arith.constant 0 : index
    %23 = vector.load %arg0[%c8, %c0_16, %c0_17] : memref<16x1x128xf32, #tpu.memory_space<vmem>>, vector<1x1x128xf32>
    %24 = vector.shape_cast %23 : vector<1x1x128xf32> to vector<1x128xf32>
    %25 = arith.addf %22, %24 : vector<1x128xf32>
    %c9 = arith.constant 9 : index
    %c0_18 = arith.constant 0 : index
    %c0_19 = arith.constant 0 : index
    %26 = vector.load %arg0[%c9, %c0_18, %c0_19] : memref<16x1x128xf32, #tpu.memory_space<vmem>>, vector<1x1x128xf32>
    %27 = vector.shape_cast %26 : vector<1x1x128xf32> to vector<1x128xf32>
    %28 = arith.addf %25, %27 : vector<1x128xf32>
    %c10 = arith.constant 10 : index
    %c0_20 = arith.constant 0 : index
    %c0_21 = arith.constant 0 : index
    %29 = vector.load %arg0[%c10, %c0_20, %c0_21] : memref<16x1x128xf32, #tpu.memory_space<vmem>>, vector<1x1x128xf32>
    %30 = vector.shape_cast %29 : vector<1x1x128xf32> to vector<1x128xf32>
    %31 = arith.addf %28, %30 : vector<1x128xf32>
    %c11 = arith.constant 11 : index
    %c0_22 = arith.constant 0 : index
    %c0_23 = arith.constant 0 : index
    %32 = vector.load %arg0[%c11, %c0_22, %c0_23] : memref<16x1x128xf32, #tpu.memory_space<vmem>>, vector<1x1x128xf32>
    %33 = vector.shape_cast %32 : vector<1x1x128xf32> to vector<1x128xf32>
    %34 = arith.addf %31, %33 : vector<1x128xf32>
    %c12 = arith.constant 12 : index
    %c0_24 = arith.constant 0 : index
    %c0_25 = arith.constant 0 : index
    %35 = vector.load %arg0[%c12, %c0_24, %c0_25] : memref<16x1x128xf32, #tpu.memory_space<vmem>>, vector<1x1x128xf32>
    %36 = vector.shape_cast %35 : vector<1x1x128xf32> to vector<1x128xf32>
    %37 = arith.addf %34, %36 : vector<1x128xf32>
    %c13 = arith.constant 13 : index
    %c0_26 = arith.constant 0 : index
    %c0_27 = arith.constant 0 : index
    %38 = vector.load %arg0[%c13, %c0_26, %c0_27] : memref<16x1x128xf32, #tpu.memory_space<vmem>>, vector<1x1x128xf32>
    %39 = vector.shape_cast %38 : vector<1x1x128xf32> to vector<1x128xf32>
    %40 = arith.addf %37, %39 : vector<1x128xf32>
    %c14 = arith.constant 14 : index
    %c0_28 = arith.constant 0 : index
    %c0_29 = arith.constant 0 : index
    %41 = vector.load %arg0[%c14, %c0_28, %c0_29] : memref<16x1x128xf32, #tpu.memory_space<vmem>>, vector<1x1x128xf32>
    %42 = vector.shape_cast %41 : vector<1x1x128xf32> to vector<1x128xf32>
    %43 = arith.addf %40, %42 : vector<1x128xf32>
    %c15 = arith.constant 15 : index
    %c0_30 = arith.constant 0 : index
    %c0_31 = arith.constant 0 : index
    %44 = vector.load %arg0[%c15, %c0_30, %c0_31] : memref<16x1x128xf32, #tpu.memory_space<vmem>>, vector<1x1x128xf32>
    %45 = vector.shape_cast %44 : vector<1x1x128xf32> to vector<1x128xf32>
    %46 = arith.addf %43, %45 : vector<1x128xf32>
    %cst = arith.constant 6.250000e-02 : f32
    %47 = vector.broadcast %cst : f32 to vector<1x128xf32>
    %48 = arith.mulf %46, %47 : vector<1x128xf32>
    %c0_32 = arith.constant 0 : index
    %c0_33 = arith.constant 0 : index
    %49 = vector.load %arg1[%c0_32, %c0_33] : memref<1x128xf32, #tpu.memory_space<vmem>>, vector<1x128xf32>
    tpu.vector_store %arg1[%c0_32, %c0_33], %48 {strides = array<i32>} : memref<1x128xf32, #tpu.memory_space<vmem>>, vector<1x128xf32>,
    return
  }
}

</mosaic_0001>

<llo_original>
// kernel: _lambda_.19
$region0: #{_lambda_.19}
  #allocation0 [shape = 'u32[]', space=smem, size = 0x4, offset = 0x4, fixed_abs, tag = 'smem constant byte address 0x4 - core index']
  #allocation1 [shape = 'u32[72,128]{1,0:T(1,128)}', space=vmem, size = 0x9000, scoped, tag = 'internal scratch']
  %s0 = inlined_call_operand.vmem [shape: bf16[8,147], index: 0, kind: input, shape index: {}]
  %s1 = inlined_call_operand.vmem [shape: bf16[147,8192], index: 1, kind: input, shape index: {}]
  %s2 = inlined_call_operand.vmem [shape: f32[8,1], index: 2, kind: input, shape index: {}]
  %s3 = inlined_call_operand.vmem [shape: f32[8,8192], index: 3, kind: output, shape index: {}]
  %s4 = sld [smem:[#allocation0]]
  $region68: #{_lambda_.19} parent=0
    _
  %s6 = ssub.s32 1, %s4
  %s7 = scalar_select 0, %s6, %s4
  $region1: #{_lambda_.19} parent=0
    #allocation2 [shape = 'u8[1245184]{0}', space=vmem, size = 0x130000, scoped, tag = 'input window, operand 1']
    loop: start=0, step=1, limit=6
    $region2: #{_lambda_.19} parent=1 // loop_pre_header
      _
    $region3: #{_lambda_.19} parent=1 // loop_header
      %s9 = sphi 0, %s13
      %p10 = scmp.ge.s32.totalorder %s9, 6
      %s17 = sphi 0, %s17
      %s19 = sphi 0, %s17
      %s20 = sphi 0, %s19
      %s34 = sphi 0, %s20
      %s40 = sphi 0, %s42
      %s43 = sphi 0, %s40
      %s44 = sphi 0, %s43
      %s60 = sphi 0, %s44
      %s64 = sphi 0, %s64
      %s66 = sphi 0, %s64
      %s67 = sphi 0, %s66
      %s81 = sphi 0, %s67
      %s87 = sphi 0, %s89
      %s90 = sphi 0, %s87
      %s91 = sphi 0, %s90
      %s107 = sphi 0, %s91
    $region4: #{_lambda_.19} parent=1 // loop_header_branch
      %12 = sbr.rel (%p10) target = $region8
    $region5: #{_lambda_.19} parent=1 // loop_body
      %s14 = ssub.s32 %s9, 1
      %s15 = ssub.s32 %s9, 2
      %s16 = sadd.s32 %s9, 1
      %s18 = sadd.s32 %s17, 1
      %p21 = scmp.eq.s32.totalorder %s9, 3
      %p22 = scmp.ne.s32.totalorder %s17, %s19
      %p23 = scmp.eq.s32.totalorder %s9, 0
      %p24 = por %p22, %p23
      %p25 = scmp.ne.s32.totalorder %s17, %s19
      %p26 = scmp.eq.s32.totalorder %s14, 3
      %p27 = por %p25, %p26
      %p28 = scmp.ne.s32.totalorder %s19, %s20
      %p29 = scmp.eq.s32.totalorder %s14, 0
      %p30 = por %p28, %p29
      %p31 = scmp.ne.s32.totalorder %s19, %s20
      %p32 = scmp.eq.s32.totalorder %s15, 3
      %p33 = por %p31, %p32
      %p35 = scmp.ne.s32.totalorder %s20, %s34
      %p36 = scmp.eq.s32.totalorder %s15, 0
      %p37 = por %p35, %p36
      %s38 = ssub.s32 %s9, %s16
      %p39 = scmp.eq.s32.totalorder %s38, 0
      %s41 = sadd.s32 %s40, 1
      %s42 = scalar_select %p39, %s40, %s41
      %p45 = pneg %p39
      %p46 = scmp.eq.s32.totalorder %s9, 3
      %p47 = por %p45, %p46
      %p48 = scmp.ne.s32.totalorder %s40, %s43
      %p49 = scmp.eq.s32.totalorder %s9, 0
      %p50 = por %p48, %p49
      %p51 = scmp.ne.s32.totalorder %s40, %s43
      %p52 = scmp.eq.s32.totalorder %s14, 3
      %p53 = por %p51, %p52
      %p54 = scmp.ne.s32.totalorder %s43, %s44
      %p55 = scmp.eq.s32.totalorder %s14, 0
      %p56 = por %p54, %p55
      %p57 = scmp.ne.s32.totalorder %s43, %s44
      %p58 = scmp.eq.s32.totalorder %s15, 3
      %p59 = por %p57, %p58
      %p61 = scmp.ne.s32.totalorder %s44, %s60
      %p62 = scmp.eq.s32.totalorder %s15, 0
      %p63 = por %p61, %p62
      %s65 = sadd.s32 %s64, 1
      %p68 = scmp.eq.s32.totalorder %s9, 3
      %p69 = scmp.ne.s32.totalorder %s64, %s66
      %p70 = scmp.eq.s32.totalorder %s9, 0
      %p71 = por %p69, %p70
      %p72 = scmp.ne.s32.totalorder %s64, %s66
      %p73 = scmp.eq.s32.totalorder %s14, 3
      %p74 = por %p72, %p73
      %p75 = scmp.ne.s32.totalorder %s66, %s67
      %p76 = scmp.eq.s32.totalorder %s14, 0
      %p77 = por %p75, %p76
      %p78 = scmp.ne.s32.totalorder %s66, %s67
      %p79 = scmp.eq.s32.totalorder %s15, 3
      %p80 = por %p78, %p79
      %p82 = scmp.ne.s32.totalorder %s67, %s81
      %p83 = scmp.eq.s32.totalorder %s15, 0
      %p84 = por %p82, %p83
      %s85 = ssub.s32 %s9, %s16
      %p86 = scmp.eq.s32.totalorder %s85, 0
      %s88 = sadd.s32 %s87, 1
      %s89 = scalar_select %p86, %s87, %s88
      %p92 = pneg %p86
      %p93 = scmp.eq.s32.totalorder %s9, 3
      %p94 = por %p92, %p93
      %p95 = scmp.ne.s32.totalorder %s87, %s90
      %p96 = scmp.eq.s32.totalorder %s9, 0
      %p97 = por %p95, %p96
      %p98 = scmp.ne.s32.totalorder %s87, %s90
      %p99 = scmp.eq.s32.totalorder %s14, 3
      %p100 = por %p98, %p99
      %p101 = scmp.ne.s32.totalorder %s90, %s91
      %p102 = scmp.eq.s32.totalorder %s14, 0
      %p103 = por %p101, %p102
      %p104 = scmp.ne.s32.totalorder %s90, %s91
      %p105 = scmp.eq.s32.totalorder %s15, 3
      %p106 = por %p104, %p105
      %p108 = scmp.ne.s32.totalorder %s91, %s107
      %p109 = scmp.eq.s32.totalorder %s15, 0
      %p110 = por %p108, %p109
      %p111 = scmp.le.s32.totalorder 1, %s9
      %p112 = scmp.lt.s32.totalorder %s9, 5
      %p113 = pnand %p111, %p112
      %p114 = pneg %p113
      // Predicated region
      $region9: #{_lambda_.19} parent=5 // pred_check
        _
      $region10: #{_lambda_.19} parent=5 // pred_check_branch
        %116 = sbr.rel (%p113) target = $region12
      $region11: #{_lambda_.19} parent=5 // pred_region
        %s117 = ssub.s32 %s9, 1
        // Predicated region
        $region13: #{_lambda_.19} parent=11 // pred_check
          %p118 = pneg %p30
        $region14: #{_lambda_.19} parent=11 // pred_check_branch
          %120 = sbr.rel (%p118) target = $region16
        $region15: #{_lambda_.19} parent=11 // pred_region
          _
        $region16: #{_lambda_.19} parent=11 // pred_fallthru
          _
        // Predicated region
        $region17: #{_lambda_.19} parent=11 // pred_check
          %p121 = pneg %p77
        $region18: #{_lambda_.19} parent=11 // pred_check_branch
          %123 = sbr.rel (%p121) target = $region20
        $region19: #{_lambda_.19} parent=11 // pred_region
          _
        $region20: #{_lambda_.19} parent=11 // pred_fallthru
          _
      $region12: #{_lambda_.19} parent=5 // pred_fallthru
        _
      %p124 = scmp.lt.s32.totalorder %s9, 4
      // Predicated region
      $region21: #{_lambda_.19} parent=5 // pred_check
        %p125 = pneg %p124
      $region22: #{_lambda_.19} parent=5 // pred_check_branch
        %127 = sbr.rel (%p125) target = $region24
      $region23: #{_lambda_.19} parent=5 // pred_region
        // Predicated region
        $region25: #{_lambda_.19} parent=23 // pred_check
          %p128 = pneg %p50
        $region26: #{_lambda_.19} parent=23 // pred_check_branch
          %130 = sbr.rel (%p128) target = $region28
        $region27: #{_lambda_.19} parent=23 // pred_region
          %s131 = sand.u32 %s40, 1
          %s132 = sand.u32 %s40, 1
          %s133 = smul.addr %s132, 1216
          %s134 = scalar_lea.vmem [#allocation2], %s133
          %s135 = smul.u32 16, %s9
          %s136 = smul.addr %s135, 4
          %s137 = scalar_lea.vmem %s1, %s136
          // Predicated region
          $region29: #{_lambda_.19} parent=27 // pred_check
            _
          $region30: #{_lambda_.19} parent=27 // pred_check_branch
            %139 = sbr.rel (0) target = $region32
          $region31: #{_lambda_.19} parent=27 // pred_region
            // Predicated region
            $region33: #{_lambda_.19} parent=31 // pred_check
              _
            $region34: #{_lambda_.19} parent=31 // pred_check_branch
              %141 = sbr.rel (0) target = $region36
            $region35: #{_lambda_.19} parent=31 // pred_region
              loop: start=0, step=1, limit=1
              $region37: #{_lambda_.19} parent=35 // loop_pre_header
                _
              $region38: #{_lambda_.19} parent=35 // loop_header
                %s143 = sphi 0, %s147
                %p144 = scmp.ge.s32.totalorder %s143, 1
                %s148 = sphi %s137, %s137
                %s149 = sphi %s134, %s134
              $region39: #{_lambda_.19} parent=35 // loop_header_branch
                %146 = sbr.rel (%p144) target = $region43
              $region40: #{_lambda_.19} parent=35 // loop_body
                %v150 = vld [vmem:[%s148] sm:$0xff]
                %151 = vst [vmem:[%s149] sm:$0xff] %v150
                %v152 = vld [vmem:[%s148 + $0x8] sm:$0xff]
                %153 = vst [vmem:[%s149 + $0x8] sm:$0xff] %v152
                %v154 = vld [vmem:[%s148 + $0x10] sm:$0xff]
                %155 = vst [vmem:[%s149 + $0x10] sm:$0xff] %v154
                %v156 = vld [vmem:[%s148 + $0x18] sm:$0xff]
                %157 = vst [vmem:[%s149 + $0x18] sm:$0xff] %v156
                %v158 = vld [vmem:[%s148 + $0x20] sm:$0xff]
                %159 = vst [vmem:[%s149 + $0x20] sm:$0xff] %v158
                %v160 = vld [vmem:[%s148 + $0x28] sm:$0xff]
                %161 = vst [vmem:[%s149 + $0x28] sm:$0xff] %v160
                %v162 = vld [vmem:[%s148 + $0x30] sm:$0xff]
                %163 = vst [vmem:[%s149 + $0x30] sm:$0xff] %v162
                %v164 = vld [vmem:[%s148 + $0x38] sm:$0xff]
                %165 = vst [vmem:[%s149 + $0x38] sm:$0xff] %v164
                %v166 = vld [vmem:[%s148 + $0x100] sm:$0xff]
                %167 = vst [vmem:[%s149 + $0x40] sm:$0xff] %v166
                %v168 = vld [vmem:[%s148 + $0x108] sm:$0xff]
                %169 = vst [vmem:[%s149 + $0x48] sm:$0xff] %v168
                %v170 = vld [vmem:[%s148 + $0x110] sm:$0xff]
                %171 = vst [vmem:[%s149 + $0x50] sm:$0xff] %v170
                %v172 = vld [vmem:[%s148 + $0x118] sm:$0xff]
                %173 = vst [vmem:[%s149 + $0x58] sm:$0xff] %v172
                %v174 = vld [vmem:[%s148 + $0x120] sm:$0xff]
                %175 = vst [vmem:[%s149 + $0x60] sm:$0xff] %v174
                %v176 = vld [vmem:[%s148 + $0x128] sm:$0xff]
                %177 = vst [vmem:[%s149 + $0x68] sm:$0xff] %v176
                %v178 = vld [vmem:[%s148 + $0x130] sm:$0xff]
                %179 = vst [vmem:[%s149 + $0x70] sm:$0xff] %v178
                %v180 = vld [vmem:[%s148 + $0x138] sm:$0xff]
                %181 = vst [vmem:[%s149 + $0x78] sm:$0xff] %v180
                %v182 = vld [vmem:[%s148 + $0x200] sm:$0xff]
                %183 = vst [vmem:[%s149 + $0x80] sm:$0xff] %v182
                %v184 = vld [vmem:[%s148 + $0x208] sm:$0xff]
                %185 = vst [vmem:[%s149 + $0x88] sm:$0xff] %v184
                %v186 = vld [vmem:[%s148 + $0x210] sm:$0xff]
                %187 = vst [vmem:[%s149 + $0x90] sm:$0xff] %v186
                %v188 = vld [vmem:[%s148 + $0x218] sm:$0xff]
                %189 = vst [vmem:[%s149 + $0x98] sm:$0xff] %v188
                %v190 = vld [vmem:[%s148 + $0x220] sm:$0xff]
                %191 = vst [vmem:[%s149 + $0xa0] sm:$0xff] %v190
                %v192 = vld [vmem:[%s148 + $0x228] sm:$0xff]
                %193 = vst [vmem:[%s149 + $0xa8] sm:$0xff] %v192
                %v194 = vld [vmem:[%s148 + $0x230] sm:$0xff]
                %195 = vst [vmem:[%s149 + $0xb0] sm:$0xff] %v194
                %v196 = vld [vmem:[%s148 + $0x238] sm:$0xff]
                %197 = vst [vmem:[%s149 + $0xb8] sm:$0xff] %v196
                %v198 = vld [vmem:[%s148 + $0x300] sm:$0xff]
                %199 = vst [vmem:[%s149 + $0xc0] sm:$0xff] %v198
                %v200 = vld [vmem:[%s148 + $0x308] sm:$0xff]
                %201 = vst [vmem:[%s149 + $0xc8] sm:$0xff] %v200
                %v202 = vld [vmem:[%s148 + $0x310] sm:$0xff]
                %203 = vst [vmem:[%s149 + $0xd0] sm:$0xff] %v202
                %v204 = vld [vmem:[%s148 + $0x318] sm:$0xff]
                %205 = vst [vmem:[%s149 + $0xd8] sm:$0xff] %v204
                %v206 = vld [vmem:[%s148 + $0x320] sm:$0xff]
                %207 = vst [vmem:[%s149 + $0xe0] sm:$0xff] %v206
                %v208 = vld [vmem:[%s148 + $0x328] sm:$0xff]
                %209 = vst [vmem:[%s149 + $0xe8] sm:$0xff] %v208
                %v210 = vld [vmem:[%s148 + $0x330] sm:$0xff]
                %211 = vst [vmem:[%s149 + $0xf0] sm:$0xff] %v210
                %v212 = vld [vmem:[%s148 + $0x338] sm:$0xff]
                %213 = vst [vmem:[%s149 + $0xf8] sm:$0xff] %v212
                %v214 = vld [vmem:[%s148 + $0x400] sm:$0xff]
                %215 = vst [vmem:[%s149 + $0x100] sm:$0xff] %v214
                %v216 = vld [vmem:[%s148 + $0x408] sm:$0xff]
                %217 = vst [vmem:[%s149 + $0x108] sm:$0xff] %v216
                %v218 = vld [vmem:[%s148 + $0x410] sm:$0xff]
                %219 = vst [vmem:[%s149 + $0x110] sm:$0xff] %v218
                %v220 = vld [vmem:[%s148 + $0x418] sm:$0xff]
                %221 = vst [vmem:[%s149 + $0x118] sm:$0xff] %v220
                %v222 = vld [vmem:[%s148 + $0x420] sm:$0xff]
                %223 = vst [vmem:[%s149 + $0x120] sm:$0xff] %v222
                %v224 = vld [vmem:[%s148 + $0x428] sm:$0xff]
                %225 = vst [vmem:[%s149 + $0x128] sm:$0xff] %v224
                %v226 = vld [vmem:[%s148 + $0x430] sm:$0xff]
                %227 = vst [vmem:[%s149 + $0x130] sm:$0xff] %v226
                %v228 = vld [vmem:[%s148 + $0x438] sm:$0xff]
                %229 = vst [vmem:[%s149 + $0x138] sm:$0xff] %v228
                %v230 = vld [vmem:[%s148 + $0x500] sm:$0xff]
                %231 = vst [vmem:[%s149 + $0x140] sm:$0xff] %v230
                %v232 = vld [vmem:[%s148 + $0x508] sm:$0xff]
                %233 = vst [vmem:[%s149 + $0x148] sm:$0xff] %v232
                %v234 = vld [vmem:[%s148 + $0x510] sm:$0xff]
                %235 = vst [vmem:[%s149 + $0x150] sm:$0xff] %v234
                %v236 = vld [vmem:[%s148 + $0x518] sm:$0xff]
                %237 = vst [vmem:[%s149 + $0x158] sm:$0xff] %v236
                %v238 = vld [vmem:[%s148 + $0x520] sm:$0xff]
                %239 = vst [vmem:[%s149 + $0x160] sm:$0xff] %v238
                %v240 = vld [vmem:[%s148 + $0x528] sm:$0xff]
                %241 = vst [vmem:[%s149 + $0x168] sm:$0xff] %v240
                %v242 = vld [vmem:[%s148 + $0x530] sm:$0xff]
                %243 = vst [vmem:[%s149 + $0x170] sm:$0xff] %v242
                %v244 = vld [vmem:[%s148 + $0x538] sm:$0xff]
                %245 = vst [vmem:[%s149 + $0x178] sm:$0xff] %v244
                %v246 = vld [vmem:[%s148 + $0x600] sm:$0xff]
                %247 = vst [vmem:[%s149 + $0x180] sm:$0xff] %v246
                %v248 = vld [vmem:[%s148 + $0x608] sm:$0xff]
                %249 = vst [vmem:[%s149 + $0x188] sm:$0xff] %v248
                %v250 = vld [vmem:[%s148 + $0x610] sm:$0xff]
                %251 = vst [vmem:[%s149 + $0x190] sm:$0xff] %v250
                %v252 = vld [vmem:[%s148 + $0x618] sm:$0xff]
                %253 = vst [vmem:[%s149 + $0x198] sm:$0xff] %v252
                %v254 = vld [vmem:[%s148 + $0x620] sm:$0xff]
                %255 = vst [vmem:[%s149 + $0x1a0] sm:$0xff] %v254
                %v256 = vld [vmem:[%s148 + $0x628] sm:$0xff]
                %257 = vst [vmem:[%s149 + $0x1a8] sm:$0xff] %v256
                %v258 = vld [vmem:[%s148 + $0x630] sm:$0xff]
                %259 = vst [vmem:[%s149 + $0x1b0] sm:$0xff] %v258
                %v260 = vld [vmem:[%s148 + $0x638] sm:$0xff]
                %261 = vst [vmem:[%s149 + $0x1b8] sm:$0xff] %v260
                %v262 = vld [vmem:[%s148 + $0x700] sm:$0xff]
                %263 = vst [vmem:[%s149 + $0x1c0] sm:$0xff] %v262
                %v264 = vld [vmem:[%s148 + $0x708] sm:$0xff]
                %265 = vst [vmem:[%s149 + $0x1c8] sm:$0xff] %v264
                %v266 = vld [vmem:[%s148 + $0x710] sm:$0xff]
                %267 = vst [vmem:[%s149 + $0x1d0] sm:$0xff] %v266
                %v268 = vld [vmem:[%s148 + $0x718] sm:$0xff]
                %269 = vst [vmem:[%s149 + $0x1d8] sm:$0xff] %v268
                %v270 = vld [vmem:[%s148 + $0x720] sm:$0xff]
                %271 = vst [vmem:[%s149 + $0x1e0] sm:$0xff] %v270
                %v272 = vld [vmem:[%s148 + $0x728] sm:$0xff]
                %273 = vst [vmem:[%s149 + $0x1e8] sm:$0xff] %v272
                %v274 = vld [vmem:[%s148 + $0x730] sm:$0xff]
                %275 = vst [vmem:[%s149 + $0x1f0] sm:$0xff] %v274
                %v276 = vld [vmem:[%s148 + $0x738] sm:$0xff]
                %277 = vst [vmem:[%s149 + $0x1f8] sm:$0xff] %v276
                %v278 = vld [vmem:[%s148 + $0x800] sm:$0xff]
                %279 = vst [vmem:[%s149 + $0x200] sm:$0xff] %v278
                %v280 = vld [vmem:[%s148 + $0x808] sm:$0xff]
                %281 = vst [vmem:[%s149 + $0x208] sm:$0xff] %v280
                %v282 = vld [vmem:[%s148 + $0x810] sm:$0xff]
                %283 = vst [vmem:[%s149 + $0x210] sm:$0xff] %v282
                %v284 = vld [vmem:[%s148 + $0x818] sm:$0xff]
                %285 = vst [vmem:[%s149 + $0x218] sm:$0xff] %v284
                %v286 = vld [vmem:[%s148 + $0x820] sm:$0xff]
                %287 = vst [vmem:[%s149 + $0x220] sm:$0xff] %v286
                %v288 = vld [vmem:[%s148 + $0x828] sm:$0xff]
                %289 = vst [vmem:[%s149 + $0x228] sm:$0xff] %v288
                %v290 = vld [vmem:[%s148 + $0x830] sm:$0xff]
                %291 = vst [vmem:[%s149 + $0x230] sm:$0xff] %v290
                %v292 = vld [vmem:[%s148 + $0x838] sm:$0xff]
                %293 = vst [vmem:[%s149 + $0x238] sm:$0xff] %v292
                %v294 = vld [vmem:[%s148 + $0x900] sm:$0xff]
                %295 = vst [vmem:[%s149 + $0x240] sm:$0xff] %v294
                %v296 = vld [vmem:[%s148 + $0x908] sm:$0xff]
                %297 = vst [vmem:[%s149 + $0x248] sm:$0xff] %v296
                %v298 = vld [vmem:[%s148 + $0x910] sm:$0xff]
                %299 = vst [vmem:[%s149 + $0x250] sm:$0xff] %v298
                %v300 = vld [vmem:[%s148 + $0x918] sm:$0xff]
                %301 = vst [vmem:[%s149 + $0x258] sm:$0xff] %v300
                %v302 = vld [vmem:[%s148 + $0x920] sm:$0xff]
                %303 = vst [vmem:[%s149 + $0x260] sm:$0xff] %v302
                %v304 = vld [vmem:[%s148 + $0x928] sm:$0xff]
                %305 = vst [vmem:[%s149 + $0x268] sm:$0xff] %v304
                %v306 = vld [vmem:[%s148 + $0x930] sm:$0xff]
                %307 = vst [vmem:[%s149 + $0x270] sm:$0xff] %v306
                %v308 = vld [vmem:[%s148 + $0x938] sm:$0xff]
                %309 = vst [vmem:[%s149 + $0x278] sm:$0xff] %v308
                %v310 = vld [vmem:[%s148 + $0xa00] sm:$0xff]
                %311 = vst [vmem:[%s149 + $0x280] sm:$0xff] %v310
                %v312 = vld [vmem:[%s148 + $0xa08] sm:$0xff]
                %313 = vst [vmem:[%s149 + $0x288] sm:$0xff] %v312
                %v314 = vld [vmem:[%s148 + $0xa10] sm:$0xff]
                %315 = vst [vmem:[%s149 + $0x290] sm:$0xff] %v314
                %v316 = vld [vmem:[%s148 + $0xa18] sm:$0xff]
                %317 = vst [vmem:[%s149 + $0x298] sm:$0xff] %v316
                %v318 = vld [vmem:[%s148 + $0xa20] sm:$0xff]
                %319 = vst [vmem:[%s149 + $0x2a0] sm:$0xff] %v318
                %v320 = vld [vmem:[%s148 + $0xa28] sm:$0xff]
                %321 = vst [vmem:[%s149 + $0x2a8] sm:$0xff] %v320
                %v322 = vld [vmem:[%s148 + $0xa30] sm:$0xff]
                %323 = vst [vmem:[%s149 + $0x2b0] sm:$0xff] %v322
                %v324 = vld [vmem:[%s148 + $0xa38] sm:$0xff]
                %325 = vst [vmem:[%s149 + $0x2b8] sm:$0xff] %v324
                %v326 = vld [vmem:[%s148 + $0xb00] sm:$0xff]
                %327 = vst [vmem:[%s149 + $0x2c0] sm:$0xff] %v326
                %v328 = vld [vmem:[%s148 + $0xb08] sm:$0xff]
                %329 = vst [vmem:[%s149 + $0x2c8] sm:$0xff] %v328
                %v330 = vld [vmem:[%s148 + $0xb10] sm:$0xff]
                %331 = vst [vmem:[%s149 + $0x2d0] sm:$0xff] %v330
                %v332 = vld [vmem:[%s148 + $0xb18] sm:$0xff]
                %333 = vst [vmem:[%s149 + $0x2d8] sm:$0xff] %v332
                %v334 = vld [vmem:[%s148 + $0xb20] sm:$0xff]
                %335 = vst [vmem:[%s149 + $0x2e0] sm:$0xff] %v334
                %v336 = vld [vmem:[%s148 + $0xb28] sm:$0xff]
                %337 = vst [vmem:[%s149 + $0x2e8] sm:$0xff] %v336
                %v338 = vld [vmem:[%s148 + $0xb30] sm:$0xff]
                %339 = vst [vmem:[%s149 + $0x2f0] sm:$0xff] %v338
                %v340 = vld [vmem:[%s148 + $0xb38] sm:$0xff]
                %341 = vst [vmem:[%s149 + $0x2f8] sm:$0xff] %v340
                %v342 = vld [vmem:[%s148 + $0xc00] sm:$0xff]
                %343 = vst [vmem:[%s149 + $0x300] sm:$0xff] %v342
                %v344 = vld [vmem:[%s148 + $0xc08] sm:$0xff]
                %345 = vst [vmem:[%s149 + $0x308] sm:$0xff] %v344
                %v346 = vld [vmem:[%s148 + $0xc10] sm:$0xff]
                %347 = vst [vmem:[%s149 + $0x310] sm:$0xff] %v346
                %v348 = vld [vmem:[%s148 + $0xc18] sm:$0xff]
                %349 = vst [vmem:[%s149 + $0x318] sm:$0xff] %v348
                %v350 = vld [vmem:[%s148 + $0xc20] sm:$0xff]
                %351 = vst [vmem:[%s149 + $0x320] sm:$0xff] %v350
                %v352 = vld [vmem:[%s148 + $0xc28] sm:$0xff]
                %353 = vst [vmem:[%s149 + $0x328] sm:$0xff] %v352
                %v354 = vld [vmem:[%s148 + $0xc30] sm:$0xff]
                %355 = vst [vmem:[%s149 + $0x330] sm:$0xff] %v354
                %v356 = vld [vmem:[%s148 + $0xc38] sm:$0xff]
                %357 = vst [vmem:[%s149 + $0x338] sm:$0xff] %v356
                %v358 = vld [vmem:[%s148 + $0xd00] sm:$0xff]
                %359 = vst [vmem:[%s149 + $0x340] sm:$0xff] %v358
                %v360 = vld [vmem:[%s148 + $0xd08] sm:$0xff]
                %361 = vst [vmem:[%s149 + $0x348] sm:$0xff] %v360
                %v362 = vld [vmem:[%s148 + $0xd10] sm:$0xff]
                %363 = vst [vmem:[%s149 + $0x350] sm:$0xff] %v362
                %v364 = vld [vmem:[%s148 + $0xd18] sm:$0xff]
                %365 = vst [vmem:[%s149 + $0x358] sm:$0xff] %v364
                %v366 = vld [vmem:[%s148 + $0xd20] sm:$0xff]
                %367 = vst [vmem:[%s149 + $0x360] sm:$0xff] %v366
                %v368 = vld [vmem:[%s148 + $0xd28] sm:$0xff]
                %369 = vst [vmem:[%s149 + $0x368] sm:$0xff] %v368
                %v370 = vld [vmem:[%s148 + $0xd30] sm:$0xff]
                %371 = vst [vmem:[%s149 + $0x370] sm:$0xff] %v370
                %v372 = vld [vmem:[%s148 + $0xd38] sm:$0xff]
                %373 = vst [vmem:[%s149 + $0x378] sm:$0xff] %v372
                %v374 = vld [vmem:[%s148 + $0xe00] sm:$0xff]
                %375 = vst [vmem:[%s149 + $0x380] sm:$0xff] %v374
                %v376 = vld [vmem:[%s148 + $0xe08] sm:$0xff]
                %377 = vst [vmem:[%s149 + $0x388] sm:$0xff] %v376
                %v378 = vld [vmem:[%s148 + $0xe10] sm:$0xff]
                %379 = vst [vmem:[%s149 + $0x390] sm:$0xff] %v378
                %v380 = vld [vmem:[%s148 + $0xe18] sm:$0xff]
                %381 = vst [vmem:[%s149 + $0x398] sm:$0xff] %v380
                %v382 = vld [vmem:[%s148 + $0xe20] sm:$0xff]
                %383 = vst [vmem:[%s149 + $0x3a0] sm:$0xff] %v382
                %v384 = vld [vmem:[%s148 + $0xe28] sm:$0xff]
                %385 = vst [vmem:[%s149 + $0x3a8] sm:$0xff] %v384
                %v386 = vld [vmem:[%s148 + $0xe30] sm:$0xff]
                %387 = vst [vmem:[%s149 + $0x3b0] sm:$0xff] %v386
                %v388 = vld [vmem:[%s148 + $0xe38] sm:$0xff]
                %389 = vst [vmem:[%s149 + $0x3b8] sm:$0xff] %v388
                %v390 = vld [vmem:[%s148 + $0xf00] sm:$0xff]
                %391 = vst [vmem:[%s149 + $0x3c0] sm:$0xff] %v390
                %v392 = vld [vmem:[%s148 + $0xf08] sm:$0xff]
                %393 = vst [vmem:[%s149 + $0x3c8] sm:$0xff] %v392
                %v394 = vld [vmem:[%s148 + $0xf10] sm:$0xff]
                %395 = vst [vmem:[%s149 + $0x3d0] sm:$0xff] %v394
                %v396 = vld [vmem:[%s148 + $0xf18] sm:$0xff]
                %397 = vst [vmem:[%s149 + $0x3d8] sm:$0xff] %v396
                %v398 = vld [vmem:[%s148 + $0xf20] sm:$0xff]
                %399 = vst [vmem:[%s149 + $0x3e0] sm:$0xff] %v398
                %v400 = vld [vmem:[%s148 + $0xf28] sm:$0xff]
                %401 = vst [vmem:[%s149 + $0x3e8] sm:$0xff] %v400
                %v402 = vld [vmem:[%s148 + $0xf30] sm:$0xff]
                %403 = vst [vmem:[%s149 + $0x3f0] sm:$0xff] %v402
                %v404 = vld [vmem:[%s148 + $0xf38] sm:$0xff]
                %405 = vst [vmem:[%s149 + $0x3f8] sm:$0xff] %v404
                %v406 = vld [vmem:[%s148 + $0x1000] sm:$0xff]
                %407 = vst [vmem:[%s149 + $0x400] sm:$0xff] %v406
                %v408 = vld [vmem:[%s148 + $0x1008] sm:$0xff]
                %409 = vst [vmem:[%s149 + $0x408] sm:$0xff] %v408
                %v410 = vld [vmem:[%s148 + $0x1010] sm:$0xff]
                %411 = vst [vmem:[%s149 + $0x410] sm:$0xff] %v410
                %v412 = vld [vmem:[%s148 + $0x1018] sm:$0xff]
                %413 = vst [vmem:[%s149 + $0x418] sm:$0xff] %v412
                %v414 = vld [vmem:[%s148 + $0x1020] sm:$0xff]
                %415 = vst [vmem:[%s149 + $0x420] sm:$0xff] %v414
                %v416 = vld [vmem:[%s148 + $0x1028] sm:$0xff]
                %417 = vst [vmem:[%s149 + $0x428] sm:$0xff] %v416
                %v418 = vld [vmem:[%s148 + $0x1030] sm:$0xff]
                %419 = vst [vmem:[%s149 + $0x430] sm:$0xff] %v418
                %v420 = vld [vmem:[%s148 + $0x1038] sm:$0xff]
                %421 = vst [vmem:[%s149 + $0x438] sm:$0xff] %v420
                %v422 = vld [vmem:[%s148 + $0x1100] sm:$0xff]
                %423 = vst [vmem:[%s149 + $0x440] sm:$0xff] %v422
                %v424 = vld [vmem:[%s148 + $0x1108] sm:$0xff]
                %425 = vst [vmem:[%s149 + $0x448] sm:$0xff] %v424
                %v426 = vld [vmem:[%s148 + $0x1110] sm:$0xff]
                %427 = vst [vmem:[%s149 + $0x450] sm:$0xff] %v426
                %v428 = vld [vmem:[%s148 + $0x1118] sm:$0xff]
                %429 = vst [vmem:[%s149 + $0x458] sm:$0xff] %v428
                %v430 = vld [vmem:[%s148 + $0x1120] sm:$0xff]
                %431 = vst [vmem:[%s149 + $0x460] sm:$0xff] %v430
                %v432 = vld [vmem:[%s148 + $0x1128] sm:$0xff]
                %433 = vst [vmem:[%s149 + $0x468] sm:$0xff] %v432
                %v434 = vld [vmem:[%s148 + $0x1130] sm:$0xff]
                %435 = vst [vmem:[%s149 + $0x470] sm:$0xff] %v434
                %v436 = vld [vmem:[%s148 + $0x1138] sm:$0xff]
                %437 = vst [vmem:[%s149 + $0x478] sm:$0xff] %v436
                %v438 = vld [vmem:[%s148 + $0x1200] sm:$0xff]
                %439 = vst [vmem:[%s149 + $0x480] sm:$0xff] %v438
                %v440 = vld [vmem:[%s148 + $0x1208] sm:$0xff]
                %441 = vst [vmem:[%s149 + $0x488] sm:$0xff] %v440
                %v442 = vld [vmem:[%s148 + $0x1210] sm:$0xff]
                %443 = vst [vmem:[%s149 + $0x490] sm:$0xff] %v442
                %v444 = vld [vmem:[%s148 + $0x1218] sm:$0xff]
                %445 = vst [vmem:[%s149 + $0x498] sm:$0xff] %v444
                %v446 = vld [vmem:[%s148 + $0x1220] sm:$0xff]
                %447 = vst [vmem:[%s149 + $0x4a0] sm:$0xff] %v446
                %v448 = vld [vmem:[%s148 + $0x1228] sm:$0xff]
                %449 = vst [vmem:[%s149 + $0x4a8] sm:$0xff] %v448
                %v450 = vld [vmem:[%s148 + $0x1230] sm:$0xff]
                %451 = vst [vmem:[%s149 + $0x4b0] sm:$0xff] %v450
                %v452 = vld [vmem:[%s148 + $0x1238] sm:$0xff]
                %453 = vst [vmem:[%s149 + $0x4b8] sm:$0xff] %v452
              $region41: #{_lambda_.19} parent=35 // loop_footer
                %s147 = sadd.s32 1, %s143
              $region42: #{_lambda_.19} parent=35 // loop_footer_branch
                %142 = sbr.rel target = $region38
              $region43: #{_lambda_.19} parent=35 // loop_exit
                _
            $region36: #{_lambda_.19} parent=31 // pred_fallthru
              _
            // Predicated region
            $region44: #{_lambda_.19} parent=31 // pred_check
              _
            $region45: #{_lambda_.19} parent=31 // pred_check_branch
              %455 = sbr.rel target = $region47
            $region46: #{_lambda_.19} parent=31 // pred_region
              _
            $region47: #{_lambda_.19} parent=31 // pred_fallthru
              _
          $region32: #{_lambda_.19} parent=27 // pred_fallthru
            _
          %456 = vnop
        $region28: #{_lambda_.19} parent=23 // pred_fallthru
          _
      $region24: #{_lambda_.19} parent=5 // pred_fallthru
        _
      %p457 = scmp.le.s32.totalorder 1, %s9
      %p458 = scmp.lt.s32.totalorder %s9, 5
      %p459 = pnand %p457, %p458
      %p460 = pneg %p459
      // Predicated region
      $region48: #{_lambda_.19} parent=5 // pred_check
        _
      $region49: #{_lambda_.19} parent=5 // pred_check_branch
        %462 = sbr.rel (%p459) target = $region51
      $region50: #{_lambda_.19} parent=5 // pred_region
        %s463 = ssub.s32 %s9, 1
        %s464 = sand.u32 %s43, 1
        %s465 = sand.u32 %s43, 1
        %s466 = smul.addr %s465, 1216
        %s467 = scalar_lea.vmem [#allocation2], %s466
        // Predicated region
        $region52: #{_lambda_.19} parent=50 // pred_check
          %p468 = pneg %p56
        $region53: #{_lambda_.19} parent=50 // pred_check_branch
          %470 = sbr.rel (%p468) target = $region55
        $region54: #{_lambda_.19} parent=50 // pred_region
          _
        $region55: #{_lambda_.19} parent=50 // pred_fallthru
          _
        %p471 = pneg %p30
        %p472 = pneg %p27
        %s473 = sand.u32 %s43, 1
        %s474 = sand.u32 %s43, 1
        %s475 = smul.addr %s474, 1216
        %s476 = scalar_lea.vmem [#allocation2], %s475
        %p477 = pneg %p56
        %p478 = pneg %p53
        %p479 = pneg %p77
        %p480 = pneg %p74
        %p481 = pneg %p103
        %p482 = pneg %p100
        %s483 = smul.u32 16, %s14
        %p484 = scmp.lt.s32.totalorder %s483, 63
        %s485 = scalar_select %p484, %s483, 63
        %s486 = smul.addr %s485, 8
        %s487 = scalar_lea.vmem %s3, %s486
        %s488 = smul.u32 16, %s14
        %s489 = smul.u32 16, %s14
        %p490 = scmp.lt.s32.totalorder %s489, 63
        %s491 = scalar_select %p490, %s489, 63
        %s492 = smul.addr %s491, 8
        %s493 = scalar_lea.vmem %s3, %s492
        %s494 = smul.u32 16, %s14
        %v496 = vld [vmem:[%s0] sm:$0xff]
        %v497 = vld [vmem:[%s467] sm:$0xff]
        %v498 = vld [vmem:[%s467 + $0x8] sm:$0xff]
        %v499 = vld [vmem:[%s467 + $0x10] sm:$0xff]
        %v500 = vld [vmem:[%s467 + $0x18] sm:$0xff]
        %v501 = vld [vmem:[%s467 + $0x20] sm:$0xff]
        %v502 = vld [vmem:[%s467 + $0x28] sm:$0xff]
        %v503 = vld [vmem:[%s467 + $0x30] sm:$0xff]
        %v504 = vld [vmem:[%s467 + $0x38] sm:$0xff]
        %v505 = vld [vmem:[%s467 + $0x40] sm:$0xff]
        %v506 = vld [vmem:[%s467 + $0x48] sm:$0xff]
        %v507 = vld [vmem:[%s467 + $0x50] sm:$0xff]
        %v508 = vld [vmem:[%s467 + $0x58] sm:$0xff]
        %v509 = vld [vmem:[%s467 + $0x60] sm:$0xff]
        %v510 = vld [vmem:[%s467 + $0x68] sm:$0xff]
        %v511 = vld [vmem:[%s467 + $0x70] sm:$0xff]
        %v512 = vld [vmem:[%s467 + $0x78] sm:$0xff]
        %v513 = vld [vmem:[%s467 + $0x80] sm:$0xff]
        %v514 = vld [vmem:[%s467 + $0x88] sm:$0xff]
        %v515 = vld [vmem:[%s467 + $0x90] sm:$0xff]
        %v516 = vld [vmem:[%s467 + $0x98] sm:$0xff]
        %v517 = vld [vmem:[%s467 + $0xa0] sm:$0xff]
        %v518 = vld [vmem:[%s467 + $0xa8] sm:$0xff]
        %v519 = vld [vmem:[%s467 + $0xb0] sm:$0xff]
        %v520 = vld [vmem:[%s467 + $0xb8] sm:$0xff]
        %v521 = vld [vmem:[%s467 + $0xc0] sm:$0xff]
        %v522 = vld [vmem:[%s467 + $0xc8] sm:$0xff]
        %v523 = vld [vmem:[%s467 + $0xd0] sm:$0xff]
        %v524 = vld [vmem:[%s467 + $0xd8] sm:$0xff]
        %v525 = vld [vmem:[%s467 + $0xe0] sm:$0xff]
        %v526 = vld [vmem:[%s467 + $0xe8] sm:$0xff]
        %v527 = vld [vmem:[%s467 + $0xf0] sm:$0xff]
        %v528 = vld [vmem:[%s467 + $0xf8] sm:$0xff]
        %v529 = vld [vmem:[%s467 + $0x100] sm:$0xff]
        %v530 = vld [vmem:[%s467 + $0x108] sm:$0xff]
        %v531 = vld [vmem:[%s467 + $0x110] sm:$0xff]
        %v532 = vld [vmem:[%s467 + $0x118] sm:$0xff]
        %v533 = vld [vmem:[%s467 + $0x120] sm:$0xff]
        %v534 = vld [vmem:[%s467 + $0x128] sm:$0xff]
        %v535 = vld [vmem:[%s467 + $0x130] sm:$0xff]
        %v536 = vld [vmem:[%s467 + $0x138] sm:$0xff]
        %v537 = vld [vmem:[%s467 + $0x140] sm:$0xff]
        %v538 = vld [vmem:[%s467 + $0x148] sm:$0xff]
        %v539 = vld [vmem:[%s467 + $0x150] sm:$0xff]
        %v540 = vld [vmem:[%s467 + $0x158] sm:$0xff]
        %v541 = vld [vmem:[%s467 + $0x160] sm:$0xff]
        %v542 = vld [vmem:[%s467 + $0x168] sm:$0xff]
        %v543 = vld [vmem:[%s467 + $0x170] sm:$0xff]
        %v544 = vld [vmem:[%s467 + $0x178] sm:$0xff]
        %v545 = vld [vmem:[%s467 + $0x180] sm:$0xff]
        %v546 = vld [vmem:[%s467 + $0x188] sm:$0xff]
        %v547 = vld [vmem:[%s467 + $0x190] sm:$0xff]
        %v548 = vld [vmem:[%s467 + $0x198] sm:$0xff]
        %v549 = vld [vmem:[%s467 + $0x1a0] sm:$0xff]
        %v550 = vld [vmem:[%s467 + $0x1a8] sm:$0xff]
        %v551 = vld [vmem:[%s467 + $0x1b0] sm:$0xff]
        %v552 = vld [vmem:[%s467 + $0x1b8] sm:$0xff]
        %v553 = vld [vmem:[%s467 + $0x1c0] sm:$0xff]
        %v554 = vld [vmem:[%s467 + $0x1c8] sm:$0xff]
        %v555 = vld [vmem:[%s467 + $0x1d0] sm:$0xff]
        %v556 = vld [vmem:[%s467 + $0x1d8] sm:$0xff]
        %v557 = vld [vmem:[%s467 + $0x1e0] sm:$0xff]
        %v558 = vld [vmem:[%s467 + $0x1e8] sm:$0xff]
        %v559 = vld [vmem:[%s467 + $0x1f0] sm:$0xff]
        %v560 = vld [vmem:[%s467 + $0x1f8] sm:$0xff]
        %v561 = vld [vmem:[%s467 + $0x200] sm:$0xff]
        %v562 = vld [vmem:[%s467 + $0x208] sm:$0xff]
        %v563 = vld [vmem:[%s467 + $0x210] sm:$0xff]
        %v564 = vld [vmem:[%s467 + $0x218] sm:$0xff]
        %v565 = vld [vmem:[%s467 + $0x220] sm:$0xff]
        %v566 = vld [vmem:[%s467 + $0x228] sm:$0xff]
        %v567 = vld [vmem:[%s467 + $0x230] sm:$0xff]
        %v568 = vld [vmem:[%s467 + $0x238] sm:$0xff]
        %v569 = vld [vmem:[%s467 + $0x240] sm:$0xff]
        %v570 = vld [vmem:[%s467 + $0x248] sm:$0xff]
        %v571 = vld [vmem:[%s467 + $0x250] sm:$0xff]
        %v572 = vld [vmem:[%s467 + $0x258] sm:$0xff]
        %v573 = vld [vmem:[%s467 + $0x260] sm:$0xff]
        %v574 = vld [vmem:[%s467 + $0x268] sm:$0xff]
        %v575 = vld [vmem:[%s467 + $0x270] sm:$0xff]
        %v576 = vld [vmem:[%s467 + $0x278] sm:$0xff]
        %v577 = vld [vmem:[%s467 + $0x280] sm:$0xff]
        %v578 = vld [vmem:[%s467 + $0x288] sm:$0xff]
        %v579 = vld [vmem:[%s467 + $0x290] sm:$0xff]
        %v580 = vld [vmem:[%s467 + $0x298] sm:$0xff]
        %v581 = vld [vmem:[%s467 + $0x2a0] sm:$0xff]
        %v582 = vld [vmem:[%s467 + $0x2a8] sm:$0xff]
        %v583 = vld [vmem:[%s467 + $0x2b0] sm:$0xff]
        %v584 = vld [vmem:[%s467 + $0x2b8] sm:$0xff]
        %v585 = vld [vmem:[%s467 + $0x2c0] sm:$0xff]
        %v586 = vld [vmem:[%s467 + $0x2c8] sm:$0xff]
        %v587 = vld [vmem:[%s467 + $0x2d0] sm:$0xff]
        %v588 = vld [vmem:[%s467 + $0x2d8] sm:$0xff]
        %v589 = vld [vmem:[%s467 + $0x2e0] sm:$0xff]
        %v590 = vld [vmem:[%s467 + $0x2e8] sm:$0xff]
        %v591 = vld [vmem:[%s467 + $0x2f0] sm:$0xff]
        %v592 = vld [vmem:[%s467 + $0x2f8] sm:$0xff]
        %v593 = vld [vmem:[%s467 + $0x300] sm:$0xff]
        %v594 = vld [vmem:[%s467 + $0x308] sm:$0xff]
        %v595 = vld [vmem:[%s467 + $0x310] sm:$0xff]
        %v596 = vld [vmem:[%s467 + $0x318] sm:$0xff]
        %v597 = vld [vmem:[%s467 + $0x320] sm:$0xff]
        %v598 = vld [vmem:[%s467 + $0x328] sm:$0xff]
        %v599 = vld [vmem:[%s467 + $0x330] sm:$0xff]
        %v600 = vld [vmem:[%s467 + $0x338] sm:$0xff]
        %v601 = vld [vmem:[%s467 + $0x340] sm:$0xff]
        %v602 = vld [vmem:[%s467 + $0x348] sm:$0xff]
        %v603 = vld [vmem:[%s467 + $0x350] sm:$0xff]
        %v604 = vld [vmem:[%s467 + $0x358] sm:$0xff]
        %v605 = vld [vmem:[%s467 + $0x360] sm:$0xff]
        %v606 = vld [vmem:[%s467 + $0x368] sm:$0xff]
        %v607 = vld [vmem:[%s467 + $0x370] sm:$0xff]
        %v608 = vld [vmem:[%s467 + $0x378] sm:$0xff]
        %v609 = vld [vmem:[%s467 + $0x380] sm:$0xff]
        %v610 = vld [vmem:[%s467 + $0x388] sm:$0xff]
        %v611 = vld [vmem:[%s467 + $0x390] sm:$0xff]
        %v612 = vld [vmem:[%s467 + $0x398] sm:$0xff]
        %v613 = vld [vmem:[%s467 + $0x3a0] sm:$0xff]
        %v614 = vld [vmem:[%s467 + $0x3a8] sm:$0xff]
        %v615 = vld [vmem:[%s467 + $0x3b0] sm:$0xff]
        %v616 = vld [vmem:[%s467 + $0x3b8] sm:$0xff]
        %v617 = vld [vmem:[%s467 + $0x3c0] sm:$0xff]
        %v618 = vld [vmem:[%s467 + $0x3c8] sm:$0xff]
        %v619 = vld [vmem:[%s467 + $0x3d0] sm:$0xff]
        %v620 = vld [vmem:[%s467 + $0x3d8] sm:$0xff]
        %v621 = vld [vmem:[%s467 + $0x3e0] sm:$0xff]
        %v622 = vld [vmem:[%s467 + $0x3e8] sm:$0xff]
        %v623 = vld [vmem:[%s467 + $0x3f0] sm:$0xff]
        %v624 = vld [vmem:[%s467 + $0x3f8] sm:$0xff]
        %v625 = vld [vmem:[%s467 + $0x400] sm:$0xff]
        %v626 = vld [vmem:[%s467 + $0x408] sm:$0xff]
        %v627 = vld [vmem:[%s467 + $0x410] sm:$0xff]
        %v628 = vld [vmem:[%s467 + $0x418] sm:$0xff]
        %v629 = vld [vmem:[%s467 + $0x420] sm:$0xff]
        %v630 = vld [vmem:[%s467 + $0x428] sm:$0xff]
        %v631 = vld [vmem:[%s467 + $0x430] sm:$0xff]
        %v632 = vld [vmem:[%s467 + $0x438] sm:$0xff]
        %v633 = vld [vmem:[%s467 + $0x440] sm:$0xff]
        %v634 = vld [vmem:[%s467 + $0x448] sm:$0xff]
        %v635 = vld [vmem:[%s467 + $0x450] sm:$0xff]
        %v636 = vld [vmem:[%s467 + $0x458] sm:$0xff]
        %v637 = vld [vmem:[%s467 + $0x460] sm:$0xff]
        %v638 = vld [vmem:[%s467 + $0x468] sm:$0xff]
        %v639 = vld [vmem:[%s467 + $0x470] sm:$0xff]
        %v640 = vld [vmem:[%s467 + $0x478] sm:$0xff]
        %v641 = vld [vmem:[%s467 + $0x480] sm:$0x33]
        %v642 = vld [vmem:[%s467 + $0x488] sm:$0x33]
        %v643 = vld [vmem:[%s467 + $0x490] sm:$0x33]
        %v644 = vld [vmem:[%s467 + $0x498] sm:$0x33]
        %v645 = vld [vmem:[%s467 + $0x4a0] sm:$0x33]
        %v646 = vld [vmem:[%s467 + $0x4a8] sm:$0x33]
        %v647 = vld [vmem:[%s467 + $0x4b0] sm:$0x33]
        %v648 = vld [vmem:[%s467 + $0x4b8] sm:$0x33]
        %v649 = vld [vmem:[%s2] sm:$0xff]
        %651 = vset.pattern.permute.xlu0 0
        %652 = vperm.xlu0 %651, %v649
        %v653 = vpop.permute.xlu0 %652
        %v656 = vunpack.c.l.b16 %v496
        %v657 = vunpack.c.h.b16 %v496
        %v658 = vpack.c.b16 %v656, %v656
        %v659 = vpack.c.b16 %v657, %v657
        %v813 = vunpack.c.l.b16 %v497
        %v814 = vunpack.c.h.b16 %v497
        %v815 = vunpack.c.l.b16 %v498
        %v816 = vunpack.c.h.b16 %v498
        %v817 = vunpack.c.l.b16 %v499
        %v818 = vunpack.c.h.b16 %v499
        %v819 = vunpack.c.l.b16 %v500
        %v820 = vunpack.c.h.b16 %v500
        %v821 = vunpack.c.l.b16 %v501
        %v822 = vunpack.c.h.b16 %v501
        %v823 = vunpack.c.l.b16 %v502
        %v824 = vunpack.c.h.b16 %v502
        %v825 = vunpack.c.l.b16 %v503
        %v826 = vunpack.c.h.b16 %v503
        %v827 = vunpack.c.l.b16 %v504
        %v828 = vunpack.c.h.b16 %v504
        %v829 = vunpack.c.l.b16 %v505
        %v830 = vunpack.c.h.b16 %v505
        %v831 = vunpack.c.l.b16 %v506
        %v832 = vunpack.c.h.b16 %v506
        %v833 = vunpack.c.l.b16 %v507
        %v834 = vunpack.c.h.b16 %v507
        %v835 = vunpack.c.l.b16 %v508
        %v836 = vunpack.c.h.b16 %v508
        %v837 = vunpack.c.l.b16 %v509
        %v838 = vunpack.c.h.b16 %v509
        %v839 = vunpack.c.l.b16 %v510
        %v840 = vunpack.c.h.b16 %v510
        %v841 = vunpack.c.l.b16 %v511
        %v842 = vunpack.c.h.b16 %v511
        %v843 = vunpack.c.l.b16 %v512
        %v844 = vunpack.c.h.b16 %v512
        %v845 = vunpack.c.l.b16 %v513
        %v846 = vunpack.c.h.b16 %v513
        %v847 = vunpack.c.l.b16 %v514
        %v848 = vunpack.c.h.b16 %v514
        %v849 = vunpack.c.l.b16 %v515
        %v850 = vunpack.c.h.b16 %v515
        %v851 = vunpack.c.l.b16 %v516
        %v852 = vunpack.c.h.b16 %v516
        %v853 = vunpack.c.l.b16 %v517
        %v854 = vunpack.c.h.b16 %v517
        %v855 = vunpack.c.l.b16 %v518
        %v856 = vunpack.c.h.b16 %v518
        %v857 = vunpack.c.l.b16 %v519
        %v858 = vunpack.c.h.b16 %v519
        %v859 = vunpack.c.l.b16 %v520
        %v860 = vunpack.c.h.b16 %v520
        %v861 = vunpack.c.l.b16 %v521
        %v862 = vunpack.c.h.b16 %v521
        %v863 = vunpack.c.l.b16 %v522
        %v864 = vunpack.c.h.b16 %v522
        %v865 = vunpack.c.l.b16 %v523
        %v866 = vunpack.c.h.b16 %v523
        %v867 = vunpack.c.l.b16 %v524
        %v868 = vunpack.c.h.b16 %v524
        %v869 = vunpack.c.l.b16 %v525
        %v870 = vunpack.c.h.b16 %v525
        %v871 = vunpack.c.l.b16 %v526
        %v872 = vunpack.c.h.b16 %v526
        %v873 = vunpack.c.l.b16 %v527
        %v874 = vunpack.c.h.b16 %v527
        %v875 = vunpack.c.l.b16 %v528
        %v876 = vunpack.c.h.b16 %v528
        %v877 = vunpack.c.l.b16 %v529
        %v878 = vunpack.c.h.b16 %v529
        %v879 = vunpack.c.l.b16 %v530
        %v880 = vunpack.c.h.b16 %v530
        %v881 = vunpack.c.l.b16 %v531
        %v882 = vunpack.c.h.b16 %v531
        %v883 = vunpack.c.l.b16 %v532
        %v884 = vunpack.c.h.b16 %v532
        %v885 = vunpack.c.l.b16 %v533
        %v886 = vunpack.c.h.b16 %v533
        %v887 = vunpack.c.l.b16 %v534
        %v888 = vunpack.c.h.b16 %v534
        %v889 = vunpack.c.l.b16 %v535
        %v890 = vunpack.c.h.b16 %v535
        %v891 = vunpack.c.l.b16 %v536
        %v892 = vunpack.c.h.b16 %v536
        %v893 = vunpack.c.l.b16 %v537
        %v894 = vunpack.c.h.b16 %v537
        %v895 = vunpack.c.l.b16 %v538
        %v896 = vunpack.c.h.b16 %v538
        %v897 = vunpack.c.l.b16 %v539
        %v898 = vunpack.c.h.b16 %v539
        %v899 = vunpack.c.l.b16 %v540
        %v900 = vunpack.c.h.b16 %v540
        %v901 = vunpack.c.l.b16 %v541
        %v902 = vunpack.c.h.b16 %v541
        %v903 = vunpack.c.l.b16 %v542
        %v904 = vunpack.c.h.b16 %v542
        %v905 = vunpack.c.l.b16 %v543
        %v906 = vunpack.c.h.b16 %v543
        %v907 = vunpack.c.l.b16 %v544
        %v908 = vunpack.c.h.b16 %v544
        %v909 = vunpack.c.l.b16 %v545
        %v910 = vunpack.c.h.b16 %v545
        %v911 = vunpack.c.l.b16 %v546
        %v912 = vunpack.c.h.b16 %v546
        %v913 = vunpack.c.l.b16 %v547
        %v914 = vunpack.c.h.b16 %v547
        %v915 = vunpack.c.l.b16 %v548
        %v916 = vunpack.c.h.b16 %v548
        %v917 = vunpack.c.l.b16 %v549
        %v918 = vunpack.c.h.b16 %v549
        %v919 = vunpack.c.l.b16 %v550
        %v920 = vunpack.c.h.b16 %v550
        %v921 = vunpack.c.l.b16 %v551
        %v922 = vunpack.c.h.b16 %v551
        %v923 = vunpack.c.l.b16 %v552
        %v924 = vunpack.c.h.b16 %v552
        %v925 = vunpack.c.l.b16 %v553
        %v926 = vunpack.c.h.b16 %v553
        %v927 = vunpack.c.l.b16 %v554
        %v928 = vunpack.c.h.b16 %v554
        %v929 = vunpack.c.l.b16 %v555
        %v930 = vunpack.c.h.b16 %v555
        %v931 = vunpack.c.l.b16 %v556
        %v932 = vunpack.c.h.b16 %v556
        %v933 = vunpack.c.l.b16 %v557
        %v934 = vunpack.c.h.b16 %v557
        %v935 = vunpack.c.l.b16 %v558
        %v936 = vunpack.c.h.b16 %v558
        %v937 = vunpack.c.l.b16 %v559
        %v938 = vunpack.c.h.b16 %v559
        %v939 = vunpack.c.l.b16 %v560
        %v940 = vunpack.c.h.b16 %v560
        %v941 = vunpack.c.l.b16 %v561
        %v942 = vunpack.c.h.b16 %v561
        %v943 = vunpack.c.l.b16 %v562
        %v944 = vunpack.c.h.b16 %v562
        %v945 = vunpack.c.l.b16 %v563
        %v946 = vunpack.c.h.b16 %v563
        %v947 = vunpack.c.l.b16 %v564
        %v948 = vunpack.c.h.b16 %v564
        %v949 = vunpack.c.l.b16 %v565
        %v950 = vunpack.c.h.b16 %v565
        %v951 = vunpack.c.l.b16 %v566
        %v952 = vunpack.c.h.b16 %v566
        %v953 = vunpack.c.l.b16 %v567
        %v954 = vunpack.c.h.b16 %v567
        %v955 = vunpack.c.l.b16 %v568
        %v956 = vunpack.c.h.b16 %v568
        %v957 = vunpack.c.l.b16 %v569
        %v958 = vunpack.c.h.b16 %v569
        %v959 = vunpack.c.l.b16 %v570
        %v960 = vunpack.c.h.b16 %v570
        %v961 = vunpack.c.l.b16 %v571
        %v962 = vunpack.c.h.b16 %v571
        %v963 = vunpack.c.l.b16 %v572
        %v964 = vunpack.c.h.b16 %v572
        %v965 = vunpack.c.l.b16 %v573
        %v966 = vunpack.c.h.b16 %v573
        %v967 = vunpack.c.l.b16 %v574
        %v968 = vunpack.c.h.b16 %v574
        %v969 = vunpack.c.l.b16 %v575
        %v970 = vunpack.c.h.b16 %v575
        %v971 = vunpack.c.l.b16 %v576
        %v972 = vunpack.c.h.b16 %v576
        %v973 = vunpack.c.l.b16 %v577
        %v974 = vunpack.c.h.b16 %v577
        %v975 = vunpack.c.l.b16 %v578
        %v976 = vunpack.c.h.b16 %v578
        %v977 = vunpack.c.l.b16 %v579
        %v978 = vunpack.c.h.b16 %v579
        %v979 = vunpack.c.l.b16 %v580
        %v980 = vunpack.c.h.b16 %v580
        %v981 = vunpack.c.l.b16 %v581
        %v982 = vunpack.c.h.b16 %v581
        %v983 = vunpack.c.l.b16 %v582
        %v984 = vunpack.c.h.b16 %v582
        %v985 = vunpack.c.l.b16 %v583
        %v986 = vunpack.c.h.b16 %v583
        %v987 = vunpack.c.l.b16 %v584
        %v988 = vunpack.c.h.b16 %v584
        %v989 = vunpack.c.l.b16 %v585
        %v990 = vunpack.c.h.b16 %v585
        %v991 = vunpack.c.l.b16 %v586
        %v992 = vunpack.c.h.b16 %v586
        %v993 = vunpack.c.l.b16 %v587
        %v994 = vunpack.c.h.b16 %v587
        %v995 = vunpack.c.l.b16 %v588
        %v996 = vunpack.c.h.b16 %v588
        %v997 = vunpack.c.l.b16 %v589
        %v998 = vunpack.c.h.b16 %v589
        %v999 = vunpack.c.l.b16 %v590
        %v1000 = vunpack.c.h.b16 %v590
        %v1001 = vunpack.c.l.b16 %v591
        %v1002 = vunpack.c.h.b16 %v591
        %v1003 = vunpack.c.l.b16 %v592
        %v1004 = vunpack.c.h.b16 %v592
        %v1005 = vunpack.c.l.b16 %v593
        %v1006 = vunpack.c.h.b16 %v593
        %v1007 = vunpack.c.l.b16 %v594
        %v1008 = vunpack.c.h.b16 %v594
        %v1009 = vunpack.c.l.b16 %v595
        %v1010 = vunpack.c.h.b16 %v595
        %v1011 = vunpack.c.l.b16 %v596
        %v1012 = vunpack.c.h.b16 %v596
        %v1013 = vunpack.c.l.b16 %v597
        %v1014 = vunpack.c.h.b16 %v597
        %v1015 = vunpack.c.l.b16 %v598
        %v1016 = vunpack.c.h.b16 %v598
        %v1017 = vunpack.c.l.b16 %v599
        %v1018 = vunpack.c.h.b16 %v599
        %v1019 = vunpack.c.l.b16 %v600
        %v1020 = vunpack.c.h.b16 %v600
        %v1021 = vunpack.c.l.b16 %v601
        %v1022 = vunpack.c.h.b16 %v601
        %v1023 = vunpack.c.l.b16 %v602
        %v1024 = vunpack.c.h.b16 %v602
        %v1025 = vunpack.c.l.b16 %v603
        %v1026 = vunpack.c.h.b16 %v603
        %v1027 = vunpack.c.l.b16 %v604
        %v1028 = vunpack.c.h.b16 %v604
        %v1029 = vunpack.c.l.b16 %v605
        %v1030 = vunpack.c.h.b16 %v605
        %v1031 = vunpack.c.l.b16 %v606
        %v1032 = vunpack.c.h.b16 %v606
        %v1033 = vunpack.c.l.b16 %v607
        %v1034 = vunpack.c.h.b16 %v607
        %v1035 = vunpack.c.l.b16 %v608
        %v1036 = vunpack.c.h.b16 %v608
        %v1037 = vunpack.c.l.b16 %v609
        %v1038 = vunpack.c.h.b16 %v609
        %v1039 = vunpack.c.l.b16 %v610
        %v1040 = vunpack.c.h.b16 %v610
        %v1041 = vunpack.c.l.b16 %v611
        %v1042 = vunpack.c.h.b16 %v611
        %v1043 = vunpack.c.l.b16 %v612
        %v1044 = vunpack.c.h.b16 %v612
        %v1045 = vunpack.c.l.b16 %v613
        %v1046 = vunpack.c.h.b16 %v613
        %v1047 = vunpack.c.l.b16 %v614
        %v1048 = vunpack.c.h.b16 %v614
        %v1049 = vunpack.c.l.b16 %v615
        %v1050 = vunpack.c.h.b16 %v615
        %v1051 = vunpack.c.l.b16 %v616
        %v1052 = vunpack.c.h.b16 %v616
        %v1053 = vunpack.c.l.b16 %v617
        %v1054 = vunpack.c.h.b16 %v617
        %v1055 = vunpack.c.l.b16 %v618
        %v1056 = vunpack.c.h.b16 %v618
        %v1057 = vunpack.c.l.b16 %v619
        %v1058 = vunpack.c.h.b16 %v619
        %v1059 = vunpack.c.l.b16 %v620
        %v1060 = vunpack.c.h.b16 %v620
        %v1061 = vunpack.c.l.b16 %v621
        %v1062 = vunpack.c.h.b16 %v621
        %v1063 = vunpack.c.l.b16 %v622
        %v1064 = vunpack.c.h.b16 %v622
        %v1065 = vunpack.c.l.b16 %v623
        %v1066 = vunpack.c.h.b16 %v623
        %v1067 = vunpack.c.l.b16 %v624
        %v1068 = vunpack.c.h.b16 %v624
        %v1069 = vunpack.c.l.b16 %v625
        %v1070 = vunpack.c.h.b16 %v625
        %v1071 = vunpack.c.l.b16 %v626
        %v1072 = vunpack.c.h.b16 %v626
        %v1073 = vunpack.c.l.b16 %v627
        %v1074 = vunpack.c.h.b16 %v627
        %v1075 = vunpack.c.l.b16 %v628
        %v1076 = vunpack.c.h.b16 %v628
        %v1077 = vunpack.c.l.b16 %v629
        %v1078 = vunpack.c.h.b16 %v629
        %v1079 = vunpack.c.l.b16 %v630
        %v1080 = vunpack.c.h.b16 %v630
        %v1081 = vunpack.c.l.b16 %v631
        %v1082 = vunpack.c.h.b16 %v631
        %v1083 = vunpack.c.l.b16 %v632
        %v1084 = vunpack.c.h.b16 %v632
        %v1085 = vunpack.c.l.b16 %v633
        %v1086 = vunpack.c.h.b16 %v633
        %v1087 = vunpack.c.l.b16 %v634
        %v1088 = vunpack.c.h.b16 %v634
        %v1089 = vunpack.c.l.b16 %v635
        %v1090 = vunpack.c.h.b16 %v635
        %v1091 = vunpack.c.l.b16 %v636
        %v1092 = vunpack.c.h.b16 %v636
        %v1093 = vunpack.c.l.b16 %v637
        %v1094 = vunpack.c.h.b16 %v637
        %v1095 = vunpack.c.l.b16 %v638
        %v1096 = vunpack.c.h.b16 %v638
        %v1097 = vunpack.c.l.b16 %v639
        %v1098 = vunpack.c.h.b16 %v639
        %v1099 = vunpack.c.l.b16 %v640
        %v1100 = vunpack.c.h.b16 %v640
        %v1101 = vunpack.c.l.b16 %v641
        %v1102 = vunpack.c.h.b16 %v641
        %v1103 = vunpack.c.l.b16 %v642
        %v1104 = vunpack.c.h.b16 %v642
        %v1105 = vunpack.c.l.b16 %v643
        %v1106 = vunpack.c.h.b16 %v643
        %v1107 = vunpack.c.l.b16 %v644
        %v1108 = vunpack.c.h.b16 %v644
        %v1109 = vunpack.c.l.b16 %v645
        %v1110 = vunpack.c.h.b16 %v645
        %v1111 = vunpack.c.l.b16 %v646
        %v1112 = vunpack.c.h.b16 %v646
        %v1113 = vunpack.c.l.b16 %v647
        %v1114 = vunpack.c.h.b16 %v647
        %v1115 = vunpack.c.l.b16 %v648
        %v1116 = vunpack.c.h.b16 %v648
        %v1117 = vpack.c.b16 %v829, %v813
        %v1118 = vpack.c.b16 %v830, %v814
        %v1119 = vpack.c.b16 %v831, %v815
        %v1120 = vpack.c.b16 %v832, %v816
        %v1121 = vpack.c.b16 %v833, %v817
        %v1122 = vpack.c.b16 %v834, %v818
        %v1123 = vpack.c.b16 %v835, %v819
        %v1124 = vpack.c.b16 %v836, %v820
        %v1125 = vpack.c.b16 %v837, %v821
        %v1126 = vpack.c.b16 %v838, %v822
        %v1127 = vpack.c.b16 %v839, %v823
        %v1128 = vpack.c.b16 %v840, %v824
        %v1129 = vpack.c.b16 %v841, %v825
        %v1130 = vpack.c.b16 %v842, %v826
        %v1131 = vpack.c.b16 %v843, %v827
        %v1132 = vpack.c.b16 %v844, %v828
        %v1133 = vpack.c.b16 %v861, %v845
        %v1134 = vpack.c.b16 %v862, %v846
        %v1135 = vpack.c.b16 %v863, %v847
        %v1136 = vpack.c.b16 %v864, %v848
        %v1137 = vpack.c.b16 %v865, %v849
        %v1138 = vpack.c.b16 %v866, %v850
        %v1139 = vpack.c.b16 %v867, %v851
        %v1140 = vpack.c.b16 %v868, %v852
        %v1141 = vpack.c.b16 %v869, %v853
        %v1142 = vpack.c.b16 %v870, %v854
        %v1143 = vpack.c.b16 %v871, %v855
        %v1144 = vpack.c.b16 %v872, %v856
        %v1145 = vpack.c.b16 %v873, %v857
        %v1146 = vpack.c.b16 %v874, %v858
        %v1147 = vpack.c.b16 %v875, %v859
        %v1148 = vpack.c.b16 %v876, %v860
        %v1149 = vpack.c.b16 %v893, %v877
        %v1150 = vpack.c.b16 %v894, %v878
        %v1151 = vpack.c.b16 %v895, %v879
        %v1152 = vpack.c.b16 %v896, %v880
        %v1153 = vpack.c.b16 %v897, %v881
        %v1154 = vpack.c.b16 %v898, %v882
        %v1155 = vpack.c.b16 %v899, %v883
        %v1156 = vpack.c.b16 %v900, %v884
        %v1157 = vpack.c.b16 %v901, %v885
        %v1158 = vpack.c.b16 %v902, %v886
        %v1159 = vpack.c.b16 %v903, %v887
        %v1160 = vpack.c.b16 %v904, %v888
        %v1161 = vpack.c.b16 %v905, %v889
        %v1162 = vpack.c.b16 %v906, %v890
        %v1163 = vpack.c.b16 %v907, %v891
        %v1164 = vpack.c.b16 %v908, %v892
        %v1165 = vpack.c.b16 %v925, %v909
        %v1166 = vpack.c.b16 %v926, %v910
        %v1167 = vpack.c.b16 %v927, %v911
        %v1168 = vpack.c.b16 %v928, %v912
        %v1169 = vpack.c.b16 %v929, %v913
        %v1170 = vpack.c.b16 %v930, %v914
        %v1171 = vpack.c.b16 %v931, %v915
        %v1172 = vpack.c.b16 %v932, %v916
        %v1173 = vpack.c.b16 %v933, %v917
        %v1174 = vpack.c.b16 %v934, %v918
        %v1175 = vpack.c.b16 %v935, %v919
        %v1176 = vpack.c.b16 %v936, %v920
        %v1177 = vpack.c.b16 %v937, %v921
        %v1178 = vpack.c.b16 %v938, %v922
        %v1179 = vpack.c.b16 %v939, %v923
        %v1180 = vpack.c.b16 %v940, %v924
        %v1181 = vpack.c.b16 %v957, %v941
        %v1182 = vpack.c.b16 %v958, %v942
        %v1183 = vpack.c.b16 %v959, %v943
        %v1184 = vpack.c.b16 %v960, %v944
        %v1185 = vpack.c.b16 %v961, %v945
        %v1186 = vpack.c.b16 %v962, %v946
        %v1187 = vpack.c.b16 %v963, %v947
        %v1188 = vpack.c.b16 %v964, %v948
        %v1189 = vpack.c.b16 %v965, %v949
        %v1190 = vpack.c.b16 %v966, %v950
        %v1191 = vpack.c.b16 %v967, %v951
        %v1192 = vpack.c.b16 %v968, %v952
        %v1193 = vpack.c.b16 %v969, %v953
        %v1194 = vpack.c.b16 %v970, %v954
        %v1195 = vpack.c.b16 %v971, %v955
        %v1196 = vpack.c.b16 %v972, %v956
        %v1197 = vpack.c.b16 %v989, %v973
        %v1198 = vpack.c.b16 %v990, %v974
        %v1199 = vpack.c.b16 %v991, %v975
        %v1200 = vpack.c.b16 %v992, %v976
        %v1201 = vpack.c.b16 %v993, %v977
        %v1202 = vpack.c.b16 %v994, %v978
        %v1203 = vpack.c.b16 %v995, %v979
        %v1204 = vpack.c.b16 %v996, %v980
        %v1205 = vpack.c.b16 %v997, %v981
        %v1206 = vpack.c.b16 %v998, %v982
        %v1207 = vpack.c.b16 %v999, %v983
        %v1208 = vpack.c.b16 %v1000, %v984
        %v1209 = vpack.c.b16 %v1001, %v985
        %v1210 = vpack.c.b16 %v1002, %v986
        %v1211 = vpack.c.b16 %v1003, %v987
        %v1212 = vpack.c.b16 %v1004, %v988
        %v1213 = vpack.c.b16 %v1021, %v1005
        %v1214 = vpack.c.b16 %v1022, %v1006
        %v1215 = vpack.c.b16 %v1023, %v1007
        %v1216 = vpack.c.b16 %v1024, %v1008
        %v1217 = vpack.c.b16 %v1025, %v1009
        %v1218 = vpack.c.b16 %v1026, %v1010
        %v1219 = vpack.c.b16 %v1027, %v1011
        %v1220 = vpack.c.b16 %v1028, %v1012
        %v1221 = vpack.c.b16 %v1029, %v1013
        %v1222 = vpack.c.b16 %v1030, %v1014
        %v1223 = vpack.c.b16 %v1031, %v1015
        %v1224 = vpack.c.b16 %v1032, %v1016
        %v1225 = vpack.c.b16 %v1033, %v1017
        %v1226 = vpack.c.b16 %v1034, %v1018
        %v1227 = vpack.c.b16 %v1035, %v1019
        %v1228 = vpack.c.b16 %v1036, %v1020
        %v1229 = vpack.c.b16 %v1053, %v1037
        %v1230 = vpack.c.b16 %v1054, %v1038
        %v1231 = vpack.c.b16 %v1055, %v1039
        %v1232 = vpack.c.b16 %v1056, %v1040
        %v1233 = vpack.c.b16 %v1057, %v1041
        %v1234 = vpack.c.b16 %v1058, %v1042
        %v1235 = vpack.c.b16 %v1059, %v1043
        %v1236 = vpack.c.b16 %v1060, %v1044
        %v1237 = vpack.c.b16 %v1061, %v1045
        %v1238 = vpack.c.b16 %v1062, %v1046
        %v1239 = vpack.c.b16 %v1063, %v1047
        %v1240 = vpack.c.b16 %v1064, %v1048
        %v1241 = vpack.c.b16 %v1065, %v1049
        %v1242 = vpack.c.b16 %v1066, %v1050
        %v1243 = vpack.c.b16 %v1067, %v1051
        %v1244 = vpack.c.b16 %v1068, %v1052
        %v1245 = vpack.c.b16 %v1085, %v1069
        %v1246 = vpack.c.b16 %v1086, %v1070
        %v1247 = vpack.c.b16 %v1087, %v1071
        %v1248 = vpack.c.b16 %v1088, %v1072
        %v1249 = vpack.c.b16 %v1089, %v1073
        %v1250 = vpack.c.b16 %v1090, %v1074
        %v1251 = vpack.c.b16 %v1091, %v1075
        %v1252 = vpack.c.b16 %v1092, %v1076
        %v1253 = vpack.c.b16 %v1093, %v1077
        %v1254 = vpack.c.b16 %v1094, %v1078
        %v1255 = vpack.c.b16 %v1095, %v1079
        %v1256 = vpack.c.b16 %v1096, %v1080
        %v1257 = vpack.c.b16 %v1097, %v1081
        %v1258 = vpack.c.b16 %v1098, %v1082
        %v1259 = vpack.c.b16 %v1099, %v1083
        %v1260 = vpack.c.b16 %v1100, %v1084
        %v1261 = vpack.c.b16 %v1101, %v1101
        %v1262 = vpack.c.b16 %v1102, %v1102
        %v1263 = vpack.c.b16 %v1103, %v1103
        %v1264 = vpack.c.b16 %v1104, %v1104
        %v1265 = vpack.c.b16 %v1105, %v1105
        %v1266 = vpack.c.b16 %v1106, %v1106
        %v1267 = vpack.c.b16 %v1107, %v1107
        %v1268 = vpack.c.b16 %v1108, %v1108
        %v1269 = vpack.c.b16 %v1109, %v1109
        %v1270 = vpack.c.b16 %v1110, %v1110
        %v1271 = vpack.c.b16 %v1111, %v1111
        %v1272 = vpack.c.b16 %v1112, %v1112
        %v1273 = vpack.c.b16 %v1113, %v1113
        %v1274 = vpack.c.b16 %v1114, %v1114
        %v1275 = vpack.c.b16 %v1115, %v1115
        %v1276 = vpack.c.b16 %v1116, %v1116
        %vm1421 = vcmask 154624
        %v1423 = vsel %vm1421, %v659, 0
        %vm1425 = vcmask 1040384
        %vm1426 = vcmask 1041408
        %v1427 = vsel %vm1425, 4294967295, 65535
        %v1428 = vsel %vm1426, %v1427, 0
        %v1430 = vand.u32 %v1261, %v1428
        %v1433 = vand.u32 %v1262, %v1428
        %v1436 = vand.u32 %v1263, %v1428
        %v1439 = vand.u32 %v1264, %v1428
        %v1442 = vand.u32 %v1265, %v1428
        %v1445 = vand.u32 %v1266, %v1428
        %v1448 = vand.u32 %v1267, %v1428
        %v1451 = vand.u32 %v1268, %v1428
        %v1454 = vand.u32 %v1269, %v1428
        %v1457 = vand.u32 %v1270, %v1428
        %v1460 = vand.u32 %v1271, %v1428
        %v1463 = vand.u32 %v1272, %v1428
        %v1466 = vand.u32 %v1273, %v1428
        %v1469 = vand.u32 %v1274, %v1428
        %v1472 = vand.u32 %v1275, %v1428
        %v1475 = vand.u32 %v1276, %v1428
        %1477 = vmatpush.bf16.msra.mxu0 %v1229
        %1478 = vmatpush.bf16.msra.mxu0 %v1213
        %1479 = vmatpush.bf16.msra.mxu0 %v1197
        %1480 = vmatpush.bf16.msra.mxu0 %v1181
        %1481 = vmatpush.bf16.msra.mxu0 %v1165
        %1482 = vmatpush.bf16.msra.mxu0 %v1149
        %1483 = vmatpush.bf16.msra.mxu0 %v1133
        %1484 = vmatpush.bf16.msra.mxu0 %v1117
        %1485 = vmatmul.bf16.gmra.mxu0 %v658
        %v1486 = vpop.f32.mrf.mxu0
        %v1487 = vadd.f32 %v653, %v1486
        %v1488 = vpop.f32.mrf.mxu0
        %1489 = vdwg.mxu0
        %1490 = vmatpush.bf16.msra.mxu0 0
        %1491 = vmatpush.bf16.msra.mxu0 0
        %1492 = vmatpush.bf16.msra.mxu0 0
        %1493 = vmatpush.bf16.msra.mxu0 0
        %1494 = vmatpush.bf16.msra.mxu0 0
        %1495 = vmatpush.bf16.msra.mxu0 0
        %1496 = vmatpush.bf16.msra.mxu0 %v1430
        %1497 = vmatpush.bf16.msra.mxu0 %v1245
        %1498 = vmatmul.bf16.gmra.mxu0 %v1423
        %v1499 = vpop.f32.mrf.mxu0
        %v1500 = vadd.f32 %v1487, %v1499
        %v1501 = vpop.f32.mrf.mxu0
        %1502 = vdwg.mxu0
        %1503 = vmatpush.bf16.msra.mxu0 %v1230
        %1504 = vmatpush.bf16.msra.mxu0 %v1214
        %1505 = vmatpush.bf16.msra.mxu0 %v1198
        %1506 = vmatpush.bf16.msra.mxu0 %v1182
        %1507 = vmatpush.bf16.msra.mxu0 %v1166
        %1508 = vmatpush.bf16.msra.mxu0 %v1150
        %1509 = vmatpush.bf16.msra.mxu0 %v1134
        %1510 = vmatpush.bf16.msra.mxu0 %v1118
        %1511 = vmatmul.bf16.gmra.mxu0 %v658
        %v1512 = vpop.f32.mrf.mxu0
        %v1513 = vadd.f32 %v653, %v1512
        %v1514 = vpop.f32.mrf.mxu0
        %1515 = vdwg.mxu0
        %1516 = vmatpush.bf16.msra.mxu0 0
        %1517 = vmatpush.bf16.msra.mxu0 0
        %1518 = vmatpush.bf16.msra.mxu0 0
        %1519 = vmatpush.bf16.msra.mxu0 0
        %1520 = vmatpush.bf16.msra.mxu0 0
        %1521 = vmatpush.bf16.msra.mxu0 0
        %1522 = vmatpush.bf16.msra.mxu0 %v1433
        %1523 = vmatpush.bf16.msra.mxu0 %v1246
        %1524 = vmatmul.bf16.gmra.mxu0 %v1423
        %v1525 = vpop.f32.mrf.mxu0
        %v1526 = vadd.f32 %v1513, %v1525
        %v1527 = vpop.f32.mrf.mxu0
        %1528 = vdwg.mxu0
        %1529 = vmatpush.bf16.msra.mxu0 %v1231
        %1530 = vmatpush.bf16.msra.mxu0 %v1215
        %1531 = vmatpush.bf16.msra.mxu0 %v1199
        %1532 = vmatpush.bf16.msra.mxu0 %v1183
        %1533 = vmatpush.bf16.msra.mxu0 %v1167
        %1534 = vmatpush.bf16.msra.mxu0 %v1151
        %1535 = vmatpush.bf16.msra.mxu0 %v1135
        %1536 = vmatpush.bf16.msra.mxu0 %v1119
        %1537 = vmatmul.bf16.gmra.mxu0 %v658
        %v1538 = vpop.f32.mrf.mxu0
        %v1539 = vadd.f32 %v653, %v1538
        %v1540 = vpop.f32.mrf.mxu0
        %1541 = vdwg.mxu0
        %1542 = vmatpush.bf16.msra.mxu0 0
        %1543 = vmatpush.bf16.msra.mxu0 0
        %1544 = vmatpush.bf16.msra.mxu0 0
        %1545 = vmatpush.bf16.msra.mxu0 0
        %1546 = vmatpush.bf16.msra.mxu0 0
        %1547 = vmatpush.bf16.msra.mxu0 0
        %1548 = vmatpush.bf16.msra.mxu0 %v1436
        %1549 = vmatpush.bf16.msra.mxu0 %v1247
        %1550 = vmatmul.bf16.gmra.mxu0 %v1423
        %v1551 = vpop.f32.mrf.mxu0
        %v1552 = vadd.f32 %v1539, %v1551
        %v1553 = vpop.f32.mrf.mxu0
        %1554 = vdwg.mxu0
        %1555 = vmatpush.bf16.msra.mxu0 %v1232
        %1556 = vmatpush.bf16.msra.mxu0 %v1216
        %1557 = vmatpush.bf16.msra.mxu0 %v1200
        %1558 = vmatpush.bf16.msra.mxu0 %v1184
        %1559 = vmatpush.bf16.msra.mxu0 %v1168
        %1560 = vmatpush.bf16.msra.mxu0 %v1152
        %1561 = vmatpush.bf16.msra.mxu0 %v1136
        %1562 = vmatpush.bf16.msra.mxu0 %v1120
        %1563 = vmatmul.bf16.gmra.mxu0 %v658
        %v1564 = vpop.f32.mrf.mxu0
        %v1565 = vadd.f32 %v653, %v1564
        %v1566 = vpop.f32.mrf.mxu0
        %1567 = vdwg.mxu0
        %1568 = vmatpush.bf16.msra.mxu0 0
        %1569 = vmatpush.bf16.msra.mxu0 0
        %1570 = vmatpush.bf16.msra.mxu0 0
        %1571 = vmatpush.bf16.msra.mxu0 0
        %1572 = vmatpush.bf16.msra.mxu0 0
        %1573 = vmatpush.bf16.msra.mxu0 0
        %1574 = vmatpush.bf16.msra.mxu0 %v1439
        %1575 = vmatpush.bf16.msra.mxu0 %v1248
        %1576 = vmatmul.bf16.gmra.mxu0 %v1423
        %v1577 = vpop.f32.mrf.mxu0
        %v1578 = vadd.f32 %v1565, %v1577
        %v1579 = vpop.f32.mrf.mxu0
        %1580 = vdwg.mxu0
        %1581 = vmatpush.bf16.msra.mxu0 %v1233
        %1582 = vmatpush.bf16.msra.mxu0 %v1217
        %1583 = vmatpush.bf16.msra.mxu0 %v1201
        %1584 = vmatpush.bf16.msra.mxu0 %v1185
        %1585 = vmatpush.bf16.msra.mxu0 %v1169
        %1586 = vmatpush.bf16.msra.mxu0 %v1153
        %1587 = vmatpush.bf16.msra.mxu0 %v1137
        %1588 = vmatpush.bf16.msra.mxu0 %v1121
        %1589 = vmatmul.bf16.gmra.mxu0 %v658
        %v1590 = vpop.f32.mrf.mxu0
        %v1591 = vadd.f32 %v653, %v1590
        %v1592 = vpop.f32.mrf.mxu0
        %1593 = vdwg.mxu0
        %1594 = vmatpush.bf16.msra.mxu0 0
        %1595 = vmatpush.bf16.msra.mxu0 0
        %1596 = vmatpush.bf16.msra.mxu0 0
        %1597 = vmatpush.bf16.msra.mxu0 0
        %1598 = vmatpush.bf16.msra.mxu0 0
        %1599 = vmatpush.bf16.msra.mxu0 0
        %1600 = vmatpush.bf16.msra.mxu0 %v1442
        %1601 = vmatpush.bf16.msra.mxu0 %v1249
        %1602 = vmatmul.bf16.gmra.mxu0 %v1423
        %v1603 = vpop.f32.mrf.mxu0
        %v1604 = vadd.f32 %v1591, %v1603
        %v1605 = vpop.f32.mrf.mxu0
        %1606 = vdwg.mxu0
        %1607 = vmatpush.bf16.msra.mxu0 %v1234
        %1608 = vmatpush.bf16.msra.mxu0 %v1218
        %1609 = vmatpush.bf16.msra.mxu0 %v1202
        %1610 = vmatpush.bf16.msra.mxu0 %v1186
        %1611 = vmatpush.bf16.msra.mxu0 %v1170
        %1612 = vmatpush.bf16.msra.mxu0 %v1154
        %1613 = vmatpush.bf16.msra.mxu0 %v1138
        %1614 = vmatpush.bf16.msra.mxu0 %v1122
        %1615 = vmatmul.bf16.gmra.mxu0 %v658
        %v1616 = vpop.f32.mrf.mxu0
        %v1617 = vadd.f32 %v653, %v1616
        %v1618 = vpop.f32.mrf.mxu0
        %1619 = vdwg.mxu0
        %1620 = vmatpush.bf16.msra.mxu0 0
        %1621 = vmatpush.bf16.msra.mxu0 0
        %1622 = vmatpush.bf16.msra.mxu0 0
        %1623 = vmatpush.bf16.msra.mxu0 0
        %1624 = vmatpush.bf16.msra.mxu0 0
        %1625 = vmatpush.bf16.msra.mxu0 0
        %1626 = vmatpush.bf16.msra.mxu0 %v1445
        %1627 = vmatpush.bf16.msra.mxu0 %v1250
        %1628 = vmatmul.bf16.gmra.mxu0 %v1423
        %v1629 = vpop.f32.mrf.mxu0
        %v1630 = vadd.f32 %v1617, %v1629
        %v1631 = vpop.f32.mrf.mxu0
        %1632 = vdwg.mxu0
        %1633 = vmatpush.bf16.msra.mxu0 %v1235
        %1634 = vmatpush.bf16.msra.mxu0 %v1219
        %1635 = vmatpush.bf16.msra.mxu0 %v1203
        %1636 = vmatpush.bf16.msra.mxu0 %v1187
        %1637 = vmatpush.bf16.msra.mxu0 %v1171
        %1638 = vmatpush.bf16.msra.mxu0 %v1155
        %1639 = vmatpush.bf16.msra.mxu0 %v1139
        %1640 = vmatpush.bf16.msra.mxu0 %v1123
        %1641 = vmatmul.bf16.gmra.mxu0 %v658
        %v1642 = vpop.f32.mrf.mxu0
        %v1643 = vadd.f32 %v653, %v1642
        %v1644 = vpop.f32.mrf.mxu0
        %1645 = vdwg.mxu0
        %1646 = vmatpush.bf16.msra.mxu0 0
        %1647 = vmatpush.bf16.msra.mxu0 0
        %1648 = vmatpush.bf16.msra.mxu0 0
        %1649 = vmatpush.bf16.msra.mxu0 0
        %1650 = vmatpush.bf16.msra.mxu0 0
        %1651 = vmatpush.bf16.msra.mxu0 0
        %1652 = vmatpush.bf16.msra.mxu0 %v1448
        %1653 = vmatpush.bf16.msra.mxu0 %v1251
        %1654 = vmatmul.bf16.gmra.mxu0 %v1423
        %v1655 = vpop.f32.mrf.mxu0
        %v1656 = vadd.f32 %v1643, %v1655
        %v1657 = vpop.f32.mrf.mxu0
        %1658 = vdwg.mxu0
        %1659 = vmatpush.bf16.msra.mxu0 %v1236
        %1660 = vmatpush.bf16.msra.mxu0 %v1220
        %1661 = vmatpush.bf16.msra.mxu0 %v1204
        %1662 = vmatpush.bf16.msra.mxu0 %v1188
        %1663 = vmatpush.bf16.msra.mxu0 %v1172
        %1664 = vmatpush.bf16.msra.mxu0 %v1156
        %1665 = vmatpush.bf16.msra.mxu0 %v1140
        %1666 = vmatpush.bf16.msra.mxu0 %v1124
        %1667 = vmatmul.bf16.gmra.mxu0 %v658
        %v1668 = vpop.f32.mrf.mxu0
        %v1669 = vadd.f32 %v653, %v1668
        %v1670 = vpop.f32.mrf.mxu0
        %1671 = vdwg.mxu0
        %1672 = vmatpush.bf16.msra.mxu0 0
        %1673 = vmatpush.bf16.msra.mxu0 0
        %1674 = vmatpush.bf16.msra.mxu0 0
        %1675 = vmatpush.bf16.msra.mxu0 0
        %1676 = vmatpush.bf16.msra.mxu0 0
        %1677 = vmatpush.bf16.msra.mxu0 0
        %1678 = vmatpush.bf16.msra.mxu0 %v1451
        %1679 = vmatpush.bf16.msra.mxu0 %v1252
        %1680 = vmatmul.bf16.gmra.mxu0 %v1423
        %v1681 = vpop.f32.mrf.mxu0
        %v1682 = vadd.f32 %v1669, %v1681
        %v1683 = vpop.f32.mrf.mxu0
        %1684 = vdwg.mxu0
        %1685 = vmatpush.bf16.msra.mxu0 %v1237
        %1686 = vmatpush.bf16.msra.mxu0 %v1221
        %1687 = vmatpush.bf16.msra.mxu0 %v1205
        %1688 = vmatpush.bf16.msra.mxu0 %v1189
        %1689 = vmatpush.bf16.msra.mxu0 %v1173
        %1690 = vmatpush.bf16.msra.mxu0 %v1157
        %1691 = vmatpush.bf16.msra.mxu0 %v1141
        %1692 = vmatpush.bf16.msra.mxu0 %v1125
        %1693 = vmatmul.bf16.gmra.mxu0 %v658
        %v1694 = vpop.f32.mrf.mxu0
        %v1695 = vadd.f32 %v653, %v1694
        %v1696 = vpop.f32.mrf.mxu0
        %1697 = vdwg.mxu0
        %1698 = vmatpush.bf16.msra.mxu0 0
        %1699 = vmatpush.bf16.msra.mxu0 0
        %1700 = vmatpush.bf16.msra.mxu0 0
        %1701 = vmatpush.bf16.msra.mxu0 0
        %1702 = vmatpush.bf16.msra.mxu0 0
        %1703 = vmatpush.bf16.msra.mxu0 0
        %1704 = vmatpush.bf16.msra.mxu0 %v1454
        %1705 = vmatpush.bf16.msra.mxu0 %v1253
        %1706 = vmatmul.bf16.gmra.mxu0 %v1423
        %v1707 = vpop.f32.mrf.mxu0
        %v1708 = vadd.f32 %v1695, %v1707
        %v1709 = vpop.f32.mrf.mxu0
        %1710 = vdwg.mxu0
        %1711 = vmatpush.bf16.msra.mxu0 %v1238
        %1712 = vmatpush.bf16.msra.mxu0 %v1222
        %1713 = vmatpush.bf16.msra.mxu0 %v1206
        %1714 = vmatpush.bf16.msra.mxu0 %v1190
        %1715 = vmatpush.bf16.msra.mxu0 %v1174
        %1716 = vmatpush.bf16.msra.mxu0 %v1158
        %1717 = vmatpush.bf16.msra.mxu0 %v1142
        %1718 = vmatpush.bf16.msra.mxu0 %v1126
        %1719 = vmatmul.bf16.gmra.mxu0 %v658
        %v1720 = vpop.f32.mrf.mxu0
        %v1721 = vadd.f32 %v653, %v1720
        %v1722 = vpop.f32.mrf.mxu0
        %1723 = vdwg.mxu0
        %1724 = vmatpush.bf16.msra.mxu0 0
        %1725 = vmatpush.bf16.msra.mxu0 0
        %1726 = vmatpush.bf16.msra.mxu0 0
        %1727 = vmatpush.bf16.msra.mxu0 0
        %1728 = vmatpush.bf16.msra.mxu0 0
        %1729 = vmatpush.bf16.msra.mxu0 0
        %1730 = vmatpush.bf16.msra.mxu0 %v1457
        %1731 = vmatpush.bf16.msra.mxu0 %v1254
        %1732 = vmatmul.bf16.gmra.mxu0 %v1423
        %v1733 = vpop.f32.mrf.mxu0
        %v1734 = vadd.f32 %v1721, %v1733
        %v1735 = vpop.f32.mrf.mxu0
        %1736 = vdwg.mxu0
        %1737 = vmatpush.bf16.msra.mxu0 %v1239
        %1738 = vmatpush.bf16.msra.mxu0 %v1223
        %1739 = vmatpush.bf16.msra.mxu0 %v1207
        %1740 = vmatpush.bf16.msra.mxu0 %v1191
        %1741 = vmatpush.bf16.msra.mxu0 %v1175
        %1742 = vmatpush.bf16.msra.mxu0 %v1159
        %1743 = vmatpush.bf16.msra.mxu0 %v1143
        %1744 = vmatpush.bf16.msra.mxu0 %v1127
        %1745 = vmatmul.bf16.gmra.mxu0 %v658
        %v1746 = vpop.f32.mrf.mxu0
        %v1747 = vadd.f32 %v653, %v1746
        %v1748 = vpop.f32.mrf.mxu0
        %1749 = vdwg.mxu0
        %1750 = vmatpush.bf16.msra.mxu0 0
        %1751 = vmatpush.bf16.msra.mxu0 0
        %1752 = vmatpush.bf16.msra.mxu0 0
        %1753 = vmatpush.bf16.msra.mxu0 0
        %1754 = vmatpush.bf16.msra.mxu0 0
        %1755 = vmatpush.bf16.msra.mxu0 0
        %1756 = vmatpush.bf16.msra.mxu0 %v1460
        %1757 = vmatpush.bf16.msra.mxu0 %v1255
        %1758 = vmatmul.bf16.gmra.mxu0 %v1423
        %v1759 = vpop.f32.mrf.mxu0
        %v1760 = vadd.f32 %v1747, %v1759
        %v1761 = vpop.f32.mrf.mxu0
        %1762 = vdwg.mxu0
        %1763 = vmatpush.bf16.msra.mxu0 %v1240
        %1764 = vmatpush.bf16.msra.mxu0 %v1224
        %1765 = vmatpush.bf16.msra.mxu0 %v1208
        %1766 = vmatpush.bf16.msra.mxu0 %v1192
        %1767 = vmatpush.bf16.msra.mxu0 %v1176
        %1768 = vmatpush.bf16.msra.mxu0 %v1160
        %1769 = vmatpush.bf16.msra.mxu0 %v1144
        %1770 = vmatpush.bf16.msra.mxu0 %v1128
        %1771 = vmatmul.bf16.gmra.mxu0 %v658
        %v1772 = vpop.f32.mrf.mxu0
        %v1773 = vadd.f32 %v653, %v1772
        %v1774 = vpop.f32.mrf.mxu0
        %1775 = vdwg.mxu0
        %1776 = vmatpush.bf16.msra.mxu0 0
        %1777 = vmatpush.bf16.msra.mxu0 0
        %1778 = vmatpush.bf16.msra.mxu0 0
        %1779 = vmatpush.bf16.msra.mxu0 0
        %1780 = vmatpush.bf16.msra.mxu0 0
        %1781 = vmatpush.bf16.msra.mxu0 0
        %1782 = vmatpush.bf16.msra.mxu0 %v1463
        %1783 = vmatpush.bf16.msra.mxu0 %v1256
        %1784 = vmatmul.bf16.gmra.mxu0 %v1423
        %v1785 = vpop.f32.mrf.mxu0
        %v1786 = vadd.f32 %v1773, %v1785
        %v1787 = vpop.f32.mrf.mxu0
        %1788 = vdwg.mxu0
        %1789 = vmatpush.bf16.msra.mxu0 %v1241
        %1790 = vmatpush.bf16.msra.mxu0 %v1225
        %1791 = vmatpush.bf16.msra.mxu0 %v1209
        %1792 = vmatpush.bf16.msra.mxu0 %v1193
        %1793 = vmatpush.bf16.msra.mxu0 %v1177
        %1794 = vmatpush.bf16.msra.mxu0 %v1161
        %1795 = vmatpush.bf16.msra.mxu0 %v1145
        %1796 = vmatpush.bf16.msra.mxu0 %v1129
        %1797 = vmatmul.bf16.gmra.mxu0 %v658
        %v1798 = vpop.f32.mrf.mxu0
        %v1799 = vadd.f32 %v653, %v1798
        %v1800 = vpop.f32.mrf.mxu0
        %1801 = vdwg.mxu0
        %1802 = vmatpush.bf16.msra.mxu0 0
        %1803 = vmatpush.bf16.msra.mxu0 0
        %1804 = vmatpush.bf16.msra.mxu0 0
        %1805 = vmatpush.bf16.msra.mxu0 0
        %1806 = vmatpush.bf16.msra.mxu0 0
        %1807 = vmatpush.bf16.msra.mxu0 0
        %1808 = vmatpush.bf16.msra.mxu0 %v1466
        %1809 = vmatpush.bf16.msra.mxu0 %v1257
        %1810 = vmatmul.bf16.gmra.mxu0 %v1423
        %v1811 = vpop.f32.mrf.mxu0
        %v1812 = vadd.f32 %v1799, %v1811
        %v1813 = vpop.f32.mrf.mxu0
        %1814 = vdwg.mxu0
        %1815 = vmatpush.bf16.msra.mxu0 %v1242
        %1816 = vmatpush.bf16.msra.mxu0 %v1226
        %1817 = vmatpush.bf16.msra.mxu0 %v1210
        %1818 = vmatpush.bf16.msra.mxu0 %v1194
        %1819 = vmatpush.bf16.msra.mxu0 %v1178
        %1820 = vmatpush.bf16.msra.mxu0 %v1162
        %1821 = vmatpush.bf16.msra.mxu0 %v1146
        %1822 = vmatpush.bf16.msra.mxu0 %v1130
        %1823 = vmatmul.bf16.gmra.mxu0 %v658
        %v1824 = vpop.f32.mrf.mxu0
        %v1825 = vadd.f32 %v653, %v1824
        %v1826 = vpop.f32.mrf.mxu0
        %1827 = vdwg.mxu0
        %1828 = vmatpush.bf16.msra.mxu0 0
        %1829 = vmatpush.bf16.msra.mxu0 0
        %1830 = vmatpush.bf16.msra.mxu0 0
        %1831 = vmatpush.bf16.msra.mxu0 0
        %1832 = vmatpush.bf16.msra.mxu0 0
        %1833 = vmatpush.bf16.msra.mxu0 0
        %1834 = vmatpush.bf16.msra.mxu0 %v1469
        %1835 = vmatpush.bf16.msra.mxu0 %v1258
        %1836 = vmatmul.bf16.gmra.mxu0 %v1423
        %v1837 = vpop.f32.mrf.mxu0
        %v1838 = vadd.f32 %v1825, %v1837
        %v1839 = vpop.f32.mrf.mxu0
        %1840 = vdwg.mxu0
        %1841 = vmatpush.bf16.msra.mxu0 %v1243
        %1842 = vmatpush.bf16.msra.mxu0 %v1227
        %1843 = vmatpush.bf16.msra.mxu0 %v1211
        %1844 = vmatpush.bf16.msra.mxu0 %v1195
        %1845 = vmatpush.bf16.msra.mxu0 %v1179
        %1846 = vmatpush.bf16.msra.mxu0 %v1163
        %1847 = vmatpush.bf16.msra.mxu0 %v1147
        %1848 = vmatpush.bf16.msra.mxu0 %v1131
        %1849 = vmatmul.bf16.gmra.mxu0 %v658
        %v1850 = vpop.f32.mrf.mxu0
        %v1851 = vadd.f32 %v653, %v1850
        %v1852 = vpop.f32.mrf.mxu0
        %1853 = vdwg.mxu0
        %1854 = vmatpush.bf16.msra.mxu0 0
        %1855 = vmatpush.bf16.msra.mxu0 0
        %1856 = vmatpush.bf16.msra.mxu0 0
        %1857 = vmatpush.bf16.msra.mxu0 0
        %1858 = vmatpush.bf16.msra.mxu0 0
        %1859 = vmatpush.bf16.msra.mxu0 0
        %1860 = vmatpush.bf16.msra.mxu0 %v1472
        %1861 = vmatpush.bf16.msra.mxu0 %v1259
        %1862 = vmatmul.bf16.gmra.mxu0 %v1423
        %v1863 = vpop.f32.mrf.mxu0
        %v1864 = vadd.f32 %v1851, %v1863
        %v1865 = vpop.f32.mrf.mxu0
        %1866 = vdwg.mxu0
        %1867 = vmatpush.bf16.msra.mxu0 %v1244
        %1868 = vmatpush.bf16.msra.mxu0 %v1228
        %1869 = vmatpush.bf16.msra.mxu0 %v1212
        %1870 = vmatpush.bf16.msra.mxu0 %v1196
        %1871 = vmatpush.bf16.msra.mxu0 %v1180
        %1872 = vmatpush.bf16.msra.mxu0 %v1164
        %1873 = vmatpush.bf16.msra.mxu0 %v1148
        %1874 = vmatpush.bf16.msra.mxu0 %v1132
        %1875 = vmatmul.bf16.gmra.mxu0 %v658
        %v1876 = vpop.f32.mrf.mxu0
        %v1877 = vadd.f32 %v653, %v1876
        %v1878 = vpop.f32.mrf.mxu0
        %1879 = vdwg.mxu0
        %1880 = vmatpush.bf16.msra.mxu0 0
        %1881 = vmatpush.bf16.msra.mxu0 0
        %1882 = vmatpush.bf16.msra.mxu0 0
        %1883 = vmatpush.bf16.msra.mxu0 0
        %1884 = vmatpush.bf16.msra.mxu0 0
        %1885 = vmatpush.bf16.msra.mxu0 0
        %1886 = vmatpush.bf16.msra.mxu0 %v1475
        %1887 = vmatpush.bf16.msra.mxu0 %v1260
        %1888 = vmatmul.bf16.gmra.mxu0 %v1423
        %v1889 = vpop.f32.mrf.mxu0
        %v1890 = vadd.f32 %v1877, %v1889
        %v1891 = vpop.f32.mrf.mxu0
        %1892 = vdwg.mxu0
        %v1893 = vmax.f32 %v1500, 0.0
        %v1894 = vmax.f32 %v1526, 0.0
        %v1895 = vmax.f32 %v1552, 0.0
        %v1896 = vmax.f32 %v1578, 0.0
        %v1897 = vmax.f32 %v1604, 0.0
        %v1898 = vmax.f32 %v1630, 0.0
        %v1899 = vmax.f32 %v1656, 0.0
        %v1900 = vmax.f32 %v1682, 0.0
        %v1901 = vmax.f32 %v1708, 0.0
        %v1902 = vmax.f32 %v1734, 0.0
        %v1903 = vmax.f32 %v1760, 0.0
        %v1904 = vmax.f32 %v1786, 0.0
        %v1905 = vmax.f32 %v1812, 0.0
        %v1906 = vmax.f32 %v1838, 0.0
        %v1907 = vmax.f32 %v1864, 0.0
        %v1908 = vmax.f32 %v1890, 0.0
        %1909 = vst [vmem:[%s493] sm:$0xff] %v1893
        %1910 = vst [vmem:[%s493 + $0x8] sm:$0xff] %v1894
        %1911 = vst [vmem:[%s493 + $0x10] sm:$0xff] %v1895
        %1912 = vst [vmem:[%s493 + $0x18] sm:$0xff] %v1896
        %1913 = vst [vmem:[%s493 + $0x20] sm:$0xff] %v1897
        %1914 = vst [vmem:[%s493 + $0x28] sm:$0xff] %v1898
        %1915 = vst [vmem:[%s493 + $0x30] sm:$0xff] %v1899
        %1916 = vst [vmem:[%s493 + $0x38] sm:$0xff] %v1900
        %1917 = vst [vmem:[%s493 + $0x40] sm:$0xff] %v1901
        %1918 = vst [vmem:[%s493 + $0x48] sm:$0xff] %v1902
        %1919 = vst [vmem:[%s493 + $0x50] sm:$0xff] %v1903
        %1920 = vst [vmem:[%s493 + $0x58] sm:$0xff] %v1904
        %1921 = vst [vmem:[%s493 + $0x60] sm:$0xff] %v1905
        %1922 = vst [vmem:[%s493 + $0x68] sm:$0xff] %v1906
        %1923 = vst [vmem:[%s493 + $0x70] sm:$0xff] %v1907
        %1924 = vst [vmem:[%s493 + $0x78] sm:$0xff] %v1908
        %s1925 = smul.u32 16, %s14
        %p1926 = scmp.lt.s32.totalorder %s1925, 63
        %s1927 = scalar_select %p1926, %s1925, 63
        %s1928 = smul.addr %s1927, 8
        %s1929 = scalar_lea.vmem %s3, %s1928
        // Predicated region
        $region56: #{_lambda_.19} parent=50 // pred_check
          %p1930 = pneg %p100
        $region57: #{_lambda_.19} parent=50 // pred_check_branch
          %1932 = sbr.rel (%p1930) target = $region59
        $region58: #{_lambda_.19} parent=50 // pred_region
          %s1933 = smul.u32 16, %s14
        $region59: #{_lambda_.19} parent=50 // pred_fallthru
          _
      $region51: #{_lambda_.19} parent=5 // pred_fallthru
        _
      %p1934 = scmp.le.s32.totalorder 2, %s9
      // Predicated region
      $region60: #{_lambda_.19} parent=5 // pred_check
        %p1935 = pneg %p1934
      $region61: #{_lambda_.19} parent=5 // pred_check_branch
        %1937 = sbr.rel (%p1935) target = $region63
      $region62: #{_lambda_.19} parent=5 // pred_region
        %s1938 = ssub.s32 %s9, 2
        // Predicated region
        $region64: #{_lambda_.19} parent=62 // pred_check
          %p1939 = pneg %p106
        $region65: #{_lambda_.19} parent=62 // pred_check_branch
          %1941 = sbr.rel (%p1939) target = $region67
        $region66: #{_lambda_.19} parent=62 // pred_region
          %s1942 = smul.u32 16, %s15
          %p1943 = scmp.lt.s32.totalorder %s1942, 63
          %s1944 = scalar_select %p1943, %s1942, 63
          %s1945 = smul.addr %s1944, 8
          %s1946 = scalar_lea.vmem %s3, %s1945
        $region67: #{_lambda_.19} parent=62 // pred_fallthru
          _
      $region63: #{_lambda_.19} parent=5 // pred_fallthru
        _
    $region6: #{_lambda_.19} parent=1 // loop_footer
      %s13 = sadd.s32 1, %s9
    $region7: #{_lambda_.19} parent=1 // loop_footer_branch
      %8 = sbr.rel target = $region3
    $region8: #{_lambda_.19} parent=1 // loop_exit
      _

// kernel: _lambda_.20
$region0: #{_lambda_.20}
  #allocation0 [shape = 'u32[]', space=smem, size = 0x4, offset = 0x4, fixed_abs, tag = 'smem constant byte address 0x4 - core index']
  #allocation1 [shape = 'u32[72,128]{1,0:T(1,128)}', space=vmem, size = 0x9000, scoped, tag = 'internal scratch']
  %s0 = inlined_call_operand.vmem [shape: f32[9,128,128], index: 0, kind: input, shape index: {}]
  %s1 = inlined_call_operand.vmem [shape: f32[128,128], index: 1, kind: output, shape index: {}]
  %s2 = sld [smem:[#allocation0]]
  $region75: #{_lambda_.20} parent=0
    _
  %s4 = ssub.s32 1, %s2
  %s5 = scalar_select 0, %s4, %s2
  $region1: #{_lambda_.20} parent=0
    #allocation2 [shape = 'u8[589824]{0}', space=vmem, size = 0x90000, scoped, tag = 'input window, operand 0']
    loop: start=0, step=1, limit=4
    $region2: #{_lambda_.20} parent=1 // loop_pre_header
      _
    $region3: #{_lambda_.20} parent=1 // loop_header
      %s7 = sphi 0, %s11
      %p8 = scmp.ge.s32.totalorder %s7, 4
      %s17 = sphi 0, %s19
      %s20 = sphi 0, %s17
      %s21 = sphi 0, %s20
      %s37 = sphi 0, %s21
      %s43 = sphi 0, %s45
      %s46 = sphi 0, %s43
      %s47 = sphi 0, %s46
      %s63 = sphi 0, %s47
    $region4: #{_lambda_.20} parent=1 // loop_header_branch
      %10 = sbr.rel (%p8) target = $region8
    $region5: #{_lambda_.20} parent=1 // loop_body
      %s12 = ssub.s32 %s7, 1
      %s13 = ssub.s32 %s7, 2
      %s14 = sadd.s32 %s7, 1
      %s15 = ssub.s32 %s7, %s14
      %p16 = scmp.eq.s32.totalorder %s15, 0
      %s18 = sadd.s32 %s17, 1
      %s19 = scalar_select %p16, %s17, %s18
      %p22 = pneg %p16
      %p23 = scmp.eq.s32.totalorder %s7, 1
      %p24 = por %p22, %p23
      %p25 = scmp.ne.s32.totalorder %s17, %s20
      %p26 = scmp.eq.s32.totalorder %s7, 0
      %p27 = por %p25, %p26
      %p28 = scmp.ne.s32.totalorder %s17, %s20
      %p29 = scmp.eq.s32.totalorder %s12, 1
      %p30 = por %p28, %p29
      %p31 = scmp.ne.s32.totalorder %s20, %s21
      %p32 = scmp.eq.s32.totalorder %s12, 0
      %p33 = por %p31, %p32
      %p34 = scmp.ne.s32.totalorder %s20, %s21
      %p35 = scmp.eq.s32.totalorder %s13, 1
      %p36 = por %p34, %p35
      %p38 = scmp.ne.s32.totalorder %s21, %s37
      %p39 = scmp.eq.s32.totalorder %s13, 0
      %p40 = por %p38, %p39
      %s41 = ssub.s32 %s7, %s14
      %p42 = scmp.eq.s32.totalorder %s41, 0
      %s44 = sadd.s32 %s43, 1
      %s45 = scalar_select %p42, %s43, %s44
      %p48 = pneg %p42
      %p49 = scmp.eq.s32.totalorder %s7, 1
      %p50 = por %p48, %p49
      %p51 = scmp.ne.s32.totalorder %s43, %s46
      %p52 = scmp.eq.s32.totalorder %s7, 0
      %p53 = por %p51, %p52
      %p54 = scmp.ne.s32.totalorder %s43, %s46
      %p55 = scmp.eq.s32.totalorder %s12, 1
      %p56 = por %p54, %p55
      %p57 = scmp.ne.s32.totalorder %s46, %s47
      %p58 = scmp.eq.s32.totalorder %s12, 0
      %p59 = por %p57, %p58
      %p60 = scmp.ne.s32.totalorder %s46, %s47
      %p61 = scmp.eq.s32.totalorder %s13, 1
      %p62 = por %p60, %p61
      %p64 = scmp.ne.s32.totalorder %s47, %s63
      %p65 = scmp.eq.s32.totalorder %s13, 0
      %p66 = por %p64, %p65
      %p67 = scmp.le.s32.totalorder 1, %s7
      %p68 = scmp.lt.s32.totalorder %s7, 3
      %p69 = pnand %p67, %p68
      %p70 = pneg %p69
      // Predicated region
      $region9: #{_lambda_.20} parent=5 // pred_check
        _
      $region10: #{_lambda_.20} parent=5 // pred_check_branch
        %72 = sbr.rel (%p69) target = $region12
      $region11: #{_lambda_.20} parent=5 // pred_region
        %s73 = ssub.s32 %s7, 1
      $region12: #{_lambda_.20} parent=5 // pred_fallthru
        _
      %p74 = scmp.lt.s32.totalorder %s7, 2
      // Predicated region
      $region13: #{_lambda_.20} parent=5 // pred_check
        %p75 = pneg %p74
      $region14: #{_lambda_.20} parent=5 // pred_check_branch
        %77 = sbr.rel (%p75) target = $region16
      $region15: #{_lambda_.20} parent=5 // pred_region
        // Predicated region
        $region17: #{_lambda_.20} parent=15 // pred_check
          %p78 = pneg %p27
        $region18: #{_lambda_.20} parent=15 // pred_check_branch
          %80 = sbr.rel (%p78) target = $region20
        $region19: #{_lambda_.20} parent=15 // pred_region
          %s81 = sand.u32 %s17, 1
          %s82 = sand.u32 %s17, 1
          %s83 = smul.addr %s82, 576
          %s84 = scalar_lea.vmem [#allocation2], %s83
          %s85 = smul.u32 8, %s7
          %s86 = smul.addr %s85, 8
          %s87 = scalar_lea.vmem %s0, %s86
          // Predicated region
          $region21: #{_lambda_.20} parent=19 // pred_check
            _
          $region22: #{_lambda_.20} parent=19 // pred_check_branch
            %89 = sbr.rel (0) target = $region24
          $region23: #{_lambda_.20} parent=19 // pred_region
            // Predicated region
            $region25: #{_lambda_.20} parent=23 // pred_check
              _
            $region26: #{_lambda_.20} parent=23 // pred_check_branch
              %91 = sbr.rel (0) target = $region28
            $region27: #{_lambda_.20} parent=23 // pred_region
              // Predicated region
              $region40: #{_lambda_.20} parent=27 // pred_check
                _
              $region41: #{_lambda_.20} parent=27 // pred_check_branch
                %249 = sbr.rel (0) target = $region43
              $region42: #{_lambda_.20} parent=27 // pred_region
                loop: start=0, step=1, limit=1
                $region44: #{_lambda_.20} parent=42 // loop_pre_header
                  _
                $region45: #{_lambda_.20} parent=42 // loop_header
                  %s251 = sphi 0, %s255
                  %p252 = scmp.ge.s32.totalorder %s251, 1
                  %s256 = sphi %s87, %s87
                  %s257 = sphi %s84, %s84
                $region46: #{_lambda_.20} parent=42 // loop_header_branch
                  %254 = sbr.rel (%p252) target = $region50
                $region47: #{_lambda_.20} parent=42 // loop_body
                  %v258 = vld [vmem:[%s256] sm:$0xff]
                  %259 = vst [vmem:[%s257] sm:$0xff] %v258
                  %v260 = vld [vmem:[%s256 + $0x8] sm:$0xff]
                  %261 = vst [vmem:[%s257 + $0x8] sm:$0xff] %v260
                  %v262 = vld [vmem:[%s256 + $0x10] sm:$0xff]
                  %263 = vst [vmem:[%s257 + $0x10] sm:$0xff] %v262
                  %v264 = vld [vmem:[%s256 + $0x18] sm:$0xff]
                  %265 = vst [vmem:[%s257 + $0x18] sm:$0xff] %v264
                  %v266 = vld [vmem:[%s256 + $0x20] sm:$0xff]
                  %267 = vst [vmem:[%s257 + $0x20] sm:$0xff] %v266
                  %v268 = vld [vmem:[%s256 + $0x28] sm:$0xff]
                  %269 = vst [vmem:[%s257 + $0x28] sm:$0xff] %v268
                  %v270 = vld [vmem:[%s256 + $0x30] sm:$0xff]
                  %271 = vst [vmem:[%s257 + $0x30] sm:$0xff] %v270
                  %v272 = vld [vmem:[%s256 + $0x38] sm:$0xff]
                  %273 = vst [vmem:[%s257 + $0x38] sm:$0xff] %v272
                  %v274 = vld [vmem:[%s256 + $0x80] sm:$0xff]
                  %275 = vst [vmem:[%s257 + $0x40] sm:$0xff] %v274
                  %v276 = vld [vmem:[%s256 + $0x88] sm:$0xff]
                  %277 = vst [vmem:[%s257 + $0x48] sm:$0xff] %v276
                  %v278 = vld [vmem:[%s256 + $0x90] sm:$0xff]
                  %279 = vst [vmem:[%s257 + $0x50] sm:$0xff] %v278
                  %v280 = vld [vmem:[%s256 + $0x98] sm:$0xff]
                  %281 = vst [vmem:[%s257 + $0x58] sm:$0xff] %v280
                  %v282 = vld [vmem:[%s256 + $0xa0] sm:$0xff]
                  %283 = vst [vmem:[%s257 + $0x60] sm:$0xff] %v282
                  %v284 = vld [vmem:[%s256 + $0xa8] sm:$0xff]
                  %285 = vst [vmem:[%s257 + $0x68] sm:$0xff] %v284
                  %v286 = vld [vmem:[%s256 + $0xb0] sm:$0xff]
                  %287 = vst [vmem:[%s257 + $0x70] sm:$0xff] %v286
                  %v288 = vld [vmem:[%s256 + $0xb8] sm:$0xff]
                  %289 = vst [vmem:[%s257 + $0x78] sm:$0xff] %v288
                  %v290 = vld [vmem:[%s256 + $0x100] sm:$0xff]
                  %291 = vst [vmem:[%s257 + $0x80] sm:$0xff] %v290
                  %v292 = vld [vmem:[%s256 + $0x108] sm:$0xff]
                  %293 = vst [vmem:[%s257 + $0x88] sm:$0xff] %v292
                  %v294 = vld [vmem:[%s256 + $0x110] sm:$0xff]
                  %295 = vst [vmem:[%s257 + $0x90] sm:$0xff] %v294
                  %v296 = vld [vmem:[%s256 + $0x118] sm:$0xff]
                  %297 = vst [vmem:[%s257 + $0x98] sm:$0xff] %v296
                  %v298 = vld [vmem:[%s256 + $0x120] sm:$0xff]
                  %299 = vst [vmem:[%s257 + $0xa0] sm:$0xff] %v298
                  %v300 = vld [vmem:[%s256 + $0x128] sm:$0xff]
                  %301 = vst [vmem:[%s257 + $0xa8] sm:$0xff] %v300
                  %v302 = vld [vmem:[%s256 + $0x130] sm:$0xff]
                  %303 = vst [vmem:[%s257 + $0xb0] sm:$0xff] %v302
                  %v304 = vld [vmem:[%s256 + $0x138] sm:$0xff]
                  %305 = vst [vmem:[%s257 + $0xb8] sm:$0xff] %v304
                  %v306 = vld [vmem:[%s256 + $0x180] sm:$0xff]
                  %307 = vst [vmem:[%s257 + $0xc0] sm:$0xff] %v306
                  %v308 = vld [vmem:[%s256 + $0x188] sm:$0xff]
                  %309 = vst [vmem:[%s257 + $0xc8] sm:$0xff] %v308
                  %v310 = vld [vmem:[%s256 + $0x190] sm:$0xff]
                  %311 = vst [vmem:[%s257 + $0xd0] sm:$0xff] %v310
                  %v312 = vld [vmem:[%s256 + $0x198] sm:$0xff]
                  %313 = vst [vmem:[%s257 + $0xd8] sm:$0xff] %v312
                  %v314 = vld [vmem:[%s256 + $0x1a0] sm:$0xff]
                  %315 = vst [vmem:[%s257 + $0xe0] sm:$0xff] %v314
                  %v316 = vld [vmem:[%s256 + $0x1a8] sm:$0xff]
                  %317 = vst [vmem:[%s257 + $0xe8] sm:$0xff] %v316
                  %v318 = vld [vmem:[%s256 + $0x1b0] sm:$0xff]
                  %319 = vst [vmem:[%s257 + $0xf0] sm:$0xff] %v318
                  %v320 = vld [vmem:[%s256 + $0x1b8] sm:$0xff]
                  %321 = vst [vmem:[%s257 + $0xf8] sm:$0xff] %v320
                  %v322 = vld [vmem:[%s256 + $0x200] sm:$0xff]
                  %323 = vst [vmem:[%s257 + $0x100] sm:$0xff] %v322
                  %v324 = vld [vmem:[%s256 + $0x208] sm:$0xff]
                  %325 = vst [vmem:[%s257 + $0x108] sm:$0xff] %v324
                  %v326 = vld [vmem:[%s256 + $0x210] sm:$0xff]
                  %327 = vst [vmem:[%s257 + $0x110] sm:$0xff] %v326
                  %v328 = vld [vmem:[%s256 + $0x218] sm:$0xff]
                  %329 = vst [vmem:[%s257 + $0x118] sm:$0xff] %v328
                  %v330 = vld [vmem:[%s256 + $0x220] sm:$0xff]
                  %331 = vst [vmem:[%s257 + $0x120] sm:$0xff] %v330
                  %v332 = vld [vmem:[%s256 + $0x228] sm:$0xff]
                  %333 = vst [vmem:[%s257 + $0x128] sm:$0xff] %v332
                  %v334 = vld [vmem:[%s256 + $0x230] sm:$0xff]
                  %335 = vst [vmem:[%s257 + $0x130] sm:$0xff] %v334
                  %v336 = vld [vmem:[%s256 + $0x238] sm:$0xff]
                  %337 = vst [vmem:[%s257 + $0x138] sm:$0xff] %v336
                  %v338 = vld [vmem:[%s256 + $0x280] sm:$0xff]
                  %339 = vst [vmem:[%s257 + $0x140] sm:$0xff] %v338
                  %v340 = vld [vmem:[%s256 + $0x288] sm:$0xff]
                  %341 = vst [vmem:[%s257 + $0x148] sm:$0xff] %v340
                  %v342 = vld [vmem:[%s256 + $0x290] sm:$0xff]
                  %343 = vst [vmem:[%s257 + $0x150] sm:$0xff] %v342
                  %v344 = vld [vmem:[%s256 + $0x298] sm:$0xff]
                  %345 = vst [vmem:[%s257 + $0x158] sm:$0xff] %v344
                  %v346 = vld [vmem:[%s256 + $0x2a0] sm:$0xff]
                  %347 = vst [vmem:[%s257 + $0x160] sm:$0xff] %v346
                  %v348 = vld [vmem:[%s256 + $0x2a8] sm:$0xff]
                  %349 = vst [vmem:[%s257 + $0x168] sm:$0xff] %v348
                  %v350 = vld [vmem:[%s256 + $0x2b0] sm:$0xff]
                  %351 = vst [vmem:[%s257 + $0x170] sm:$0xff] %v350
                  %v352 = vld [vmem:[%s256 + $0x2b8] sm:$0xff]
                  %353 = vst [vmem:[%s257 + $0x178] sm:$0xff] %v352
                  %v354 = vld [vmem:[%s256 + $0x300] sm:$0xff]
                  %355 = vst [vmem:[%s257 + $0x180] sm:$0xff] %v354
                  %v356 = vld [vmem:[%s256 + $0x308] sm:$0xff]
                  %357 = vst [vmem:[%s257 + $0x188] sm:$0xff] %v356
                  %v358 = vld [vmem:[%s256 + $0x310] sm:$0xff]
                  %359 = vst [vmem:[%s257 + $0x190] sm:$0xff] %v358
                  %v360 = vld [vmem:[%s256 + $0x318] sm:$0xff]
                  %361 = vst [vmem:[%s257 + $0x198] sm:$0xff] %v360
                  %v362 = vld [vmem:[%s256 + $0x320] sm:$0xff]
                  %363 = vst [vmem:[%s257 + $0x1a0] sm:$0xff] %v362
                  %v364 = vld [vmem:[%s256 + $0x328] sm:$0xff]
                  %365 = vst [vmem:[%s257 + $0x1a8] sm:$0xff] %v364
                  %v366 = vld [vmem:[%s256 + $0x330] sm:$0xff]
                  %367 = vst [vmem:[%s257 + $0x1b0] sm:$0xff] %v366
                  %v368 = vld [vmem:[%s256 + $0x338] sm:$0xff]
                  %369 = vst [vmem:[%s257 + $0x1b8] sm:$0xff] %v368
                  %v370 = vld [vmem:[%s256 + $0x380] sm:$0xff]
                  %371 = vst [vmem:[%s257 + $0x1c0] sm:$0xff] %v370
                  %v372 = vld [vmem:[%s256 + $0x388] sm:$0xff]
                  %373 = vst [vmem:[%s257 + $0x1c8] sm:$0xff] %v372
                  %v374 = vld [vmem:[%s256 + $0x390] sm:$0xff]
                  %375 = vst [vmem:[%s257 + $0x1d0] sm:$0xff] %v374
                  %v376 = vld [vmem:[%s256 + $0x398] sm:$0xff]
                  %377 = vst [vmem:[%s257 + $0x1d8] sm:$0xff] %v376
                  %v378 = vld [vmem:[%s256 + $0x3a0] sm:$0xff]
                  %379 = vst [vmem:[%s257 + $0x1e0] sm:$0xff] %v378
                  %v380 = vld [vmem:[%s256 + $0x3a8] sm:$0xff]
                  %381 = vst [vmem:[%s257 + $0x1e8] sm:$0xff] %v380
                  %v382 = vld [vmem:[%s256 + $0x3b0] sm:$0xff]
                  %383 = vst [vmem:[%s257 + $0x1f0] sm:$0xff] %v382
                  %v384 = vld [vmem:[%s256 + $0x3b8] sm:$0xff]
                  %385 = vst [vmem:[%s257 + $0x1f8] sm:$0xff] %v384
                  %v386 = vld [vmem:[%s256 + $0x400] sm:$0xff]
                  %387 = vst [vmem:[%s257 + $0x200] sm:$0xff] %v386
                  %v388 = vld [vmem:[%s256 + $0x408] sm:$0xff]
                  %389 = vst [vmem:[%s257 + $0x208] sm:$0xff] %v388
                  %v390 = vld [vmem:[%s256 + $0x410] sm:$0xff]
                  %391 = vst [vmem:[%s257 + $0x210] sm:$0xff] %v390
                  %v392 = vld [vmem:[%s256 + $0x418] sm:$0xff]
                  %393 = vst [vmem:[%s257 + $0x218] sm:$0xff] %v392
                  %v394 = vld [vmem:[%s256 + $0x420] sm:$0xff]
                  %395 = vst [vmem:[%s257 + $0x220] sm:$0xff] %v394
                  %v396 = vld [vmem:[%s256 + $0x428] sm:$0xff]
                  %397 = vst [vmem:[%s257 + $0x228] sm:$0xff] %v396
                  %v398 = vld [vmem:[%s256 + $0x430] sm:$0xff]
                  %399 = vst [vmem:[%s257 + $0x230] sm:$0xff] %v398
                  %v400 = vld [vmem:[%s256 + $0x438] sm:$0xff]
                  %401 = vst [vmem:[%s257 + $0x238] sm:$0xff] %v400
                $region48: #{_lambda_.20} parent=42 // loop_footer
                  %s255 = sadd.s32 1, %s251
                $region49: #{_lambda_.20} parent=42 // loop_footer_branch
                  %250 = sbr.rel target = $region45
                $region50: #{_lambda_.20} parent=42 // loop_exit
                  _
              $region43: #{_lambda_.20} parent=27 // pred_fallthru
                _
              // Predicated region
              $region51: #{_lambda_.20} parent=27 // pred_check
                _
              $region52: #{_lambda_.20} parent=27 // pred_check_branch
                %403 = sbr.rel target = $region54
              $region53: #{_lambda_.20} parent=27 // pred_region
                _
              $region54: #{_lambda_.20} parent=27 // pred_fallthru
                _
            $region28: #{_lambda_.20} parent=23 // pred_fallthru
              _
            // Predicated region
            $region29: #{_lambda_.20} parent=23 // pred_check
              _
            $region30: #{_lambda_.20} parent=23 // pred_check_branch
              %93 = sbr.rel target = $region32
            $region31: #{_lambda_.20} parent=23 // pred_region
              %s95 = ssub.s32 256, 1
              loop: start=0, step=1, limit=1
              $region33: #{_lambda_.20} parent=31 // loop_pre_header
                _
              $region34: #{_lambda_.20} parent=31 // loop_header
                %s97 = sphi 0, %s101
                %p98 = scmp.ge.s32.totalorder %s97, 1
                %s102 = sphi %s87, %s87
                %s103 = sphi %s84, %s84
              $region35: #{_lambda_.20} parent=31 // loop_header_branch
                %100 = sbr.rel (%p98) target = $region39
              $region36: #{_lambda_.20} parent=31 // loop_body
                %v104 = vld [vmem:[%s102] sm:%s95]
                %105 = vst [vmem:[%s103] sm:%s95] %v104
                %v106 = vld [vmem:[%s102 + $0x8] sm:%s95]
                %107 = vst [vmem:[%s103 + $0x8] sm:%s95] %v106
                %v108 = vld [vmem:[%s102 + $0x10] sm:%s95]
                %109 = vst [vmem:[%s103 + $0x10] sm:%s95] %v108
                %v110 = vld [vmem:[%s102 + $0x18] sm:%s95]
                %111 = vst [vmem:[%s103 + $0x18] sm:%s95] %v110
                %v112 = vld [vmem:[%s102 + $0x20] sm:%s95]
                %113 = vst [vmem:[%s103 + $0x20] sm:%s95] %v112
                %v114 = vld [vmem:[%s102 + $0x28] sm:%s95]
                %115 = vst [vmem:[%s103 + $0x28] sm:%s95] %v114
                %v116 = vld [vmem:[%s102 + $0x30] sm:%s95]
                %117 = vst [vmem:[%s103 + $0x30] sm:%s95] %v116
                %v118 = vld [vmem:[%s102 + $0x38] sm:%s95]
                %119 = vst [vmem:[%s103 + $0x38] sm:%s95] %v118
                %v120 = vld [vmem:[%s102 + $0x80] sm:%s95]
                %121 = vst [vmem:[%s103 + $0x40] sm:%s95] %v120
                %v122 = vld [vmem:[%s102 + $0x88] sm:%s95]
                %123 = vst [vmem:[%s103 + $0x48] sm:%s95] %v122
                %v124 = vld [vmem:[%s102 + $0x90] sm:%s95]
                %125 = vst [vmem:[%s103 + $0x50] sm:%s95] %v124
                %v126 = vld [vmem:[%s102 + $0x98] sm:%s95]
                %127 = vst [vmem:[%s103 + $0x58] sm:%s95] %v126
                %v128 = vld [vmem:[%s102 + $0xa0] sm:%s95]
                %129 = vst [vmem:[%s103 + $0x60] sm:%s95] %v128
                %v130 = vld [vmem:[%s102 + $0xa8] sm:%s95]
                %131 = vst [vmem:[%s103 + $0x68] sm:%s95] %v130
                %v132 = vld [vmem:[%s102 + $0xb0] sm:%s95]
                %133 = vst [vmem:[%s103 + $0x70] sm:%s95] %v132
                %v134 = vld [vmem:[%s102 + $0xb8] sm:%s95]
                %135 = vst [vmem:[%s103 + $0x78] sm:%s95] %v134
                %v136 = vld [vmem:[%s102 + $0x100] sm:%s95]
                %137 = vst [vmem:[%s103 + $0x80] sm:%s95] %v136
                %v138 = vld [vmem:[%s102 + $0x108] sm:%s95]
                %139 = vst [vmem:[%s103 + $0x88] sm:%s95] %v138
                %v140 = vld [vmem:[%s102 + $0x110] sm:%s95]
                %141 = vst [vmem:[%s103 + $0x90] sm:%s95] %v140
                %v142 = vld [vmem:[%s102 + $0x118] sm:%s95]
                %143 = vst [vmem:[%s103 + $0x98] sm:%s95] %v142
                %v144 = vld [vmem:[%s102 + $0x120] sm:%s95]
                %145 = vst [vmem:[%s103 + $0xa0] sm:%s95] %v144
                %v146 = vld [vmem:[%s102 + $0x128] sm:%s95]
                %147 = vst [vmem:[%s103 + $0xa8] sm:%s95] %v146
                %v148 = vld [vmem:[%s102 + $0x130] sm:%s95]
                %149 = vst [vmem:[%s103 + $0xb0] sm:%s95] %v148
                %v150 = vld [vmem:[%s102 + $0x138] sm:%s95]
                %151 = vst [vmem:[%s103 + $0xb8] sm:%s95] %v150
                %v152 = vld [vmem:[%s102 + $0x180] sm:%s95]
                %153 = vst [vmem:[%s103 + $0xc0] sm:%s95] %v152
                %v154 = vld [vmem:[%s102 + $0x188] sm:%s95]
                %155 = vst [vmem:[%s103 + $0xc8] sm:%s95] %v154
                %v156 = vld [vmem:[%s102 + $0x190] sm:%s95]
                %157 = vst [vmem:[%s103 + $0xd0] sm:%s95] %v156
                %v158 = vld [vmem:[%s102 + $0x198] sm:%s95]
                %159 = vst [vmem:[%s103 + $0xd8] sm:%s95] %v158
                %v160 = vld [vmem:[%s102 + $0x1a0] sm:%s95]
                %161 = vst [vmem:[%s103 + $0xe0] sm:%s95] %v160
                %v162 = vld [vmem:[%s102 + $0x1a8] sm:%s95]
                %163 = vst [vmem:[%s103 + $0xe8] sm:%s95] %v162
                %v164 = vld [vmem:[%s102 + $0x1b0] sm:%s95]
                %165 = vst [vmem:[%s103 + $0xf0] sm:%s95] %v164
                %v166 = vld [vmem:[%s102 + $0x1b8] sm:%s95]
                %167 = vst [vmem:[%s103 + $0xf8] sm:%s95] %v166
                %v168 = vld [vmem:[%s102 + $0x200] sm:%s95]
                %169 = vst [vmem:[%s103 + $0x100] sm:%s95] %v168
                %v170 = vld [vmem:[%s102 + $0x208] sm:%s95]
                %171 = vst [vmem:[%s103 + $0x108] sm:%s95] %v170
                %v172 = vld [vmem:[%s102 + $0x210] sm:%s95]
                %173 = vst [vmem:[%s103 + $0x110] sm:%s95] %v172
                %v174 = vld [vmem:[%s102 + $0x218] sm:%s95]
                %175 = vst [vmem:[%s103 + $0x118] sm:%s95] %v174
                %v176 = vld [vmem:[%s102 + $0x220] sm:%s95]
                %177 = vst [vmem:[%s103 + $0x120] sm:%s95] %v176
                %v178 = vld [vmem:[%s102 + $0x228] sm:%s95]
                %179 = vst [vmem:[%s103 + $0x128] sm:%s95] %v178
                %v180 = vld [vmem:[%s102 + $0x230] sm:%s95]
                %181 = vst [vmem:[%s103 + $0x130] sm:%s95] %v180
                %v182 = vld [vmem:[%s102 + $0x238] sm:%s95]
                %183 = vst [vmem:[%s103 + $0x138] sm:%s95] %v182
                %v184 = vld [vmem:[%s102 + $0x280] sm:%s95]
                %185 = vst [vmem:[%s103 + $0x140] sm:%s95] %v184
                %v186 = vld [vmem:[%s102 + $0x288] sm:%s95]
                %187 = vst [vmem:[%s103 + $0x148] sm:%s95] %v186
                %v188 = vld [vmem:[%s102 + $0x290] sm:%s95]
                %189 = vst [vmem:[%s103 + $0x150] sm:%s95] %v188
                %v190 = vld [vmem:[%s102 + $0x298] sm:%s95]
                %191 = vst [vmem:[%s103 + $0x158] sm:%s95] %v190
                %v192 = vld [vmem:[%s102 + $0x2a0] sm:%s95]
                %193 = vst [vmem:[%s103 + $0x160] sm:%s95] %v192
                %v194 = vld [vmem:[%s102 + $0x2a8] sm:%s95]
                %195 = vst [vmem:[%s103 + $0x168] sm:%s95] %v194
                %v196 = vld [vmem:[%s102 + $0x2b0] sm:%s95]
                %197 = vst [vmem:[%s103 + $0x170] sm:%s95] %v196
                %v198 = vld [vmem:[%s102 + $0x2b8] sm:%s95]
                %199 = vst [vmem:[%s103 + $0x178] sm:%s95] %v198
                %v200 = vld [vmem:[%s102 + $0x300] sm:%s95]
                %201 = vst [vmem:[%s103 + $0x180] sm:%s95] %v200
                %v202 = vld [vmem:[%s102 + $0x308] sm:%s95]
                %203 = vst [vmem:[%s103 + $0x188] sm:%s95] %v202
                %v204 = vld [vmem:[%s102 + $0x310] sm:%s95]
                %205 = vst [vmem:[%s103 + $0x190] sm:%s95] %v204
                %v206 = vld [vmem:[%s102 + $0x318] sm:%s95]
                %207 = vst [vmem:[%s103 + $0x198] sm:%s95] %v206
                %v208 = vld [vmem:[%s102 + $0x320] sm:%s95]
                %209 = vst [vmem:[%s103 + $0x1a0] sm:%s95] %v208
                %v210 = vld [vmem:[%s102 + $0x328] sm:%s95]
                %211 = vst [vmem:[%s103 + $0x1a8] sm:%s95] %v210
                %v212 = vld [vmem:[%s102 + $0x330] sm:%s95]
                %213 = vst [vmem:[%s103 + $0x1b0] sm:%s95] %v212
                %v214 = vld [vmem:[%s102 + $0x338] sm:%s95]
                %215 = vst [vmem:[%s103 + $0x1b8] sm:%s95] %v214
                %v216 = vld [vmem:[%s102 + $0x380] sm:%s95]
                %217 = vst [vmem:[%s103 + $0x1c0] sm:%s95] %v216
                %v218 = vld [vmem:[%s102 + $0x388] sm:%s95]
                %219 = vst [vmem:[%s103 + $0x1c8] sm:%s95] %v218
                %v220 = vld [vmem:[%s102 + $0x390] sm:%s95]
                %221 = vst [vmem:[%s103 + $0x1d0] sm:%s95] %v220
                %v222 = vld [vmem:[%s102 + $0x398] sm:%s95]
                %223 = vst [vmem:[%s103 + $0x1d8] sm:%s95] %v222
                %v224 = vld [vmem:[%s102 + $0x3a0] sm:%s95]
                %225 = vst [vmem:[%s103 + $0x1e0] sm:%s95] %v224
                %v226 = vld [vmem:[%s102 + $0x3a8] sm:%s95]
                %227 = vst [vmem:[%s103 + $0x1e8] sm:%s95] %v226
                %v228 = vld [vmem:[%s102 + $0x3b0] sm:%s95]
                %229 = vst [vmem:[%s103 + $0x1f0] sm:%s95] %v228
                %v230 = vld [vmem:[%s102 + $0x3b8] sm:%s95]
                %231 = vst [vmem:[%s103 + $0x1f8] sm:%s95] %v230
                %v232 = vld [vmem:[%s102 + $0x400] sm:%s95]
                %233 = vst [vmem:[%s103 + $0x200] sm:%s95] %v232
                %v234 = vld [vmem:[%s102 + $0x408] sm:%s95]
                %235 = vst [vmem:[%s103 + $0x208] sm:%s95] %v234
                %v236 = vld [vmem:[%s102 + $0x410] sm:%s95]
                %237 = vst [vmem:[%s103 + $0x210] sm:%s95] %v236
                %v238 = vld [vmem:[%s102 + $0x418] sm:%s95]
                %239 = vst [vmem:[%s103 + $0x218] sm:%s95] %v238
                %v240 = vld [vmem:[%s102 + $0x420] sm:%s95]
                %241 = vst [vmem:[%s103 + $0x220] sm:%s95] %v240
                %v242 = vld [vmem:[%s102 + $0x428] sm:%s95]
                %243 = vst [vmem:[%s103 + $0x228] sm:%s95] %v242
                %v244 = vld [vmem:[%s102 + $0x430] sm:%s95]
                %245 = vst [vmem:[%s103 + $0x230] sm:%s95] %v244
                %v246 = vld [vmem:[%s102 + $0x438] sm:%s95]
                %247 = vst [vmem:[%s103 + $0x238] sm:%s95] %v246
              $region37: #{_lambda_.20} parent=31 // loop_footer
                %s101 = sadd.s32 1, %s97
              $region38: #{_lambda_.20} parent=31 // loop_footer_branch
                %96 = sbr.rel target = $region34
              $region39: #{_lambda_.20} parent=31 // loop_exit
                _
            $region32: #{_lambda_.20} parent=23 // pred_fallthru
              _
          $region24: #{_lambda_.20} parent=19 // pred_fallthru
            _
          %404 = vnop
        $region20: #{_lambda_.20} parent=15 // pred_fallthru
          _
      $region16: #{_lambda_.20} parent=5 // pred_fallthru
        _
      %p405 = scmp.le.s32.totalorder 1, %s7
      %p406 = scmp.lt.s32.totalorder %s7, 3
      %p407 = pnand %p405, %p406
      %p408 = pneg %p407
      // Predicated region
      $region55: #{_lambda_.20} parent=5 // pred_check
        _
      $region56: #{_lambda_.20} parent=5 // pred_check_branch
        %410 = sbr.rel (%p407) target = $region58
      $region57: #{_lambda_.20} parent=5 // pred_region
        %s411 = ssub.s32 %s7, 1
        %s412 = sand.u32 %s20, 1
        %s413 = sand.u32 %s20, 1
        %s414 = smul.addr %s413, 576
        %s415 = scalar_lea.vmem [#allocation2], %s414
        // Predicated region
        $region59: #{_lambda_.20} parent=57 // pred_check
          %p416 = pneg %p33
        $region60: #{_lambda_.20} parent=57 // pred_check_branch
          %418 = sbr.rel (%p416) target = $region62
        $region61: #{_lambda_.20} parent=57 // pred_region
          _
        $region62: #{_lambda_.20} parent=57 // pred_fallthru
          _
        %s419 = sand.u32 %s20, 1
        %s420 = sand.u32 %s20, 1
        %s421 = smul.addr %s420, 576
        %s422 = scalar_lea.vmem [#allocation2], %s421
        %p423 = pneg %p33
        %p424 = pneg %p30
        %p425 = pneg %p59
        %p426 = pneg %p56
        %s427 = smul.u32 8, %s12
        %p428 = scmp.lt.s32.totalorder %s427, 15
        %s429 = scalar_select %p428, %s427, 15
        %s430 = smul.addr %s429, 8
        %s431 = scalar_lea.vmem %s1, %s430
        %s432 = smul.u32 8, %s12
        %s433 = smul.u32 8, %s12
        %p434 = scmp.lt.s32.totalorder %s433, 15
        %s435 = scalar_select %p434, %s433, 15
        %s436 = smul.addr %s435, 8
        %s437 = scalar_lea.vmem %s1, %s436
        %s438 = smul.u32 8, %s12
        %v439 = vld [vmem:[%s415] sm:$0xff]
        %v440 = vld [vmem:[%s415 + $0x8] sm:$0xff]
        %v441 = vld [vmem:[%s415 + $0x10] sm:$0xff]
        %v442 = vld [vmem:[%s415 + $0x18] sm:$0xff]
        %v443 = vld [vmem:[%s415 + $0x20] sm:$0xff]
        %v444 = vld [vmem:[%s415 + $0x28] sm:$0xff]
        %v445 = vld [vmem:[%s415 + $0x30] sm:$0xff]
        %v446 = vld [vmem:[%s415 + $0x38] sm:$0xff]
        %s447 = scalar_lea.vmem %s415, 64 [#allocation2]
        %v448 = vld [vmem:[%s447] sm:$0xff]
        %v449 = vld [vmem:[%s447 + $0x8] sm:$0xff]
        %v450 = vld [vmem:[%s447 + $0x10] sm:$0xff]
        %v451 = vld [vmem:[%s447 + $0x18] sm:$0xff]
        %v452 = vld [vmem:[%s447 + $0x20] sm:$0xff]
        %v453 = vld [vmem:[%s447 + $0x28] sm:$0xff]
        %v454 = vld [vmem:[%s447 + $0x30] sm:$0xff]
        %v455 = vld [vmem:[%s447 + $0x38] sm:$0xff]
        %v456 = vmax.f32 %v439, %v448
        %v457 = vmax.f32 %v440, %v449
        %v458 = vmax.f32 %v441, %v450
        %v459 = vmax.f32 %v442, %v451
        %v460 = vmax.f32 %v443, %v452
        %v461 = vmax.f32 %v444, %v453
        %v462 = vmax.f32 %v445, %v454
        %v463 = vmax.f32 %v446, %v455
        %s464 = scalar_lea.vmem %s415, 128 [#allocation2]
        %v465 = vld [vmem:[%s464] sm:$0xff]
        %v466 = vld [vmem:[%s464 + $0x8] sm:$0xff]
        %v467 = vld [vmem:[%s464 + $0x10] sm:$0xff]
        %v468 = vld [vmem:[%s464 + $0x18] sm:$0xff]
        %v469 = vld [vmem:[%s464 + $0x20] sm:$0xff]
        %v470 = vld [vmem:[%s464 + $0x28] sm:$0xff]
        %v471 = vld [vmem:[%s464 + $0x30] sm:$0xff]
        %v472 = vld [vmem:[%s464 + $0x38] sm:$0xff]
        %v473 = vmax.f32 %v456, %v465
        %v474 = vmax.f32 %v457, %v466
        %v475 = vmax.f32 %v458, %v467
        %v476 = vmax.f32 %v459, %v468
        %v477 = vmax.f32 %v460, %v469
        %v478 = vmax.f32 %v461, %v470
        %v479 = vmax.f32 %v462, %v471
        %v480 = vmax.f32 %v463, %v472
        %s481 = scalar_lea.vmem %s415, 192 [#allocation2]
        %v482 = vld [vmem:[%s481] sm:$0xff]
        %v483 = vld [vmem:[%s481 + $0x8] sm:$0xff]
        %v484 = vld [vmem:[%s481 + $0x10] sm:$0xff]
        %v485 = vld [vmem:[%s481 + $0x18] sm:$0xff]
        %v486 = vld [vmem:[%s481 + $0x20] sm:$0xff]
        %v487 = vld [vmem:[%s481 + $0x28] sm:$0xff]
        %v488 = vld [vmem:[%s481 + $0x30] sm:$0xff]
        %v489 = vld [vmem:[%s481 + $0x38] sm:$0xff]
        %v490 = vmax.f32 %v473, %v482
        %v491 = vmax.f32 %v474, %v483
        %v492 = vmax.f32 %v475, %v484
        %v493 = vmax.f32 %v476, %v485
        %v494 = vmax.f32 %v477, %v486
        %v495 = vmax.f32 %v478, %v487
        %v496 = vmax.f32 %v479, %v488
        %v497 = vmax.f32 %v480, %v489
        %s498 = scalar_lea.vmem %s415, 256 [#allocation2]
        %v499 = vld [vmem:[%s498] sm:$0xff]
        %v500 = vld [vmem:[%s498 + $0x8] sm:$0xff]
        %v501 = vld [vmem:[%s498 + $0x10] sm:$0xff]
        %v502 = vld [vmem:[%s498 + $0x18] sm:$0xff]
        %v503 = vld [vmem:[%s498 + $0x20] sm:$0xff]
        %v504 = vld [vmem:[%s498 + $0x28] sm:$0xff]
        %v505 = vld [vmem:[%s498 + $0x30] sm:$0xff]
        %v506 = vld [vmem:[%s498 + $0x38] sm:$0xff]
        %v507 = vmax.f32 %v490, %v499
        %v508 = vmax.f32 %v491, %v500
        %v509 = vmax.f32 %v492, %v501
        %v510 = vmax.f32 %v493, %v502
        %v511 = vmax.f32 %v494, %v503
        %v512 = vmax.f32 %v495, %v504
        %v513 = vmax.f32 %v496, %v505
        %v514 = vmax.f32 %v497, %v506
        %s515 = scalar_lea.vmem %s415, 320 [#allocation2]
        %v516 = vld [vmem:[%s515] sm:$0xff]
        %v517 = vld [vmem:[%s515 + $0x8] sm:$0xff]
        %v518 = vld [vmem:[%s515 + $0x10] sm:$0xff]
        %v519 = vld [vmem:[%s515 + $0x18] sm:$0xff]
        %v520 = vld [vmem:[%s515 + $0x20] sm:$0xff]
        %v521 = vld [vmem:[%s515 + $0x28] sm:$0xff]
        %v522 = vld [vmem:[%s515 + $0x30] sm:$0xff]
        %v523 = vld [vmem:[%s515 + $0x38] sm:$0xff]
        %v524 = vmax.f32 %v507, %v516
        %v525 = vmax.f32 %v508, %v517
        %v526 = vmax.f32 %v509, %v518
        %v527 = vmax.f32 %v510, %v519
        %v528 = vmax.f32 %v511, %v520
        %v529 = vmax.f32 %v512, %v521
        %v530 = vmax.f32 %v513, %v522
        %v531 = vmax.f32 %v514, %v523
        %s532 = scalar_lea.vmem %s415, 384 [#allocation2]
        %v533 = vld [vmem:[%s532] sm:$0xff]
        %v534 = vld [vmem:[%s532 + $0x8] sm:$0xff]
        %v535 = vld [vmem:[%s532 + $0x10] sm:$0xff]
        %v536 = vld [vmem:[%s532 + $0x18] sm:$0xff]
        %v537 = vld [vmem:[%s532 + $0x20] sm:$0xff]
        %v538 = vld [vmem:[%s532 + $0x28] sm:$0xff]
        %v539 = vld [vmem:[%s532 + $0x30] sm:$0xff]
        %v540 = vld [vmem:[%s532 + $0x38] sm:$0xff]
        %v541 = vmax.f32 %v524, %v533
        %v542 = vmax.f32 %v525, %v534
        %v543 = vmax.f32 %v526, %v535
        %v544 = vmax.f32 %v527, %v536
        %v545 = vmax.f32 %v528, %v537
        %v546 = vmax.f32 %v529, %v538
        %v547 = vmax.f32 %v530, %v539
        %v548 = vmax.f32 %v531, %v540
        %s549 = scalar_lea.vmem %s415, 448 [#allocation2]
        %v550 = vld [vmem:[%s549] sm:$0xff]
        %v551 = vld [vmem:[%s549 + $0x8] sm:$0xff]
        %v552 = vld [vmem:[%s549 + $0x10] sm:$0xff]
        %v553 = vld [vmem:[%s549 + $0x18] sm:$0xff]
        %v554 = vld [vmem:[%s549 + $0x20] sm:$0xff]
        %v555 = vld [vmem:[%s549 + $0x28] sm:$0xff]
        %v556 = vld [vmem:[%s549 + $0x30] sm:$0xff]
        %v557 = vld [vmem:[%s549 + $0x38] sm:$0xff]
        %v558 = vmax.f32 %v541, %v550
        %v559 = vmax.f32 %v542, %v551
        %v560 = vmax.f32 %v543, %v552
        %v561 = vmax.f32 %v544, %v553
        %v562 = vmax.f32 %v545, %v554
        %v563 = vmax.f32 %v546, %v555
        %v564 = vmax.f32 %v547, %v556
        %v565 = vmax.f32 %v548, %v557
        %s566 = scalar_lea.vmem %s415, 512 [#allocation2]
        %v567 = vld [vmem:[%s566] sm:$0xff]
        %v568 = vld [vmem:[%s566 + $0x8] sm:$0xff]
        %v569 = vld [vmem:[%s566 + $0x10] sm:$0xff]
        %v570 = vld [vmem:[%s566 + $0x18] sm:$0xff]
        %v571 = vld [vmem:[%s566 + $0x20] sm:$0xff]
        %v572 = vld [vmem:[%s566 + $0x28] sm:$0xff]
        %v573 = vld [vmem:[%s566 + $0x30] sm:$0xff]
        %v574 = vld [vmem:[%s566 + $0x38] sm:$0xff]
        %v575 = vmax.f32 %v558, %v567
        %v576 = vmax.f32 %v559, %v568
        %v577 = vmax.f32 %v560, %v569
        %v578 = vmax.f32 %v561, %v570
        %v579 = vmax.f32 %v562, %v571
        %v580 = vmax.f32 %v563, %v572
        %v581 = vmax.f32 %v564, %v573
        %v582 = vmax.f32 %v565, %v574
        %583 = vst [vmem:[%s437] sm:$0xff] %v575
        %584 = vst [vmem:[%s437 + $0x8] sm:$0xff] %v576
        %585 = vst [vmem:[%s437 + $0x10] sm:$0xff] %v577
        %586 = vst [vmem:[%s437 + $0x18] sm:$0xff] %v578
        %587 = vst [vmem:[%s437 + $0x20] sm:$0xff] %v579
        %588 = vst [vmem:[%s437 + $0x28] sm:$0xff] %v580
        %589 = vst [vmem:[%s437 + $0x30] sm:$0xff] %v581
        %590 = vst [vmem:[%s437 + $0x38] sm:$0xff] %v582
        %s591 = smul.u32 8, %s12
        %p592 = scmp.lt.s32.totalorder %s591, 15
        %s593 = scalar_select %p592, %s591, 15
        %s594 = smul.addr %s593, 8
        %s595 = scalar_lea.vmem %s1, %s594
        // Predicated region
        $region63: #{_lambda_.20} parent=57 // pred_check
          %p596 = pneg %p56
        $region64: #{_lambda_.20} parent=57 // pred_check_branch
          %598 = sbr.rel (%p596) target = $region66
        $region65: #{_lambda_.20} parent=57 // pred_region
          %s599 = smul.u32 8, %s12
        $region66: #{_lambda_.20} parent=57 // pred_fallthru
          _
      $region58: #{_lambda_.20} parent=5 // pred_fallthru
        _
      %p600 = scmp.le.s32.totalorder 2, %s7
      // Predicated region
      $region67: #{_lambda_.20} parent=5 // pred_check
        %p601 = pneg %p600
      $region68: #{_lambda_.20} parent=5 // pred_check_branch
        %603 = sbr.rel (%p601) target = $region70
      $region69: #{_lambda_.20} parent=5 // pred_region
        %s604 = ssub.s32 %s7, 2
        // Predicated region
        $region71: #{_lambda_.20} parent=69 // pred_check
          %p605 = pneg %p62
        $region72: #{_lambda_.20} parent=69 // pred_check_branch
          %607 = sbr.rel (%p605) target = $region74
        $region73: #{_lambda_.20} parent=69 // pred_region
          %s608 = smul.u32 8, %s13
          %p609 = scmp.lt.s32.totalorder %s608, 15
          %s610 = scalar_select %p609, %s608, 15
          %s611 = smul.addr %s610, 8
          %s612 = scalar_lea.vmem %s1, %s611
        $region74: #{_lambda_.20} parent=69 // pred_fallthru
          _
      $region70: #{_lambda_.20} parent=5 // pred_fallthru
        _
    $region6: #{_lambda_.20} parent=1 // loop_footer
      %s11 = sadd.s32 1, %s7
    $region7: #{_lambda_.20} parent=1 // loop_footer_branch
      %6 = sbr.rel target = $region3
    $region8: #{_lambda_.20} parent=1 // loop_exit
      _

// kernel: _lambda_.21
$region0: #{_lambda_.21}
  #allocation0 [shape = 'u32[]', space=smem, size = 0x4, offset = 0x4, fixed_abs, tag = 'smem constant byte address 0x4 - core index']
  #allocation1 [shape = 'u32[72,128]{1,0:T(1,128)}', space=vmem, size = 0x9000, scoped, tag = 'internal scratch']
  %s0 = inlined_call_operand.vmem [shape: bf16[8,72], index: 0, kind: input, shape index: {}]
  %s1 = inlined_call_operand.vmem [shape: bf16[72,2048], index: 1, kind: input, shape index: {}]
  %s2 = inlined_call_operand.vmem [shape: f32[8,1], index: 2, kind: input, shape index: {}]
  %s3 = inlined_call_operand.vmem [shape: f32[8,2048], index: 3, kind: output, shape index: {}]
  %s4 = sld [smem:[#allocation0]]
  $region68: #{_lambda_.21} parent=0
    _
  %s6 = ssub.s32 1, %s4
  %s7 = scalar_select 0, %s6, %s4
  $region1: #{_lambda_.21} parent=0
    #allocation2 [shape = 'u8[294912]{0}', space=vmem, size = 0x48000, scoped, tag = 'input window, operand 1']
    loop: start=0, step=1, limit=4
    $region2: #{_lambda_.21} parent=1 // loop_pre_header
      _
    $region3: #{_lambda_.21} parent=1 // loop_header
      %s9 = sphi 0, %s13
      %p10 = scmp.ge.s32.totalorder %s9, 4
      %s17 = sphi 0, %s17
      %s19 = sphi 0, %s17
      %s20 = sphi 0, %s19
      %s34 = sphi 0, %s20
      %s40 = sphi 0, %s42
      %s43 = sphi 0, %s40
      %s44 = sphi 0, %s43
      %s60 = sphi 0, %s44
      %s64 = sphi 0, %s64
      %s66 = sphi 0, %s64
      %s67 = sphi 0, %s66
      %s81 = sphi 0, %s67
      %s87 = sphi 0, %s89
      %s90 = sphi 0, %s87
      %s91 = sphi 0, %s90
      %s107 = sphi 0, %s91
    $region4: #{_lambda_.21} parent=1 // loop_header_branch
      %12 = sbr.rel (%p10) target = $region8
    $region5: #{_lambda_.21} parent=1 // loop_body
      %s14 = ssub.s32 %s9, 1
      %s15 = ssub.s32 %s9, 2
      %s16 = sadd.s32 %s9, 1
      %s18 = sadd.s32 %s17, 1
      %p21 = scmp.eq.s32.totalorder %s9, 1
      %p22 = scmp.ne.s32.totalorder %s17, %s19
      %p23 = scmp.eq.s32.totalorder %s9, 0
      %p24 = por %p22, %p23
      %p25 = scmp.ne.s32.totalorder %s17, %s19
      %p26 = scmp.eq.s32.totalorder %s14, 1
      %p27 = por %p25, %p26
      %p28 = scmp.ne.s32.totalorder %s19, %s20
      %p29 = scmp.eq.s32.totalorder %s14, 0
      %p30 = por %p28, %p29
      %p31 = scmp.ne.s32.totalorder %s19, %s20
      %p32 = scmp.eq.s32.totalorder %s15, 1
      %p33 = por %p31, %p32
      %p35 = scmp.ne.s32.totalorder %s20, %s34
      %p36 = scmp.eq.s32.totalorder %s15, 0
      %p37 = por %p35, %p36
      %s38 = ssub.s32 %s9, %s16
      %p39 = scmp.eq.s32.totalorder %s38, 0
      %s41 = sadd.s32 %s40, 1
      %s42 = scalar_select %p39, %s40, %s41
      %p45 = pneg %p39
      %p46 = scmp.eq.s32.totalorder %s9, 1
      %p47 = por %p45, %p46
      %p48 = scmp.ne.s32.totalorder %s40, %s43
      %p49 = scmp.eq.s32.totalorder %s9, 0
      %p50 = por %p48, %p49
      %p51 = scmp.ne.s32.totalorder %s40, %s43
      %p52 = scmp.eq.s32.totalorder %s14, 1
      %p53 = por %p51, %p52
      %p54 = scmp.ne.s32.totalorder %s43, %s44
      %p55 = scmp.eq.s32.totalorder %s14, 0
      %p56 = por %p54, %p55
      %p57 = scmp.ne.s32.totalorder %s43, %s44
      %p58 = scmp.eq.s32.totalorder %s15, 1
      %p59 = por %p57, %p58
      %p61 = scmp.ne.s32.totalorder %s44, %s60
      %p62 = scmp.eq.s32.totalorder %s15, 0
      %p63 = por %p61, %p62
      %s65 = sadd.s32 %s64, 1
      %p68 = scmp.eq.s32.totalorder %s9, 1
      %p69 = scmp.ne.s32.totalorder %s64, %s66
      %p70 = scmp.eq.s32.totalorder %s9, 0
      %p71 = por %p69, %p70
      %p72 = scmp.ne.s32.totalorder %s64, %s66
      %p73 = scmp.eq.s32.totalorder %s14, 1
      %p74 = por %p72, %p73
      %p75 = scmp.ne.s32.totalorder %s66, %s67
      %p76 = scmp.eq.s32.totalorder %s14, 0
      %p77 = por %p75, %p76
      %p78 = scmp.ne.s32.totalorder %s66, %s67
      %p79 = scmp.eq.s32.totalorder %s15, 1
      %p80 = por %p78, %p79
      %p82 = scmp.ne.s32.totalorder %s67, %s81
      %p83 = scmp.eq.s32.totalorder %s15, 0
      %p84 = por %p82, %p83
      %s85 = ssub.s32 %s9, %s16
      %p86 = scmp.eq.s32.totalorder %s85, 0
      %s88 = sadd.s32 %s87, 1
      %s89 = scalar_select %p86, %s87, %s88
      %p92 = pneg %p86
      %p93 = scmp.eq.s32.totalorder %s9, 1
      %p94 = por %p92, %p93
      %p95 = scmp.ne.s32.totalorder %s87, %s90
      %p96 = scmp.eq.s32.totalorder %s9, 0
      %p97 = por %p95, %p96
      %p98 = scmp.ne.s32.totalorder %s87, %s90
      %p99 = scmp.eq.s32.totalorder %s14, 1
      %p100 = por %p98, %p99
      %p101 = scmp.ne.s32.totalorder %s90, %s91
      %p102 = scmp.eq.s32.totalorder %s14, 0
      %p103 = por %p101, %p102
      %p104 = scmp.ne.s32.totalorder %s90, %s91
      %p105 = scmp.eq.s32.totalorder %s15, 1
      %p106 = por %p104, %p105
      %p108 = scmp.ne.s32.totalorder %s91, %s107
      %p109 = scmp.eq.s32.totalorder %s15, 0
      %p110 = por %p108, %p109
      %p111 = scmp.le.s32.totalorder 1, %s9
      %p112 = scmp.lt.s32.totalorder %s9, 3
      %p113 = pnand %p111, %p112
      %p114 = pneg %p113
      // Predicated region
      $region9: #{_lambda_.21} parent=5 // pred_check
        _
      $region10: #{_lambda_.21} parent=5 // pred_check_branch
        %116 = sbr.rel (%p113) target = $region12
      $region11: #{_lambda_.21} parent=5 // pred_region
        %s117 = ssub.s32 %s9, 1
        // Predicated region
        $region13: #{_lambda_.21} parent=11 // pred_check
          %p118 = pneg %p30
        $region14: #{_lambda_.21} parent=11 // pred_check_branch
          %120 = sbr.rel (%p118) target = $region16
        $region15: #{_lambda_.21} parent=11 // pred_region
          _
        $region16: #{_lambda_.21} parent=11 // pred_fallthru
          _
        // Predicated region
        $region17: #{_lambda_.21} parent=11 // pred_check
          %p121 = pneg %p77
        $region18: #{_lambda_.21} parent=11 // pred_check_branch
          %123 = sbr.rel (%p121) target = $region20
        $region19: #{_lambda_.21} parent=11 // pred_region
          _
        $region20: #{_lambda_.21} parent=11 // pred_fallthru
          _
      $region12: #{_lambda_.21} parent=5 // pred_fallthru
        _
      %p124 = scmp.lt.s32.totalorder %s9, 2
      // Predicated region
      $region21: #{_lambda_.21} parent=5 // pred_check
        %p125 = pneg %p124
      $region22: #{_lambda_.21} parent=5 // pred_check_branch
        %127 = sbr.rel (%p125) target = $region24
      $region23: #{_lambda_.21} parent=5 // pred_region
        // Predicated region
        $region25: #{_lambda_.21} parent=23 // pred_check
          %p128 = pneg %p50
        $region26: #{_lambda_.21} parent=23 // pred_check_branch
          %130 = sbr.rel (%p128) target = $region28
        $region27: #{_lambda_.21} parent=23 // pred_region
          %s131 = sand.u32 %s40, 1
          %s132 = sand.u32 %s40, 1
          %s133 = smul.addr %s132, 288
          %s134 = scalar_lea.vmem [#allocation2], %s133
          %s135 = smul.u32 8, %s9
          %s136 = smul.addr %s135, 4
          %s137 = scalar_lea.vmem %s1, %s136
          // Predicated region
          $region29: #{_lambda_.21} parent=27 // pred_check
            _
          $region30: #{_lambda_.21} parent=27 // pred_check_branch
            %139 = sbr.rel (0) target = $region32
          $region31: #{_lambda_.21} parent=27 // pred_region
            // Predicated region
            $region33: #{_lambda_.21} parent=31 // pred_check
              _
            $region34: #{_lambda_.21} parent=31 // pred_check_branch
              %141 = sbr.rel (0) target = $region36
            $region35: #{_lambda_.21} parent=31 // pred_region
              loop: start=0, step=1, limit=1
              $region37: #{_lambda_.21} parent=35 // loop_pre_header
                _
              $region38: #{_lambda_.21} parent=35 // loop_header
                %s143 = sphi 0, %s147
                %p144 = scmp.ge.s32.totalorder %s143, 1
                %s148 = sphi %s137, %s137
                %s149 = sphi %s134, %s134
              $region39: #{_lambda_.21} parent=35 // loop_header_branch
                %146 = sbr.rel (%p144) target = $region43
              $region40: #{_lambda_.21} parent=35 // loop_body
                %v150 = vld [vmem:[%s148] sm:$0xff]
                %151 = vst [vmem:[%s149] sm:$0xff] %v150
                %v152 = vld [vmem:[%s148 + $0x8] sm:$0xff]
                %153 = vst [vmem:[%s149 + $0x8] sm:$0xff] %v152
                %v154 = vld [vmem:[%s148 + $0x10] sm:$0xff]
                %155 = vst [vmem:[%s149 + $0x10] sm:$0xff] %v154
                %v156 = vld [vmem:[%s148 + $0x18] sm:$0xff]
                %157 = vst [vmem:[%s149 + $0x18] sm:$0xff] %v156
                %v158 = vld [vmem:[%s148 + $0x40] sm:$0xff]
                %159 = vst [vmem:[%s149 + $0x20] sm:$0xff] %v158
                %v160 = vld [vmem:[%s148 + $0x48] sm:$0xff]
                %161 = vst [vmem:[%s149 + $0x28] sm:$0xff] %v160
                %v162 = vld [vmem:[%s148 + $0x50] sm:$0xff]
                %163 = vst [vmem:[%s149 + $0x30] sm:$0xff] %v162
                %v164 = vld [vmem:[%s148 + $0x58] sm:$0xff]
                %165 = vst [vmem:[%s149 + $0x38] sm:$0xff] %v164
                %v166 = vld [vmem:[%s148 + $0x80] sm:$0xff]
                %167 = vst [vmem:[%s149 + $0x40] sm:$0xff] %v166
                %v168 = vld [vmem:[%s148 + $0x88] sm:$0xff]
                %169 = vst [vmem:[%s149 + $0x48] sm:$0xff] %v168
                %v170 = vld [vmem:[%s148 + $0x90] sm:$0xff]
                %171 = vst [vmem:[%s149 + $0x50] sm:$0xff] %v170
                %v172 = vld [vmem:[%s148 + $0x98] sm:$0xff]
                %173 = vst [vmem:[%s149 + $0x58] sm:$0xff] %v172
                %v174 = vld [vmem:[%s148 + $0xc0] sm:$0xff]
                %175 = vst [vmem:[%s149 + $0x60] sm:$0xff] %v174
                %v176 = vld [vmem:[%s148 + $0xc8] sm:$0xff]
                %177 = vst [vmem:[%s149 + $0x68] sm:$0xff] %v176
                %v178 = vld [vmem:[%s148 + $0xd0] sm:$0xff]
                %179 = vst [vmem:[%s149 + $0x70] sm:$0xff] %v178
                %v180 = vld [vmem:[%s148 + $0xd8] sm:$0xff]
                %181 = vst [vmem:[%s149 + $0x78] sm:$0xff] %v180
                %v182 = vld [vmem:[%s148 + $0x100] sm:$0xff]
                %183 = vst [vmem:[%s149 + $0x80] sm:$0xff] %v182
                %v184 = vld [vmem:[%s148 + $0x108] sm:$0xff]
                %185 = vst [vmem:[%s149 + $0x88] sm:$0xff] %v184
                %v186 = vld [vmem:[%s148 + $0x110] sm:$0xff]
                %187 = vst [vmem:[%s149 + $0x90] sm:$0xff] %v186
                %v188 = vld [vmem:[%s148 + $0x118] sm:$0xff]
                %189 = vst [vmem:[%s149 + $0x98] sm:$0xff] %v188
                %v190 = vld [vmem:[%s148 + $0x140] sm:$0xff]
                %191 = vst [vmem:[%s149 + $0xa0] sm:$0xff] %v190
                %v192 = vld [vmem:[%s148 + $0x148] sm:$0xff]
                %193 = vst [vmem:[%s149 + $0xa8] sm:$0xff] %v192
                %v194 = vld [vmem:[%s148 + $0x150] sm:$0xff]
                %195 = vst [vmem:[%s149 + $0xb0] sm:$0xff] %v194
                %v196 = vld [vmem:[%s148 + $0x158] sm:$0xff]
                %197 = vst [vmem:[%s149 + $0xb8] sm:$0xff] %v196
                %v198 = vld [vmem:[%s148 + $0x180] sm:$0xff]
                %199 = vst [vmem:[%s149 + $0xc0] sm:$0xff] %v198
                %v200 = vld [vmem:[%s148 + $0x188] sm:$0xff]
                %201 = vst [vmem:[%s149 + $0xc8] sm:$0xff] %v200
                %v202 = vld [vmem:[%s148 + $0x190] sm:$0xff]
                %203 = vst [vmem:[%s149 + $0xd0] sm:$0xff] %v202
                %v204 = vld [vmem:[%s148 + $0x198] sm:$0xff]
                %205 = vst [vmem:[%s149 + $0xd8] sm:$0xff] %v204
                %v206 = vld [vmem:[%s148 + $0x1c0] sm:$0xff]
                %207 = vst [vmem:[%s149 + $0xe0] sm:$0xff] %v206
                %v208 = vld [vmem:[%s148 + $0x1c8] sm:$0xff]
                %209 = vst [vmem:[%s149 + $0xe8] sm:$0xff] %v208
                %v210 = vld [vmem:[%s148 + $0x1d0] sm:$0xff]
                %211 = vst [vmem:[%s149 + $0xf0] sm:$0xff] %v210
                %v212 = vld [vmem:[%s148 + $0x1d8] sm:$0xff]
                %213 = vst [vmem:[%s149 + $0xf8] sm:$0xff] %v212
                %v214 = vld [vmem:[%s148 + $0x200] sm:$0xff]
                %215 = vst [vmem:[%s149 + $0x100] sm:$0xff] %v214
                %v216 = vld [vmem:[%s148 + $0x208] sm:$0xff]
                %217 = vst [vmem:[%s149 + $0x108] sm:$0xff] %v216
                %v218 = vld [vmem:[%s148 + $0x210] sm:$0xff]
                %219 = vst [vmem:[%s149 + $0x110] sm:$0xff] %v218
                %v220 = vld [vmem:[%s148 + $0x218] sm:$0xff]
                %221 = vst [vmem:[%s149 + $0x118] sm:$0xff] %v220
              $region41: #{_lambda_.21} parent=35 // loop_footer
                %s147 = sadd.s32 1, %s143
              $region42: #{_lambda_.21} parent=35 // loop_footer_branch
                %142 = sbr.rel target = $region38
              $region43: #{_lambda_.21} parent=35 // loop_exit
                _
            $region36: #{_lambda_.21} parent=31 // pred_fallthru
              _
            // Predicated region
            $region44: #{_lambda_.21} parent=31 // pred_check
              _
            $region45: #{_lambda_.21} parent=31 // pred_check_branch
              %223 = sbr.rel target = $region47
            $region46: #{_lambda_.21} parent=31 // pred_region
              _
            $region47: #{_lambda_.21} parent=31 // pred_fallthru
              _
          $region32: #{_lambda_.21} parent=27 // pred_fallthru
            _
          %224 = vnop
        $region28: #{_lambda_.21} parent=23 // pred_fallthru
          _
      $region24: #{_lambda_.21} parent=5 // pred_fallthru
        _
      %p225 = scmp.le.s32.totalorder 1, %s9
      %p226 = scmp.lt.s32.totalorder %s9, 3
      %p227 = pnand %p225, %p226
      %p228 = pneg %p227
      // Predicated region
      $region48: #{_lambda_.21} parent=5 // pred_check
        _
      $region49: #{_lambda_.21} parent=5 // pred_check_branch
        %230 = sbr.rel (%p227) target = $region51
      $region50: #{_lambda_.21} parent=5 // pred_region
        %s231 = ssub.s32 %s9, 1
        %s232 = sand.u32 %s43, 1
        %s233 = sand.u32 %s43, 1
        %s234 = smul.addr %s233, 288
        %s235 = scalar_lea.vmem [#allocation2], %s234
        // Predicated region
        $region52: #{_lambda_.21} parent=50 // pred_check
          %p236 = pneg %p56
        $region53: #{_lambda_.21} parent=50 // pred_check_branch
          %238 = sbr.rel (%p236) target = $region55
        $region54: #{_lambda_.21} parent=50 // pred_region
          _
        $region55: #{_lambda_.21} parent=50 // pred_fallthru
          _
        %p239 = pneg %p30
        %p240 = pneg %p27
        %s241 = sand.u32 %s43, 1
        %s242 = sand.u32 %s43, 1
        %s243 = smul.addr %s242, 288
        %s244 = scalar_lea.vmem [#allocation2], %s243
        %p245 = pneg %p56
        %p246 = pneg %p53
        %p247 = pneg %p77
        %p248 = pneg %p74
        %p249 = pneg %p103
        %p250 = pneg %p100
        %s251 = smul.u32 8, %s14
        %p252 = scmp.lt.s32.totalorder %s251, 15
        %s253 = scalar_select %p252, %s251, 15
        %s254 = smul.addr %s253, 8
        %s255 = scalar_lea.vmem %s3, %s254
        %s256 = smul.u32 8, %s14
        %s257 = smul.u32 8, %s14
        %p258 = scmp.lt.s32.totalorder %s257, 15
        %s259 = scalar_select %p258, %s257, 15
        %s260 = smul.addr %s259, 8
        %s261 = scalar_lea.vmem %s3, %s260
        %s262 = smul.u32 8, %s14
        %v264 = vld [vmem:[%s0] sm:$0xf]
        %v265 = vld [vmem:[%s235] sm:$0xff]
        %v266 = vld [vmem:[%s235 + $0x8] sm:$0xff]
        %v267 = vld [vmem:[%s235 + $0x10] sm:$0xff]
        %v268 = vld [vmem:[%s235 + $0x18] sm:$0xff]
        %v269 = vld [vmem:[%s235 + $0x20] sm:$0xff]
        %v270 = vld [vmem:[%s235 + $0x28] sm:$0xff]
        %v271 = vld [vmem:[%s235 + $0x30] sm:$0xff]
        %v272 = vld [vmem:[%s235 + $0x38] sm:$0xff]
        %v273 = vld [vmem:[%s235 + $0x40] sm:$0xff]
        %v274 = vld [vmem:[%s235 + $0x48] sm:$0xff]
        %v275 = vld [vmem:[%s235 + $0x50] sm:$0xff]
        %v276 = vld [vmem:[%s235 + $0x58] sm:$0xff]
        %v277 = vld [vmem:[%s235 + $0x60] sm:$0xff]
        %v278 = vld [vmem:[%s235 + $0x68] sm:$0xff]
        %v279 = vld [vmem:[%s235 + $0x70] sm:$0xff]
        %v280 = vld [vmem:[%s235 + $0x78] sm:$0xff]
        %v281 = vld [vmem:[%s235 + $0x80] sm:$0xff]
        %v282 = vld [vmem:[%s235 + $0x88] sm:$0xff]
        %v283 = vld [vmem:[%s235 + $0x90] sm:$0xff]
        %v284 = vld [vmem:[%s235 + $0x98] sm:$0xff]
        %v285 = vld [vmem:[%s235 + $0xa0] sm:$0xff]
        %v286 = vld [vmem:[%s235 + $0xa8] sm:$0xff]
        %v287 = vld [vmem:[%s235 + $0xb0] sm:$0xff]
        %v288 = vld [vmem:[%s235 + $0xb8] sm:$0xff]
        %v289 = vld [vmem:[%s235 + $0xc0] sm:$0xff]
        %v290 = vld [vmem:[%s235 + $0xc8] sm:$0xff]
        %v291 = vld [vmem:[%s235 + $0xd0] sm:$0xff]
        %v292 = vld [vmem:[%s235 + $0xd8] sm:$0xff]
        %v293 = vld [vmem:[%s235 + $0xe0] sm:$0xff]
        %v294 = vld [vmem:[%s235 + $0xe8] sm:$0xff]
        %v295 = vld [vmem:[%s235 + $0xf0] sm:$0xff]
        %v296 = vld [vmem:[%s235 + $0xf8] sm:$0xff]
        %v297 = vld [vmem:[%s235 + $0x100] sm:$0xff]
        %v298 = vld [vmem:[%s235 + $0x108] sm:$0xff]
        %v299 = vld [vmem:[%s235 + $0x110] sm:$0xff]
        %v300 = vld [vmem:[%s235 + $0x118] sm:$0xff]
        %v301 = vld [vmem:[%s2] sm:$0xff]
        %303 = vset.pattern.permute.xlu0 0
        %304 = vperm.xlu0 %303, %v301
        %v305 = vpop.permute.xlu0 %304
        %v343 = vunpack.c.l.b16 %v265
        %v344 = vunpack.c.h.b16 %v265
        %v345 = vunpack.c.l.b16 %v266
        %v346 = vunpack.c.h.b16 %v266
        %v347 = vunpack.c.l.b16 %v267
        %v348 = vunpack.c.h.b16 %v267
        %v349 = vunpack.c.l.b16 %v268
        %v350 = vunpack.c.h.b16 %v268
        %v351 = vunpack.c.l.b16 %v269
        %v352 = vunpack.c.h.b16 %v269
        %v353 = vunpack.c.l.b16 %v270
        %v354 = vunpack.c.h.b16 %v270
        %v355 = vunpack.c.l.b16 %v271
        %v356 = vunpack.c.h.b16 %v271
        %v357 = vunpack.c.l.b16 %v272
        %v358 = vunpack.c.h.b16 %v272
        %v359 = vunpack.c.l.b16 %v273
        %v360 = vunpack.c.h.b16 %v273
        %v361 = vunpack.c.l.b16 %v274
        %v362 = vunpack.c.h.b16 %v274
        %v363 = vunpack.c.l.b16 %v275
        %v364 = vunpack.c.h.b16 %v275
        %v365 = vunpack.c.l.b16 %v276
        %v366 = vunpack.c.h.b16 %v276
        %v367 = vunpack.c.l.b16 %v277
        %v368 = vunpack.c.h.b16 %v277
        %v369 = vunpack.c.l.b16 %v278
        %v370 = vunpack.c.h.b16 %v278
        %v371 = vunpack.c.l.b16 %v279
        %v372 = vunpack.c.h.b16 %v279
        %v373 = vunpack.c.l.b16 %v280
        %v374 = vunpack.c.h.b16 %v280
        %v375 = vunpack.c.l.b16 %v281
        %v376 = vunpack.c.h.b16 %v281
        %v377 = vunpack.c.l.b16 %v282
        %v378 = vunpack.c.h.b16 %v282
        %v379 = vunpack.c.l.b16 %v283
        %v380 = vunpack.c.h.b16 %v283
        %v381 = vunpack.c.l.b16 %v284
        %v382 = vunpack.c.h.b16 %v284
        %v383 = vunpack.c.l.b16 %v285
        %v384 = vunpack.c.h.b16 %v285
        %v385 = vunpack.c.l.b16 %v286
        %v386 = vunpack.c.h.b16 %v286
        %v387 = vunpack.c.l.b16 %v287
        %v388 = vunpack.c.h.b16 %v287
        %v389 = vunpack.c.l.b16 %v288
        %v390 = vunpack.c.h.b16 %v288
        %v391 = vunpack.c.l.b16 %v289
        %v392 = vunpack.c.h.b16 %v289
        %v393 = vunpack.c.l.b16 %v290
        %v394 = vunpack.c.h.b16 %v290
        %v395 = vunpack.c.l.b16 %v291
        %v396 = vunpack.c.h.b16 %v291
        %v397 = vunpack.c.l.b16 %v292
        %v398 = vunpack.c.h.b16 %v292
        %v399 = vunpack.c.l.b16 %v293
        %v400 = vunpack.c.h.b16 %v293
        %v401 = vunpack.c.l.b16 %v294
        %v402 = vunpack.c.h.b16 %v294
        %v403 = vunpack.c.l.b16 %v295
        %v404 = vunpack.c.h.b16 %v295
        %v405 = vunpack.c.l.b16 %v296
        %v406 = vunpack.c.h.b16 %v296
        %v407 = vunpack.c.l.b16 %v297
        %v408 = vunpack.c.h.b16 %v297
        %v409 = vunpack.c.l.b16 %v298
        %v410 = vunpack.c.h.b16 %v298
        %v411 = vunpack.c.l.b16 %v299
        %v412 = vunpack.c.h.b16 %v299
        %v413 = vunpack.c.l.b16 %v300
        %v414 = vunpack.c.h.b16 %v300
        %v415 = vpack.c.b16 %v351, %v343
        %v416 = vpack.c.b16 %v352, %v344
        %v417 = vpack.c.b16 %v353, %v345
        %v418 = vpack.c.b16 %v354, %v346
        %v419 = vpack.c.b16 %v355, %v347
        %v420 = vpack.c.b16 %v356, %v348
        %v421 = vpack.c.b16 %v357, %v349
        %v422 = vpack.c.b16 %v358, %v350
        %v423 = vpack.c.b16 %v367, %v359
        %v424 = vpack.c.b16 %v368, %v360
        %v425 = vpack.c.b16 %v369, %v361
        %v426 = vpack.c.b16 %v370, %v362
        %v427 = vpack.c.b16 %v371, %v363
        %v428 = vpack.c.b16 %v372, %v364
        %v429 = vpack.c.b16 %v373, %v365
        %v430 = vpack.c.b16 %v374, %v366
        %v431 = vpack.c.b16 %v383, %v375
        %v432 = vpack.c.b16 %v384, %v376
        %v433 = vpack.c.b16 %v385, %v377
        %v434 = vpack.c.b16 %v386, %v378
        %v435 = vpack.c.b16 %v387, %v379
        %v436 = vpack.c.b16 %v388, %v380
        %v437 = vpack.c.b16 %v389, %v381
        %v438 = vpack.c.b16 %v390, %v382
        %v439 = vpack.c.b16 %v399, %v391
        %v440 = vpack.c.b16 %v400, %v392
        %v441 = vpack.c.b16 %v401, %v393
        %v442 = vpack.c.b16 %v402, %v394
        %v443 = vpack.c.b16 %v403, %v395
        %v444 = vpack.c.b16 %v404, %v396
        %v445 = vpack.c.b16 %v405, %v397
        %v446 = vpack.c.b16 %v406, %v398
        %v447 = vpack.c.b16 %v407, %v407
        %v448 = vpack.c.b16 %v408, %v408
        %v449 = vpack.c.b16 %v409, %v409
        %v450 = vpack.c.b16 %v410, %v410
        %v451 = vpack.c.b16 %v411, %v411
        %v452 = vpack.c.b16 %v412, %v412
        %v453 = vpack.c.b16 %v413, %v413
        %v454 = vpack.c.b16 %v414, %v414
        %vm487 = vcmask 588800
        %v489 = vsel %vm487, %v264, 0
        %vm491 = vcmask 1043456
        %v493 = vsel %vm491, %v447, 0
        %v496 = vsel %vm491, %v448, 0
        %v499 = vsel %vm491, %v449, 0
        %v502 = vsel %vm491, %v450, 0
        %v505 = vsel %vm491, %v451, 0
        %v508 = vsel %vm491, %v452, 0
        %v511 = vsel %vm491, %v453, 0
        %v514 = vsel %vm491, %v454, 0
        %516 = vmatpush.bf16.msra.mxu0 0
        %517 = vmatpush.bf16.msra.mxu0 0
        %518 = vmatpush.bf16.msra.mxu0 0
        %519 = vmatpush.bf16.msra.mxu0 %v493
        %520 = vmatpush.bf16.msra.mxu0 %v439
        %521 = vmatpush.bf16.msra.mxu0 %v431
        %522 = vmatpush.bf16.msra.mxu0 %v423
        %523 = vmatpush.bf16.msra.mxu0 %v415
        %524 = vmatmul.bf16.gmra.mxu0 %v489
        %v525 = vpop.f32.mrf.mxu0
        %v526 = vadd.f32 %v305, %v525
        %v527 = vpop.f32.mrf.mxu0
        %528 = vdwg.mxu0
        %529 = vmatpush.bf16.msra.mxu0 0
        %530 = vmatpush.bf16.msra.mxu0 0
        %531 = vmatpush.bf16.msra.mxu0 0
        %532 = vmatpush.bf16.msra.mxu0 %v496
        %533 = vmatpush.bf16.msra.mxu0 %v440
        %534 = vmatpush.bf16.msra.mxu0 %v432
        %535 = vmatpush.bf16.msra.mxu0 %v424
        %536 = vmatpush.bf16.msra.mxu0 %v416
        %537 = vmatmul.bf16.gmra.mxu0 %v489
        %v538 = vpop.f32.mrf.mxu0
        %v539 = vadd.f32 %v305, %v538
        %v540 = vpop.f32.mrf.mxu0
        %541 = vdwg.mxu0
        %542 = vmatpush.bf16.msra.mxu0 0
        %543 = vmatpush.bf16.msra.mxu0 0
        %544 = vmatpush.bf16.msra.mxu0 0
        %545 = vmatpush.bf16.msra.mxu0 %v499
        %546 = vmatpush.bf16.msra.mxu0 %v441
        %547 = vmatpush.bf16.msra.mxu0 %v433
        %548 = vmatpush.bf16.msra.mxu0 %v425
        %549 = vmatpush.bf16.msra.mxu0 %v417
        %550 = vmatmul.bf16.gmra.mxu0 %v489
        %v551 = vpop.f32.mrf.mxu0
        %v552 = vadd.f32 %v305, %v551
        %v553 = vpop.f32.mrf.mxu0
        %554 = vdwg.mxu0
        %555 = vmatpush.bf16.msra.mxu0 0
        %556 = vmatpush.bf16.msra.mxu0 0
        %557 = vmatpush.bf16.msra.mxu0 0
        %558 = vmatpush.bf16.msra.mxu0 %v502
        %559 = vmatpush.bf16.msra.mxu0 %v442
        %560 = vmatpush.bf16.msra.mxu0 %v434
        %561 = vmatpush.bf16.msra.mxu0 %v426
        %562 = vmatpush.bf16.msra.mxu0 %v418
        %563 = vmatmul.bf16.gmra.mxu0 %v489
        %v564 = vpop.f32.mrf.mxu0
        %v565 = vadd.f32 %v305, %v564
        %v566 = vpop.f32.mrf.mxu0
        %567 = vdwg.mxu0
        %568 = vmatpush.bf16.msra.mxu0 0
        %569 = vmatpush.bf16.msra.mxu0 0
        %570 = vmatpush.bf16.msra.mxu0 0
        %571 = vmatpush.bf16.msra.mxu0 %v505
        %572 = vmatpush.bf16.msra.mxu0 %v443
        %573 = vmatpush.bf16.msra.mxu0 %v435
        %574 = vmatpush.bf16.msra.mxu0 %v427
        %575 = vmatpush.bf16.msra.mxu0 %v419
        %576 = vmatmul.bf16.gmra.mxu0 %v489
        %v577 = vpop.f32.mrf.mxu0
        %v578 = vadd.f32 %v305, %v577
        %v579 = vpop.f32.mrf.mxu0
        %580 = vdwg.mxu0
        %581 = vmatpush.bf16.msra.mxu0 0
        %582 = vmatpush.bf16.msra.mxu0 0
        %583 = vmatpush.bf16.msra.mxu0 0
        %584 = vmatpush.bf16.msra.mxu0 %v508
        %585 = vmatpush.bf16.msra.mxu0 %v444
        %586 = vmatpush.bf16.msra.mxu0 %v436
        %587 = vmatpush.bf16.msra.mxu0 %v428
        %588 = vmatpush.bf16.msra.mxu0 %v420
        %589 = vmatmul.bf16.gmra.mxu0 %v489
        %v590 = vpop.f32.mrf.mxu0
        %v591 = vadd.f32 %v305, %v590
        %v592 = vpop.f32.mrf.mxu0
        %593 = vdwg.mxu0
        %594 = vmatpush.bf16.msra.mxu0 0
        %595 = vmatpush.bf16.msra.mxu0 0
        %596 = vmatpush.bf16.msra.mxu0 0
        %597 = vmatpush.bf16.msra.mxu0 %v511
        %598 = vmatpush.bf16.msra.mxu0 %v445
        %599 = vmatpush.bf16.msra.mxu0 %v437
        %600 = vmatpush.bf16.msra.mxu0 %v429
        %601 = vmatpush.bf16.msra.mxu0 %v421
        %602 = vmatmul.bf16.gmra.mxu0 %v489
        %v603 = vpop.f32.mrf.mxu0
        %v604 = vadd.f32 %v305, %v603
        %v605 = vpop.f32.mrf.mxu0
        %606 = vdwg.mxu0
        %607 = vmatpush.bf16.msra.mxu0 0
        %608 = vmatpush.bf16.msra.mxu0 0
        %609 = vmatpush.bf16.msra.mxu0 0
        %610 = vmatpush.bf16.msra.mxu0 %v514
        %611 = vmatpush.bf16.msra.mxu0 %v446
        %612 = vmatpush.bf16.msra.mxu0 %v438
        %613 = vmatpush.bf16.msra.mxu0 %v430
        %614 = vmatpush.bf16.msra.mxu0 %v422
        %615 = vmatmul.bf16.gmra.mxu0 %v489
        %v616 = vpop.f32.mrf.mxu0
        %v617 = vadd.f32 %v305, %v616
        %v618 = vpop.f32.mrf.mxu0
        %619 = vdwg.mxu0
        %v620 = vmax.f32 %v526, 0.0
        %v621 = vmax.f32 %v539, 0.0
        %v622 = vmax.f32 %v552, 0.0
        %v623 = vmax.f32 %v565, 0.0
        %v624 = vmax.f32 %v578, 0.0
        %v625 = vmax.f32 %v591, 0.0
        %v626 = vmax.f32 %v604, 0.0
        %v627 = vmax.f32 %v617, 0.0
        %628 = vst [vmem:[%s261] sm:$0xff] %v620
        %629 = vst [vmem:[%s261 + $0x8] sm:$0xff] %v621
        %630 = vst [vmem:[%s261 + $0x10] sm:$0xff] %v622
        %631 = vst [vmem:[%s261 + $0x18] sm:$0xff] %v623
        %632 = vst [vmem:[%s261 + $0x20] sm:$0xff] %v624
        %633 = vst [vmem:[%s261 + $0x28] sm:$0xff] %v625
        %634 = vst [vmem:[%s261 + $0x30] sm:$0xff] %v626
        %635 = vst [vmem:[%s261 + $0x38] sm:$0xff] %v627
        %s636 = smul.u32 8, %s14
        %p637 = scmp.lt.s32.totalorder %s636, 15
        %s638 = scalar_select %p637, %s636, 15
        %s639 = smul.addr %s638, 8
        %s640 = scalar_lea.vmem %s3, %s639
        // Predicated region
        $region56: #{_lambda_.21} parent=50 // pred_check
          %p641 = pneg %p100
        $region57: #{_lambda_.21} parent=50 // pred_check_branch
          %643 = sbr.rel (%p641) target = $region59
        $region58: #{_lambda_.21} parent=50 // pred_region
          %s644 = smul.u32 8, %s14
        $region59: #{_lambda_.21} parent=50 // pred_fallthru
          _
      $region51: #{_lambda_.21} parent=5 // pred_fallthru
        _
      %p645 = scmp.le.s32.totalorder 2, %s9
      // Predicated region
      $region60: #{_lambda_.21} parent=5 // pred_check
        %p646 = pneg %p645
      $region61: #{_lambda_.21} parent=5 // pred_check_branch
        %648 = sbr.rel (%p646) target = $region63
      $region62: #{_lambda_.21} parent=5 // pred_region
        %s649 = ssub.s32 %s9, 2
        // Predicated region
        $region64: #{_lambda_.21} parent=62 // pred_check
          %p650 = pneg %p106
        $region65: #{_lambda_.21} parent=62 // pred_check_branch
          %652 = sbr.rel (%p650) target = $region67
        $region66: #{_lambda_.21} parent=62 // pred_region
          %s653 = smul.u32 8, %s15
          %p654 = scmp.lt.s32.totalorder %s653, 15
          %s655 = scalar_select %p654, %s653, 15
          %s656 = smul.addr %s655, 8
          %s657 = scalar_lea.vmem %s3, %s656
        $region67: #{_lambda_.21} parent=62 // pred_fallthru
          _
      $region63: #{_lambda_.21} parent=5 // pred_fallthru
        _
    $region6: #{_lambda_.21} parent=1 // loop_footer
      %s13 = sadd.s32 1, %s9
    $region7: #{_lambda_.21} parent=1 // loop_footer_branch
      %8 = sbr.rel target = $region3
    $region8: #{_lambda_.21} parent=1 // loop_exit
      _

// kernel: _lambda_.22
$region0: #{_lambda_.22}
  #allocation0 [shape = 'u32[]', space=smem, size = 0x4, offset = 0x4, fixed_abs, tag = 'smem constant byte address 0x4 - core index']
  #allocation1 [shape = 'u32[72,128]{1,0:T(1,128)}', space=vmem, size = 0x9000, scoped, tag = 'internal scratch']
  %s0 = inlined_call_operand.vmem [shape: bf16[8,72], index: 0, kind: input, shape index: {}]
  %s1 = inlined_call_operand.vmem [shape: bf16[72,2048], index: 1, kind: input, shape index: {}]
  %s2 = inlined_call_operand.vmem [shape: f32[8,1], index: 2, kind: input, shape index: {}]
  %s3 = inlined_call_operand.vmem [shape: f32[8,2048], index: 3, kind: input, shape index: {}]
  %s4 = inlined_call_operand.vmem [shape: f32[8,2048], index: 4, kind: output, shape index: {}]
  %s5 = sld [smem:[#allocation0]]
  $region72: #{_lambda_.22} parent=0
    _
  %s7 = ssub.s32 1, %s5
  %s8 = scalar_select 0, %s7, %s5
  $region1: #{_lambda_.22} parent=0
    #allocation2 [shape = 'u8[294912]{0}', space=vmem, size = 0x48000, scoped, tag = 'input window, operand 1']
    loop: start=0, step=1, limit=4
    $region2: #{_lambda_.22} parent=1 // loop_pre_header
      _
    $region3: #{_lambda_.22} parent=1 // loop_header
      %s10 = sphi 0, %s14
      %p11 = scmp.ge.s32.totalorder %s10, 4
      %s18 = sphi 0, %s18
      %s20 = sphi 0, %s18
      %s21 = sphi 0, %s20
      %s35 = sphi 0, %s21
      %s41 = sphi 0, %s43
      %s44 = sphi 0, %s41
      %s45 = sphi 0, %s44
      %s61 = sphi 0, %s45
      %s65 = sphi 0, %s65
      %s67 = sphi 0, %s65
      %s68 = sphi 0, %s67
      %s82 = sphi 0, %s68
      %s88 = sphi 0, %s90
      %s91 = sphi 0, %s88
      %s92 = sphi 0, %s91
      %s108 = sphi 0, %s92
      %s114 = sphi 0, %s116
      %s117 = sphi 0, %s114
      %s118 = sphi 0, %s117
      %s134 = sphi 0, %s118
    $region4: #{_lambda_.22} parent=1 // loop_header_branch
      %13 = sbr.rel (%p11) target = $region8
    $region5: #{_lambda_.22} parent=1 // loop_body
      %s15 = ssub.s32 %s10, 1
      %s16 = ssub.s32 %s10, 2
      %s17 = sadd.s32 %s10, 1
      %s19 = sadd.s32 %s18, 1
      %p22 = scmp.eq.s32.totalorder %s10, 1
      %p23 = scmp.ne.s32.totalorder %s18, %s20
      %p24 = scmp.eq.s32.totalorder %s10, 0
      %p25 = por %p23, %p24
      %p26 = scmp.ne.s32.totalorder %s18, %s20
      %p27 = scmp.eq.s32.totalorder %s15, 1
      %p28 = por %p26, %p27
      %p29 = scmp.ne.s32.totalorder %s20, %s21
      %p30 = scmp.eq.s32.totalorder %s15, 0
      %p31 = por %p29, %p30
      %p32 = scmp.ne.s32.totalorder %s20, %s21
      %p33 = scmp.eq.s32.totalorder %s16, 1
      %p34 = por %p32, %p33
      %p36 = scmp.ne.s32.totalorder %s21, %s35
      %p37 = scmp.eq.s32.totalorder %s16, 0
      %p38 = por %p36, %p37
      %s39 = ssub.s32 %s10, %s17
      %p40 = scmp.eq.s32.totalorder %s39, 0
      %s42 = sadd.s32 %s41, 1
      %s43 = scalar_select %p40, %s41, %s42
      %p46 = pneg %p40
      %p47 = scmp.eq.s32.totalorder %s10, 1
      %p48 = por %p46, %p47
      %p49 = scmp.ne.s32.totalorder %s41, %s44
      %p50 = scmp.eq.s32.totalorder %s10, 0
      %p51 = por %p49, %p50
      %p52 = scmp.ne.s32.totalorder %s41, %s44
      %p53 = scmp.eq.s32.totalorder %s15, 1
      %p54 = por %p52, %p53
      %p55 = scmp.ne.s32.totalorder %s44, %s45
      %p56 = scmp.eq.s32.totalorder %s15, 0
      %p57 = por %p55, %p56
      %p58 = scmp.ne.s32.totalorder %s44, %s45
      %p59 = scmp.eq.s32.totalorder %s16, 1
      %p60 = por %p58, %p59
      %p62 = scmp.ne.s32.totalorder %s45, %s61
      %p63 = scmp.eq.s32.totalorder %s16, 0
      %p64 = por %p62, %p63
      %s66 = sadd.s32 %s65, 1
      %p69 = scmp.eq.s32.totalorder %s10, 1
      %p70 = scmp.ne.s32.totalorder %s65, %s67
      %p71 = scmp.eq.s32.totalorder %s10, 0
      %p72 = por %p70, %p71
      %p73 = scmp.ne.s32.totalorder %s65, %s67
      %p74 = scmp.eq.s32.totalorder %s15, 1
      %p75 = por %p73, %p74
      %p76 = scmp.ne.s32.totalorder %s67, %s68
      %p77 = scmp.eq.s32.totalorder %s15, 0
      %p78 = por %p76, %p77
      %p79 = scmp.ne.s32.totalorder %s67, %s68
      %p80 = scmp.eq.s32.totalorder %s16, 1
      %p81 = por %p79, %p80
      %p83 = scmp.ne.s32.totalorder %s68, %s82
      %p84 = scmp.eq.s32.totalorder %s16, 0
      %p85 = por %p83, %p84
      %s86 = ssub.s32 %s10, %s17
      %p87 = scmp.eq.s32.totalorder %s86, 0
      %s89 = sadd.s32 %s88, 1
      %s90 = scalar_select %p87, %s88, %s89
      %p93 = pneg %p87
      %p94 = scmp.eq.s32.totalorder %s10, 1
      %p95 = por %p93, %p94
      %p96 = scmp.ne.s32.totalorder %s88, %s91
      %p97 = scmp.eq.s32.totalorder %s10, 0
      %p98 = por %p96, %p97
      %p99 = scmp.ne.s32.totalorder %s88, %s91
      %p100 = scmp.eq.s32.totalorder %s15, 1
      %p101 = por %p99, %p100
      %p102 = scmp.ne.s32.totalorder %s91, %s92
      %p103 = scmp.eq.s32.totalorder %s15, 0
      %p104 = por %p102, %p103
      %p105 = scmp.ne.s32.totalorder %s91, %s92
      %p106 = scmp.eq.s32.totalorder %s16, 1
      %p107 = por %p105, %p106
      %p109 = scmp.ne.s32.totalorder %s92, %s108
      %p110 = scmp.eq.s32.totalorder %s16, 0
      %p111 = por %p109, %p110
      %s112 = ssub.s32 %s10, %s17
      %p113 = scmp.eq.s32.totalorder %s112, 0
      %s115 = sadd.s32 %s114, 1
      %s116 = scalar_select %p113, %s114, %s115
      %p119 = pneg %p113
      %p120 = scmp.eq.s32.totalorder %s10, 1
      %p121 = por %p119, %p120
      %p122 = scmp.ne.s32.totalorder %s114, %s117
      %p123 = scmp.eq.s32.totalorder %s10, 0
      %p124 = por %p122, %p123
      %p125 = scmp.ne.s32.totalorder %s114, %s117
      %p126 = scmp.eq.s32.totalorder %s15, 1
      %p127 = por %p125, %p126
      %p128 = scmp.ne.s32.totalorder %s117, %s118
      %p129 = scmp.eq.s32.totalorder %s15, 0
      %p130 = por %p128, %p129
      %p131 = scmp.ne.s32.totalorder %s117, %s118
      %p132 = scmp.eq.s32.totalorder %s16, 1
      %p133 = por %p131, %p132
      %p135 = scmp.ne.s32.totalorder %s118, %s134
      %p136 = scmp.eq.s32.totalorder %s16, 0
      %p137 = por %p135, %p136
      %p138 = scmp.le.s32.totalorder 1, %s10
      %p139 = scmp.lt.s32.totalorder %s10, 3
      %p140 = pnand %p138, %p139
      %p141 = pneg %p140
      // Predicated region
      $region9: #{_lambda_.22} parent=5 // pred_check
        _
      $region10: #{_lambda_.22} parent=5 // pred_check_branch
        %143 = sbr.rel (%p140) target = $region12
      $region11: #{_lambda_.22} parent=5 // pred_region
        %s144 = ssub.s32 %s10, 1
        // Predicated region
        $region13: #{_lambda_.22} parent=11 // pred_check
          %p145 = pneg %p31
        $region14: #{_lambda_.22} parent=11 // pred_check_branch
          %147 = sbr.rel (%p145) target = $region16
        $region15: #{_lambda_.22} parent=11 // pred_region
          _
        $region16: #{_lambda_.22} parent=11 // pred_fallthru
          _
        // Predicated region
        $region17: #{_lambda_.22} parent=11 // pred_check
          %p148 = pneg %p78
        $region18: #{_lambda_.22} parent=11 // pred_check_branch
          %150 = sbr.rel (%p148) target = $region20
        $region19: #{_lambda_.22} parent=11 // pred_region
          _
        $region20: #{_lambda_.22} parent=11 // pred_fallthru
          _
      $region12: #{_lambda_.22} parent=5 // pred_fallthru
        _
      %p151 = scmp.lt.s32.totalorder %s10, 2
      // Predicated region
      $region21: #{_lambda_.22} parent=5 // pred_check
        %p152 = pneg %p151
      $region22: #{_lambda_.22} parent=5 // pred_check_branch
        %154 = sbr.rel (%p152) target = $region24
      $region23: #{_lambda_.22} parent=5 // pred_region
        // Predicated region
        $region25: #{_lambda_.22} parent=23 // pred_check
          %p155 = pneg %p51
        $region26: #{_lambda_.22} parent=23 // pred_check_branch
          %157 = sbr.rel (%p155) target = $region28
        $region27: #{_lambda_.22} parent=23 // pred_region
          %s158 = sand.u32 %s41, 1
          %s159 = sand.u32 %s41, 1
          %s160 = smul.addr %s159, 288
          %s161 = scalar_lea.vmem [#allocation2], %s160
          %s162 = smul.u32 8, %s10
          %s163 = smul.addr %s162, 4
          %s164 = scalar_lea.vmem %s1, %s163
          // Predicated region
          $region29: #{_lambda_.22} parent=27 // pred_check
            _
          $region30: #{_lambda_.22} parent=27 // pred_check_branch
            %166 = sbr.rel (0) target = $region32
          $region31: #{_lambda_.22} parent=27 // pred_region
            // Predicated region
            $region33: #{_lambda_.22} parent=31 // pred_check
              _
            $region34: #{_lambda_.22} parent=31 // pred_check_branch
              %168 = sbr.rel (0) target = $region36
            $region35: #{_lambda_.22} parent=31 // pred_region
              loop: start=0, step=1, limit=1
              $region37: #{_lambda_.22} parent=35 // loop_pre_header
                _
              $region38: #{_lambda_.22} parent=35 // loop_header
                %s170 = sphi 0, %s174
                %p171 = scmp.ge.s32.totalorder %s170, 1
                %s175 = sphi %s164, %s164
                %s176 = sphi %s161, %s161
              $region39: #{_lambda_.22} parent=35 // loop_header_branch
                %173 = sbr.rel (%p171) target = $region43
              $region40: #{_lambda_.22} parent=35 // loop_body
                %v177 = vld [vmem:[%s175] sm:$0xff]
                %178 = vst [vmem:[%s176] sm:$0xff] %v177
                %v179 = vld [vmem:[%s175 + $0x8] sm:$0xff]
                %180 = vst [vmem:[%s176 + $0x8] sm:$0xff] %v179
                %v181 = vld [vmem:[%s175 + $0x10] sm:$0xff]
                %182 = vst [vmem:[%s176 + $0x10] sm:$0xff] %v181
                %v183 = vld [vmem:[%s175 + $0x18] sm:$0xff]
                %184 = vst [vmem:[%s176 + $0x18] sm:$0xff] %v183
                %v185 = vld [vmem:[%s175 + $0x40] sm:$0xff]
                %186 = vst [vmem:[%s176 + $0x20] sm:$0xff] %v185
                %v187 = vld [vmem:[%s175 + $0x48] sm:$0xff]
                %188 = vst [vmem:[%s176 + $0x28] sm:$0xff] %v187
                %v189 = vld [vmem:[%s175 + $0x50] sm:$0xff]
                %190 = vst [vmem:[%s176 + $0x30] sm:$0xff] %v189
                %v191 = vld [vmem:[%s175 + $0x58] sm:$0xff]
                %192 = vst [vmem:[%s176 + $0x38] sm:$0xff] %v191
                %v193 = vld [vmem:[%s175 + $0x80] sm:$0xff]
                %194 = vst [vmem:[%s176 + $0x40] sm:$0xff] %v193
                %v195 = vld [vmem:[%s175 + $0x88] sm:$0xff]
                %196 = vst [vmem:[%s176 + $0x48] sm:$0xff] %v195
                %v197 = vld [vmem:[%s175 + $0x90] sm:$0xff]
                %198 = vst [vmem:[%s176 + $0x50] sm:$0xff] %v197
                %v199 = vld [vmem:[%s175 + $0x98] sm:$0xff]
                %200 = vst [vmem:[%s176 + $0x58] sm:$0xff] %v199
                %v201 = vld [vmem:[%s175 + $0xc0] sm:$0xff]
                %202 = vst [vmem:[%s176 + $0x60] sm:$0xff] %v201
                %v203 = vld [vmem:[%s175 + $0xc8] sm:$0xff]
                %204 = vst [vmem:[%s176 + $0x68] sm:$0xff] %v203
                %v205 = vld [vmem:[%s175 + $0xd0] sm:$0xff]
                %206 = vst [vmem:[%s176 + $0x70] sm:$0xff] %v205
                %v207 = vld [vmem:[%s175 + $0xd8] sm:$0xff]
                %208 = vst [vmem:[%s176 + $0x78] sm:$0xff] %v207
                %v209 = vld [vmem:[%s175 + $0x100] sm:$0xff]
                %210 = vst [vmem:[%s176 + $0x80] sm:$0xff] %v209
                %v211 = vld [vmem:[%s175 + $0x108] sm:$0xff]
                %212 = vst [vmem:[%s176 + $0x88] sm:$0xff] %v211
                %v213 = vld [vmem:[%s175 + $0x110] sm:$0xff]
                %214 = vst [vmem:[%s176 + $0x90] sm:$0xff] %v213
                %v215 = vld [vmem:[%s175 + $0x118] sm:$0xff]
                %216 = vst [vmem:[%s176 + $0x98] sm:$0xff] %v215
                %v217 = vld [vmem:[%s175 + $0x140] sm:$0xff]
                %218 = vst [vmem:[%s176 + $0xa0] sm:$0xff] %v217
                %v219 = vld [vmem:[%s175 + $0x148] sm:$0xff]
                %220 = vst [vmem:[%s176 + $0xa8] sm:$0xff] %v219
                %v221 = vld [vmem:[%s175 + $0x150] sm:$0xff]
                %222 = vst [vmem:[%s176 + $0xb0] sm:$0xff] %v221
                %v223 = vld [vmem:[%s175 + $0x158] sm:$0xff]
                %224 = vst [vmem:[%s176 + $0xb8] sm:$0xff] %v223
                %v225 = vld [vmem:[%s175 + $0x180] sm:$0xff]
                %226 = vst [vmem:[%s176 + $0xc0] sm:$0xff] %v225
                %v227 = vld [vmem:[%s175 + $0x188] sm:$0xff]
                %228 = vst [vmem:[%s176 + $0xc8] sm:$0xff] %v227
                %v229 = vld [vmem:[%s175 + $0x190] sm:$0xff]
                %230 = vst [vmem:[%s176 + $0xd0] sm:$0xff] %v229
                %v231 = vld [vmem:[%s175 + $0x198] sm:$0xff]
                %232 = vst [vmem:[%s176 + $0xd8] sm:$0xff] %v231
                %v233 = vld [vmem:[%s175 + $0x1c0] sm:$0xff]
                %234 = vst [vmem:[%s176 + $0xe0] sm:$0xff] %v233
                %v235 = vld [vmem:[%s175 + $0x1c8] sm:$0xff]
                %236 = vst [vmem:[%s176 + $0xe8] sm:$0xff] %v235
                %v237 = vld [vmem:[%s175 + $0x1d0] sm:$0xff]
                %238 = vst [vmem:[%s176 + $0xf0] sm:$0xff] %v237
                %v239 = vld [vmem:[%s175 + $0x1d8] sm:$0xff]
                %240 = vst [vmem:[%s176 + $0xf8] sm:$0xff] %v239
                %v241 = vld [vmem:[%s175 + $0x200] sm:$0xff]
                %242 = vst [vmem:[%s176 + $0x100] sm:$0xff] %v241
                %v243 = vld [vmem:[%s175 + $0x208] sm:$0xff]
                %244 = vst [vmem:[%s176 + $0x108] sm:$0xff] %v243
                %v245 = vld [vmem:[%s175 + $0x210] sm:$0xff]
                %246 = vst [vmem:[%s176 + $0x110] sm:$0xff] %v245
                %v247 = vld [vmem:[%s175 + $0x218] sm:$0xff]
                %248 = vst [vmem:[%s176 + $0x118] sm:$0xff] %v247
              $region41: #{_lambda_.22} parent=35 // loop_footer
                %s174 = sadd.s32 1, %s170
              $region42: #{_lambda_.22} parent=35 // loop_footer_branch
                %169 = sbr.rel target = $region38
              $region43: #{_lambda_.22} parent=35 // loop_exit
                _
            $region36: #{_lambda_.22} parent=31 // pred_fallthru
              _
            // Predicated region
            $region44: #{_lambda_.22} parent=31 // pred_check
              _
            $region45: #{_lambda_.22} parent=31 // pred_check_branch
              %250 = sbr.rel target = $region47
            $region46: #{_lambda_.22} parent=31 // pred_region
              _
            $region47: #{_lambda_.22} parent=31 // pred_fallthru
              _
          $region32: #{_lambda_.22} parent=27 // pred_fallthru
            _
          %251 = vnop
        $region28: #{_lambda_.22} parent=23 // pred_fallthru
          _
        // Predicated region
        $region48: #{_lambda_.22} parent=23 // pred_check
          %p252 = pneg %p98
        $region49: #{_lambda_.22} parent=23 // pred_check_branch
          %254 = sbr.rel (%p252) target = $region51
        $region50: #{_lambda_.22} parent=23 // pred_region
          %s255 = smul.u32 8, %s10
          %p256 = scmp.lt.s32.totalorder %s255, 15
          %s257 = scalar_select %p256, %s255, 15
          %s258 = smul.addr %s257, 8
          %s259 = scalar_lea.vmem %s3, %s258
          %s260 = smul.u32 8, %s10
        $region51: #{_lambda_.22} parent=23 // pred_fallthru
          _
      $region24: #{_lambda_.22} parent=5 // pred_fallthru
        _
      %p261 = scmp.le.s32.totalorder 1, %s10
      %p262 = scmp.lt.s32.totalorder %s10, 3
      %p263 = pnand %p261, %p262
      %p264 = pneg %p263
      // Predicated region
      $region52: #{_lambda_.22} parent=5 // pred_check
        _
      $region53: #{_lambda_.22} parent=5 // pred_check_branch
        %266 = sbr.rel (%p263) target = $region55
      $region54: #{_lambda_.22} parent=5 // pred_region
        %s267 = ssub.s32 %s10, 1
        %s268 = sand.u32 %s44, 1
        %s269 = sand.u32 %s44, 1
        %s270 = smul.addr %s269, 288
        %s271 = scalar_lea.vmem [#allocation2], %s270
        // Predicated region
        $region56: #{_lambda_.22} parent=54 // pred_check
          %p272 = pneg %p57
        $region57: #{_lambda_.22} parent=54 // pred_check_branch
          %274 = sbr.rel (%p272) target = $region59
        $region58: #{_lambda_.22} parent=54 // pred_region
          _
        $region59: #{_lambda_.22} parent=54 // pred_fallthru
          _
        %p275 = pneg %p31
        %p276 = pneg %p28
        %s277 = sand.u32 %s44, 1
        %s278 = sand.u32 %s44, 1
        %s279 = smul.addr %s278, 288
        %s280 = scalar_lea.vmem [#allocation2], %s279
        %p281 = pneg %p57
        %p282 = pneg %p54
        %p283 = pneg %p78
        %p284 = pneg %p75
        %s285 = smul.u32 8, %s15
        %p286 = scmp.lt.s32.totalorder %s285, 15
        %s287 = scalar_select %p286, %s285, 15
        %s288 = smul.addr %s287, 8
        %s289 = scalar_lea.vmem %s3, %s288
        %p290 = pneg %p104
        %p291 = pneg %p101
        %p292 = pneg %p130
        %p293 = pneg %p127
        %s294 = smul.u32 8, %s15
        %p295 = scmp.lt.s32.totalorder %s294, 15
        %s296 = scalar_select %p295, %s294, 15
        %s297 = smul.addr %s296, 8
        %s298 = scalar_lea.vmem %s4, %s297
        %s299 = smul.u32 8, %s15
        %s300 = smul.u32 8, %s15
        %p301 = scmp.lt.s32.totalorder %s300, 15
        %s302 = scalar_select %p301, %s300, 15
        %s303 = smul.addr %s302, 8
        %s304 = scalar_lea.vmem %s3, %s303
        %s305 = smul.u32 8, %s15
        %s306 = smul.u32 8, %s15
        %p307 = scmp.lt.s32.totalorder %s306, 15
        %s308 = scalar_select %p307, %s306, 15
        %s309 = smul.addr %s308, 8
        %s310 = scalar_lea.vmem %s4, %s309
        %s311 = smul.u32 8, %s15
        %v313 = vld [vmem:[%s0] sm:$0xf]
        %v314 = vld [vmem:[%s271] sm:$0xff]
        %v315 = vld [vmem:[%s271 + $0x8] sm:$0xff]
        %v316 = vld [vmem:[%s271 + $0x10] sm:$0xff]
        %v317 = vld [vmem:[%s271 + $0x18] sm:$0xff]
        %v318 = vld [vmem:[%s271 + $0x20] sm:$0xff]
        %v319 = vld [vmem:[%s271 + $0x28] sm:$0xff]
        %v320 = vld [vmem:[%s271 + $0x30] sm:$0xff]
        %v321 = vld [vmem:[%s271 + $0x38] sm:$0xff]
        %v322 = vld [vmem:[%s271 + $0x40] sm:$0xff]
        %v323 = vld [vmem:[%s271 + $0x48] sm:$0xff]
        %v324 = vld [vmem:[%s271 + $0x50] sm:$0xff]
        %v325 = vld [vmem:[%s271 + $0x58] sm:$0xff]
        %v326 = vld [vmem:[%s271 + $0x60] sm:$0xff]
        %v327 = vld [vmem:[%s271 + $0x68] sm:$0xff]
        %v328 = vld [vmem:[%s271 + $0x70] sm:$0xff]
        %v329 = vld [vmem:[%s271 + $0x78] sm:$0xff]
        %v330 = vld [vmem:[%s271 + $0x80] sm:$0xff]
        %v331 = vld [vmem:[%s271 + $0x88] sm:$0xff]
        %v332 = vld [vmem:[%s271 + $0x90] sm:$0xff]
        %v333 = vld [vmem:[%s271 + $0x98] sm:$0xff]
        %v334 = vld [vmem:[%s271 + $0xa0] sm:$0xff]
        %v335 = vld [vmem:[%s271 + $0xa8] sm:$0xff]
        %v336 = vld [vmem:[%s271 + $0xb0] sm:$0xff]
        %v337 = vld [vmem:[%s271 + $0xb8] sm:$0xff]
        %v338 = vld [vmem:[%s271 + $0xc0] sm:$0xff]
        %v339 = vld [vmem:[%s271 + $0xc8] sm:$0xff]
        %v340 = vld [vmem:[%s271 + $0xd0] sm:$0xff]
        %v341 = vld [vmem:[%s271 + $0xd8] sm:$0xff]
        %v342 = vld [vmem:[%s271 + $0xe0] sm:$0xff]
        %v343 = vld [vmem:[%s271 + $0xe8] sm:$0xff]
        %v344 = vld [vmem:[%s271 + $0xf0] sm:$0xff]
        %v345 = vld [vmem:[%s271 + $0xf8] sm:$0xff]
        %v346 = vld [vmem:[%s271 + $0x100] sm:$0xff]
        %v347 = vld [vmem:[%s271 + $0x108] sm:$0xff]
        %v348 = vld [vmem:[%s271 + $0x110] sm:$0xff]
        %v349 = vld [vmem:[%s271 + $0x118] sm:$0xff]
        %v350 = vld [vmem:[%s2] sm:$0xff]
        %352 = vset.pattern.permute.xlu0 0
        %353 = vperm.xlu0 %352, %v350
        %v354 = vpop.permute.xlu0 %353
        %v392 = vunpack.c.l.b16 %v314
        %v393 = vunpack.c.h.b16 %v314
        %v394 = vunpack.c.l.b16 %v315
        %v395 = vunpack.c.h.b16 %v315
        %v396 = vunpack.c.l.b16 %v316
        %v397 = vunpack.c.h.b16 %v316
        %v398 = vunpack.c.l.b16 %v317
        %v399 = vunpack.c.h.b16 %v317
        %v400 = vunpack.c.l.b16 %v318
        %v401 = vunpack.c.h.b16 %v318
        %v402 = vunpack.c.l.b16 %v319
        %v403 = vunpack.c.h.b16 %v319
        %v404 = vunpack.c.l.b16 %v320
        %v405 = vunpack.c.h.b16 %v320
        %v406 = vunpack.c.l.b16 %v321
        %v407 = vunpack.c.h.b16 %v321
        %v408 = vunpack.c.l.b16 %v322
        %v409 = vunpack.c.h.b16 %v322
        %v410 = vunpack.c.l.b16 %v323
        %v411 = vunpack.c.h.b16 %v323
        %v412 = vunpack.c.l.b16 %v324
        %v413 = vunpack.c.h.b16 %v324
        %v414 = vunpack.c.l.b16 %v325
        %v415 = vunpack.c.h.b16 %v325
        %v416 = vunpack.c.l.b16 %v326
        %v417 = vunpack.c.h.b16 %v326
        %v418 = vunpack.c.l.b16 %v327
        %v419 = vunpack.c.h.b16 %v327
        %v420 = vunpack.c.l.b16 %v328
        %v421 = vunpack.c.h.b16 %v328
        %v422 = vunpack.c.l.b16 %v329
        %v423 = vunpack.c.h.b16 %v329
        %v424 = vunpack.c.l.b16 %v330
        %v425 = vunpack.c.h.b16 %v330
        %v426 = vunpack.c.l.b16 %v331
        %v427 = vunpack.c.h.b16 %v331
        %v428 = vunpack.c.l.b16 %v332
        %v429 = vunpack.c.h.b16 %v332
        %v430 = vunpack.c.l.b16 %v333
        %v431 = vunpack.c.h.b16 %v333
        %v432 = vunpack.c.l.b16 %v334
        %v433 = vunpack.c.h.b16 %v334
        %v434 = vunpack.c.l.b16 %v335
        %v435 = vunpack.c.h.b16 %v335
        %v436 = vunpack.c.l.b16 %v336
        %v437 = vunpack.c.h.b16 %v336
        %v438 = vunpack.c.l.b16 %v337
        %v439 = vunpack.c.h.b16 %v337
        %v440 = vunpack.c.l.b16 %v338
        %v441 = vunpack.c.h.b16 %v338
        %v442 = vunpack.c.l.b16 %v339
        %v443 = vunpack.c.h.b16 %v339
        %v444 = vunpack.c.l.b16 %v340
        %v445 = vunpack.c.h.b16 %v340
        %v446 = vunpack.c.l.b16 %v341
        %v447 = vunpack.c.h.b16 %v341
        %v448 = vunpack.c.l.b16 %v342
        %v449 = vunpack.c.h.b16 %v342
        %v450 = vunpack.c.l.b16 %v343
        %v451 = vunpack.c.h.b16 %v343
        %v452 = vunpack.c.l.b16 %v344
        %v453 = vunpack.c.h.b16 %v344
        %v454 = vunpack.c.l.b16 %v345
        %v455 = vunpack.c.h.b16 %v345
        %v456 = vunpack.c.l.b16 %v346
        %v457 = vunpack.c.h.b16 %v346
        %v458 = vunpack.c.l.b16 %v347
        %v459 = vunpack.c.h.b16 %v347
        %v460 = vunpack.c.l.b16 %v348
        %v461 = vunpack.c.h.b16 %v348
        %v462 = vunpack.c.l.b16 %v349
        %v463 = vunpack.c.h.b16 %v349
        %v464 = vpack.c.b16 %v400, %v392
        %v465 = vpack.c.b16 %v401, %v393
        %v466 = vpack.c.b16 %v402, %v394
        %v467 = vpack.c.b16 %v403, %v395
        %v468 = vpack.c.b16 %v404, %v396
        %v469 = vpack.c.b16 %v405, %v397
        %v470 = vpack.c.b16 %v406, %v398
        %v471 = vpack.c.b16 %v407, %v399
        %v472 = vpack.c.b16 %v416, %v408
        %v473 = vpack.c.b16 %v417, %v409
        %v474 = vpack.c.b16 %v418, %v410
        %v475 = vpack.c.b16 %v419, %v411
        %v476 = vpack.c.b16 %v420, %v412
        %v477 = vpack.c.b16 %v421, %v413
        %v478 = vpack.c.b16 %v422, %v414
        %v479 = vpack.c.b16 %v423, %v415
        %v480 = vpack.c.b16 %v432, %v424
        %v481 = vpack.c.b16 %v433, %v425
        %v482 = vpack.c.b16 %v434, %v426
        %v483 = vpack.c.b16 %v435, %v427
        %v484 = vpack.c.b16 %v436, %v428
        %v485 = vpack.c.b16 %v437, %v429
        %v486 = vpack.c.b16 %v438, %v430
        %v487 = vpack.c.b16 %v439, %v431
        %v488 = vpack.c.b16 %v448, %v440
        %v489 = vpack.c.b16 %v449, %v441
        %v490 = vpack.c.b16 %v450, %v442
        %v491 = vpack.c.b16 %v451, %v443
        %v492 = vpack.c.b16 %v452, %v444
        %v493 = vpack.c.b16 %v453, %v445
        %v494 = vpack.c.b16 %v454, %v446
        %v495 = vpack.c.b16 %v455, %v447
        %v496 = vpack.c.b16 %v456, %v456
        %v497 = vpack.c.b16 %v457, %v457
        %v498 = vpack.c.b16 %v458, %v458
        %v499 = vpack.c.b16 %v459, %v459
        %v500 = vpack.c.b16 %v460, %v460
        %v501 = vpack.c.b16 %v461, %v461
        %v502 = vpack.c.b16 %v462, %v462
        %v503 = vpack.c.b16 %v463, %v463
        %vm536 = vcmask 588800
        %v538 = vsel %vm536, %v313, 0
        %vm540 = vcmask 1043456
        %v542 = vsel %vm540, %v496, 0
        %v545 = vsel %vm540, %v497, 0
        %v548 = vsel %vm540, %v498, 0
        %v551 = vsel %vm540, %v499, 0
        %v554 = vsel %vm540, %v500, 0
        %v557 = vsel %vm540, %v501, 0
        %v560 = vsel %vm540, %v502, 0
        %v563 = vsel %vm540, %v503, 0
        %565 = vmatpush.bf16.msra.mxu0 0
        %566 = vmatpush.bf16.msra.mxu0 0
        %567 = vmatpush.bf16.msra.mxu0 0
        %568 = vmatpush.bf16.msra.mxu0 %v542
        %569 = vmatpush.bf16.msra.mxu0 %v488
        %570 = vmatpush.bf16.msra.mxu0 %v480
        %571 = vmatpush.bf16.msra.mxu0 %v472
        %572 = vmatpush.bf16.msra.mxu0 %v464
        %573 = vmatmul.bf16.gmra.mxu0 %v538
        %v574 = vpop.f32.mrf.mxu0
        %v575 = vadd.f32 %v354, %v574
        %v576 = vpop.f32.mrf.mxu0
        %577 = vdwg.mxu0
        %578 = vmatpush.bf16.msra.mxu0 0
        %579 = vmatpush.bf16.msra.mxu0 0
        %580 = vmatpush.bf16.msra.mxu0 0
        %581 = vmatpush.bf16.msra.mxu0 %v545
        %582 = vmatpush.bf16.msra.mxu0 %v489
        %583 = vmatpush.bf16.msra.mxu0 %v481
        %584 = vmatpush.bf16.msra.mxu0 %v473
        %585 = vmatpush.bf16.msra.mxu0 %v465
        %586 = vmatmul.bf16.gmra.mxu0 %v538
        %v587 = vpop.f32.mrf.mxu0
        %v588 = vadd.f32 %v354, %v587
        %v589 = vpop.f32.mrf.mxu0
        %590 = vdwg.mxu0
        %591 = vmatpush.bf16.msra.mxu0 0
        %592 = vmatpush.bf16.msra.mxu0 0
        %593 = vmatpush.bf16.msra.mxu0 0
        %594 = vmatpush.bf16.msra.mxu0 %v548
        %595 = vmatpush.bf16.msra.mxu0 %v490
        %596 = vmatpush.bf16.msra.mxu0 %v482
        %597 = vmatpush.bf16.msra.mxu0 %v474
        %598 = vmatpush.bf16.msra.mxu0 %v466
        %599 = vmatmul.bf16.gmra.mxu0 %v538
        %v600 = vpop.f32.mrf.mxu0
        %v601 = vadd.f32 %v354, %v600
        %v602 = vpop.f32.mrf.mxu0
        %603 = vdwg.mxu0
        %604 = vmatpush.bf16.msra.mxu0 0
        %605 = vmatpush.bf16.msra.mxu0 0
        %606 = vmatpush.bf16.msra.mxu0 0
        %607 = vmatpush.bf16.msra.mxu0 %v551
        %608 = vmatpush.bf16.msra.mxu0 %v491
        %609 = vmatpush.bf16.msra.mxu0 %v483
        %610 = vmatpush.bf16.msra.mxu0 %v475
        %611 = vmatpush.bf16.msra.mxu0 %v467
        %612 = vmatmul.bf16.gmra.mxu0 %v538
        %v613 = vpop.f32.mrf.mxu0
        %v614 = vadd.f32 %v354, %v613
        %v615 = vpop.f32.mrf.mxu0
        %616 = vdwg.mxu0
        %617 = vmatpush.bf16.msra.mxu0 0
        %618 = vmatpush.bf16.msra.mxu0 0
        %619 = vmatpush.bf16.msra.mxu0 0
        %620 = vmatpush.bf16.msra.mxu0 %v554
        %621 = vmatpush.bf16.msra.mxu0 %v492
        %622 = vmatpush.bf16.msra.mxu0 %v484
        %623 = vmatpush.bf16.msra.mxu0 %v476
        %624 = vmatpush.bf16.msra.mxu0 %v468
        %625 = vmatmul.bf16.gmra.mxu0 %v538
        %v626 = vpop.f32.mrf.mxu0
        %v627 = vadd.f32 %v354, %v626
        %v628 = vpop.f32.mrf.mxu0
        %629 = vdwg.mxu0
        %630 = vmatpush.bf16.msra.mxu0 0
        %631 = vmatpush.bf16.msra.mxu0 0
        %632 = vmatpush.bf16.msra.mxu0 0
        %633 = vmatpush.bf16.msra.mxu0 %v557
        %634 = vmatpush.bf16.msra.mxu0 %v493
        %635 = vmatpush.bf16.msra.mxu0 %v485
        %636 = vmatpush.bf16.msra.mxu0 %v477
        %637 = vmatpush.bf16.msra.mxu0 %v469
        %638 = vmatmul.bf16.gmra.mxu0 %v538
        %v639 = vpop.f32.mrf.mxu0
        %v640 = vadd.f32 %v354, %v639
        %v641 = vpop.f32.mrf.mxu0
        %642 = vdwg.mxu0
        %643 = vmatpush.bf16.msra.mxu0 0
        %644 = vmatpush.bf16.msra.mxu0 0
        %645 = vmatpush.bf16.msra.mxu0 0
        %646 = vmatpush.bf16.msra.mxu0 %v560
        %647 = vmatpush.bf16.msra.mxu0 %v494
        %648 = vmatpush.bf16.msra.mxu0 %v486
        %649 = vmatpush.bf16.msra.mxu0 %v478
        %650 = vmatpush.bf16.msra.mxu0 %v470
        %651 = vmatmul.bf16.gmra.mxu0 %v538
        %v652 = vpop.f32.mrf.mxu0
        %v653 = vadd.f32 %v354, %v652
        %v654 = vpop.f32.mrf.mxu0
        %655 = vdwg.mxu0
        %656 = vmatpush.bf16.msra.mxu0 0
        %657 = vmatpush.bf16.msra.mxu0 0
        %658 = vmatpush.bf16.msra.mxu0 0
        %659 = vmatpush.bf16.msra.mxu0 %v563
        %660 = vmatpush.bf16.msra.mxu0 %v495
        %661 = vmatpush.bf16.msra.mxu0 %v487
        %662 = vmatpush.bf16.msra.mxu0 %v479
        %663 = vmatpush.bf16.msra.mxu0 %v471
        %664 = vmatmul.bf16.gmra.mxu0 %v538
        %v665 = vpop.f32.mrf.mxu0
        %v666 = vadd.f32 %v354, %v665
        %v667 = vpop.f32.mrf.mxu0
        %668 = vdwg.mxu0
        %v669 = vld [vmem:[%s304] sm:$0xff]
        %v670 = vld [vmem:[%s304 + $0x8] sm:$0xff]
        %v671 = vld [vmem:[%s304 + $0x10] sm:$0xff]
        %v672 = vld [vmem:[%s304 + $0x18] sm:$0xff]
        %v673 = vld [vmem:[%s304 + $0x20] sm:$0xff]
        %v674 = vld [vmem:[%s304 + $0x28] sm:$0xff]
        %v675 = vld [vmem:[%s304 + $0x30] sm:$0xff]
        %v676 = vld [vmem:[%s304 + $0x38] sm:$0xff]
        %v677 = vadd.f32 %v575, %v669
        %v678 = vadd.f32 %v588, %v670
        %v679 = vadd.f32 %v601, %v671
        %v680 = vadd.f32 %v614, %v672
        %v681 = vadd.f32 %v627, %v673
        %v682 = vadd.f32 %v640, %v674
        %v683 = vadd.f32 %v653, %v675
        %v684 = vadd.f32 %v666, %v676
        %v685 = vmax.f32 %v677, 0.0
        %v686 = vmax.f32 %v678, 0.0
        %v687 = vmax.f32 %v679, 0.0
        %v688 = vmax.f32 %v680, 0.0
        %v689 = vmax.f32 %v681, 0.0
        %v690 = vmax.f32 %v682, 0.0
        %v691 = vmax.f32 %v683, 0.0
        %v692 = vmax.f32 %v684, 0.0
        %693 = vst [vmem:[%s310] sm:$0xff] %v685
        %694 = vst [vmem:[%s310 + $0x8] sm:$0xff] %v686
        %695 = vst [vmem:[%s310 + $0x10] sm:$0xff] %v687
        %696 = vst [vmem:[%s310 + $0x18] sm:$0xff] %v688
        %697 = vst [vmem:[%s310 + $0x20] sm:$0xff] %v689
        %698 = vst [vmem:[%s310 + $0x28] sm:$0xff] %v690
        %699 = vst [vmem:[%s310 + $0x30] sm:$0xff] %v691
        %700 = vst [vmem:[%s310 + $0x38] sm:$0xff] %v692
        %s701 = smul.u32 8, %s15
        %p702 = scmp.lt.s32.totalorder %s701, 15
        %s703 = scalar_select %p702, %s701, 15
        %s704 = smul.addr %s703, 8
        %s705 = scalar_lea.vmem %s4, %s704
        // Predicated region
        $region60: #{_lambda_.22} parent=54 // pred_check
          %p706 = pneg %p127
        $region61: #{_lambda_.22} parent=54 // pred_check_branch
          %708 = sbr.rel (%p706) target = $region63
        $region62: #{_lambda_.22} parent=54 // pred_region
          %s709 = smul.u32 8, %s15
        $region63: #{_lambda_.22} parent=54 // pred_fallthru
          _
      $region55: #{_lambda_.22} parent=5 // pred_fallthru
        _
      %p710 = scmp.le.s32.totalorder 2, %s10
      // Predicated region
      $region64: #{_lambda_.22} parent=5 // pred_check
        %p711 = pneg %p710
      $region65: #{_lambda_.22} parent=5 // pred_check_branch
        %713 = sbr.rel (%p711) target = $region67
      $region66: #{_lambda_.22} parent=5 // pred_region
        %s714 = ssub.s32 %s10, 2
        // Predicated region
        $region68: #{_lambda_.22} parent=66 // pred_check
          %p715 = pneg %p133
        $region69: #{_lambda_.22} parent=66 // pred_check_branch
          %717 = sbr.rel (%p715) target = $region71
        $region70: #{_lambda_.22} parent=66 // pred_region
          %s718 = smul.u32 8, %s16
          %p719 = scmp.lt.s32.totalorder %s718, 15
          %s720 = scalar_select %p719, %s718, 15
          %s721 = smul.addr %s720, 8
          %s722 = scalar_lea.vmem %s4, %s721
        $region71: #{_lambda_.22} parent=66 // pred_fallthru
          _
      $region67: #{_lambda_.22} parent=5 // pred_fallthru
        _
    $region6: #{_lambda_.22} parent=1 // loop_footer
      %s14 = sadd.s32 1, %s10
    $region7: #{_lambda_.22} parent=1 // loop_footer_branch
      %9 = sbr.rel target = $region3
    $region8: #{_lambda_.22} parent=1 // loop_exit
      _

// kernel: _lambda_.25
$region0: #{_lambda_.25}
  #allocation0 [shape = 'u32[]', space=smem, size = 0x4, offset = 0x4, fixed_abs, tag = 'smem constant byte address 0x4 - core index']
  #allocation1 [shape = 'u32[72,128]{1,0:T(1,128)}', space=vmem, size = 0x9000, scoped, tag = 'internal scratch']
  %s0 = inlined_call_operand.vmem [shape: bf16[32,72], index: 0, kind: input, shape index: {}]
  %s1 = inlined_call_operand.vmem [shape: bf16[72,512], index: 1, kind: input, shape index: {}]
  %s2 = inlined_call_operand.vmem [shape: f32[32,1], index: 2, kind: input, shape index: {}]
  %s3 = inlined_call_operand.vmem [shape: f32[32,512], index: 3, kind: output, shape index: {}]
  %s4 = sld [smem:[#allocation0]]
  $region102: #{_lambda_.25} parent=0
    _
  %s6 = ssub.s32 1, %s4
  %s7 = scalar_select 0, %s6, %s4
  $region1: #{_lambda_.25} parent=0
    #allocation2 [shape = 'u8[73728]{0}', space=vmem, size = 0x12000, scoped, tag = 'input window, operand 1']
    #allocation3 [shape = 'u8[65536]{0}', space=vmem, size = 0x10000, scoped, tag = 'output window, operand 0']
    loop: start=0, step=1, limit=4
    $region2: #{_lambda_.25} parent=1 // loop_pre_header
      _
    $region3: #{_lambda_.25} parent=1 // loop_header
      %s9 = sphi 0, %s13
      %p10 = scmp.ge.s32.totalorder %s9, 4
      %s17 = sphi 0, %s17
      %s19 = sphi 0, %s17
      %s20 = sphi 0, %s19
      %s34 = sphi 0, %s20
      %s40 = sphi 0, %s42
      %s43 = sphi 0, %s40
      %s44 = sphi 0, %s43
      %s60 = sphi 0, %s44
      %s64 = sphi 0, %s64
      %s66 = sphi 0, %s64
      %s67 = sphi 0, %s66
      %s81 = sphi 0, %s67
      %s87 = sphi 0, %s89
      %s90 = sphi 0, %s87
      %s91 = sphi 0, %s90
      %s107 = sphi 0, %s91
    $region4: #{_lambda_.25} parent=1 // loop_header_branch
      %12 = sbr.rel (%p10) target = $region8
    $region5: #{_lambda_.25} parent=1 // loop_body
      %s14 = ssub.s32 %s9, 1
      %s15 = ssub.s32 %s9, 2
      %s16 = sadd.s32 %s9, 1
      %s18 = sadd.s32 %s17, 1
      %p21 = scmp.eq.s32.totalorder %s9, 1
      %p22 = scmp.ne.s32.totalorder %s17, %s19
      %p23 = scmp.eq.s32.totalorder %s9, 0
      %p24 = por %p22, %p23
      %p25 = scmp.ne.s32.totalorder %s17, %s19
      %p26 = scmp.eq.s32.totalorder %s14, 1
      %p27 = por %p25, %p26
      %p28 = scmp.ne.s32.totalorder %s19, %s20
      %p29 = scmp.eq.s32.totalorder %s14, 0
      %p30 = por %p28, %p29
      %p31 = scmp.ne.s32.totalorder %s19, %s20
      %p32 = scmp.eq.s32.totalorder %s15, 1
      %p33 = por %p31, %p32
      %p35 = scmp.ne.s32.totalorder %s20, %s34
      %p36 = scmp.eq.s32.totalorder %s15, 0
      %p37 = por %p35, %p36
      %s38 = ssub.s32 %s9, %s16
      %p39 = scmp.eq.s32.totalorder %s38, 0
      %s41 = sadd.s32 %s40, 1
      %s42 = scalar_select %p39, %s40, %s41
      %p45 = pneg %p39
      %p46 = scmp.eq.s32.totalorder %s9, 1
      %p47 = por %p45, %p46
      %p48 = scmp.ne.s32.totalorder %s40, %s43
      %p49 = scmp.eq.s32.totalorder %s9, 0
      %p50 = por %p48, %p49
      %p51 = scmp.ne.s32.totalorder %s40, %s43
      %p52 = scmp.eq.s32.totalorder %s14, 1
      %p53 = por %p51, %p52
      %p54 = scmp.ne.s32.totalorder %s43, %s44
      %p55 = scmp.eq.s32.totalorder %s14, 0
      %p56 = por %p54, %p55
      %p57 = scmp.ne.s32.totalorder %s43, %s44
      %p58 = scmp.eq.s32.totalorder %s15, 1
      %p59 = por %p57, %p58
      %p61 = scmp.ne.s32.totalorder %s44, %s60
      %p62 = scmp.eq.s32.totalorder %s15, 0
      %p63 = por %p61, %p62
      %s65 = sadd.s32 %s64, 1
      %p68 = scmp.eq.s32.totalorder %s9, 1
      %p69 = scmp.ne.s32.totalorder %s64, %s66
      %p70 = scmp.eq.s32.totalorder %s9, 0
      %p71 = por %p69, %p70
      %p72 = scmp.ne.s32.totalorder %s64, %s66
      %p73 = scmp.eq.s32.totalorder %s14, 1
      %p74 = por %p72, %p73
      %p75 = scmp.ne.s32.totalorder %s66, %s67
      %p76 = scmp.eq.s32.totalorder %s14, 0
      %p77 = por %p75, %p76
      %p78 = scmp.ne.s32.totalorder %s66, %s67
      %p79 = scmp.eq.s32.totalorder %s15, 1
      %p80 = por %p78, %p79
      %p82 = scmp.ne.s32.totalorder %s67, %s81
      %p83 = scmp.eq.s32.totalorder %s15, 0
      %p84 = por %p82, %p83
      %s85 = ssub.s32 %s9, %s16
      %p86 = scmp.eq.s32.totalorder %s85, 0
      %s88 = sadd.s32 %s87, 1
      %s89 = scalar_select %p86, %s87, %s88
      %p92 = pneg %p86
      %p93 = scmp.eq.s32.totalorder %s9, 1
      %p94 = por %p92, %p93
      %p95 = scmp.ne.s32.totalorder %s87, %s90
      %p96 = scmp.eq.s32.totalorder %s9, 0
      %p97 = por %p95, %p96
      %p98 = scmp.ne.s32.totalorder %s87, %s90
      %p99 = scmp.eq.s32.totalorder %s14, 1
      %p100 = por %p98, %p99
      %p101 = scmp.ne.s32.totalorder %s90, %s91
      %p102 = scmp.eq.s32.totalorder %s14, 0
      %p103 = por %p101, %p102
      %p104 = scmp.ne.s32.totalorder %s90, %s91
      %p105 = scmp.eq.s32.totalorder %s15, 1
      %p106 = por %p104, %p105
      %p108 = scmp.ne.s32.totalorder %s91, %s107
      %p109 = scmp.eq.s32.totalorder %s15, 0
      %p110 = por %p108, %p109
      %p111 = scmp.le.s32.totalorder 1, %s9
      %p112 = scmp.lt.s32.totalorder %s9, 3
      %p113 = pnand %p111, %p112
      %p114 = pneg %p113
      // Predicated region
      $region9: #{_lambda_.25} parent=5 // pred_check
        _
      $region10: #{_lambda_.25} parent=5 // pred_check_branch
        %116 = sbr.rel (%p113) target = $region12
      $region11: #{_lambda_.25} parent=5 // pred_region
        %s117 = ssub.s32 %s9, 1
        // Predicated region
        $region13: #{_lambda_.25} parent=11 // pred_check
          %p118 = pneg %p30
        $region14: #{_lambda_.25} parent=11 // pred_check_branch
          %120 = sbr.rel (%p118) target = $region16
        $region15: #{_lambda_.25} parent=11 // pred_region
          _
        $region16: #{_lambda_.25} parent=11 // pred_fallthru
          _
        // Predicated region
        $region17: #{_lambda_.25} parent=11 // pred_check
          %p121 = pneg %p77
        $region18: #{_lambda_.25} parent=11 // pred_check_branch
          %123 = sbr.rel (%p121) target = $region20
        $region19: #{_lambda_.25} parent=11 // pred_region
          _
        $region20: #{_lambda_.25} parent=11 // pred_fallthru
          _
      $region12: #{_lambda_.25} parent=5 // pred_fallthru
        _
      %p124 = scmp.lt.s32.totalorder %s9, 2
      // Predicated region
      $region21: #{_lambda_.25} parent=5 // pred_check
        %p125 = pneg %p124
      $region22: #{_lambda_.25} parent=5 // pred_check_branch
        %127 = sbr.rel (%p125) target = $region24
      $region23: #{_lambda_.25} parent=5 // pred_region
        // Predicated region
        $region25: #{_lambda_.25} parent=23 // pred_check
          %p128 = pneg %p50
        $region26: #{_lambda_.25} parent=23 // pred_check_branch
          %130 = sbr.rel (%p128) target = $region28
        $region27: #{_lambda_.25} parent=23 // pred_region
          %s131 = sand.u32 %s40, 1
          %s132 = sand.u32 %s40, 1
          %s133 = smul.addr %s132, 72
          %s134 = scalar_lea.vmem [#allocation2], %s133
          %s135 = smul.u32 2, %s9
          %s136 = smul.addr %s135, 4
          %s137 = scalar_lea.vmem %s1, %s136
          // Predicated region
          $region29: #{_lambda_.25} parent=27 // pred_check
            _
          $region30: #{_lambda_.25} parent=27 // pred_check_branch
            %139 = sbr.rel (0) target = $region32
          $region31: #{_lambda_.25} parent=27 // pred_region
            // Predicated region
            $region33: #{_lambda_.25} parent=31 // pred_check
              _
            $region34: #{_lambda_.25} parent=31 // pred_check_branch
              %141 = sbr.rel (0) target = $region36
            $region35: #{_lambda_.25} parent=31 // pred_region
              // Predicated region
              $region48: #{_lambda_.25} parent=35 // pred_check
                _
              $region49: #{_lambda_.25} parent=35 // pred_check_branch
                %173 = sbr.rel (0) target = $region51
              $region50: #{_lambda_.25} parent=35 // pred_region
                loop: start=0, step=1, limit=1
                $region52: #{_lambda_.25} parent=50 // loop_pre_header
                  _
                $region53: #{_lambda_.25} parent=50 // loop_header
                  %s175 = sphi 0, %s179
                  %p176 = scmp.ge.s32.totalorder %s175, 1
                  %s180 = sphi %s137, %s137
                  %s181 = sphi %s134, %s134
                $region54: #{_lambda_.25} parent=50 // loop_header_branch
                  %178 = sbr.rel (%p176) target = $region58
                $region55: #{_lambda_.25} parent=50 // loop_body
                  %v182 = vld [vmem:[%s180] sm:$0xff]
                  %183 = vst [vmem:[%s181] sm:$0xff] %v182
                  %v184 = vld [vmem:[%s180 + $0x10] sm:$0xff]
                  %185 = vst [vmem:[%s181 + $0x8] sm:$0xff] %v184
                  %v186 = vld [vmem:[%s180 + $0x20] sm:$0xff]
                  %187 = vst [vmem:[%s181 + $0x10] sm:$0xff] %v186
                  %v188 = vld [vmem:[%s180 + $0x30] sm:$0xff]
                  %189 = vst [vmem:[%s181 + $0x18] sm:$0xff] %v188
                  %v190 = vld [vmem:[%s180 + $0x40] sm:$0xff]
                  %191 = vst [vmem:[%s181 + $0x20] sm:$0xff] %v190
                  %v192 = vld [vmem:[%s180 + $0x50] sm:$0xff]
                  %193 = vst [vmem:[%s181 + $0x28] sm:$0xff] %v192
                  %v194 = vld [vmem:[%s180 + $0x60] sm:$0xff]
                  %195 = vst [vmem:[%s181 + $0x30] sm:$0xff] %v194
                  %v196 = vld [vmem:[%s180 + $0x70] sm:$0xff]
                  %197 = vst [vmem:[%s181 + $0x38] sm:$0xff] %v196
                  %v198 = vld [vmem:[%s180 + $0x80] sm:$0xff]
                  %199 = vst [vmem:[%s181 + $0x40] sm:$0xff] %v198
                $region56: #{_lambda_.25} parent=50 // loop_footer
                  %s179 = sadd.s32 1, %s175
                $region57: #{_lambda_.25} parent=50 // loop_footer_branch
                  %174 = sbr.rel target = $region53
                $region58: #{_lambda_.25} parent=50 // loop_exit
                  _
              $region51: #{_lambda_.25} parent=35 // pred_fallthru
                _
              // Predicated region
              $region59: #{_lambda_.25} parent=35 // pred_check
                _
              $region60: #{_lambda_.25} parent=35 // pred_check_branch
                %201 = sbr.rel target = $region62
              $region61: #{_lambda_.25} parent=35 // pred_region
                _
              $region62: #{_lambda_.25} parent=35 // pred_fallthru
                _
            $region36: #{_lambda_.25} parent=31 // pred_fallthru
              _
            // Predicated region
            $region37: #{_lambda_.25} parent=31 // pred_check
              _
            $region38: #{_lambda_.25} parent=31 // pred_check_branch
              %143 = sbr.rel target = $region40
            $region39: #{_lambda_.25} parent=31 // pred_region
              %s145 = ssub.s32 256, 1
              loop: start=0, step=1, limit=1
              $region41: #{_lambda_.25} parent=39 // loop_pre_header
                _
              $region42: #{_lambda_.25} parent=39 // loop_header
                %s147 = sphi 0, %s151
                %p148 = scmp.ge.s32.totalorder %s147, 1
                %s152 = sphi %s137, %s137
                %s153 = sphi %s134, %s134
              $region43: #{_lambda_.25} parent=39 // loop_header_branch
                %150 = sbr.rel (%p148) target = $region47
              $region44: #{_lambda_.25} parent=39 // loop_body
                %v154 = vld [vmem:[%s152] sm:%s145]
                %155 = vst [vmem:[%s153] sm:%s145] %v154
                %v156 = vld [vmem:[%s152 + $0x10] sm:%s145]
                %157 = vst [vmem:[%s153 + $0x8] sm:%s145] %v156
                %v158 = vld [vmem:[%s152 + $0x20] sm:%s145]
                %159 = vst [vmem:[%s153 + $0x10] sm:%s145] %v158
                %v160 = vld [vmem:[%s152 + $0x30] sm:%s145]
                %161 = vst [vmem:[%s153 + $0x18] sm:%s145] %v160
                %v162 = vld [vmem:[%s152 + $0x40] sm:%s145]
                %163 = vst [vmem:[%s153 + $0x20] sm:%s145] %v162
                %v164 = vld [vmem:[%s152 + $0x50] sm:%s145]
                %165 = vst [vmem:[%s153 + $0x28] sm:%s145] %v164
                %v166 = vld [vmem:[%s152 + $0x60] sm:%s145]
                %167 = vst [vmem:[%s153 + $0x30] sm:%s145] %v166
                %v168 = vld [vmem:[%s152 + $0x70] sm:%s145]
                %169 = vst [vmem:[%s153 + $0x38] sm:%s145] %v168
                %v170 = vld [vmem:[%s152 + $0x80] sm:%s145]
                %171 = vst [vmem:[%s153 + $0x40] sm:%s145] %v170
              $region45: #{_lambda_.25} parent=39 // loop_footer
                %s151 = sadd.s32 1, %s147
              $region46: #{_lambda_.25} parent=39 // loop_footer_branch
                %146 = sbr.rel target = $region42
              $region47: #{_lambda_.25} parent=39 // loop_exit
                _
            $region40: #{_lambda_.25} parent=31 // pred_fallthru
              _
          $region32: #{_lambda_.25} parent=27 // pred_fallthru
            _
          %202 = vnop
        $region28: #{_lambda_.25} parent=23 // pred_fallthru
          _
      $region24: #{_lambda_.25} parent=5 // pred_fallthru
        _
      %p203 = scmp.le.s32.totalorder 1, %s9
      %p204 = scmp.lt.s32.totalorder %s9, 3
      %p205 = pnand %p203, %p204
      %p206 = pneg %p205
      // Predicated region
      $region63: #{_lambda_.25} parent=5 // pred_check
        _
      $region64: #{_lambda_.25} parent=5 // pred_check_branch
        %208 = sbr.rel (%p205) target = $region66
      $region65: #{_lambda_.25} parent=5 // pred_region
        %s209 = ssub.s32 %s9, 1
        %s210 = sand.u32 %s43, 1
        %s211 = sand.u32 %s43, 1
        %s212 = smul.addr %s211, 72
        %s213 = scalar_lea.vmem [#allocation2], %s212
        // Predicated region
        $region67: #{_lambda_.25} parent=65 // pred_check
          %p214 = pneg %p56
        $region68: #{_lambda_.25} parent=65 // pred_check_branch
          %216 = sbr.rel (%p214) target = $region70
        $region69: #{_lambda_.25} parent=65 // pred_region
          _
        $region70: #{_lambda_.25} parent=65 // pred_fallthru
          _
        %p217 = pneg %p30
        %p218 = pneg %p27
        %s219 = sand.u32 %s43, 1
        %s220 = sand.u32 %s43, 1
        %s221 = smul.addr %s220, 72
        %s222 = scalar_lea.vmem [#allocation2], %s221
        %p223 = pneg %p56
        %p224 = pneg %p53
        %p225 = pneg %p77
        %p226 = pneg %p74
        %p227 = pneg %p103
        %p228 = pneg %p100
        %s229 = sand.u32 %s90, 1
        %s230 = sand.u32 %s90, 1
        %s231 = smul.addr %s230, 64
        %s232 = scalar_lea.vmem [#allocation3], %s231
        %s233 = smul.u32 2, %s14
        %s234 = smul.u32 2, %s14
        %v236 = vld [vmem:[%s0] sm:$0xf]
        %v237 = vld [vmem:[%s0 + $0x4] sm:$0xf]
        %v238 = vld [vmem:[%s0 + $0x8] sm:$0xf]
        %v239 = vld [vmem:[%s0 + $0xc] sm:$0xf]
        %v240 = vld [vmem:[%s213] sm:$0xff]
        %v241 = vld [vmem:[%s213 + $0x8] sm:$0xff]
        %v242 = vld [vmem:[%s213 + $0x10] sm:$0xff]
        %v243 = vld [vmem:[%s213 + $0x18] sm:$0xff]
        %v244 = vld [vmem:[%s213 + $0x20] sm:$0xff]
        %v245 = vld [vmem:[%s213 + $0x28] sm:$0xff]
        %v246 = vld [vmem:[%s213 + $0x30] sm:$0xff]
        %v247 = vld [vmem:[%s213 + $0x38] sm:$0xff]
        %v248 = vld [vmem:[%s213 + $0x40] sm:$0xff]
        %v249 = vld [vmem:[%s2] sm:$0xff]
        %v250 = vld [vmem:[%s2 + $0x8] sm:$0xff]
        %v251 = vld [vmem:[%s2 + $0x10] sm:$0xff]
        %v252 = vld [vmem:[%s2 + $0x18] sm:$0xff]
        %254 = vset.pattern.permute.xlu0 0
        %255 = vperm.xlu0 %254, %v249
        %v256 = vpop.permute.xlu0 %255
        %259 = vset.pattern.permute.xlu0 0
        %260 = vperm.xlu0 %259, %v250
        %v261 = vpop.permute.xlu0 %260
        %264 = vset.pattern.permute.xlu0 0
        %265 = vperm.xlu0 %264, %v251
        %v266 = vpop.permute.xlu0 %265
        %269 = vset.pattern.permute.xlu0 0
        %270 = vperm.xlu0 %269, %v252
        %v271 = vpop.permute.xlu0 %270
        %v277 = vunpack.c.l.b16 %v236
        %v278 = vunpack.c.l.b16 %v237
        %v279 = vunpack.c.l.b16 %v238
        %v280 = vunpack.c.l.b16 %v239
        %v281 = vpack.c.b16 %v278, %v277
        %v282 = vpack.c.b16 %v280, %v279
        %v292 = vunpack.c.l.b16 %v240
        %v293 = vunpack.c.h.b16 %v240
        %v294 = vunpack.c.l.b16 %v241
        %v295 = vunpack.c.h.b16 %v241
        %v296 = vunpack.c.l.b16 %v242
        %v297 = vunpack.c.h.b16 %v242
        %v298 = vunpack.c.l.b16 %v243
        %v299 = vunpack.c.h.b16 %v243
        %v300 = vunpack.c.l.b16 %v244
        %v301 = vunpack.c.h.b16 %v244
        %v302 = vunpack.c.l.b16 %v245
        %v303 = vunpack.c.h.b16 %v245
        %v304 = vunpack.c.l.b16 %v246
        %v305 = vunpack.c.h.b16 %v246
        %v306 = vunpack.c.l.b16 %v247
        %v307 = vunpack.c.h.b16 %v247
        %v308 = vunpack.c.l.b16 %v248
        %v309 = vunpack.c.h.b16 %v248
        %v310 = vpack.c.b16 %v294, %v292
        %v311 = vpack.c.b16 %v295, %v293
        %v312 = vpack.c.b16 %v298, %v296
        %v313 = vpack.c.b16 %v299, %v297
        %v314 = vpack.c.b16 %v302, %v300
        %v315 = vpack.c.b16 %v303, %v301
        %v316 = vpack.c.b16 %v306, %v304
        %v317 = vpack.c.b16 %v307, %v305
        %v318 = vpack.c.b16 %v308, %v308
        %v319 = vpack.c.b16 %v309, %v309
        %vm328 = vcmask 588800
        %v330 = vsel %vm328, %v281, 0
        %v333 = vsel %vm328, %v282, 0
        %vm335 = vcmask 1043456
        %v337 = vsel %vm335, %v318, 0
        %v340 = vsel %vm335, %v319, 0
        %342 = vmatpush.bf16.msra.mxu0 0
        %343 = vmatpush.bf16.msra.mxu0 0
        %344 = vmatpush.bf16.msra.mxu0 0
        %345 = vmatpush.bf16.msra.mxu0 %v337
        %346 = vmatpush.bf16.msra.mxu0 %v316
        %347 = vmatpush.bf16.msra.mxu0 %v314
        %348 = vmatpush.bf16.msra.mxu0 %v312
        %349 = vmatpush.bf16.msra.mxu0 %v310
        %350 = vmatmul.bf16.gmra.mxu0 %v330
        %v351 = vpop.f32.mrf.mxu0
        %v352 = vadd.f32 %v256, %v351
        %v353 = vpop.f32.mrf.mxu0
        %v354 = vadd.f32 %v261, %v353
        %355 = vmatmul.bf16.gmra.mxu0 %v333
        %v356 = vpop.f32.mrf.mxu0
        %v357 = vadd.f32 %v266, %v356
        %v358 = vpop.f32.mrf.mxu0
        %v359 = vadd.f32 %v271, %v358
        %360 = vdwg.mxu0
        %361 = vmatpush.bf16.msra.mxu0 0
        %362 = vmatpush.bf16.msra.mxu0 0
        %363 = vmatpush.bf16.msra.mxu0 0
        %364 = vmatpush.bf16.msra.mxu0 %v340
        %365 = vmatpush.bf16.msra.mxu0 %v317
        %366 = vmatpush.bf16.msra.mxu0 %v315
        %367 = vmatpush.bf16.msra.mxu0 %v313
        %368 = vmatpush.bf16.msra.mxu0 %v311
        %369 = vmatmul.bf16.gmra.mxu0 %v330
        %v370 = vpop.f32.mrf.mxu0
        %v371 = vadd.f32 %v256, %v370
        %v372 = vpop.f32.mrf.mxu0
        %v373 = vadd.f32 %v261, %v372
        %374 = vmatmul.bf16.gmra.mxu0 %v333
        %v375 = vpop.f32.mrf.mxu0
        %v376 = vadd.f32 %v266, %v375
        %v377 = vpop.f32.mrf.mxu0
        %v378 = vadd.f32 %v271, %v377
        %379 = vdwg.mxu0
        %v380 = vlaneseq
        %v381 = vshrl.u32 %v380, 7
        %v382 = vadd.s32 %v381, 8
        %v383 = vadd.s32 %v381, 16
        %v384 = vadd.s32 %v381, 24
        %vm385 = vcmp.lt.s32.totalorder %v381, 16
        %vm386 = vcmp.lt.s32.totalorder %v382, 16
        %vm387 = vcmp.lt.s32.totalorder %v383, 16
        %vm388 = vcmp.lt.s32.totalorder %v384, 16
        %v389 = vmax.f32 %v352, 0.0
        %v390 = vmax.f32 %v371, 0.0
        %v391 = vmax.f32 %v354, 0.0
        %v392 = vmax.f32 %v373, 0.0
        %v393 = vmax.f32 %v357, 0.0
        %v394 = vmax.f32 %v376, 0.0
        %v395 = vmax.f32 %v359, 0.0
        %v396 = vmax.f32 %v378, 0.0
        %v397 = vsel %vm385, %v389, %v352
        %v398 = vsel %vm385, %v390, %v371
        %v399 = vsel %vm386, %v391, %v354
        %v400 = vsel %vm386, %v392, %v373
        %v401 = vsel %vm387, %v393, %v357
        %v402 = vsel %vm387, %v394, %v376
        %v403 = vsel %vm388, %v395, %v359
        %v404 = vsel %vm388, %v396, %v378
        %405 = vst [vmem:[%s232] sm:$0xff] %v397
        %406 = vst [vmem:[%s232 + $0x8] sm:$0xff] %v398
        %407 = vst [vmem:[%s232 + $0x10] sm:$0xff] %v399
        %408 = vst [vmem:[%s232 + $0x18] sm:$0xff] %v400
        %409 = vst [vmem:[%s232 + $0x20] sm:$0xff] %v401
        %410 = vst [vmem:[%s232 + $0x28] sm:$0xff] %v402
        %411 = vst [vmem:[%s232 + $0x30] sm:$0xff] %v403
        %412 = vst [vmem:[%s232 + $0x38] sm:$0xff] %v404
        %s413 = sand.u32 %s90, 1
        %s414 = sand.u32 %s90, 1
        %s415 = smul.addr %s414, 64
        %s416 = scalar_lea.vmem [#allocation3], %s415
        // Predicated region
        $region71: #{_lambda_.25} parent=65 // pred_check
          %p417 = pneg %p100
        $region72: #{_lambda_.25} parent=65 // pred_check_branch
          %419 = sbr.rel (%p417) target = $region74
        $region73: #{_lambda_.25} parent=65 // pred_region
          %s420 = smul.u32 2, %s14
          %s421 = smul.addr %s420, 8
          %s422 = scalar_lea.vmem %s3, %s421
          // Predicated region
          $region75: #{_lambda_.25} parent=73 // pred_check
            _
          $region76: #{_lambda_.25} parent=73 // pred_check_branch
            %424 = sbr.rel (0) target = $region78
          $region77: #{_lambda_.25} parent=73 // pred_region
            // Predicated region
            $region79: #{_lambda_.25} parent=77 // pred_check
              _
            $region80: #{_lambda_.25} parent=77 // pred_check_branch
              %426 = sbr.rel (0) target = $region82
            $region81: #{_lambda_.25} parent=77 // pred_region
              loop: start=0, step=1, limit=1
              $region83: #{_lambda_.25} parent=81 // loop_pre_header
                _
              $region84: #{_lambda_.25} parent=81 // loop_header
                %s428 = sphi 0, %s432
                %p429 = scmp.ge.s32.totalorder %s428, 1
                %s433 = sphi %s416, %s416
                %s434 = sphi %s422, %s422
              $region85: #{_lambda_.25} parent=81 // loop_header_branch
                %431 = sbr.rel (%p429) target = $region89
              $region86: #{_lambda_.25} parent=81 // loop_body
                %v435 = vld [vmem:[%s433] sm:$0xff]
                %436 = vst [vmem:[%s434] sm:$0xff] %v435
                %v437 = vld [vmem:[%s433 + $0x8] sm:$0xff]
                %438 = vst [vmem:[%s434 + $0x8] sm:$0xff] %v437
                %v439 = vld [vmem:[%s433 + $0x10] sm:$0xff]
                %440 = vst [vmem:[%s434 + $0x20] sm:$0xff] %v439
                %v441 = vld [vmem:[%s433 + $0x18] sm:$0xff]
                %442 = vst [vmem:[%s434 + $0x28] sm:$0xff] %v441
                %v443 = vld [vmem:[%s433 + $0x20] sm:$0xff]
                %444 = vst [vmem:[%s434 + $0x40] sm:$0xff] %v443
                %v445 = vld [vmem:[%s433 + $0x28] sm:$0xff]
                %446 = vst [vmem:[%s434 + $0x48] sm:$0xff] %v445
                %v447 = vld [vmem:[%s433 + $0x30] sm:$0xff]
                %448 = vst [vmem:[%s434 + $0x60] sm:$0xff] %v447
                %v449 = vld [vmem:[%s433 + $0x38] sm:$0xff]
                %450 = vst [vmem:[%s434 + $0x68] sm:$0xff] %v449
              $region87: #{_lambda_.25} parent=81 // loop_footer
                %s432 = sadd.s32 1, %s428
              $region88: #{_lambda_.25} parent=81 // loop_footer_branch
                %427 = sbr.rel target = $region84
              $region89: #{_lambda_.25} parent=81 // loop_exit
                _
            $region82: #{_lambda_.25} parent=77 // pred_fallthru
              _
            // Predicated region
            $region90: #{_lambda_.25} parent=77 // pred_check
              _
            $region91: #{_lambda_.25} parent=77 // pred_check_branch
              %452 = sbr.rel target = $region93
            $region92: #{_lambda_.25} parent=77 // pred_region
              _
            $region93: #{_lambda_.25} parent=77 // pred_fallthru
              _
          $region78: #{_lambda_.25} parent=73 // pred_fallthru
            _
          %453 = vnop
        $region74: #{_lambda_.25} parent=65 // pred_fallthru
          _
      $region66: #{_lambda_.25} parent=5 // pred_fallthru
        _
      %p454 = scmp.le.s32.totalorder 2, %s9
      // Predicated region
      $region94: #{_lambda_.25} parent=5 // pred_check
        %p455 = pneg %p454
      $region95: #{_lambda_.25} parent=5 // pred_check_branch
        %457 = sbr.rel (%p455) target = $region97
      $region96: #{_lambda_.25} parent=5 // pred_region
        %s458 = ssub.s32 %s9, 2
        // Predicated region
        $region98: #{_lambda_.25} parent=96 // pred_check
          %p459 = pneg %p106
        $region99: #{_lambda_.25} parent=96 // pred_check_branch
          %461 = sbr.rel (%p459) target = $region101
        $region100: #{_lambda_.25} parent=96 // pred_region
          %s462 = sand.u32 %s91, 1
          %s463 = sand.u32 %s91, 1
          %s464 = smul.addr %s463, 64
          %s465 = scalar_lea.vmem [#allocation3], %s464
        $region101: #{_lambda_.25} parent=96 // pred_fallthru
          _
      $region97: #{_lambda_.25} parent=5 // pred_fallthru
        _
    $region6: #{_lambda_.25} parent=1 // loop_footer
      %s13 = sadd.s32 1, %s9
    $region7: #{_lambda_.25} parent=1 // loop_footer_branch
      %8 = sbr.rel target = $region3
    $region8: #{_lambda_.25} parent=1 // loop_exit
      _

// kernel: _lambda_.26
$region0: #{_lambda_.26}
  #allocation0 [shape = 'u32[]', space=smem, size = 0x4, offset = 0x4, fixed_abs, tag = 'smem constant byte address 0x4 - core index']
  #allocation1 [shape = 'u32[72,128]{1,0:T(1,128)}', space=vmem, size = 0x9000, scoped, tag = 'internal scratch']
  %s0 = inlined_call_operand.vmem [shape: bf16[16,144], index: 0, kind: input, shape index: {}]
  %s1 = inlined_call_operand.vmem [shape: bf16[144,512], index: 1, kind: input, shape index: {}]
  %s2 = inlined_call_operand.vmem [shape: f32[16,1], index: 2, kind: input, shape index: {}]
  %s3 = inlined_call_operand.vmem [shape: f32[16,512], index: 3, kind: input, shape index: {}]
  %s4 = inlined_call_operand.vmem [shape: f32[16,512], index: 4, kind: output, shape index: {}]
  %s5 = sld [smem:[#allocation0]]
  $region129: #{_lambda_.26} parent=0
    _
  %s7 = ssub.s32 1, %s5
  %s8 = scalar_select 0, %s7, %s5
  $region1: #{_lambda_.26} parent=0
    #allocation2 [shape = 'u8[147456]{0}', space=vmem, size = 0x24000, scoped, tag = 'input window, operand 1']
    #allocation3 [shape = 'u8[32768]{0}', space=vmem, size = 0x8000, scoped, tag = 'input window, operand 3']
    #allocation4 [shape = 'u8[32768]{0}', space=vmem, size = 0x8000, scoped, tag = 'output window, operand 0']
    loop: start=0, step=1, limit=4
    $region2: #{_lambda_.26} parent=1 // loop_pre_header
      _
    $region3: #{_lambda_.26} parent=1 // loop_header
      %s10 = sphi 0, %s14
      %p11 = scmp.ge.s32.totalorder %s10, 4
      %s18 = sphi 0, %s18
      %s20 = sphi 0, %s18
      %s21 = sphi 0, %s20
      %s35 = sphi 0, %s21
      %s41 = sphi 0, %s43
      %s44 = sphi 0, %s41
      %s45 = sphi 0, %s44
      %s61 = sphi 0, %s45
      %s65 = sphi 0, %s65
      %s67 = sphi 0, %s65
      %s68 = sphi 0, %s67
      %s82 = sphi 0, %s68
      %s88 = sphi 0, %s90
      %s91 = sphi 0, %s88
      %s92 = sphi 0, %s91
      %s108 = sphi 0, %s92
      %s114 = sphi 0, %s116
      %s117 = sphi 0, %s114
      %s118 = sphi 0, %s117
      %s134 = sphi 0, %s118
    $region4: #{_lambda_.26} parent=1 // loop_header_branch
      %13 = sbr.rel (%p11) target = $region8
    $region5: #{_lambda_.26} parent=1 // loop_body
      %s15 = ssub.s32 %s10, 1
      %s16 = ssub.s32 %s10, 2
      %s17 = sadd.s32 %s10, 1
      %s19 = sadd.s32 %s18, 1
      %p22 = scmp.eq.s32.totalorder %s10, 1
      %p23 = scmp.ne.s32.totalorder %s18, %s20
      %p24 = scmp.eq.s32.totalorder %s10, 0
      %p25 = por %p23, %p24
      %p26 = scmp.ne.s32.totalorder %s18, %s20
      %p27 = scmp.eq.s32.totalorder %s15, 1
      %p28 = por %p26, %p27
      %p29 = scmp.ne.s32.totalorder %s20, %s21
      %p30 = scmp.eq.s32.totalorder %s15, 0
      %p31 = por %p29, %p30
      %p32 = scmp.ne.s32.totalorder %s20, %s21
      %p33 = scmp.eq.s32.totalorder %s16, 1
      %p34 = por %p32, %p33
      %p36 = scmp.ne.s32.totalorder %s21, %s35
      %p37 = scmp.eq.s32.totalorder %s16, 0
      %p38 = por %p36, %p37
      %s39 = ssub.s32 %s10, %s17
      %p40 = scmp.eq.s32.totalorder %s39, 0
      %s42 = sadd.s32 %s41, 1
      %s43 = scalar_select %p40, %s41, %s42
      %p46 = pneg %p40
      %p47 = scmp.eq.s32.totalorder %s10, 1
      %p48 = por %p46, %p47
      %p49 = scmp.ne.s32.totalorder %s41, %s44
      %p50 = scmp.eq.s32.totalorder %s10, 0
      %p51 = por %p49, %p50
      %p52 = scmp.ne.s32.totalorder %s41, %s44
      %p53 = scmp.eq.s32.totalorder %s15, 1
      %p54 = por %p52, %p53
      %p55 = scmp.ne.s32.totalorder %s44, %s45
      %p56 = scmp.eq.s32.totalorder %s15, 0
      %p57 = por %p55, %p56
      %p58 = scmp.ne.s32.totalorder %s44, %s45
      %p59 = scmp.eq.s32.totalorder %s16, 1
      %p60 = por %p58, %p59
      %p62 = scmp.ne.s32.totalorder %s45, %s61
      %p63 = scmp.eq.s32.totalorder %s16, 0
      %p64 = por %p62, %p63
      %s66 = sadd.s32 %s65, 1
      %p69 = scmp.eq.s32.totalorder %s10, 1
      %p70 = scmp.ne.s32.totalorder %s65, %s67
      %p71 = scmp.eq.s32.totalorder %s10, 0
      %p72 = por %p70, %p71
      %p73 = scmp.ne.s32.totalorder %s65, %s67
      %p74 = scmp.eq.s32.totalorder %s15, 1
      %p75 = por %p73, %p74
      %p76 = scmp.ne.s32.totalorder %s67, %s68
      %p77 = scmp.eq.s32.totalorder %s15, 0
      %p78 = por %p76, %p77
      %p79 = scmp.ne.s32.totalorder %s67, %s68
      %p80 = scmp.eq.s32.totalorder %s16, 1
      %p81 = por %p79, %p80
      %p83 = scmp.ne.s32.totalorder %s68, %s82
      %p84 = scmp.eq.s32.totalorder %s16, 0
      %p85 = por %p83, %p84
      %s86 = ssub.s32 %s10, %s17
      %p87 = scmp.eq.s32.totalorder %s86, 0
      %s89 = sadd.s32 %s88, 1
      %s90 = scalar_select %p87, %s88, %s89
      %p93 = pneg %p87
      %p94 = scmp.eq.s32.totalorder %s10, 1
      %p95 = por %p93, %p94
      %p96 = scmp.ne.s32.totalorder %s88, %s91
      %p97 = scmp.eq.s32.totalorder %s10, 0
      %p98 = por %p96, %p97
      %p99 = scmp.ne.s32.totalorder %s88, %s91
      %p100 = scmp.eq.s32.totalorder %s15, 1
      %p101 = por %p99, %p100
      %p102 = scmp.ne.s32.totalorder %s91, %s92
      %p103 = scmp.eq.s32.totalorder %s15, 0
      %p104 = por %p102, %p103
      %p105 = scmp.ne.s32.totalorder %s91, %s92
      %p106 = scmp.eq.s32.totalorder %s16, 1
      %p107 = por %p105, %p106
      %p109 = scmp.ne.s32.totalorder %s92, %s108
      %p110 = scmp.eq.s32.totalorder %s16, 0
      %p111 = por %p109, %p110
      %s112 = ssub.s32 %s10, %s17
      %p113 = scmp.eq.s32.totalorder %s112, 0
      %s115 = sadd.s32 %s114, 1
      %s116 = scalar_select %p113, %s114, %s115
      %p119 = pneg %p113
      %p120 = scmp.eq.s32.totalorder %s10, 1
      %p121 = por %p119, %p120
      %p122 = scmp.ne.s32.totalorder %s114, %s117
      %p123 = scmp.eq.s32.totalorder %s10, 0
      %p124 = por %p122, %p123
      %p125 = scmp.ne.s32.totalorder %s114, %s117
      %p126 = scmp.eq.s32.totalorder %s15, 1
      %p127 = por %p125, %p126
      %p128 = scmp.ne.s32.totalorder %s117, %s118
      %p129 = scmp.eq.s32.totalorder %s15, 0
      %p130 = por %p128, %p129
      %p131 = scmp.ne.s32.totalorder %s117, %s118
      %p132 = scmp.eq.s32.totalorder %s16, 1
      %p133 = por %p131, %p132
      %p135 = scmp.ne.s32.totalorder %s118, %s134
      %p136 = scmp.eq.s32.totalorder %s16, 0
      %p137 = por %p135, %p136
      %p138 = scmp.le.s32.totalorder 1, %s10
      %p139 = scmp.lt.s32.totalorder %s10, 3
      %p140 = pnand %p138, %p139
      %p141 = pneg %p140
      // Predicated region
      $region9: #{_lambda_.26} parent=5 // pred_check
        _
      $region10: #{_lambda_.26} parent=5 // pred_check_branch
        %143 = sbr.rel (%p140) target = $region12
      $region11: #{_lambda_.26} parent=5 // pred_region
        %s144 = ssub.s32 %s10, 1
        // Predicated region
        $region13: #{_lambda_.26} parent=11 // pred_check
          %p145 = pneg %p31
        $region14: #{_lambda_.26} parent=11 // pred_check_branch
          %147 = sbr.rel (%p145) target = $region16
        $region15: #{_lambda_.26} parent=11 // pred_region
          _
        $region16: #{_lambda_.26} parent=11 // pred_fallthru
          _
        // Predicated region
        $region17: #{_lambda_.26} parent=11 // pred_check
          %p148 = pneg %p78
        $region18: #{_lambda_.26} parent=11 // pred_check_branch
          %150 = sbr.rel (%p148) target = $region20
        $region19: #{_lambda_.26} parent=11 // pred_region
          _
        $region20: #{_lambda_.26} parent=11 // pred_fallthru
          _
      $region12: #{_lambda_.26} parent=5 // pred_fallthru
        _
      %p151 = scmp.lt.s32.totalorder %s10, 2
      // Predicated region
      $region21: #{_lambda_.26} parent=5 // pred_check
        %p152 = pneg %p151
      $region22: #{_lambda_.26} parent=5 // pred_check_branch
        %154 = sbr.rel (%p152) target = $region24
      $region23: #{_lambda_.26} parent=5 // pred_region
        // Predicated region
        $region25: #{_lambda_.26} parent=23 // pred_check
          %p155 = pneg %p51
        $region26: #{_lambda_.26} parent=23 // pred_check_branch
          %157 = sbr.rel (%p155) target = $region28
        $region27: #{_lambda_.26} parent=23 // pred_region
          %s158 = sand.u32 %s41, 1
          %s159 = sand.u32 %s41, 1
          %s160 = smul.addr %s159, 144
          %s161 = scalar_lea.vmem [#allocation2], %s160
          %s162 = smul.u32 2, %s10
          %s163 = smul.addr %s162, 4
          %s164 = scalar_lea.vmem %s1, %s163
          // Predicated region
          $region29: #{_lambda_.26} parent=27 // pred_check
            _
          $region30: #{_lambda_.26} parent=27 // pred_check_branch
            %166 = sbr.rel (0) target = $region32
          $region31: #{_lambda_.26} parent=27 // pred_region
            // Predicated region
            $region33: #{_lambda_.26} parent=31 // pred_check
              _
            $region34: #{_lambda_.26} parent=31 // pred_check_branch
              %168 = sbr.rel (0) target = $region36
            $region35: #{_lambda_.26} parent=31 // pred_region
              // Predicated region
              $region48: #{_lambda_.26} parent=35 // pred_check
                _
              $region49: #{_lambda_.26} parent=35 // pred_check_branch
                %218 = sbr.rel (0) target = $region51
              $region50: #{_lambda_.26} parent=35 // pred_region
                loop: start=0, step=1, limit=1
                $region52: #{_lambda_.26} parent=50 // loop_pre_header
                  _
                $region53: #{_lambda_.26} parent=50 // loop_header
                  %s220 = sphi 0, %s224
                  %p221 = scmp.ge.s32.totalorder %s220, 1
                  %s225 = sphi %s164, %s164
                  %s226 = sphi %s161, %s161
                $region54: #{_lambda_.26} parent=50 // loop_header_branch
                  %223 = sbr.rel (%p221) target = $region58
                $region55: #{_lambda_.26} parent=50 // loop_body
                  %v227 = vld [vmem:[%s225] sm:$0xff]
                  %228 = vst [vmem:[%s226] sm:$0xff] %v227
                  %v229 = vld [vmem:[%s225 + $0x10] sm:$0xff]
                  %230 = vst [vmem:[%s226 + $0x8] sm:$0xff] %v229
                  %v231 = vld [vmem:[%s225 + $0x20] sm:$0xff]
                  %232 = vst [vmem:[%s226 + $0x10] sm:$0xff] %v231
                  %v233 = vld [vmem:[%s225 + $0x30] sm:$0xff]
                  %234 = vst [vmem:[%s226 + $0x18] sm:$0xff] %v233
                  %v235 = vld [vmem:[%s225 + $0x40] sm:$0xff]
                  %236 = vst [vmem:[%s226 + $0x20] sm:$0xff] %v235
                  %v237 = vld [vmem:[%s225 + $0x50] sm:$0xff]
                  %238 = vst [vmem:[%s226 + $0x28] sm:$0xff] %v237
                  %v239 = vld [vmem:[%s225 + $0x60] sm:$0xff]
                  %240 = vst [vmem:[%s226 + $0x30] sm:$0xff] %v239
                  %v241 = vld [vmem:[%s225 + $0x70] sm:$0xff]
                  %242 = vst [vmem:[%s226 + $0x38] sm:$0xff] %v241
                  %v243 = vld [vmem:[%s225 + $0x80] sm:$0xff]
                  %244 = vst [vmem:[%s226 + $0x40] sm:$0xff] %v243
                  %v245 = vld [vmem:[%s225 + $0x90] sm:$0xff]
                  %246 = vst [vmem:[%s226 + $0x48] sm:$0xff] %v245
                  %v247 = vld [vmem:[%s225 + $0xa0] sm:$0xff]
                  %248 = vst [vmem:[%s226 + $0x50] sm:$0xff] %v247
                  %v249 = vld [vmem:[%s225 + $0xb0] sm:$0xff]
                  %250 = vst [vmem:[%s226 + $0x58] sm:$0xff] %v249
                  %v251 = vld [vmem:[%s225 + $0xc0] sm:$0xff]
                  %252 = vst [vmem:[%s226 + $0x60] sm:$0xff] %v251
                  %v253 = vld [vmem:[%s225 + $0xd0] sm:$0xff]
                  %254 = vst [vmem:[%s226 + $0x68] sm:$0xff] %v253
                  %v255 = vld [vmem:[%s225 + $0xe0] sm:$0xff]
                  %256 = vst [vmem:[%s226 + $0x70] sm:$0xff] %v255
                  %v257 = vld [vmem:[%s225 + $0xf0] sm:$0xff]
                  %258 = vst [vmem:[%s226 + $0x78] sm:$0xff] %v257
                  %v259 = vld [vmem:[%s225 + $0x100] sm:$0xff]
                  %260 = vst [vmem:[%s226 + $0x80] sm:$0xff] %v259
                  %v261 = vld [vmem:[%s225 + $0x110] sm:$0xff]
                  %262 = vst [vmem:[%s226 + $0x88] sm:$0xff] %v261
                $region56: #{_lambda_.26} parent=50 // loop_footer
                  %s224 = sadd.s32 1, %s220
                $region57: #{_lambda_.26} parent=50 // loop_footer_branch
                  %219 = sbr.rel target = $region53
                $region58: #{_lambda_.26} parent=50 // loop_exit
                  _
              $region51: #{_lambda_.26} parent=35 // pred_fallthru
                _
              // Predicated region
              $region59: #{_lambda_.26} parent=35 // pred_check
                _
              $region60: #{_lambda_.26} parent=35 // pred_check_branch
                %264 = sbr.rel target = $region62
              $region61: #{_lambda_.26} parent=35 // pred_region
                _
              $region62: #{_lambda_.26} parent=35 // pred_fallthru
                _
            $region36: #{_lambda_.26} parent=31 // pred_fallthru
              _
            // Predicated region
            $region37: #{_lambda_.26} parent=31 // pred_check
              _
            $region38: #{_lambda_.26} parent=31 // pred_check_branch
              %170 = sbr.rel target = $region40
            $region39: #{_lambda_.26} parent=31 // pred_region
              %s172 = ssub.s32 256, 1
              loop: start=0, step=1, limit=1
              $region41: #{_lambda_.26} parent=39 // loop_pre_header
                _
              $region42: #{_lambda_.26} parent=39 // loop_header
                %s174 = sphi 0, %s178
                %p175 = scmp.ge.s32.totalorder %s174, 1
                %s179 = sphi %s164, %s164
                %s180 = sphi %s161, %s161
              $region43: #{_lambda_.26} parent=39 // loop_header_branch
                %177 = sbr.rel (%p175) target = $region47
              $region44: #{_lambda_.26} parent=39 // loop_body
                %v181 = vld [vmem:[%s179] sm:%s172]
                %182 = vst [vmem:[%s180] sm:%s172] %v181
                %v183 = vld [vmem:[%s179 + $0x10] sm:%s172]
                %184 = vst [vmem:[%s180 + $0x8] sm:%s172] %v183
                %v185 = vld [vmem:[%s179 + $0x20] sm:%s172]
                %186 = vst [vmem:[%s180 + $0x10] sm:%s172] %v185
                %v187 = vld [vmem:[%s179 + $0x30] sm:%s172]
                %188 = vst [vmem:[%s180 + $0x18] sm:%s172] %v187
                %v189 = vld [vmem:[%s179 + $0x40] sm:%s172]
                %190 = vst [vmem:[%s180 + $0x20] sm:%s172] %v189
                %v191 = vld [vmem:[%s179 + $0x50] sm:%s172]
                %192 = vst [vmem:[%s180 + $0x28] sm:%s172] %v191
                %v193 = vld [vmem:[%s179 + $0x60] sm:%s172]
                %194 = vst [vmem:[%s180 + $0x30] sm:%s172] %v193
                %v195 = vld [vmem:[%s179 + $0x70] sm:%s172]
                %196 = vst [vmem:[%s180 + $0x38] sm:%s172] %v195
                %v197 = vld [vmem:[%s179 + $0x80] sm:%s172]
                %198 = vst [vmem:[%s180 + $0x40] sm:%s172] %v197
                %v199 = vld [vmem:[%s179 + $0x90] sm:%s172]
                %200 = vst [vmem:[%s180 + $0x48] sm:%s172] %v199
                %v201 = vld [vmem:[%s179 + $0xa0] sm:%s172]
                %202 = vst [vmem:[%s180 + $0x50] sm:%s172] %v201
                %v203 = vld [vmem:[%s179 + $0xb0] sm:%s172]
                %204 = vst [vmem:[%s180 + $0x58] sm:%s172] %v203
                %v205 = vld [vmem:[%s179 + $0xc0] sm:%s172]
                %206 = vst [vmem:[%s180 + $0x60] sm:%s172] %v205
                %v207 = vld [vmem:[%s179 + $0xd0] sm:%s172]
                %208 = vst [vmem:[%s180 + $0x68] sm:%s172] %v207
                %v209 = vld [vmem:[%s179 + $0xe0] sm:%s172]
                %210 = vst [vmem:[%s180 + $0x70] sm:%s172] %v209
                %v211 = vld [vmem:[%s179 + $0xf0] sm:%s172]
                %212 = vst [vmem:[%s180 + $0x78] sm:%s172] %v211
                %v213 = vld [vmem:[%s179 + $0x100] sm:%s172]
                %214 = vst [vmem:[%s180 + $0x80] sm:%s172] %v213
                %v215 = vld [vmem:[%s179 + $0x110] sm:%s172]
                %216 = vst [vmem:[%s180 + $0x88] sm:%s172] %v215
              $region45: #{_lambda_.26} parent=39 // loop_footer
                %s178 = sadd.s32 1, %s174
              $region46: #{_lambda_.26} parent=39 // loop_footer_branch
                %173 = sbr.rel target = $region42
              $region47: #{_lambda_.26} parent=39 // loop_exit
                _
            $region40: #{_lambda_.26} parent=31 // pred_fallthru
              _
          $region32: #{_lambda_.26} parent=27 // pred_fallthru
            _
          %265 = vnop
        $region28: #{_lambda_.26} parent=23 // pred_fallthru
          _
        // Predicated region
        $region63: #{_lambda_.26} parent=23 // pred_check
          %p266 = pneg %p98
        $region64: #{_lambda_.26} parent=23 // pred_check_branch
          %268 = sbr.rel (%p266) target = $region66
        $region65: #{_lambda_.26} parent=23 // pred_region
          %s269 = sand.u32 %s88, 1
          %s270 = sand.u32 %s88, 1
          %s271 = smul.addr %s270, 32
          %s272 = scalar_lea.vmem [#allocation3], %s271
          %s273 = smul.u32 2, %s10
          %s274 = smul.addr %s273, 8
          %s275 = scalar_lea.vmem %s3, %s274
          // Predicated region
          $region67: #{_lambda_.26} parent=65 // pred_check
            _
          $region68: #{_lambda_.26} parent=65 // pred_check_branch
            %277 = sbr.rel (0) target = $region70
          $region69: #{_lambda_.26} parent=65 // pred_region
            // Predicated region
            $region71: #{_lambda_.26} parent=69 // pred_check
              _
            $region72: #{_lambda_.26} parent=69 // pred_check_branch
              %279 = sbr.rel (0) target = $region74
            $region73: #{_lambda_.26} parent=69 // pred_region
              loop: start=0, step=1, limit=1
              $region75: #{_lambda_.26} parent=73 // loop_pre_header
                _
              $region76: #{_lambda_.26} parent=73 // loop_header
                %s281 = sphi 0, %s285
                %p282 = scmp.ge.s32.totalorder %s281, 1
                %s286 = sphi %s275, %s275
                %s287 = sphi %s272, %s272
              $region77: #{_lambda_.26} parent=73 // loop_header_branch
                %284 = sbr.rel (%p282) target = $region81
              $region78: #{_lambda_.26} parent=73 // loop_body
                %v288 = vld [vmem:[%s286] sm:$0xff]
                %289 = vst [vmem:[%s287] sm:$0xff] %v288
                %v290 = vld [vmem:[%s286 + $0x8] sm:$0xff]
                %291 = vst [vmem:[%s287 + $0x8] sm:$0xff] %v290
                %v292 = vld [vmem:[%s286 + $0x20] sm:$0xff]
                %293 = vst [vmem:[%s287 + $0x10] sm:$0xff] %v292
                %v294 = vld [vmem:[%s286 + $0x28] sm:$0xff]
                %295 = vst [vmem:[%s287 + $0x18] sm:$0xff] %v294
              $region79: #{_lambda_.26} parent=73 // loop_footer
                %s285 = sadd.s32 1, %s281
              $region80: #{_lambda_.26} parent=73 // loop_footer_branch
                %280 = sbr.rel target = $region76
              $region81: #{_lambda_.26} parent=73 // loop_exit
                _
            $region74: #{_lambda_.26} parent=69 // pred_fallthru
              _
            // Predicated region
            $region82: #{_lambda_.26} parent=69 // pred_check
              _
            $region83: #{_lambda_.26} parent=69 // pred_check_branch
              %297 = sbr.rel target = $region85
            $region84: #{_lambda_.26} parent=69 // pred_region
              _
            $region85: #{_lambda_.26} parent=69 // pred_fallthru
              _
          $region70: #{_lambda_.26} parent=65 // pred_fallthru
            _
          %298 = vnop
        $region66: #{_lambda_.26} parent=23 // pred_fallthru
          _
      $region24: #{_lambda_.26} parent=5 // pred_fallthru
        _
      %p299 = scmp.le.s32.totalorder 1, %s10
      %p300 = scmp.lt.s32.totalorder %s10, 3
      %p301 = pnand %p299, %p300
      %p302 = pneg %p301
      // Predicated region
      $region86: #{_lambda_.26} parent=5 // pred_check
        _
      $region87: #{_lambda_.26} parent=5 // pred_check_branch
        %304 = sbr.rel (%p301) target = $region89
      $region88: #{_lambda_.26} parent=5 // pred_region
        %s305 = ssub.s32 %s10, 1
        %s306 = sand.u32 %s44, 1
        %s307 = sand.u32 %s44, 1
        %s308 = smul.addr %s307, 144
        %s309 = scalar_lea.vmem [#allocation2], %s308
        // Predicated region
        $region90: #{_lambda_.26} parent=88 // pred_check
          %p310 = pneg %p57
        $region91: #{_lambda_.26} parent=88 // pred_check_branch
          %312 = sbr.rel (%p310) target = $region93
        $region92: #{_lambda_.26} parent=88 // pred_region
          _
        $region93: #{_lambda_.26} parent=88 // pred_fallthru
          _
        %s313 = sand.u32 %s91, 1
        %s314 = sand.u32 %s91, 1
        %s315 = smul.addr %s314, 32
        %s316 = scalar_lea.vmem [#allocation3], %s315
        // Predicated region
        $region94: #{_lambda_.26} parent=88 // pred_check
          %p317 = pneg %p104
        $region95: #{_lambda_.26} parent=88 // pred_check_branch
          %319 = sbr.rel (%p317) target = $region97
        $region96: #{_lambda_.26} parent=88 // pred_region
          _
        $region97: #{_lambda_.26} parent=88 // pred_fallthru
          _
        %p320 = pneg %p31
        %p321 = pneg %p28
        %s322 = sand.u32 %s44, 1
        %s323 = sand.u32 %s44, 1
        %s324 = smul.addr %s323, 144
        %s325 = scalar_lea.vmem [#allocation2], %s324
        %p326 = pneg %p57
        %p327 = pneg %p54
        %p328 = pneg %p78
        %p329 = pneg %p75
        %s330 = sand.u32 %s91, 1
        %s331 = sand.u32 %s91, 1
        %s332 = smul.addr %s331, 32
        %s333 = scalar_lea.vmem [#allocation3], %s332
        %p334 = pneg %p104
        %p335 = pneg %p101
        %p336 = pneg %p130
        %p337 = pneg %p127
        %s338 = sand.u32 %s117, 1
        %s339 = sand.u32 %s117, 1
        %s340 = smul.addr %s339, 32
        %s341 = scalar_lea.vmem [#allocation4], %s340
        %s342 = smul.u32 2, %s15
        %s343 = smul.u32 2, %s15
        %s344 = smul.u32 2, %s15
        %v346 = vld [vmem:[%s0] sm:$0xff]
        %v347 = vld [vmem:[%s0 + $0x8] sm:$0xff]
        %v348 = vld [vmem:[%s309] sm:$0xff]
        %v349 = vld [vmem:[%s309 + $0x8] sm:$0xff]
        %v350 = vld [vmem:[%s309 + $0x10] sm:$0xff]
        %v351 = vld [vmem:[%s309 + $0x18] sm:$0xff]
        %v352 = vld [vmem:[%s309 + $0x20] sm:$0xff]
        %v353 = vld [vmem:[%s309 + $0x28] sm:$0xff]
        %v354 = vld [vmem:[%s309 + $0x30] sm:$0xff]
        %v355 = vld [vmem:[%s309 + $0x38] sm:$0xff]
        %v356 = vld [vmem:[%s309 + $0x40] sm:$0xff]
        %v357 = vld [vmem:[%s309 + $0x48] sm:$0xff]
        %v358 = vld [vmem:[%s309 + $0x50] sm:$0xff]
        %v359 = vld [vmem:[%s309 + $0x58] sm:$0xff]
        %v360 = vld [vmem:[%s309 + $0x60] sm:$0xff]
        %v361 = vld [vmem:[%s309 + $0x68] sm:$0xff]
        %v362 = vld [vmem:[%s309 + $0x70] sm:$0xff]
        %v363 = vld [vmem:[%s309 + $0x78] sm:$0xff]
        %v364 = vld [vmem:[%s309 + $0x80] sm:$0xff]
        %v365 = vld [vmem:[%s309 + $0x88] sm:$0xff]
        %v366 = vld [vmem:[%s2] sm:$0xff]
        %v367 = vld [vmem:[%s2 + $0x8] sm:$0xff]
        %369 = vset.pattern.permute.xlu0 0
        %370 = vperm.xlu0 %369, %v366
        %v371 = vpop.permute.xlu0 %370
        %374 = vset.pattern.permute.xlu0 0
        %375 = vperm.xlu0 %374, %v367
        %v376 = vpop.permute.xlu0 %375
        %v380 = vunpack.c.l.b16 %v346
        %v381 = vunpack.c.h.b16 %v346
        %v382 = vunpack.c.l.b16 %v347
        %v383 = vunpack.c.h.b16 %v347
        %v384 = vpack.c.b16 %v382, %v380
        %v385 = vpack.c.b16 %v383, %v381
        %v405 = vunpack.c.l.b16 %v348
        %v406 = vunpack.c.h.b16 %v348
        %v407 = vunpack.c.l.b16 %v349
        %v408 = vunpack.c.h.b16 %v349
        %v409 = vunpack.c.l.b16 %v350
        %v410 = vunpack.c.h.b16 %v350
        %v411 = vunpack.c.l.b16 %v351
        %v412 = vunpack.c.h.b16 %v351
        %v413 = vunpack.c.l.b16 %v352
        %v414 = vunpack.c.h.b16 %v352
        %v415 = vunpack.c.l.b16 %v353
        %v416 = vunpack.c.h.b16 %v353
        %v417 = vunpack.c.l.b16 %v354
        %v418 = vunpack.c.h.b16 %v354
        %v419 = vunpack.c.l.b16 %v355
        %v420 = vunpack.c.h.b16 %v355
        %v421 = vunpack.c.l.b16 %v356
        %v422 = vunpack.c.h.b16 %v356
        %v423 = vunpack.c.l.b16 %v357
        %v424 = vunpack.c.h.b16 %v357
        %v425 = vunpack.c.l.b16 %v358
        %v426 = vunpack.c.h.b16 %v358
        %v427 = vunpack.c.l.b16 %v359
        %v428 = vunpack.c.h.b16 %v359
        %v429 = vunpack.c.l.b16 %v360
        %v430 = vunpack.c.h.b16 %v360
        %v431 = vunpack.c.l.b16 %v361
        %v432 = vunpack.c.h.b16 %v361
        %v433 = vunpack.c.l.b16 %v362
        %v434 = vunpack.c.h.b16 %v362
        %v435 = vunpack.c.l.b16 %v363
        %v436 = vunpack.c.h.b16 %v363
        %v437 = vunpack.c.l.b16 %v364
        %v438 = vunpack.c.h.b16 %v364
        %v439 = vunpack.c.l.b16 %v365
        %v440 = vunpack.c.h.b16 %v365
        %v441 = vpack.c.b16 %v407, %v405
        %v442 = vpack.c.b16 %v408, %v406
        %v443 = vpack.c.b16 %v411, %v409
        %v444 = vpack.c.b16 %v412, %v410
        %v445 = vpack.c.b16 %v415, %v413
        %v446 = vpack.c.b16 %v416, %v414
        %v447 = vpack.c.b16 %v419, %v417
        %v448 = vpack.c.b16 %v420, %v418
        %v449 = vpack.c.b16 %v423, %v421
        %v450 = vpack.c.b16 %v424, %v422
        %v451 = vpack.c.b16 %v427, %v425
        %v452 = vpack.c.b16 %v428, %v426
        %v453 = vpack.c.b16 %v431, %v429
        %v454 = vpack.c.b16 %v432, %v430
        %v455 = vpack.c.b16 %v435, %v433
        %v456 = vpack.c.b16 %v436, %v434
        %v457 = vpack.c.b16 %v439, %v437
        %v458 = vpack.c.b16 %v440, %v438
        %vm477 = vcmask 130048
        %v479 = vsel %vm477, %v385, 0
        %481 = vmatpush.bf16.msra.mxu0 %v455
        %482 = vmatpush.bf16.msra.mxu0 %v453
        %483 = vmatpush.bf16.msra.mxu0 %v451
        %484 = vmatpush.bf16.msra.mxu0 %v449
        %485 = vmatpush.bf16.msra.mxu0 %v447
        %486 = vmatpush.bf16.msra.mxu0 %v445
        %487 = vmatpush.bf16.msra.mxu0 %v443
        %488 = vmatpush.bf16.msra.mxu0 %v441
        %489 = vmatmul.bf16.gmra.mxu0 %v384
        %v490 = vpop.f32.mrf.mxu0
        %v491 = vadd.f32 %v371, %v490
        %v492 = vpop.f32.mrf.mxu0
        %v493 = vadd.f32 %v376, %v492
        %494 = vdwg.mxu0
        %495 = vmatpush.bf16.msra.mxu0 0
        %496 = vmatpush.bf16.msra.mxu0 0
        %497 = vmatpush.bf16.msra.mxu0 0
        %498 = vmatpush.bf16.msra.mxu0 0
        %499 = vmatpush.bf16.msra.mxu0 0
        %500 = vmatpush.bf16.msra.mxu0 0
        %501 = vmatpush.bf16.msra.mxu0 0
        %502 = vmatpush.bf16.msra.mxu0 %v457
        %503 = vmatmul.bf16.gmra.mxu0 %v479
        %v504 = vpop.f32.mrf.mxu0
        %v505 = vadd.f32 %v491, %v504
        %v506 = vpop.f32.mrf.mxu0
        %v507 = vadd.f32 %v493, %v506
        %508 = vdwg.mxu0
        %509 = vmatpush.bf16.msra.mxu0 %v456
        %510 = vmatpush.bf16.msra.mxu0 %v454
        %511 = vmatpush.bf16.msra.mxu0 %v452
        %512 = vmatpush.bf16.msra.mxu0 %v450
        %513 = vmatpush.bf16.msra.mxu0 %v448
        %514 = vmatpush.bf16.msra.mxu0 %v446
        %515 = vmatpush.bf16.msra.mxu0 %v444
        %516 = vmatpush.bf16.msra.mxu0 %v442
        %517 = vmatmul.bf16.gmra.mxu0 %v384
        %v518 = vpop.f32.mrf.mxu0
        %v519 = vadd.f32 %v371, %v518
        %v520 = vpop.f32.mrf.mxu0
        %v521 = vadd.f32 %v376, %v520
        %522 = vdwg.mxu0
        %523 = vmatpush.bf16.msra.mxu0 0
        %524 = vmatpush.bf16.msra.mxu0 0
        %525 = vmatpush.bf16.msra.mxu0 0
        %526 = vmatpush.bf16.msra.mxu0 0
        %527 = vmatpush.bf16.msra.mxu0 0
        %528 = vmatpush.bf16.msra.mxu0 0
        %529 = vmatpush.bf16.msra.mxu0 0
        %530 = vmatpush.bf16.msra.mxu0 %v458
        %531 = vmatmul.bf16.gmra.mxu0 %v479
        %v532 = vpop.f32.mrf.mxu0
        %v533 = vadd.f32 %v519, %v532
        %v534 = vpop.f32.mrf.mxu0
        %v535 = vadd.f32 %v521, %v534
        %536 = vdwg.mxu0
        %v537 = vld [vmem:[%s316] sm:$0xff]
        %v538 = vld [vmem:[%s316 + $0x8] sm:$0xff]
        %v539 = vld [vmem:[%s316 + $0x10] sm:$0xff]
        %v540 = vld [vmem:[%s316 + $0x18] sm:$0xff]
        %v541 = vadd.f32 %v505, %v537
        %v542 = vadd.f32 %v533, %v538
        %v543 = vadd.f32 %v507, %v539
        %v544 = vadd.f32 %v535, %v540
        %v545 = vmax.f32 %v541, 0.0
        %v546 = vmax.f32 %v542, 0.0
        %v547 = vmax.f32 %v543, 0.0
        %v548 = vmax.f32 %v544, 0.0
        %549 = vst [vmem:[%s341] sm:$0xff] %v545
        %550 = vst [vmem:[%s341 + $0x8] sm:$0xff] %v546
        %551 = vst [vmem:[%s341 + $0x10] sm:$0xff] %v547
        %552 = vst [vmem:[%s341 + $0x18] sm:$0xff] %v548
        %s553 = sand.u32 %s117, 1
        %s554 = sand.u32 %s117, 1
        %s555 = smul.addr %s554, 32
        %s556 = scalar_lea.vmem [#allocation4], %s555
        // Predicated region
        $region98: #{_lambda_.26} parent=88 // pred_check
          %p557 = pneg %p127
        $region99: #{_lambda_.26} parent=88 // pred_check_branch
          %559 = sbr.rel (%p557) target = $region101
        $region100: #{_lambda_.26} parent=88 // pred_region
          %s560 = smul.u32 2, %s15
          %s561 = smul.addr %s560, 8
          %s562 = scalar_lea.vmem %s4, %s561
          // Predicated region
          $region102: #{_lambda_.26} parent=100 // pred_check
            _
          $region103: #{_lambda_.26} parent=100 // pred_check_branch
            %564 = sbr.rel (0) target = $region105
          $region104: #{_lambda_.26} parent=100 // pred_region
            // Predicated region
            $region106: #{_lambda_.26} parent=104 // pred_check
              _
            $region107: #{_lambda_.26} parent=104 // pred_check_branch
              %566 = sbr.rel (0) target = $region109
            $region108: #{_lambda_.26} parent=104 // pred_region
              loop: start=0, step=1, limit=1
              $region110: #{_lambda_.26} parent=108 // loop_pre_header
                _
              $region111: #{_lambda_.26} parent=108 // loop_header
                %s568 = sphi 0, %s572
                %p569 = scmp.ge.s32.totalorder %s568, 1
                %s573 = sphi %s556, %s556
                %s574 = sphi %s562, %s562
              $region112: #{_lambda_.26} parent=108 // loop_header_branch
                %571 = sbr.rel (%p569) target = $region116
              $region113: #{_lambda_.26} parent=108 // loop_body
                %v575 = vld [vmem:[%s573] sm:$0xff]
                %576 = vst [vmem:[%s574] sm:$0xff] %v575
                %v577 = vld [vmem:[%s573 + $0x8] sm:$0xff]
                %578 = vst [vmem:[%s574 + $0x8] sm:$0xff] %v577
                %v579 = vld [vmem:[%s573 + $0x10] sm:$0xff]
                %580 = vst [vmem:[%s574 + $0x20] sm:$0xff] %v579
                %v581 = vld [vmem:[%s573 + $0x18] sm:$0xff]
                %582 = vst [vmem:[%s574 + $0x28] sm:$0xff] %v581
              $region114: #{_lambda_.26} parent=108 // loop_footer
                %s572 = sadd.s32 1, %s568
              $region115: #{_lambda_.26} parent=108 // loop_footer_branch
                %567 = sbr.rel target = $region111
              $region116: #{_lambda_.26} parent=108 // loop_exit
                _
            $region109: #{_lambda_.26} parent=104 // pred_fallthru
              _
            // Predicated region
            $region117: #{_lambda_.26} parent=104 // pred_check
              _
            $region118: #{_lambda_.26} parent=104 // pred_check_branch
              %584 = sbr.rel target = $region120
            $region119: #{_lambda_.26} parent=104 // pred_region
              _
            $region120: #{_lambda_.26} parent=104 // pred_fallthru
              _
          $region105: #{_lambda_.26} parent=100 // pred_fallthru
            _
          %585 = vnop
        $region101: #{_lambda_.26} parent=88 // pred_fallthru
          _
      $region89: #{_lambda_.26} parent=5 // pred_fallthru
        _
      %p586 = scmp.le.s32.totalorder 2, %s10
      // Predicated region
      $region121: #{_lambda_.26} parent=5 // pred_check
        %p587 = pneg %p586
      $region122: #{_lambda_.26} parent=5 // pred_check_branch
        %589 = sbr.rel (%p587) target = $region124
      $region123: #{_lambda_.26} parent=5 // pred_region
        %s590 = ssub.s32 %s10, 2
        // Predicated region
        $region125: #{_lambda_.26} parent=123 // pred_check
          %p591 = pneg %p133
        $region126: #{_lambda_.26} parent=123 // pred_check_branch
          %593 = sbr.rel (%p591) target = $region128
        $region127: #{_lambda_.26} parent=123 // pred_region
          %s594 = sand.u32 %s118, 1
          %s595 = sand.u32 %s118, 1
          %s596 = smul.addr %s595, 32
          %s597 = scalar_lea.vmem [#allocation4], %s596
        $region128: #{_lambda_.26} parent=123 // pred_fallthru
          _
      $region124: #{_lambda_.26} parent=5 // pred_fallthru
        _
    $region6: #{_lambda_.26} parent=1 // loop_footer
      %s14 = sadd.s32 1, %s10
    $region7: #{_lambda_.26} parent=1 // loop_footer_branch
      %9 = sbr.rel target = $region3
    $region8: #{_lambda_.26} parent=1 // loop_exit
      _

// kernel: _lambda_.27
$region0: #{_lambda_.27}
  #allocation0 [shape = 'u32[]', space=smem, size = 0x4, offset = 0x4, fixed_abs, tag = 'smem constant byte address 0x4 - core index']
  #allocation1 [shape = 'u32[72,128]{1,0:T(1,128)}', space=vmem, size = 0x9000, scoped, tag = 'internal scratch']
  %s0 = inlined_call_operand.vmem [shape: bf16[16,144], index: 0, kind: input, shape index: {}]
  %s1 = inlined_call_operand.vmem [shape: bf16[144,512], index: 1, kind: input, shape index: {}]
  %s2 = inlined_call_operand.vmem [shape: f32[16,1], index: 2, kind: input, shape index: {}]
  %s3 = inlined_call_operand.vmem [shape: f32[16,512], index: 3, kind: output, shape index: {}]
  %s4 = sld [smem:[#allocation0]]
  $region102: #{_lambda_.27} parent=0
    _
  %s6 = ssub.s32 1, %s4
  %s7 = scalar_select 0, %s6, %s4
  $region1: #{_lambda_.27} parent=0
    #allocation2 [shape = 'u8[147456]{0}', space=vmem, size = 0x24000, scoped, tag = 'input window, operand 1']
    #allocation3 [shape = 'u8[32768]{0}', space=vmem, size = 0x8000, scoped, tag = 'output window, operand 0']
    loop: start=0, step=1, limit=4
    $region2: #{_lambda_.27} parent=1 // loop_pre_header
      _
    $region3: #{_lambda_.27} parent=1 // loop_header
      %s9 = sphi 0, %s13
      %p10 = scmp.ge.s32.totalorder %s9, 4
      %s17 = sphi 0, %s17
      %s19 = sphi 0, %s17
      %s20 = sphi 0, %s19
      %s34 = sphi 0, %s20
      %s40 = sphi 0, %s42
      %s43 = sphi 0, %s40
      %s44 = sphi 0, %s43
      %s60 = sphi 0, %s44
      %s64 = sphi 0, %s64
      %s66 = sphi 0, %s64
      %s67 = sphi 0, %s66
      %s81 = sphi 0, %s67
      %s87 = sphi 0, %s89
      %s90 = sphi 0, %s87
      %s91 = sphi 0, %s90
      %s107 = sphi 0, %s91
    $region4: #{_lambda_.27} parent=1 // loop_header_branch
      %12 = sbr.rel (%p10) target = $region8
    $region5: #{_lambda_.27} parent=1 // loop_body
      %s14 = ssub.s32 %s9, 1
      %s15 = ssub.s32 %s9, 2
      %s16 = sadd.s32 %s9, 1
      %s18 = sadd.s32 %s17, 1
      %p21 = scmp.eq.s32.totalorder %s9, 1
      %p22 = scmp.ne.s32.totalorder %s17, %s19
      %p23 = scmp.eq.s32.totalorder %s9, 0
      %p24 = por %p22, %p23
      %p25 = scmp.ne.s32.totalorder %s17, %s19
      %p26 = scmp.eq.s32.totalorder %s14, 1
      %p27 = por %p25, %p26
      %p28 = scmp.ne.s32.totalorder %s19, %s20
      %p29 = scmp.eq.s32.totalorder %s14, 0
      %p30 = por %p28, %p29
      %p31 = scmp.ne.s32.totalorder %s19, %s20
      %p32 = scmp.eq.s32.totalorder %s15, 1
      %p33 = por %p31, %p32
      %p35 = scmp.ne.s32.totalorder %s20, %s34
      %p36 = scmp.eq.s32.totalorder %s15, 0
      %p37 = por %p35, %p36
      %s38 = ssub.s32 %s9, %s16
      %p39 = scmp.eq.s32.totalorder %s38, 0
      %s41 = sadd.s32 %s40, 1
      %s42 = scalar_select %p39, %s40, %s41
      %p45 = pneg %p39
      %p46 = scmp.eq.s32.totalorder %s9, 1
      %p47 = por %p45, %p46
      %p48 = scmp.ne.s32.totalorder %s40, %s43
      %p49 = scmp.eq.s32.totalorder %s9, 0
      %p50 = por %p48, %p49
      %p51 = scmp.ne.s32.totalorder %s40, %s43
      %p52 = scmp.eq.s32.totalorder %s14, 1
      %p53 = por %p51, %p52
      %p54 = scmp.ne.s32.totalorder %s43, %s44
      %p55 = scmp.eq.s32.totalorder %s14, 0
      %p56 = por %p54, %p55
      %p57 = scmp.ne.s32.totalorder %s43, %s44
      %p58 = scmp.eq.s32.totalorder %s15, 1
      %p59 = por %p57, %p58
      %p61 = scmp.ne.s32.totalorder %s44, %s60
      %p62 = scmp.eq.s32.totalorder %s15, 0
      %p63 = por %p61, %p62
      %s65 = sadd.s32 %s64, 1
      %p68 = scmp.eq.s32.totalorder %s9, 1
      %p69 = scmp.ne.s32.totalorder %s64, %s66
      %p70 = scmp.eq.s32.totalorder %s9, 0
      %p71 = por %p69, %p70
      %p72 = scmp.ne.s32.totalorder %s64, %s66
      %p73 = scmp.eq.s32.totalorder %s14, 1
      %p74 = por %p72, %p73
      %p75 = scmp.ne.s32.totalorder %s66, %s67
      %p76 = scmp.eq.s32.totalorder %s14, 0
      %p77 = por %p75, %p76
      %p78 = scmp.ne.s32.totalorder %s66, %s67
      %p79 = scmp.eq.s32.totalorder %s15, 1
      %p80 = por %p78, %p79
      %p82 = scmp.ne.s32.totalorder %s67, %s81
      %p83 = scmp.eq.s32.totalorder %s15, 0
      %p84 = por %p82, %p83
      %s85 = ssub.s32 %s9, %s16
      %p86 = scmp.eq.s32.totalorder %s85, 0
      %s88 = sadd.s32 %s87, 1
      %s89 = scalar_select %p86, %s87, %s88
      %p92 = pneg %p86
      %p93 = scmp.eq.s32.totalorder %s9, 1
      %p94 = por %p92, %p93
      %p95 = scmp.ne.s32.totalorder %s87, %s90
      %p96 = scmp.eq.s32.totalorder %s9, 0
      %p97 = por %p95, %p96
      %p98 = scmp.ne.s32.totalorder %s87, %s90
      %p99 = scmp.eq.s32.totalorder %s14, 1
      %p100 = por %p98, %p99
      %p101 = scmp.ne.s32.totalorder %s90, %s91
      %p102 = scmp.eq.s32.totalorder %s14, 0
      %p103 = por %p101, %p102
      %p104 = scmp.ne.s32.totalorder %s90, %s91
      %p105 = scmp.eq.s32.totalorder %s15, 1
      %p106 = por %p104, %p105
      %p108 = scmp.ne.s32.totalorder %s91, %s107
      %p109 = scmp.eq.s32.totalorder %s15, 0
      %p110 = por %p108, %p109
      %p111 = scmp.le.s32.totalorder 1, %s9
      %p112 = scmp.lt.s32.totalorder %s9, 3
      %p113 = pnand %p111, %p112
      %p114 = pneg %p113
      // Predicated region
      $region9: #{_lambda_.27} parent=5 // pred_check
        _
      $region10: #{_lambda_.27} parent=5 // pred_check_branch
        %116 = sbr.rel (%p113) target = $region12
      $region11: #{_lambda_.27} parent=5 // pred_region
        %s117 = ssub.s32 %s9, 1
        // Predicated region
        $region13: #{_lambda_.27} parent=11 // pred_check
          %p118 = pneg %p30
        $region14: #{_lambda_.27} parent=11 // pred_check_branch
          %120 = sbr.rel (%p118) target = $region16
        $region15: #{_lambda_.27} parent=11 // pred_region
          _
        $region16: #{_lambda_.27} parent=11 // pred_fallthru
          _
        // Predicated region
        $region17: #{_lambda_.27} parent=11 // pred_check
          %p121 = pneg %p77
        $region18: #{_lambda_.27} parent=11 // pred_check_branch
          %123 = sbr.rel (%p121) target = $region20
        $region19: #{_lambda_.27} parent=11 // pred_region
          _
        $region20: #{_lambda_.27} parent=11 // pred_fallthru
          _
      $region12: #{_lambda_.27} parent=5 // pred_fallthru
        _
      %p124 = scmp.lt.s32.totalorder %s9, 2
      // Predicated region
      $region21: #{_lambda_.27} parent=5 // pred_check
        %p125 = pneg %p124
      $region22: #{_lambda_.27} parent=5 // pred_check_branch
        %127 = sbr.rel (%p125) target = $region24
      $region23: #{_lambda_.27} parent=5 // pred_region
        // Predicated region
        $region25: #{_lambda_.27} parent=23 // pred_check
          %p128 = pneg %p50
        $region26: #{_lambda_.27} parent=23 // pred_check_branch
          %130 = sbr.rel (%p128) target = $region28
        $region27: #{_lambda_.27} parent=23 // pred_region
          %s131 = sand.u32 %s40, 1
          %s132 = sand.u32 %s40, 1
          %s133 = smul.addr %s132, 144
          %s134 = scalar_lea.vmem [#allocation2], %s133
          %s135 = smul.u32 2, %s9
          %s136 = smul.addr %s135, 4
          %s137 = scalar_lea.vmem %s1, %s136
          // Predicated region
          $region29: #{_lambda_.27} parent=27 // pred_check
            _
          $region30: #{_lambda_.27} parent=27 // pred_check_branch
            %139 = sbr.rel (0) target = $region32
          $region31: #{_lambda_.27} parent=27 // pred_region
            // Predicated region
            $region33: #{_lambda_.27} parent=31 // pred_check
              _
            $region34: #{_lambda_.27} parent=31 // pred_check_branch
              %141 = sbr.rel (0) target = $region36
            $region35: #{_lambda_.27} parent=31 // pred_region
              // Predicated region
              $region48: #{_lambda_.27} parent=35 // pred_check
                _
              $region49: #{_lambda_.27} parent=35 // pred_check_branch
                %191 = sbr.rel (0) target = $region51
              $region50: #{_lambda_.27} parent=35 // pred_region
                loop: start=0, step=1, limit=1
                $region52: #{_lambda_.27} parent=50 // loop_pre_header
                  _
                $region53: #{_lambda_.27} parent=50 // loop_header
                  %s193 = sphi 0, %s197
                  %p194 = scmp.ge.s32.totalorder %s193, 1
                  %s198 = sphi %s137, %s137
                  %s199 = sphi %s134, %s134
                $region54: #{_lambda_.27} parent=50 // loop_header_branch
                  %196 = sbr.rel (%p194) target = $region58
                $region55: #{_lambda_.27} parent=50 // loop_body
                  %v200 = vld [vmem:[%s198] sm:$0xff]
                  %201 = vst [vmem:[%s199] sm:$0xff] %v200
                  %v202 = vld [vmem:[%s198 + $0x10] sm:$0xff]
                  %203 = vst [vmem:[%s199 + $0x8] sm:$0xff] %v202
                  %v204 = vld [vmem:[%s198 + $0x20] sm:$0xff]
                  %205 = vst [vmem:[%s199 + $0x10] sm:$0xff] %v204
                  %v206 = vld [vmem:[%s198 + $0x30] sm:$0xff]
                  %207 = vst [vmem:[%s199 + $0x18] sm:$0xff] %v206
                  %v208 = vld [vmem:[%s198 + $0x40] sm:$0xff]
                  %209 = vst [vmem:[%s199 + $0x20] sm:$0xff] %v208
                  %v210 = vld [vmem:[%s198 + $0x50] sm:$0xff]
                  %211 = vst [vmem:[%s199 + $0x28] sm:$0xff] %v210
                  %v212 = vld [vmem:[%s198 + $0x60] sm:$0xff]
                  %213 = vst [vmem:[%s199 + $0x30] sm:$0xff] %v212
                  %v214 = vld [vmem:[%s198 + $0x70] sm:$0xff]
                  %215 = vst [vmem:[%s199 + $0x38] sm:$0xff] %v214
                  %v216 = vld [vmem:[%s198 + $0x80] sm:$0xff]
                  %217 = vst [vmem:[%s199 + $0x40] sm:$0xff] %v216
                  %v218 = vld [vmem:[%s198 + $0x90] sm:$0xff]
                  %219 = vst [vmem:[%s199 + $0x48] sm:$0xff] %v218
                  %v220 = vld [vmem:[%s198 + $0xa0] sm:$0xff]
                  %221 = vst [vmem:[%s199 + $0x50] sm:$0xff] %v220
                  %v222 = vld [vmem:[%s198 + $0xb0] sm:$0xff]
                  %223 = vst [vmem:[%s199 + $0x58] sm:$0xff] %v222
                  %v224 = vld [vmem:[%s198 + $0xc0] sm:$0xff]
                  %225 = vst [vmem:[%s199 + $0x60] sm:$0xff] %v224
                  %v226 = vld [vmem:[%s198 + $0xd0] sm:$0xff]
                  %227 = vst [vmem:[%s199 + $0x68] sm:$0xff] %v226
                  %v228 = vld [vmem:[%s198 + $0xe0] sm:$0xff]
                  %229 = vst [vmem:[%s199 + $0x70] sm:$0xff] %v228
                  %v230 = vld [vmem:[%s198 + $0xf0] sm:$0xff]
                  %231 = vst [vmem:[%s199 + $0x78] sm:$0xff] %v230
                  %v232 = vld [vmem:[%s198 + $0x100] sm:$0xff]
                  %233 = vst [vmem:[%s199 + $0x80] sm:$0xff] %v232
                  %v234 = vld [vmem:[%s198 + $0x110] sm:$0xff]
                  %235 = vst [vmem:[%s199 + $0x88] sm:$0xff] %v234
                $region56: #{_lambda_.27} parent=50 // loop_footer
                  %s197 = sadd.s32 1, %s193
                $region57: #{_lambda_.27} parent=50 // loop_footer_branch
                  %192 = sbr.rel target = $region53
                $region58: #{_lambda_.27} parent=50 // loop_exit
                  _
              $region51: #{_lambda_.27} parent=35 // pred_fallthru
                _
              // Predicated region
              $region59: #{_lambda_.27} parent=35 // pred_check
                _
              $region60: #{_lambda_.27} parent=35 // pred_check_branch
                %237 = sbr.rel target = $region62
              $region61: #{_lambda_.27} parent=35 // pred_region
                _
              $region62: #{_lambda_.27} parent=35 // pred_fallthru
                _
            $region36: #{_lambda_.27} parent=31 // pred_fallthru
              _
            // Predicated region
            $region37: #{_lambda_.27} parent=31 // pred_check
              _
            $region38: #{_lambda_.27} parent=31 // pred_check_branch
              %143 = sbr.rel target = $region40
            $region39: #{_lambda_.27} parent=31 // pred_region
              %s145 = ssub.s32 256, 1
              loop: start=0, step=1, limit=1
              $region41: #{_lambda_.27} parent=39 // loop_pre_header
                _
              $region42: #{_lambda_.27} parent=39 // loop_header
                %s147 = sphi 0, %s151
                %p148 = scmp.ge.s32.totalorder %s147, 1
                %s152 = sphi %s137, %s137
                %s153 = sphi %s134, %s134
              $region43: #{_lambda_.27} parent=39 // loop_header_branch
                %150 = sbr.rel (%p148) target = $region47
              $region44: #{_lambda_.27} parent=39 // loop_body
                %v154 = vld [vmem:[%s152] sm:%s145]
                %155 = vst [vmem:[%s153] sm:%s145] %v154
                %v156 = vld [vmem:[%s152 + $0x10] sm:%s145]
                %157 = vst [vmem:[%s153 + $0x8] sm:%s145] %v156
                %v158 = vld [vmem:[%s152 + $0x20] sm:%s145]
                %159 = vst [vmem:[%s153 + $0x10] sm:%s145] %v158
                %v160 = vld [vmem:[%s152 + $0x30] sm:%s145]
                %161 = vst [vmem:[%s153 + $0x18] sm:%s145] %v160
                %v162 = vld [vmem:[%s152 + $0x40] sm:%s145]
                %163 = vst [vmem:[%s153 + $0x20] sm:%s145] %v162
                %v164 = vld [vmem:[%s152 + $0x50] sm:%s145]
                %165 = vst [vmem:[%s153 + $0x28] sm:%s145] %v164
                %v166 = vld [vmem:[%s152 + $0x60] sm:%s145]
                %167 = vst [vmem:[%s153 + $0x30] sm:%s145] %v166
                %v168 = vld [vmem:[%s152 + $0x70] sm:%s145]
                %169 = vst [vmem:[%s153 + $0x38] sm:%s145] %v168
                %v170 = vld [vmem:[%s152 + $0x80] sm:%s145]
                %171 = vst [vmem:[%s153 + $0x40] sm:%s145] %v170
                %v172 = vld [vmem:[%s152 + $0x90] sm:%s145]
                %173 = vst [vmem:[%s153 + $0x48] sm:%s145] %v172
                %v174 = vld [vmem:[%s152 + $0xa0] sm:%s145]
                %175 = vst [vmem:[%s153 + $0x50] sm:%s145] %v174
                %v176 = vld [vmem:[%s152 + $0xb0] sm:%s145]
                %177 = vst [vmem:[%s153 + $0x58] sm:%s145] %v176
                %v178 = vld [vmem:[%s152 + $0xc0] sm:%s145]
                %179 = vst [vmem:[%s153 + $0x60] sm:%s145] %v178
                %v180 = vld [vmem:[%s152 + $0xd0] sm:%s145]
                %181 = vst [vmem:[%s153 + $0x68] sm:%s145] %v180
                %v182 = vld [vmem:[%s152 + $0xe0] sm:%s145]
                %183 = vst [vmem:[%s153 + $0x70] sm:%s145] %v182
                %v184 = vld [vmem:[%s152 + $0xf0] sm:%s145]
                %185 = vst [vmem:[%s153 + $0x78] sm:%s145] %v184
                %v186 = vld [vmem:[%s152 + $0x100] sm:%s145]
                %187 = vst [vmem:[%s153 + $0x80] sm:%s145] %v186
                %v188 = vld [vmem:[%s152 + $0x110] sm:%s145]
                %189 = vst [vmem:[%s153 + $0x88] sm:%s145] %v188
              $region45: #{_lambda_.27} parent=39 // loop_footer
                %s151 = sadd.s32 1, %s147
              $region46: #{_lambda_.27} parent=39 // loop_footer_branch
                %146 = sbr.rel target = $region42
              $region47: #{_lambda_.27} parent=39 // loop_exit
                _
            $region40: #{_lambda_.27} parent=31 // pred_fallthru
              _
          $region32: #{_lambda_.27} parent=27 // pred_fallthru
            _
          %238 = vnop
        $region28: #{_lambda_.27} parent=23 // pred_fallthru
          _
      $region24: #{_lambda_.27} parent=5 // pred_fallthru
        _
      %p239 = scmp.le.s32.totalorder 1, %s9
      %p240 = scmp.lt.s32.totalorder %s9, 3
      %p241 = pnand %p239, %p240
      %p242 = pneg %p241
      // Predicated region
      $region63: #{_lambda_.27} parent=5 // pred_check
        _
      $region64: #{_lambda_.27} parent=5 // pred_check_branch
        %244 = sbr.rel (%p241) target = $region66
      $region65: #{_lambda_.27} parent=5 // pred_region
        %s245 = ssub.s32 %s9, 1
        %s246 = sand.u32 %s43, 1
        %s247 = sand.u32 %s43, 1
        %s248 = smul.addr %s247, 144
        %s249 = scalar_lea.vmem [#allocation2], %s248
        // Predicated region
        $region67: #{_lambda_.27} parent=65 // pred_check
          %p250 = pneg %p56
        $region68: #{_lambda_.27} parent=65 // pred_check_branch
          %252 = sbr.rel (%p250) target = $region70
        $region69: #{_lambda_.27} parent=65 // pred_region
          _
        $region70: #{_lambda_.27} parent=65 // pred_fallthru
          _
        %p253 = pneg %p30
        %p254 = pneg %p27
        %s255 = sand.u32 %s43, 1
        %s256 = sand.u32 %s43, 1
        %s257 = smul.addr %s256, 144
        %s258 = scalar_lea.vmem [#allocation2], %s257
        %p259 = pneg %p56
        %p260 = pneg %p53
        %p261 = pneg %p77
        %p262 = pneg %p74
        %p263 = pneg %p103
        %p264 = pneg %p100
        %s265 = sand.u32 %s90, 1
        %s266 = sand.u32 %s90, 1
        %s267 = smul.addr %s266, 32
        %s268 = scalar_lea.vmem [#allocation3], %s267
        %s269 = smul.u32 2, %s14
        %s270 = smul.u32 2, %s14
        %v272 = vld [vmem:[%s0] sm:$0xff]
        %v273 = vld [vmem:[%s0 + $0x8] sm:$0xff]
        %v274 = vld [vmem:[%s249] sm:$0xff]
        %v275 = vld [vmem:[%s249 + $0x8] sm:$0xff]
        %v276 = vld [vmem:[%s249 + $0x10] sm:$0xff]
        %v277 = vld [vmem:[%s249 + $0x18] sm:$0xff]
        %v278 = vld [vmem:[%s249 + $0x20] sm:$0xff]
        %v279 = vld [vmem:[%s249 + $0x28] sm:$0xff]
        %v280 = vld [vmem:[%s249 + $0x30] sm:$0xff]
        %v281 = vld [vmem:[%s249 + $0x38] sm:$0xff]
        %v282 = vld [vmem:[%s249 + $0x40] sm:$0xff]
        %v283 = vld [vmem:[%s249 + $0x48] sm:$0xff]
        %v284 = vld [vmem:[%s249 + $0x50] sm:$0xff]
        %v285 = vld [vmem:[%s249 + $0x58] sm:$0xff]
        %v286 = vld [vmem:[%s249 + $0x60] sm:$0xff]
        %v287 = vld [vmem:[%s249 + $0x68] sm:$0xff]
        %v288 = vld [vmem:[%s249 + $0x70] sm:$0xff]
        %v289 = vld [vmem:[%s249 + $0x78] sm:$0xff]
        %v290 = vld [vmem:[%s249 + $0x80] sm:$0xff]
        %v291 = vld [vmem:[%s249 + $0x88] sm:$0xff]
        %v292 = vld [vmem:[%s2] sm:$0xff]
        %v293 = vld [vmem:[%s2 + $0x8] sm:$0xff]
        %295 = vset.pattern.permute.xlu0 0
        %296 = vperm.xlu0 %295, %v292
        %v297 = vpop.permute.xlu0 %296
        %300 = vset.pattern.permute.xlu0 0
        %301 = vperm.xlu0 %300, %v293
        %v302 = vpop.permute.xlu0 %301
        %v306 = vunpack.c.l.b16 %v272
        %v307 = vunpack.c.h.b16 %v272
        %v308 = vunpack.c.l.b16 %v273
        %v309 = vunpack.c.h.b16 %v273
        %v310 = vpack.c.b16 %v308, %v306
        %v311 = vpack.c.b16 %v309, %v307
        %v331 = vunpack.c.l.b16 %v274
        %v332 = vunpack.c.h.b16 %v274
        %v333 = vunpack.c.l.b16 %v275
        %v334 = vunpack.c.h.b16 %v275
        %v335 = vunpack.c.l.b16 %v276
        %v336 = vunpack.c.h.b16 %v276
        %v337 = vunpack.c.l.b16 %v277
        %v338 = vunpack.c.h.b16 %v277
        %v339 = vunpack.c.l.b16 %v278
        %v340 = vunpack.c.h.b16 %v278
        %v341 = vunpack.c.l.b16 %v279
        %v342 = vunpack.c.h.b16 %v279
        %v343 = vunpack.c.l.b16 %v280
        %v344 = vunpack.c.h.b16 %v280
        %v345 = vunpack.c.l.b16 %v281
        %v346 = vunpack.c.h.b16 %v281
        %v347 = vunpack.c.l.b16 %v282
        %v348 = vunpack.c.h.b16 %v282
        %v349 = vunpack.c.l.b16 %v283
        %v350 = vunpack.c.h.b16 %v283
        %v351 = vunpack.c.l.b16 %v284
        %v352 = vunpack.c.h.b16 %v284
        %v353 = vunpack.c.l.b16 %v285
        %v354 = vunpack.c.h.b16 %v285
        %v355 = vunpack.c.l.b16 %v286
        %v356 = vunpack.c.h.b16 %v286
        %v357 = vunpack.c.l.b16 %v287
        %v358 = vunpack.c.h.b16 %v287
        %v359 = vunpack.c.l.b16 %v288
        %v360 = vunpack.c.h.b16 %v288
        %v361 = vunpack.c.l.b16 %v289
        %v362 = vunpack.c.h.b16 %v289
        %v363 = vunpack.c.l.b16 %v290
        %v364 = vunpack.c.h.b16 %v290
        %v365 = vunpack.c.l.b16 %v291
        %v366 = vunpack.c.h.b16 %v291
        %v367 = vpack.c.b16 %v333, %v331
        %v368 = vpack.c.b16 %v334, %v332
        %v369 = vpack.c.b16 %v337, %v335
        %v370 = vpack.c.b16 %v338, %v336
        %v371 = vpack.c.b16 %v341, %v339
        %v372 = vpack.c.b16 %v342, %v340
        %v373 = vpack.c.b16 %v345, %v343
        %v374 = vpack.c.b16 %v346, %v344
        %v375 = vpack.c.b16 %v349, %v347
        %v376 = vpack.c.b16 %v350, %v348
        %v377 = vpack.c.b16 %v353, %v351
        %v378 = vpack.c.b16 %v354, %v352
        %v379 = vpack.c.b16 %v357, %v355
        %v380 = vpack.c.b16 %v358, %v356
        %v381 = vpack.c.b16 %v361, %v359
        %v382 = vpack.c.b16 %v362, %v360
        %v383 = vpack.c.b16 %v365, %v363
        %v384 = vpack.c.b16 %v366, %v364
        %vm403 = vcmask 130048
        %v405 = vsel %vm403, %v311, 0
        %407 = vmatpush.bf16.msra.mxu0 %v381
        %408 = vmatpush.bf16.msra.mxu0 %v379
        %409 = vmatpush.bf16.msra.mxu0 %v377
        %410 = vmatpush.bf16.msra.mxu0 %v375
        %411 = vmatpush.bf16.msra.mxu0 %v373
        %412 = vmatpush.bf16.msra.mxu0 %v371
        %413 = vmatpush.bf16.msra.mxu0 %v369
        %414 = vmatpush.bf16.msra.mxu0 %v367
        %415 = vmatmul.bf16.gmra.mxu0 %v310
        %v416 = vpop.f32.mrf.mxu0
        %v417 = vadd.f32 %v297, %v416
        %v418 = vpop.f32.mrf.mxu0
        %v419 = vadd.f32 %v302, %v418
        %420 = vdwg.mxu0
        %421 = vmatpush.bf16.msra.mxu0 0
        %422 = vmatpush.bf16.msra.mxu0 0
        %423 = vmatpush.bf16.msra.mxu0 0
        %424 = vmatpush.bf16.msra.mxu0 0
        %425 = vmatpush.bf16.msra.mxu0 0
        %426 = vmatpush.bf16.msra.mxu0 0
        %427 = vmatpush.bf16.msra.mxu0 0
        %428 = vmatpush.bf16.msra.mxu0 %v383
        %429 = vmatmul.bf16.gmra.mxu0 %v405
        %v430 = vpop.f32.mrf.mxu0
        %v431 = vadd.f32 %v417, %v430
        %v432 = vpop.f32.mrf.mxu0
        %v433 = vadd.f32 %v419, %v432
        %434 = vdwg.mxu0
        %435 = vmatpush.bf16.msra.mxu0 %v382
        %436 = vmatpush.bf16.msra.mxu0 %v380
        %437 = vmatpush.bf16.msra.mxu0 %v378
        %438 = vmatpush.bf16.msra.mxu0 %v376
        %439 = vmatpush.bf16.msra.mxu0 %v374
        %440 = vmatpush.bf16.msra.mxu0 %v372
        %441 = vmatpush.bf16.msra.mxu0 %v370
        %442 = vmatpush.bf16.msra.mxu0 %v368
        %443 = vmatmul.bf16.gmra.mxu0 %v310
        %v444 = vpop.f32.mrf.mxu0
        %v445 = vadd.f32 %v297, %v444
        %v446 = vpop.f32.mrf.mxu0
        %v447 = vadd.f32 %v302, %v446
        %448 = vdwg.mxu0
        %449 = vmatpush.bf16.msra.mxu0 0
        %450 = vmatpush.bf16.msra.mxu0 0
        %451 = vmatpush.bf16.msra.mxu0 0
        %452 = vmatpush.bf16.msra.mxu0 0
        %453 = vmatpush.bf16.msra.mxu0 0
        %454 = vmatpush.bf16.msra.mxu0 0
        %455 = vmatpush.bf16.msra.mxu0 0
        %456 = vmatpush.bf16.msra.mxu0 %v384
        %457 = vmatmul.bf16.gmra.mxu0 %v405
        %v458 = vpop.f32.mrf.mxu0
        %v459 = vadd.f32 %v445, %v458
        %v460 = vpop.f32.mrf.mxu0
        %v461 = vadd.f32 %v447, %v460
        %462 = vdwg.mxu0
        %v463 = vmax.f32 %v431, 0.0
        %v464 = vmax.f32 %v459, 0.0
        %v465 = vmax.f32 %v433, 0.0
        %v466 = vmax.f32 %v461, 0.0
        %467 = vst [vmem:[%s268] sm:$0xff] %v463
        %468 = vst [vmem:[%s268 + $0x8] sm:$0xff] %v464
        %469 = vst [vmem:[%s268 + $0x10] sm:$0xff] %v465
        %470 = vst [vmem:[%s268 + $0x18] sm:$0xff] %v466
        %s471 = sand.u32 %s90, 1
        %s472 = sand.u32 %s90, 1
        %s473 = smul.addr %s472, 32
        %s474 = scalar_lea.vmem [#allocation3], %s473
        // Predicated region
        $region71: #{_lambda_.27} parent=65 // pred_check
          %p475 = pneg %p100
        $region72: #{_lambda_.27} parent=65 // pred_check_branch
          %477 = sbr.rel (%p475) target = $region74
        $region73: #{_lambda_.27} parent=65 // pred_region
          %s478 = smul.u32 2, %s14
          %s479 = smul.addr %s478, 8
          %s480 = scalar_lea.vmem %s3, %s479
          // Predicated region
          $region75: #{_lambda_.27} parent=73 // pred_check
            _
          $region76: #{_lambda_.27} parent=73 // pred_check_branch
            %482 = sbr.rel (0) target = $region78
          $region77: #{_lambda_.27} parent=73 // pred_region
            // Predicated region
            $region79: #{_lambda_.27} parent=77 // pred_check
              _
            $region80: #{_lambda_.27} parent=77 // pred_check_branch
              %484 = sbr.rel (0) target = $region82
            $region81: #{_lambda_.27} parent=77 // pred_region
              loop: start=0, step=1, limit=1
              $region83: #{_lambda_.27} parent=81 // loop_pre_header
                _
              $region84: #{_lambda_.27} parent=81 // loop_header
                %s486 = sphi 0, %s490
                %p487 = scmp.ge.s32.totalorder %s486, 1
                %s491 = sphi %s474, %s474
                %s492 = sphi %s480, %s480
              $region85: #{_lambda_.27} parent=81 // loop_header_branch
                %489 = sbr.rel (%p487) target = $region89
              $region86: #{_lambda_.27} parent=81 // loop_body
                %v493 = vld [vmem:[%s491] sm:$0xff]
                %494 = vst [vmem:[%s492] sm:$0xff] %v493
                %v495 = vld [vmem:[%s491 + $0x8] sm:$0xff]
                %496 = vst [vmem:[%s492 + $0x8] sm:$0xff] %v495
                %v497 = vld [vmem:[%s491 + $0x10] sm:$0xff]
                %498 = vst [vmem:[%s492 + $0x20] sm:$0xff] %v497
                %v499 = vld [vmem:[%s491 + $0x18] sm:$0xff]
                %500 = vst [vmem:[%s492 + $0x28] sm:$0xff] %v499
              $region87: #{_lambda_.27} parent=81 // loop_footer
                %s490 = sadd.s32 1, %s486
              $region88: #{_lambda_.27} parent=81 // loop_footer_branch
                %485 = sbr.rel target = $region84
              $region89: #{_lambda_.27} parent=81 // loop_exit
                _
            $region82: #{_lambda_.27} parent=77 // pred_fallthru
              _
            // Predicated region
            $region90: #{_lambda_.27} parent=77 // pred_check
              _
            $region91: #{_lambda_.27} parent=77 // pred_check_branch
              %502 = sbr.rel target = $region93
            $region92: #{_lambda_.27} parent=77 // pred_region
              _
            $region93: #{_lambda_.27} parent=77 // pred_fallthru
              _
          $region78: #{_lambda_.27} parent=73 // pred_fallthru
            _
          %503 = vnop
        $region74: #{_lambda_.27} parent=65 // pred_fallthru
          _
      $region66: #{_lambda_.27} parent=5 // pred_fallthru
        _
      %p504 = scmp.le.s32.totalorder 2, %s9
      // Predicated region
      $region94: #{_lambda_.27} parent=5 // pred_check
        %p505 = pneg %p504
      $region95: #{_lambda_.27} parent=5 // pred_check_branch
        %507 = sbr.rel (%p505) target = $region97
      $region96: #{_lambda_.27} parent=5 // pred_region
        %s508 = ssub.s32 %s9, 2
        // Predicated region
        $region98: #{_lambda_.27} parent=96 // pred_check
          %p509 = pneg %p106
        $region99: #{_lambda_.27} parent=96 // pred_check_branch
          %511 = sbr.rel (%p509) target = $region101
        $region100: #{_lambda_.27} parent=96 // pred_region
          %s512 = sand.u32 %s91, 1
          %s513 = sand.u32 %s91, 1
          %s514 = smul.addr %s513, 32
          %s515 = scalar_lea.vmem [#allocation3], %s514
        $region101: #{_lambda_.27} parent=96 // pred_fallthru
          _
      $region97: #{_lambda_.27} parent=5 // pred_fallthru
        _
    $region6: #{_lambda_.27} parent=1 // loop_footer
      %s13 = sadd.s32 1, %s9
    $region7: #{_lambda_.27} parent=1 // loop_footer_branch
      %8 = sbr.rel target = $region3
    $region8: #{_lambda_.27} parent=1 // loop_exit
      _

// kernel: _lambda_.29
$region0: #{_lambda_.29}
  #allocation0 [shape = 'u32[]', space=smem, size = 0x4, offset = 0x4, fixed_abs, tag = 'smem constant byte address 0x4 - core index']
  #allocation1 [shape = 'u32[72,128]{1,0:T(1,128)}', space=vmem, size = 0x9000, scoped, tag = 'internal scratch']
  %s0 = inlined_call_operand.vmem [shape: bf16[64,144], index: 0, kind: input, shape index: {}]
  %s1 = inlined_call_operand.vmem [shape: bf16[144,128], index: 1, kind: input, shape index: {}]
  %s2 = inlined_call_operand.vmem [shape: f32[64,1], index: 2, kind: input, shape index: {}]
  %s3 = inlined_call_operand.vmem [shape: f32[64,128], index: 3, kind: output, shape index: {}]
  %s4 = sld [smem:[#allocation0]]
  $region22: #{_lambda_.29} parent=0
    _
  %s6 = ssub.s32 1, %s4
  %s7 = scalar_select 0, %s6, %s4
  // Predicated region
  $region2: #{_lambda_.29} parent=0 // pred_check
    _
  $region3: #{_lambda_.29} parent=0 // pred_check_branch
    %9 = sbr.rel (0) target = $region5
  $region4: #{_lambda_.29} parent=0 // pred_region
    _
  $region5: #{_lambda_.29} parent=0 // pred_fallthru
    _
  // Predicated region
  $region6: #{_lambda_.29} parent=0 // pred_check
    _
  $region7: #{_lambda_.29} parent=0 // pred_check_branch
    %11 = sbr.rel (0) target = $region9
  $region8: #{_lambda_.29} parent=0 // pred_region
    _
  $region9: #{_lambda_.29} parent=0 // pred_fallthru
    _
  // Predicated region
  $region10: #{_lambda_.29} parent=0 // pred_check
    _
  $region11: #{_lambda_.29} parent=0 // pred_check_branch
    %13 = sbr.rel (0) target = $region13
  $region12: #{_lambda_.29} parent=0 // pred_region
    _
  $region13: #{_lambda_.29} parent=0 // pred_fallthru
    _
  %v15 = vld [vmem:[%s0] sm:$0xff]
  %v16 = vld [vmem:[%s0 + $0x8] sm:$0xff]
  %v17 = vld [vmem:[%s0 + $0x10] sm:$0xff]
  %v18 = vld [vmem:[%s0 + $0x18] sm:$0xff]
  %v19 = vld [vmem:[%s0 + $0x20] sm:$0xff]
  %v20 = vld [vmem:[%s0 + $0x28] sm:$0xff]
  %v21 = vld [vmem:[%s0 + $0x30] sm:$0xff]
  %v22 = vld [vmem:[%s0 + $0x38] sm:$0xff]
  %v23 = vld [vmem:[%s1] sm:$0xf]
  %v24 = vld [vmem:[%s1 + $0x4] sm:$0xf]
  %v25 = vld [vmem:[%s1 + $0x8] sm:$0xf]
  %v26 = vld [vmem:[%s1 + $0xc] sm:$0xf]
  %v27 = vld [vmem:[%s1 + $0x10] sm:$0xf]
  %v28 = vld [vmem:[%s1 + $0x14] sm:$0xf]
  %v29 = vld [vmem:[%s1 + $0x18] sm:$0xf]
  %v30 = vld [vmem:[%s1 + $0x1c] sm:$0xf]
  %v31 = vld [vmem:[%s1 + $0x20] sm:$0xf]
  %v32 = vld [vmem:[%s1 + $0x24] sm:$0xf]
  %v33 = vld [vmem:[%s1 + $0x28] sm:$0xf]
  %v34 = vld [vmem:[%s1 + $0x2c] sm:$0xf]
  %v35 = vld [vmem:[%s1 + $0x30] sm:$0xf]
  %v36 = vld [vmem:[%s1 + $0x34] sm:$0xf]
  %v37 = vld [vmem:[%s1 + $0x38] sm:$0xf]
  %v38 = vld [vmem:[%s1 + $0x3c] sm:$0xf]
  %v39 = vld [vmem:[%s1 + $0x40] sm:$0xf]
  %v40 = vld [vmem:[%s1 + $0x44] sm:$0xf]
  %v41 = vld [vmem:[%s2] sm:$0xff]
  %v42 = vld [vmem:[%s2 + $0x8] sm:$0xff]
  %v43 = vld [vmem:[%s2 + $0x10] sm:$0xff]
  %v44 = vld [vmem:[%s2 + $0x18] sm:$0xff]
  %v45 = vld [vmem:[%s2 + $0x20] sm:$0xff]
  %v46 = vld [vmem:[%s2 + $0x28] sm:$0xff]
  %v47 = vld [vmem:[%s2 + $0x30] sm:$0xff]
  %v48 = vld [vmem:[%s2 + $0x38] sm:$0xff]
  %50 = vset.pattern.permute.xlu0 0
  %51 = vperm.xlu0 %50, %v41
  %v52 = vpop.permute.xlu0 %51
  %55 = vset.pattern.permute.xlu0 0
  %56 = vperm.xlu0 %55, %v42
  %v57 = vpop.permute.xlu0 %56
  %60 = vset.pattern.permute.xlu0 0
  %61 = vperm.xlu0 %60, %v43
  %v62 = vpop.permute.xlu0 %61
  %65 = vset.pattern.permute.xlu0 0
  %66 = vperm.xlu0 %65, %v44
  %v67 = vpop.permute.xlu0 %66
  %70 = vset.pattern.permute.xlu0 0
  %71 = vperm.xlu0 %70, %v45
  %v72 = vpop.permute.xlu0 %71
  %75 = vset.pattern.permute.xlu0 0
  %76 = vperm.xlu0 %75, %v46
  %v77 = vpop.permute.xlu0 %76
  %80 = vset.pattern.permute.xlu0 0
  %81 = vperm.xlu0 %80, %v47
  %v82 = vpop.permute.xlu0 %81
  %85 = vset.pattern.permute.xlu0 0
  %86 = vperm.xlu0 %85, %v48
  %v87 = vpop.permute.xlu0 %86
  %v97 = vunpack.c.l.b16 %v15
  %v98 = vunpack.c.h.b16 %v15
  %v99 = vunpack.c.l.b16 %v16
  %v100 = vunpack.c.h.b16 %v16
  %v101 = vunpack.c.l.b16 %v17
  %v102 = vunpack.c.h.b16 %v17
  %v103 = vunpack.c.l.b16 %v18
  %v104 = vunpack.c.h.b16 %v18
  %v105 = vunpack.c.l.b16 %v19
  %v106 = vunpack.c.h.b16 %v19
  %v107 = vunpack.c.l.b16 %v20
  %v108 = vunpack.c.h.b16 %v20
  %v109 = vunpack.c.l.b16 %v21
  %v110 = vunpack.c.h.b16 %v21
  %v111 = vunpack.c.l.b16 %v22
  %v112 = vunpack.c.h.b16 %v22
  %v113 = vpack.c.b16 %v99, %v97
  %v114 = vpack.c.b16 %v100, %v98
  %v115 = vpack.c.b16 %v103, %v101
  %v116 = vpack.c.b16 %v104, %v102
  %v117 = vpack.c.b16 %v107, %v105
  %v118 = vpack.c.b16 %v108, %v106
  %v119 = vpack.c.b16 %v111, %v109
  %v120 = vpack.c.b16 %v112, %v110
  %v143 = vunpack.c.l.b16 %v23
  %v144 = vunpack.c.l.b16 %v24
  %v145 = vunpack.c.l.b16 %v25
  %v146 = vunpack.c.l.b16 %v26
  %v147 = vunpack.c.l.b16 %v27
  %v148 = vunpack.c.l.b16 %v28
  %v149 = vunpack.c.l.b16 %v29
  %v150 = vunpack.c.l.b16 %v30
  %v151 = vunpack.c.l.b16 %v31
  %v152 = vunpack.c.l.b16 %v32
  %v153 = vunpack.c.l.b16 %v33
  %v154 = vunpack.c.l.b16 %v34
  %v155 = vunpack.c.l.b16 %v35
  %v156 = vunpack.c.l.b16 %v36
  %v157 = vunpack.c.l.b16 %v37
  %v158 = vunpack.c.l.b16 %v38
  %v159 = vunpack.c.l.b16 %v39
  %v160 = vunpack.c.l.b16 %v40
  %v161 = vpack.c.b16 %v144, %v143
  %v162 = vpack.c.b16 %v146, %v145
  %v163 = vpack.c.b16 %v148, %v147
  %v164 = vpack.c.b16 %v150, %v149
  %v165 = vpack.c.b16 %v152, %v151
  %v166 = vpack.c.b16 %v154, %v153
  %v167 = vpack.c.b16 %v156, %v155
  %v168 = vpack.c.b16 %v158, %v157
  %v169 = vpack.c.b16 %v160, %v159
  %vm179 = vcmask 130048
  %v181 = vsel %vm179, %v114, 0
  %v184 = vsel %vm179, %v116, 0
  %v187 = vsel %vm179, %v118, 0
  %v190 = vsel %vm179, %v120, 0
  %192 = vmatpush.bf16.msra.mxu0 %v168
  %193 = vmatpush.bf16.msra.mxu0 %v167
  %194 = vmatpush.bf16.msra.mxu0 %v166
  %195 = vmatpush.bf16.msra.mxu0 %v165
  %196 = vmatpush.bf16.msra.mxu0 %v164
  %197 = vmatpush.bf16.msra.mxu0 %v163
  %198 = vmatpush.bf16.msra.mxu0 %v162
  %199 = vmatpush.bf16.msra.mxu0 %v161
  %200 = vmatmul.bf16.gmra.mxu0 %v113
  %v201 = vpop.f32.mrf.mxu0
  %v202 = vadd.f32 %v52, %v201
  %v203 = vpop.f32.mrf.mxu0
  %v204 = vadd.f32 %v57, %v203
  %205 = vmatmul.bf16.gmra.mxu0 %v115
  %v206 = vpop.f32.mrf.mxu0
  %v207 = vadd.f32 %v62, %v206
  %v208 = vpop.f32.mrf.mxu0
  %v209 = vadd.f32 %v67, %v208
  %210 = vmatmul.bf16.gmra.mxu0 %v117
  %v211 = vpop.f32.mrf.mxu0
  %v212 = vadd.f32 %v72, %v211
  %v213 = vpop.f32.mrf.mxu0
  %v214 = vadd.f32 %v77, %v213
  %215 = vmatmul.bf16.gmra.mxu0 %v119
  %v216 = vpop.f32.mrf.mxu0
  %v217 = vadd.f32 %v82, %v216
  %v218 = vpop.f32.mrf.mxu0
  %v219 = vadd.f32 %v87, %v218
  %220 = vdwg.mxu0
  %221 = vmatpush.bf16.msra.mxu0 0
  %222 = vmatpush.bf16.msra.mxu0 0
  %223 = vmatpush.bf16.msra.mxu0 0
  %224 = vmatpush.bf16.msra.mxu0 0
  %225 = vmatpush.bf16.msra.mxu0 0
  %226 = vmatpush.bf16.msra.mxu0 0
  %227 = vmatpush.bf16.msra.mxu0 0
  %228 = vmatpush.bf16.msra.mxu0 %v169
  %229 = vmatmul.bf16.gmra.mxu0 %v181
  %v230 = vpop.f32.mrf.mxu0
  %v231 = vadd.f32 %v202, %v230
  %v232 = vpop.f32.mrf.mxu0
  %v233 = vadd.f32 %v204, %v232
  %234 = vmatmul.bf16.gmra.mxu0 %v184
  %v235 = vpop.f32.mrf.mxu0
  %v236 = vadd.f32 %v207, %v235
  %v237 = vpop.f32.mrf.mxu0
  %v238 = vadd.f32 %v209, %v237
  %239 = vmatmul.bf16.gmra.mxu0 %v187
  %v240 = vpop.f32.mrf.mxu0
  %v241 = vadd.f32 %v212, %v240
  %v242 = vpop.f32.mrf.mxu0
  %v243 = vadd.f32 %v214, %v242
  %244 = vmatmul.bf16.gmra.mxu0 %v190
  %v245 = vpop.f32.mrf.mxu0
  %v246 = vadd.f32 %v217, %v245
  %v247 = vpop.f32.mrf.mxu0
  %v248 = vadd.f32 %v219, %v247
  %249 = vdwg.mxu0
  %v250 = vlaneseq
  %v251 = vshrl.u32 %v250, 7
  %v252 = vadd.s32 %v251, 8
  %v253 = vadd.s32 %v251, 16
  %v254 = vadd.s32 %v251, 24
  %v255 = vadd.s32 %v251, 32
  %v256 = vadd.s32 %v251, 40
  %v257 = vadd.s32 %v251, 48
  %v258 = vadd.s32 %v251, 56
  %vm259 = vcmp.lt.s32.totalorder %v251, 32
  %vm260 = vcmp.lt.s32.totalorder %v252, 32
  %vm261 = vcmp.lt.s32.totalorder %v253, 32
  %vm262 = vcmp.lt.s32.totalorder %v254, 32
  %vm263 = vcmp.lt.s32.totalorder %v255, 32
  %vm264 = vcmp.lt.s32.totalorder %v256, 32
  %vm265 = vcmp.lt.s32.totalorder %v257, 32
  %vm266 = vcmp.lt.s32.totalorder %v258, 32
  %v267 = vmax.f32 %v231, 0.0
  %v268 = vmax.f32 %v233, 0.0
  %v269 = vmax.f32 %v236, 0.0
  %v270 = vmax.f32 %v238, 0.0
  %v271 = vmax.f32 %v241, 0.0
  %v272 = vmax.f32 %v243, 0.0
  %v273 = vmax.f32 %v246, 0.0
  %v274 = vmax.f32 %v248, 0.0
  %v275 = vsel %vm259, %v267, %v231
  %v276 = vsel %vm260, %v268, %v233
  %v277 = vsel %vm261, %v269, %v236
  %v278 = vsel %vm262, %v270, %v238
  %v279 = vsel %vm263, %v271, %v241
  %v280 = vsel %vm264, %v272, %v243
  %v281 = vsel %vm265, %v273, %v246
  %v282 = vsel %vm266, %v274, %v248
  %283 = vst [vmem:[%s3] sm:$0xff] %v275
  %284 = vst [vmem:[%s3 + $0x8] sm:$0xff] %v276
  %285 = vst [vmem:[%s3 + $0x10] sm:$0xff] %v277
  %286 = vst [vmem:[%s3 + $0x18] sm:$0xff] %v278
  %287 = vst [vmem:[%s3 + $0x20] sm:$0xff] %v279
  %288 = vst [vmem:[%s3 + $0x28] sm:$0xff] %v280
  %289 = vst [vmem:[%s3 + $0x30] sm:$0xff] %v281
  %290 = vst [vmem:[%s3 + $0x38] sm:$0xff] %v282
  // Predicated region
  $region14: #{_lambda_.29} parent=0 // pred_check
    _
  $region15: #{_lambda_.29} parent=0 // pred_check_branch
    %292 = sbr.rel (0) target = $region17
  $region16: #{_lambda_.29} parent=0 // pred_region
    _
  $region17: #{_lambda_.29} parent=0 // pred_fallthru
    _
  // Predicated region
  $region18: #{_lambda_.29} parent=0 // pred_check
    _
  $region19: #{_lambda_.29} parent=0 // pred_check_branch
    %294 = sbr.rel (0) target = $region21
  $region20: #{_lambda_.29} parent=0 // pred_region
    _
  $region21: #{_lambda_.29} parent=0 // pred_fallthru
    _

// kernel: _lambda_.30
$region0: #{_lambda_.30}
  #allocation0 [shape = 'u32[]', space=smem, size = 0x4, offset = 0x4, fixed_abs, tag = 'smem constant byte address 0x4 - core index']
  #allocation1 [shape = 'u32[72,128]{1,0:T(1,128)}', space=vmem, size = 0x9000, scoped, tag = 'internal scratch']
  %s0 = inlined_call_operand.vmem [shape: bf16[32,288], index: 0, kind: input, shape index: {}]
  %s1 = inlined_call_operand.vmem [shape: bf16[288,128], index: 1, kind: input, shape index: {}]
  %s2 = inlined_call_operand.vmem [shape: f32[32,1], index: 2, kind: input, shape index: {}]
  %s3 = inlined_call_operand.vmem [shape: f32[32,128], index: 3, kind: input, shape index: {}]
  %s4 = inlined_call_operand.vmem [shape: f32[32,128], index: 4, kind: output, shape index: {}]
  %s5 = sld [smem:[#allocation0]]
  $region26: #{_lambda_.30} parent=0
    _
  %s7 = ssub.s32 1, %s5
  %s8 = scalar_select 0, %s7, %s5
  // Predicated region
  $region2: #{_lambda_.30} parent=0 // pred_check
    _
  $region3: #{_lambda_.30} parent=0 // pred_check_branch
    %10 = sbr.rel (0) target = $region5
  $region4: #{_lambda_.30} parent=0 // pred_region
    _
  $region5: #{_lambda_.30} parent=0 // pred_fallthru
    _
  // Predicated region
  $region6: #{_lambda_.30} parent=0 // pred_check
    _
  $region7: #{_lambda_.30} parent=0 // pred_check_branch
    %12 = sbr.rel (0) target = $region9
  $region8: #{_lambda_.30} parent=0 // pred_region
    _
  $region9: #{_lambda_.30} parent=0 // pred_fallthru
    _
  // Predicated region
  $region10: #{_lambda_.30} parent=0 // pred_check
    _
  $region11: #{_lambda_.30} parent=0 // pred_check_branch
    %14 = sbr.rel (0) target = $region13
  $region12: #{_lambda_.30} parent=0 // pred_region
    _
  $region13: #{_lambda_.30} parent=0 // pred_fallthru
    _
  // Predicated region
  $region14: #{_lambda_.30} parent=0 // pred_check
    _
  $region15: #{_lambda_.30} parent=0 // pred_check_branch
    %16 = sbr.rel (0) target = $region17
  $region16: #{_lambda_.30} parent=0 // pred_region
    _
  $region17: #{_lambda_.30} parent=0 // pred_fallthru
    _
  %v18 = vld [vmem:[%s0] sm:$0xff]
  %v19 = vld [vmem:[%s0 + $0x8] sm:$0xf]
  %v20 = vld [vmem:[%s0 + $0xc] sm:$0xff]
  %v21 = vld [vmem:[%s0 + $0x14] sm:$0xf]
  %v22 = vld [vmem:[%s0 + $0x18] sm:$0xff]
  %v23 = vld [vmem:[%s0 + $0x20] sm:$0xf]
  %v24 = vld [vmem:[%s0 + $0x24] sm:$0xff]
  %v25 = vld [vmem:[%s0 + $0x2c] sm:$0xf]
  %v26 = vld [vmem:[%s1] sm:$0xf]
  %v27 = vld [vmem:[%s1 + $0x4] sm:$0xf]
  %v28 = vld [vmem:[%s1 + $0x8] sm:$0xf]
  %v29 = vld [vmem:[%s1 + $0xc] sm:$0xf]
  %v30 = vld [vmem:[%s1 + $0x10] sm:$0xf]
  %v31 = vld [vmem:[%s1 + $0x14] sm:$0xf]
  %v32 = vld [vmem:[%s1 + $0x18] sm:$0xf]
  %v33 = vld [vmem:[%s1 + $0x1c] sm:$0xf]
  %v34 = vld [vmem:[%s1 + $0x20] sm:$0xf]
  %v35 = vld [vmem:[%s1 + $0x24] sm:$0xf]
  %v36 = vld [vmem:[%s1 + $0x28] sm:$0xf]
  %v37 = vld [vmem:[%s1 + $0x2c] sm:$0xf]
  %v38 = vld [vmem:[%s1 + $0x30] sm:$0xf]
  %v39 = vld [vmem:[%s1 + $0x34] sm:$0xf]
  %v40 = vld [vmem:[%s1 + $0x38] sm:$0xf]
  %v41 = vld [vmem:[%s1 + $0x3c] sm:$0xf]
  %v42 = vld [vmem:[%s1 + $0x40] sm:$0xf]
  %v43 = vld [vmem:[%s1 + $0x44] sm:$0xf]
  %v44 = vld [vmem:[%s1 + $0x48] sm:$0xf]
  %v45 = vld [vmem:[%s1 + $0x4c] sm:$0xf]
  %v46 = vld [vmem:[%s1 + $0x50] sm:$0xf]
  %v47 = vld [vmem:[%s1 + $0x54] sm:$0xf]
  %v48 = vld [vmem:[%s1 + $0x58] sm:$0xf]
  %v49 = vld [vmem:[%s1 + $0x5c] sm:$0xf]
  %v50 = vld [vmem:[%s1 + $0x60] sm:$0xf]
  %v51 = vld [vmem:[%s1 + $0x64] sm:$0xf]
  %v52 = vld [vmem:[%s1 + $0x68] sm:$0xf]
  %v53 = vld [vmem:[%s1 + $0x6c] sm:$0xf]
  %v54 = vld [vmem:[%s1 + $0x70] sm:$0xf]
  %v55 = vld [vmem:[%s1 + $0x74] sm:$0xf]
  %v56 = vld [vmem:[%s1 + $0x78] sm:$0xf]
  %v57 = vld [vmem:[%s1 + $0x7c] sm:$0xf]
  %v58 = vld [vmem:[%s1 + $0x80] sm:$0xf]
  %v59 = vld [vmem:[%s1 + $0x84] sm:$0xf]
  %v60 = vld [vmem:[%s1 + $0x88] sm:$0xf]
  %v61 = vld [vmem:[%s1 + $0x8c] sm:$0xf]
  %v62 = vld [vmem:[%s2] sm:$0xff]
  %v63 = vld [vmem:[%s2 + $0x8] sm:$0xff]
  %v64 = vld [vmem:[%s2 + $0x10] sm:$0xff]
  %v65 = vld [vmem:[%s2 + $0x18] sm:$0xff]
  %67 = vset.pattern.permute.xlu0 0
  %68 = vperm.xlu0 %67, %v62
  %v69 = vpop.permute.xlu0 %68
  %72 = vset.pattern.permute.xlu0 0
  %73 = vperm.xlu0 %72, %v63
  %v74 = vpop.permute.xlu0 %73
  %77 = vset.pattern.permute.xlu0 0
  %78 = vperm.xlu0 %77, %v64
  %v79 = vpop.permute.xlu0 %78
  %82 = vset.pattern.permute.xlu0 0
  %83 = vperm.xlu0 %82, %v65
  %v84 = vpop.permute.xlu0 %83
  %v94 = vunpack.c.l.b16 %v18
  %v95 = vunpack.c.h.b16 %v18
  %v96 = vunpack.c.l.b16 %v19
  %v97 = vunpack.c.l.b16 %v20
  %v98 = vunpack.c.h.b16 %v20
  %v99 = vunpack.c.l.b16 %v21
  %v100 = vunpack.c.l.b16 %v22
  %v101 = vunpack.c.h.b16 %v22
  %v102 = vunpack.c.l.b16 %v23
  %v103 = vunpack.c.l.b16 %v24
  %v104 = vunpack.c.h.b16 %v24
  %v105 = vunpack.c.l.b16 %v25
  %v106 = vpack.c.b16 %v97, %v94
  %v107 = vpack.c.b16 %v98, %v95
  %v108 = vpack.c.b16 %v99, %v96
  %v109 = vpack.c.b16 %v103, %v100
  %v110 = vpack.c.b16 %v104, %v101
  %v111 = vpack.c.b16 %v105, %v102
  %v152 = vunpack.c.l.b16 %v26
  %v153 = vunpack.c.l.b16 %v27
  %v154 = vunpack.c.l.b16 %v28
  %v155 = vunpack.c.l.b16 %v29
  %v156 = vunpack.c.l.b16 %v30
  %v157 = vunpack.c.l.b16 %v31
  %v158 = vunpack.c.l.b16 %v32
  %v159 = vunpack.c.l.b16 %v33
  %v160 = vunpack.c.l.b16 %v34
  %v161 = vunpack.c.l.b16 %v35
  %v162 = vunpack.c.l.b16 %v36
  %v163 = vunpack.c.l.b16 %v37
  %v164 = vunpack.c.l.b16 %v38
  %v165 = vunpack.c.l.b16 %v39
  %v166 = vunpack.c.l.b16 %v40
  %v167 = vunpack.c.l.b16 %v41
  %v168 = vunpack.c.l.b16 %v42
  %v169 = vunpack.c.l.b16 %v43
  %v170 = vunpack.c.l.b16 %v44
  %v171 = vunpack.c.l.b16 %v45
  %v172 = vunpack.c.l.b16 %v46
  %v173 = vunpack.c.l.b16 %v47
  %v174 = vunpack.c.l.b16 %v48
  %v175 = vunpack.c.l.b16 %v49
  %v176 = vunpack.c.l.b16 %v50
  %v177 = vunpack.c.l.b16 %v51
  %v178 = vunpack.c.l.b16 %v52
  %v179 = vunpack.c.l.b16 %v53
  %v180 = vunpack.c.l.b16 %v54
  %v181 = vunpack.c.l.b16 %v55
  %v182 = vunpack.c.l.b16 %v56
  %v183 = vunpack.c.l.b16 %v57
  %v184 = vunpack.c.l.b16 %v58
  %v185 = vunpack.c.l.b16 %v59
  %v186 = vunpack.c.l.b16 %v60
  %v187 = vunpack.c.l.b16 %v61
  %v188 = vpack.c.b16 %v153, %v152
  %v189 = vpack.c.b16 %v155, %v154
  %v190 = vpack.c.b16 %v157, %v156
  %v191 = vpack.c.b16 %v159, %v158
  %v192 = vpack.c.b16 %v161, %v160
  %v193 = vpack.c.b16 %v163, %v162
  %v194 = vpack.c.b16 %v165, %v164
  %v195 = vpack.c.b16 %v167, %v166
  %v196 = vpack.c.b16 %v169, %v168
  %v197 = vpack.c.b16 %v171, %v170
  %v198 = vpack.c.b16 %v173, %v172
  %v199 = vpack.c.b16 %v175, %v174
  %v200 = vpack.c.b16 %v177, %v176
  %v201 = vpack.c.b16 %v179, %v178
  %v202 = vpack.c.b16 %v181, %v180
  %v203 = vpack.c.b16 %v183, %v182
  %v204 = vpack.c.b16 %v185, %v184
  %v205 = vpack.c.b16 %v187, %v186
  %vm224 = vcmask 261120
  %v226 = vsel %vm224, %v108, 0
  %v229 = vsel %vm224, %v111, 0
  %231 = vmatpush.bf16.msra.mxu0 %v195
  %232 = vmatpush.bf16.msra.mxu0 %v194
  %233 = vmatpush.bf16.msra.mxu0 %v193
  %234 = vmatpush.bf16.msra.mxu0 %v192
  %235 = vmatpush.bf16.msra.mxu0 %v191
  %236 = vmatpush.bf16.msra.mxu0 %v190
  %237 = vmatpush.bf16.msra.mxu0 %v189
  %238 = vmatpush.bf16.msra.mxu0 %v188
  %239 = vmatmul.bf16.gmra.mxu0 %v106
  %v240 = vpop.f32.mrf.mxu0
  %v241 = vadd.f32 %v69, %v240
  %v242 = vpop.f32.mrf.mxu0
  %v243 = vadd.f32 %v74, %v242
  %244 = vmatmul.bf16.gmra.mxu0 %v109
  %v245 = vpop.f32.mrf.mxu0
  %v246 = vadd.f32 %v79, %v245
  %v247 = vpop.f32.mrf.mxu0
  %v248 = vadd.f32 %v84, %v247
  %249 = vdwg.mxu0
  %250 = vmatpush.bf16.msra.mxu0 %v203
  %251 = vmatpush.bf16.msra.mxu0 %v202
  %252 = vmatpush.bf16.msra.mxu0 %v201
  %253 = vmatpush.bf16.msra.mxu0 %v200
  %254 = vmatpush.bf16.msra.mxu0 %v199
  %255 = vmatpush.bf16.msra.mxu0 %v198
  %256 = vmatpush.bf16.msra.mxu0 %v197
  %257 = vmatpush.bf16.msra.mxu0 %v196
  %258 = vmatmul.bf16.gmra.mxu0 %v107
  %v259 = vpop.f32.mrf.mxu0
  %v260 = vadd.f32 %v241, %v259
  %v261 = vpop.f32.mrf.mxu0
  %v262 = vadd.f32 %v243, %v261
  %263 = vmatmul.bf16.gmra.mxu0 %v110
  %v264 = vpop.f32.mrf.mxu0
  %v265 = vadd.f32 %v246, %v264
  %v266 = vpop.f32.mrf.mxu0
  %v267 = vadd.f32 %v248, %v266
  %268 = vdwg.mxu0
  %269 = vmatpush.bf16.msra.mxu0 0
  %270 = vmatpush.bf16.msra.mxu0 0
  %271 = vmatpush.bf16.msra.mxu0 0
  %272 = vmatpush.bf16.msra.mxu0 0
  %273 = vmatpush.bf16.msra.mxu0 0
  %274 = vmatpush.bf16.msra.mxu0 0
  %275 = vmatpush.bf16.msra.mxu0 %v205
  %276 = vmatpush.bf16.msra.mxu0 %v204
  %277 = vmatmul.bf16.gmra.mxu0 %v226
  %v278 = vpop.f32.mrf.mxu0
  %v279 = vadd.f32 %v260, %v278
  %v280 = vpop.f32.mrf.mxu0
  %v281 = vadd.f32 %v262, %v280
  %282 = vmatmul.bf16.gmra.mxu0 %v229
  %v283 = vpop.f32.mrf.mxu0
  %v284 = vadd.f32 %v265, %v283
  %v285 = vpop.f32.mrf.mxu0
  %v286 = vadd.f32 %v267, %v285
  %287 = vdwg.mxu0
  %v288 = vld [vmem:[%s3] sm:$0xff]
  %v289 = vld [vmem:[%s3 + $0x8] sm:$0xff]
  %v290 = vld [vmem:[%s3 + $0x10] sm:$0xff]
  %v291 = vld [vmem:[%s3 + $0x18] sm:$0xff]
  %v292 = vadd.f32 %v279, %v288
  %v293 = vadd.f32 %v281, %v289
  %v294 = vadd.f32 %v284, %v290
  %v295 = vadd.f32 %v286, %v291
  %v296 = vmax.f32 %v292, 0.0
  %v297 = vmax.f32 %v293, 0.0
  %v298 = vmax.f32 %v294, 0.0
  %v299 = vmax.f32 %v295, 0.0
  %300 = vst [vmem:[%s4] sm:$0xff] %v296
  %301 = vst [vmem:[%s4 + $0x8] sm:$0xff] %v297
  %302 = vst [vmem:[%s4 + $0x10] sm:$0xff] %v298
  %303 = vst [vmem:[%s4 + $0x18] sm:$0xff] %v299
  // Predicated region
  $region18: #{_lambda_.30} parent=0 // pred_check
    _
  $region19: #{_lambda_.30} parent=0 // pred_check_branch
    %305 = sbr.rel (0) target = $region21
  $region20: #{_lambda_.30} parent=0 // pred_region
    _
  $region21: #{_lambda_.30} parent=0 // pred_fallthru
    _
  // Predicated region
  $region22: #{_lambda_.30} parent=0 // pred_check
    _
  $region23: #{_lambda_.30} parent=0 // pred_check_branch
    %307 = sbr.rel (0) target = $region25
  $region24: #{_lambda_.30} parent=0 // pred_region
    _
  $region25: #{_lambda_.30} parent=0 // pred_fallthru
    _

// kernel: _lambda_.31
$region0: #{_lambda_.31}
  #allocation0 [shape = 'u32[]', space=smem, size = 0x4, offset = 0x4, fixed_abs, tag = 'smem constant byte address 0x4 - core index']
  #allocation1 [shape = 'u32[72,128]{1,0:T(1,128)}', space=vmem, size = 0x9000, scoped, tag = 'internal scratch']
  %s0 = inlined_call_operand.vmem [shape: bf16[32,288], index: 0, kind: input, shape index: {}]
  %s1 = inlined_call_operand.vmem [shape: bf16[288,128], index: 1, kind: input, shape index: {}]
  %s2 = inlined_call_operand.vmem [shape: f32[32,1], index: 2, kind: input, shape index: {}]
  %s3 = inlined_call_operand.vmem [shape: f32[32,128], index: 3, kind: output, shape index: {}]
  %s4 = sld [smem:[#allocation0]]
  $region22: #{_lambda_.31} parent=0
    _
  %s6 = ssub.s32 1, %s4
  %s7 = scalar_select 0, %s6, %s4
  // Predicated region
  $region2: #{_lambda_.31} parent=0 // pred_check
    _
  $region3: #{_lambda_.31} parent=0 // pred_check_branch
    %9 = sbr.rel (0) target = $region5
  $region4: #{_lambda_.31} parent=0 // pred_region
    _
  $region5: #{_lambda_.31} parent=0 // pred_fallthru
    _
  // Predicated region
  $region6: #{_lambda_.31} parent=0 // pred_check
    _
  $region7: #{_lambda_.31} parent=0 // pred_check_branch
    %11 = sbr.rel (0) target = $region9
  $region8: #{_lambda_.31} parent=0 // pred_region
    _
  $region9: #{_lambda_.31} parent=0 // pred_fallthru
    _
  // Predicated region
  $region10: #{_lambda_.31} parent=0 // pred_check
    _
  $region11: #{_lambda_.31} parent=0 // pred_check_branch
    %13 = sbr.rel (0) target = $region13
  $region12: #{_lambda_.31} parent=0 // pred_region
    _
  $region13: #{_lambda_.31} parent=0 // pred_fallthru
    _
  %v15 = vld [vmem:[%s0] sm:$0xff]
  %v16 = vld [vmem:[%s0 + $0x8] sm:$0xf]
  %v17 = vld [vmem:[%s0 + $0xc] sm:$0xff]
  %v18 = vld [vmem:[%s0 + $0x14] sm:$0xf]
  %v19 = vld [vmem:[%s0 + $0x18] sm:$0xff]
  %v20 = vld [vmem:[%s0 + $0x20] sm:$0xf]
  %v21 = vld [vmem:[%s0 + $0x24] sm:$0xff]
  %v22 = vld [vmem:[%s0 + $0x2c] sm:$0xf]
  %v23 = vld [vmem:[%s1] sm:$0xf]
  %v24 = vld [vmem:[%s1 + $0x4] sm:$0xf]
  %v25 = vld [vmem:[%s1 + $0x8] sm:$0xf]
  %v26 = vld [vmem:[%s1 + $0xc] sm:$0xf]
  %v27 = vld [vmem:[%s1 + $0x10] sm:$0xf]
  %v28 = vld [vmem:[%s1 + $0x14] sm:$0xf]
  %v29 = vld [vmem:[%s1 + $0x18] sm:$0xf]
  %v30 = vld [vmem:[%s1 + $0x1c] sm:$0xf]
  %v31 = vld [vmem:[%s1 + $0x20] sm:$0xf]
  %v32 = vld [vmem:[%s1 + $0x24] sm:$0xf]
  %v33 = vld [vmem:[%s1 + $0x28] sm:$0xf]
  %v34 = vld [vmem:[%s1 + $0x2c] sm:$0xf]
  %v35 = vld [vmem:[%s1 + $0x30] sm:$0xf]
  %v36 = vld [vmem:[%s1 + $0x34] sm:$0xf]
  %v37 = vld [vmem:[%s1 + $0x38] sm:$0xf]
  %v38 = vld [vmem:[%s1 + $0x3c] sm:$0xf]
  %v39 = vld [vmem:[%s1 + $0x40] sm:$0xf]
  %v40 = vld [vmem:[%s1 + $0x44] sm:$0xf]
  %v41 = vld [vmem:[%s1 + $0x48] sm:$0xf]
  %v42 = vld [vmem:[%s1 + $0x4c] sm:$0xf]
  %v43 = vld [vmem:[%s1 + $0x50] sm:$0xf]
  %v44 = vld [vmem:[%s1 + $0x54] sm:$0xf]
  %v45 = vld [vmem:[%s1 + $0x58] sm:$0xf]
  %v46 = vld [vmem:[%s1 + $0x5c] sm:$0xf]
  %v47 = vld [vmem:[%s1 + $0x60] sm:$0xf]
  %v48 = vld [vmem:[%s1 + $0x64] sm:$0xf]
  %v49 = vld [vmem:[%s1 + $0x68] sm:$0xf]
  %v50 = vld [vmem:[%s1 + $0x6c] sm:$0xf]
  %v51 = vld [vmem:[%s1 + $0x70] sm:$0xf]
  %v52 = vld [vmem:[%s1 + $0x74] sm:$0xf]
  %v53 = vld [vmem:[%s1 + $0x78] sm:$0xf]
  %v54 = vld [vmem:[%s1 + $0x7c] sm:$0xf]
  %v55 = vld [vmem:[%s1 + $0x80] sm:$0xf]
  %v56 = vld [vmem:[%s1 + $0x84] sm:$0xf]
  %v57 = vld [vmem:[%s1 + $0x88] sm:$0xf]
  %v58 = vld [vmem:[%s1 + $0x8c] sm:$0xf]
  %v59 = vld [vmem:[%s2] sm:$0xff]
  %v60 = vld [vmem:[%s2 + $0x8] sm:$0xff]
  %v61 = vld [vmem:[%s2 + $0x10] sm:$0xff]
  %v62 = vld [vmem:[%s2 + $0x18] sm:$0xff]
  %64 = vset.pattern.permute.xlu0 0
  %65 = vperm.xlu0 %64, %v59
  %v66 = vpop.permute.xlu0 %65
  %69 = vset.pattern.permute.xlu0 0
  %70 = vperm.xlu0 %69, %v60
  %v71 = vpop.permute.xlu0 %70
  %74 = vset.pattern.permute.xlu0 0
  %75 = vperm.xlu0 %74, %v61
  %v76 = vpop.permute.xlu0 %75
  %79 = vset.pattern.permute.xlu0 0
  %80 = vperm.xlu0 %79, %v62
  %v81 = vpop.permute.xlu0 %80
  %v91 = vunpack.c.l.b16 %v15
  %v92 = vunpack.c.h.b16 %v15
  %v93 = vunpack.c.l.b16 %v16
  %v94 = vunpack.c.l.b16 %v17
  %v95 = vunpack.c.h.b16 %v17
  %v96 = vunpack.c.l.b16 %v18
  %v97 = vunpack.c.l.b16 %v19
  %v98 = vunpack.c.h.b16 %v19
  %v99 = vunpack.c.l.b16 %v20
  %v100 = vunpack.c.l.b16 %v21
  %v101 = vunpack.c.h.b16 %v21
  %v102 = vunpack.c.l.b16 %v22
  %v103 = vpack.c.b16 %v94, %v91
  %v104 = vpack.c.b16 %v95, %v92
  %v105 = vpack.c.b16 %v96, %v93
  %v106 = vpack.c.b16 %v100, %v97
  %v107 = vpack.c.b16 %v101, %v98
  %v108 = vpack.c.b16 %v102, %v99
  %v149 = vunpack.c.l.b16 %v23
  %v150 = vunpack.c.l.b16 %v24
  %v151 = vunpack.c.l.b16 %v25
  %v152 = vunpack.c.l.b16 %v26
  %v153 = vunpack.c.l.b16 %v27
  %v154 = vunpack.c.l.b16 %v28
  %v155 = vunpack.c.l.b16 %v29
  %v156 = vunpack.c.l.b16 %v30
  %v157 = vunpack.c.l.b16 %v31
  %v158 = vunpack.c.l.b16 %v32
  %v159 = vunpack.c.l.b16 %v33
  %v160 = vunpack.c.l.b16 %v34
  %v161 = vunpack.c.l.b16 %v35
  %v162 = vunpack.c.l.b16 %v36
  %v163 = vunpack.c.l.b16 %v37
  %v164 = vunpack.c.l.b16 %v38
  %v165 = vunpack.c.l.b16 %v39
  %v166 = vunpack.c.l.b16 %v40
  %v167 = vunpack.c.l.b16 %v41
  %v168 = vunpack.c.l.b16 %v42
  %v169 = vunpack.c.l.b16 %v43
  %v170 = vunpack.c.l.b16 %v44
  %v171 = vunpack.c.l.b16 %v45
  %v172 = vunpack.c.l.b16 %v46
  %v173 = vunpack.c.l.b16 %v47
  %v174 = vunpack.c.l.b16 %v48
  %v175 = vunpack.c.l.b16 %v49
  %v176 = vunpack.c.l.b16 %v50
  %v177 = vunpack.c.l.b16 %v51
  %v178 = vunpack.c.l.b16 %v52
  %v179 = vunpack.c.l.b16 %v53
  %v180 = vunpack.c.l.b16 %v54
  %v181 = vunpack.c.l.b16 %v55
  %v182 = vunpack.c.l.b16 %v56
  %v183 = vunpack.c.l.b16 %v57
  %v184 = vunpack.c.l.b16 %v58
  %v185 = vpack.c.b16 %v150, %v149
  %v186 = vpack.c.b16 %v152, %v151
  %v187 = vpack.c.b16 %v154, %v153
  %v188 = vpack.c.b16 %v156, %v155
  %v189 = vpack.c.b16 %v158, %v157
  %v190 = vpack.c.b16 %v160, %v159
  %v191 = vpack.c.b16 %v162, %v161
  %v192 = vpack.c.b16 %v164, %v163
  %v193 = vpack.c.b16 %v166, %v165
  %v194 = vpack.c.b16 %v168, %v167
  %v195 = vpack.c.b16 %v170, %v169
  %v196 = vpack.c.b16 %v172, %v171
  %v197 = vpack.c.b16 %v174, %v173
  %v198 = vpack.c.b16 %v176, %v175
  %v199 = vpack.c.b16 %v178, %v177
  %v200 = vpack.c.b16 %v180, %v179
  %v201 = vpack.c.b16 %v182, %v181
  %v202 = vpack.c.b16 %v184, %v183
  %vm221 = vcmask 261120
  %v223 = vsel %vm221, %v105, 0
  %v226 = vsel %vm221, %v108, 0
  %228 = vmatpush.bf16.msra.mxu0 %v192
  %229 = vmatpush.bf16.msra.mxu0 %v191
  %230 = vmatpush.bf16.msra.mxu0 %v190
  %231 = vmatpush.bf16.msra.mxu0 %v189
  %232 = vmatpush.bf16.msra.mxu0 %v188
  %233 = vmatpush.bf16.msra.mxu0 %v187
  %234 = vmatpush.bf16.msra.mxu0 %v186
  %235 = vmatpush.bf16.msra.mxu0 %v185
  %236 = vmatmul.bf16.gmra.mxu0 %v103
  %v237 = vpop.f32.mrf.mxu0
  %v238 = vadd.f32 %v66, %v237
  %v239 = vpop.f32.mrf.mxu0
  %v240 = vadd.f32 %v71, %v239
  %241 = vmatmul.bf16.gmra.mxu0 %v106
  %v242 = vpop.f32.mrf.mxu0
  %v243 = vadd.f32 %v76, %v242
  %v244 = vpop.f32.mrf.mxu0
  %v245 = vadd.f32 %v81, %v244
  %246 = vdwg.mxu0
  %247 = vmatpush.bf16.msra.mxu0 %v200
  %248 = vmatpush.bf16.msra.mxu0 %v199
  %249 = vmatpush.bf16.msra.mxu0 %v198
  %250 = vmatpush.bf16.msra.mxu0 %v197
  %251 = vmatpush.bf16.msra.mxu0 %v196
  %252 = vmatpush.bf16.msra.mxu0 %v195
  %253 = vmatpush.bf16.msra.mxu0 %v194
  %254 = vmatpush.bf16.msra.mxu0 %v193
  %255 = vmatmul.bf16.gmra.mxu0 %v104
  %v256 = vpop.f32.mrf.mxu0
  %v257 = vadd.f32 %v238, %v256
  %v258 = vpop.f32.mrf.mxu0
  %v259 = vadd.f32 %v240, %v258
  %260 = vmatmul.bf16.gmra.mxu0 %v107
  %v261 = vpop.f32.mrf.mxu0
  %v262 = vadd.f32 %v243, %v261
  %v263 = vpop.f32.mrf.mxu0
  %v264 = vadd.f32 %v245, %v263
  %265 = vdwg.mxu0
  %266 = vmatpush.bf16.msra.mxu0 0
  %267 = vmatpush.bf16.msra.mxu0 0
  %268 = vmatpush.bf16.msra.mxu0 0
  %269 = vmatpush.bf16.msra.mxu0 0
  %270 = vmatpush.bf16.msra.mxu0 0
  %271 = vmatpush.bf16.msra.mxu0 0
  %272 = vmatpush.bf16.msra.mxu0 %v202
  %273 = vmatpush.bf16.msra.mxu0 %v201
  %274 = vmatmul.bf16.gmra.mxu0 %v223
  %v275 = vpop.f32.mrf.mxu0
  %v276 = vadd.f32 %v257, %v275
  %v277 = vpop.f32.mrf.mxu0
  %v278 = vadd.f32 %v259, %v277
  %279 = vmatmul.bf16.gmra.mxu0 %v226
  %v280 = vpop.f32.mrf.mxu0
  %v281 = vadd.f32 %v262, %v280
  %v282 = vpop.f32.mrf.mxu0
  %v283 = vadd.f32 %v264, %v282
  %284 = vdwg.mxu0
  %v285 = vmax.f32 %v276, 0.0
  %v286 = vmax.f32 %v278, 0.0
  %v287 = vmax.f32 %v281, 0.0
  %v288 = vmax.f32 %v283, 0.0
  %289 = vst [vmem:[%s3] sm:$0xff] %v285
  %290 = vst [vmem:[%s3 + $0x8] sm:$0xff] %v286
  %291 = vst [vmem:[%s3 + $0x10] sm:$0xff] %v287
  %292 = vst [vmem:[%s3 + $0x18] sm:$0xff] %v288
  // Predicated region
  $region14: #{_lambda_.31} parent=0 // pred_check
    _
  $region15: #{_lambda_.31} parent=0 // pred_check_branch
    %294 = sbr.rel (0) target = $region17
  $region16: #{_lambda_.31} parent=0 // pred_region
    _
  $region17: #{_lambda_.31} parent=0 // pred_fallthru
    _
  // Predicated region
  $region18: #{_lambda_.31} parent=0 // pred_check
    _
  $region19: #{_lambda_.31} parent=0 // pred_check_branch
    %296 = sbr.rel (0) target = $region21
  $region20: #{_lambda_.31} parent=0 // pred_region
    _
  $region21: #{_lambda_.31} parent=0 // pred_fallthru
    _

// kernel: _lambda_.33
$region0: #{_lambda_.33}
  #allocation0 [shape = 'u32[]', space=smem, size = 0x4, offset = 0x4, fixed_abs, tag = 'smem constant byte address 0x4 - core index']
  #allocation1 [shape = 'u32[72,128]{1,0:T(1,128)}', space=vmem, size = 0x9000, scoped, tag = 'internal scratch']
  %s0 = inlined_call_operand.vmem [shape: bf16[128,288], index: 0, kind: input, shape index: {}]
  %s1 = inlined_call_operand.vmem [shape: bf16[288,128], index: 1, kind: input, shape index: {}]
  %s2 = inlined_call_operand.vmem [shape: f32[128,1], index: 2, kind: input, shape index: {}]
  %s3 = inlined_call_operand.vmem [shape: f32[128,128], index: 3, kind: output, shape index: {}]
  %s4 = sld [smem:[#allocation0]]
  $region22: #{_lambda_.33} parent=0
    _
  %s6 = ssub.s32 1, %s4
  %s7 = scalar_select 0, %s6, %s4
  // Predicated region
  $region2: #{_lambda_.33} parent=0 // pred_check
    _
  $region3: #{_lambda_.33} parent=0 // pred_check_branch
    %9 = sbr.rel (0) target = $region5
  $region4: #{_lambda_.33} parent=0 // pred_region
    _
  $region5: #{_lambda_.33} parent=0 // pred_fallthru
    _
  // Predicated region
  $region6: #{_lambda_.33} parent=0 // pred_check
    _
  $region7: #{_lambda_.33} parent=0 // pred_check_branch
    %11 = sbr.rel (0) target = $region9
  $region8: #{_lambda_.33} parent=0 // pred_region
    _
  $region9: #{_lambda_.33} parent=0 // pred_fallthru
    _
  // Predicated region
  $region10: #{_lambda_.33} parent=0 // pred_check
    _
  $region11: #{_lambda_.33} parent=0 // pred_check_branch
    %13 = sbr.rel (0) target = $region13
  $region12: #{_lambda_.33} parent=0 // pred_region
    _
  $region13: #{_lambda_.33} parent=0 // pred_fallthru
    _
  %v15 = vld [vmem:[%s0] sm:$0xff]
  %v16 = vld [vmem:[%s0 + $0x8] sm:$0xf]
  %v17 = vld [vmem:[%s0 + $0xc] sm:$0xff]
  %v18 = vld [vmem:[%s0 + $0x14] sm:$0xf]
  %v19 = vld [vmem:[%s0 + $0x18] sm:$0xff]
  %v20 = vld [vmem:[%s0 + $0x20] sm:$0xf]
  %v21 = vld [vmem:[%s0 + $0x24] sm:$0xff]
  %v22 = vld [vmem:[%s0 + $0x2c] sm:$0xf]
  %v23 = vld [vmem:[%s0 + $0x30] sm:$0xff]
  %v24 = vld [vmem:[%s0 + $0x38] sm:$0xf]
  %v25 = vld [vmem:[%s0 + $0x3c] sm:$0xff]
  %v26 = vld [vmem:[%s0 + $0x44] sm:$0xf]
  %v27 = vld [vmem:[%s0 + $0x48] sm:$0xff]
  %v28 = vld [vmem:[%s0 + $0x50] sm:$0xf]
  %v29 = vld [vmem:[%s0 + $0x54] sm:$0xff]
  %v30 = vld [vmem:[%s0 + $0x5c] sm:$0xf]
  %v31 = vld [vmem:[%s0 + $0x60] sm:$0xff]
  %v32 = vld [vmem:[%s0 + $0x68] sm:$0xf]
  %v33 = vld [vmem:[%s0 + $0x6c] sm:$0xff]
  %v34 = vld [vmem:[%s0 + $0x74] sm:$0xf]
  %v35 = vld [vmem:[%s0 + $0x78] sm:$0xff]
  %v36 = vld [vmem:[%s0 + $0x80] sm:$0xf]
  %v37 = vld [vmem:[%s0 + $0x84] sm:$0xff]
  %v38 = vld [vmem:[%s0 + $0x8c] sm:$0xf]
  %v39 = vld [vmem:[%s0 + $0x90] sm:$0xff]
  %v40 = vld [vmem:[%s0 + $0x98] sm:$0xf]
  %v41 = vld [vmem:[%s0 + $0x9c] sm:$0xff]
  %v42 = vld [vmem:[%s0 + $0xa4] sm:$0xf]
  %v43 = vld [vmem:[%s0 + $0xa8] sm:$0xff]
  %v44 = vld [vmem:[%s0 + $0xb0] sm:$0xf]
  %v45 = vld [vmem:[%s0 + $0xb4] sm:$0xff]
  %v46 = vld [vmem:[%s0 + $0xbc] sm:$0xf]
  %v47 = vld [vmem:[%s1] sm:$0xf]
  %v48 = vld [vmem:[%s1 + $0x4] sm:$0xf]
  %v49 = vld [vmem:[%s1 + $0x8] sm:$0xf]
  %v50 = vld [vmem:[%s1 + $0xc] sm:$0xf]
  %v51 = vld [vmem:[%s1 + $0x10] sm:$0xf]
  %v52 = vld [vmem:[%s1 + $0x14] sm:$0xf]
  %v53 = vld [vmem:[%s1 + $0x18] sm:$0xf]
  %v54 = vld [vmem:[%s1 + $0x1c] sm:$0xf]
  %v55 = vld [vmem:[%s1 + $0x20] sm:$0xf]
  %v56 = vld [vmem:[%s1 + $0x24] sm:$0xf]
  %v57 = vld [vmem:[%s1 + $0x28] sm:$0xf]
  %v58 = vld [vmem:[%s1 + $0x2c] sm:$0xf]
  %v59 = vld [vmem:[%s1 + $0x30] sm:$0xf]
  %v60 = vld [vmem:[%s1 + $0x34] sm:$0xf]
  %v61 = vld [vmem:[%s1 + $0x38] sm:$0xf]
  %v62 = vld [vmem:[%s1 + $0x3c] sm:$0xf]
  %v63 = vld [vmem:[%s1 + $0x40] sm:$0xf]
  %v64 = vld [vmem:[%s1 + $0x44] sm:$0xf]
  %v65 = vld [vmem:[%s1 + $0x48] sm:$0xf]
  %v66 = vld [vmem:[%s1 + $0x4c] sm:$0xf]
  %v67 = vld [vmem:[%s1 + $0x50] sm:$0xf]
  %v68 = vld [vmem:[%s1 + $0x54] sm:$0xf]
  %v69 = vld [vmem:[%s1 + $0x58] sm:$0xf]
  %v70 = vld [vmem:[%s1 + $0x5c] sm:$0xf]
  %v71 = vld [vmem:[%s1 + $0x60] sm:$0xf]
  %v72 = vld [vmem:[%s1 + $0x64] sm:$0xf]
  %v73 = vld [vmem:[%s1 + $0x68] sm:$0xf]
  %v74 = vld [vmem:[%s1 + $0x6c] sm:$0xf]
  %v75 = vld [vmem:[%s1 + $0x70] sm:$0xf]
  %v76 = vld [vmem:[%s1 + $0x74] sm:$0xf]
  %v77 = vld [vmem:[%s1 + $0x78] sm:$0xf]
  %v78 = vld [vmem:[%s1 + $0x7c] sm:$0xf]
  %v79 = vld [vmem:[%s1 + $0x80] sm:$0xf]
  %v80 = vld [vmem:[%s1 + $0x84] sm:$0xf]
  %v81 = vld [vmem:[%s1 + $0x88] sm:$0xf]
  %v82 = vld [vmem:[%s1 + $0x8c] sm:$0xf]
  %v83 = vld [vmem:[%s2] sm:$0xff]
  %v84 = vld [vmem:[%s2 + $0x8] sm:$0xff]
  %v85 = vld [vmem:[%s2 + $0x10] sm:$0xff]
  %v86 = vld [vmem:[%s2 + $0x18] sm:$0xff]
  %v87 = vld [vmem:[%s2 + $0x20] sm:$0xff]
  %v88 = vld [vmem:[%s2 + $0x28] sm:$0xff]
  %v89 = vld [vmem:[%s2 + $0x30] sm:$0xff]
  %v90 = vld [vmem:[%s2 + $0x38] sm:$0xff]
  %v91 = vld [vmem:[%s2 + $0x40] sm:$0xff]
  %v92 = vld [vmem:[%s2 + $0x48] sm:$0xff]
  %v93 = vld [vmem:[%s2 + $0x50] sm:$0xff]
  %v94 = vld [vmem:[%s2 + $0x58] sm:$0xff]
  %v95 = vld [vmem:[%s2 + $0x60] sm:$0xff]
  %v96 = vld [vmem:[%s2 + $0x68] sm:$0xff]
  %v97 = vld [vmem:[%s2 + $0x70] sm:$0xff]
  %v98 = vld [vmem:[%s2 + $0x78] sm:$0xff]
  %100 = vset.pattern.permute.xlu0 0
  %101 = vperm.xlu0 %100, %v83
  %v102 = vpop.permute.xlu0 %101
  %105 = vset.pattern.permute.xlu0 0
  %106 = vperm.xlu0 %105, %v84
  %v107 = vpop.permute.xlu0 %106
  %110 = vset.pattern.permute.xlu0 0
  %111 = vperm.xlu0 %110, %v85
  %v112 = vpop.permute.xlu0 %111
  %115 = vset.pattern.permute.xlu0 0
  %116 = vperm.xlu0 %115, %v86
  %v117 = vpop.permute.xlu0 %116
  %120 = vset.pattern.permute.xlu0 0
  %121 = vperm.xlu0 %120, %v87
  %v122 = vpop.permute.xlu0 %121
  %125 = vset.pattern.permute.xlu0 0
  %126 = vperm.xlu0 %125, %v88
  %v127 = vpop.permute.xlu0 %126
  %130 = vset.pattern.permute.xlu0 0
  %131 = vperm.xlu0 %130, %v89
  %v132 = vpop.permute.xlu0 %131
  %135 = vset.pattern.permute.xlu0 0
  %136 = vperm.xlu0 %135, %v90
  %v137 = vpop.permute.xlu0 %136
  %140 = vset.pattern.permute.xlu0 0
  %141 = vperm.xlu0 %140, %v91
  %v142 = vpop.permute.xlu0 %141
  %145 = vset.pattern.permute.xlu0 0
  %146 = vperm.xlu0 %145, %v92
  %v147 = vpop.permute.xlu0 %146
  %150 = vset.pattern.permute.xlu0 0
  %151 = vperm.xlu0 %150, %v93
  %v152 = vpop.permute.xlu0 %151
  %155 = vset.pattern.permute.xlu0 0
  %156 = vperm.xlu0 %155, %v94
  %v157 = vpop.permute.xlu0 %156
  %160 = vset.pattern.permute.xlu0 0
  %161 = vperm.xlu0 %160, %v95
  %v162 = vpop.permute.xlu0 %161
  %165 = vset.pattern.permute.xlu0 0
  %166 = vperm.xlu0 %165, %v96
  %v167 = vpop.permute.xlu0 %166
  %170 = vset.pattern.permute.xlu0 0
  %171 = vperm.xlu0 %170, %v97
  %v172 = vpop.permute.xlu0 %171
  %175 = vset.pattern.permute.xlu0 0
  %176 = vperm.xlu0 %175, %v98
  %v177 = vpop.permute.xlu0 %176
  %v211 = vunpack.c.l.b16 %v15
  %v212 = vunpack.c.h.b16 %v15
  %v213 = vunpack.c.l.b16 %v16
  %v214 = vunpack.c.l.b16 %v17
  %v215 = vunpack.c.h.b16 %v17
  %v216 = vunpack.c.l.b16 %v18
  %v217 = vunpack.c.l.b16 %v19
  %v218 = vunpack.c.h.b16 %v19
  %v219 = vunpack.c.l.b16 %v20
  %v220 = vunpack.c.l.b16 %v21
  %v221 = vunpack.c.h.b16 %v21
  %v222 = vunpack.c.l.b16 %v22
  %v223 = vunpack.c.l.b16 %v23
  %v224 = vunpack.c.h.b16 %v23
  %v225 = vunpack.c.l.b16 %v24
  %v226 = vunpack.c.l.b16 %v25
  %v227 = vunpack.c.h.b16 %v25
  %v228 = vunpack.c.l.b16 %v26
  %v229 = vunpack.c.l.b16 %v27
  %v230 = vunpack.c.h.b16 %v27
  %v231 = vunpack.c.l.b16 %v28
  %v232 = vunpack.c.l.b16 %v29
  %v233 = vunpack.c.h.b16 %v29
  %v234 = vunpack.c.l.b16 %v30
  %v235 = vunpack.c.l.b16 %v31
  %v236 = vunpack.c.h.b16 %v31
  %v237 = vunpack.c.l.b16 %v32
  %v238 = vunpack.c.l.b16 %v33
  %v239 = vunpack.c.h.b16 %v33
  %v240 = vunpack.c.l.b16 %v34
  %v241 = vunpack.c.l.b16 %v35
  %v242 = vunpack.c.h.b16 %v35
  %v243 = vunpack.c.l.b16 %v36
  %v244 = vunpack.c.l.b16 %v37
  %v245 = vunpack.c.h.b16 %v37
  %v246 = vunpack.c.l.b16 %v38
  %v247 = vunpack.c.l.b16 %v39
  %v248 = vunpack.c.h.b16 %v39
  %v249 = vunpack.c.l.b16 %v40
  %v250 = vunpack.c.l.b16 %v41
  %v251 = vunpack.c.h.b16 %v41
  %v252 = vunpack.c.l.b16 %v42
  %v253 = vunpack.c.l.b16 %v43
  %v254 = vunpack.c.h.b16 %v43
  %v255 = vunpack.c.l.b16 %v44
  %v256 = vunpack.c.l.b16 %v45
  %v257 = vunpack.c.h.b16 %v45
  %v258 = vunpack.c.l.b16 %v46
  %v259 = vpack.c.b16 %v214, %v211
  %v260 = vpack.c.b16 %v215, %v212
  %v261 = vpack.c.b16 %v216, %v213
  %v262 = vpack.c.b16 %v220, %v217
  %v263 = vpack.c.b16 %v221, %v218
  %v264 = vpack.c.b16 %v222, %v219
  %v265 = vpack.c.b16 %v226, %v223
  %v266 = vpack.c.b16 %v227, %v224
  %v267 = vpack.c.b16 %v228, %v225
  %v268 = vpack.c.b16 %v232, %v229
  %v269 = vpack.c.b16 %v233, %v230
  %v270 = vpack.c.b16 %v234, %v231
  %v271 = vpack.c.b16 %v238, %v235
  %v272 = vpack.c.b16 %v239, %v236
  %v273 = vpack.c.b16 %v240, %v237
  %v274 = vpack.c.b16 %v244, %v241
  %v275 = vpack.c.b16 %v245, %v242
  %v276 = vpack.c.b16 %v246, %v243
  %v277 = vpack.c.b16 %v250, %v247
  %v278 = vpack.c.b16 %v251, %v248
  %v279 = vpack.c.b16 %v252, %v249
  %v280 = vpack.c.b16 %v256, %v253
  %v281 = vpack.c.b16 %v257, %v254
  %v282 = vpack.c.b16 %v258, %v255
  %v335 = vunpack.c.l.b16 %v47
  %v336 = vunpack.c.l.b16 %v48
  %v337 = vunpack.c.l.b16 %v49
  %v338 = vunpack.c.l.b16 %v50
  %v339 = vunpack.c.l.b16 %v51
  %v340 = vunpack.c.l.b16 %v52
  %v341 = vunpack.c.l.b16 %v53
  %v342 = vunpack.c.l.b16 %v54
  %v343 = vunpack.c.l.b16 %v55
  %v344 = vunpack.c.l.b16 %v56
  %v345 = vunpack.c.l.b16 %v57
  %v346 = vunpack.c.l.b16 %v58
  %v347 = vunpack.c.l.b16 %v59
  %v348 = vunpack.c.l.b16 %v60
  %v349 = vunpack.c.l.b16 %v61
  %v350 = vunpack.c.l.b16 %v62
  %v351 = vunpack.c.l.b16 %v63
  %v352 = vunpack.c.l.b16 %v64
  %v353 = vunpack.c.l.b16 %v65
  %v354 = vunpack.c.l.b16 %v66
  %v355 = vunpack.c.l.b16 %v67
  %v356 = vunpack.c.l.b16 %v68
  %v357 = vunpack.c.l.b16 %v69
  %v358 = vunpack.c.l.b16 %v70
  %v359 = vunpack.c.l.b16 %v71
  %v360 = vunpack.c.l.b16 %v72
  %v361 = vunpack.c.l.b16 %v73
  %v362 = vunpack.c.l.b16 %v74
  %v363 = vunpack.c.l.b16 %v75
  %v364 = vunpack.c.l.b16 %v76
  %v365 = vunpack.c.l.b16 %v77
  %v366 = vunpack.c.l.b16 %v78
  %v367 = vunpack.c.l.b16 %v79
  %v368 = vunpack.c.l.b16 %v80
  %v369 = vunpack.c.l.b16 %v81
  %v370 = vunpack.c.l.b16 %v82
  %v371 = vpack.c.b16 %v336, %v335
  %v372 = vpack.c.b16 %v338, %v337
  %v373 = vpack.c.b16 %v340, %v339
  %v374 = vpack.c.b16 %v342, %v341
  %v375 = vpack.c.b16 %v344, %v343
  %v376 = vpack.c.b16 %v346, %v345
  %v377 = vpack.c.b16 %v348, %v347
  %v378 = vpack.c.b16 %v350, %v349
  %v379 = vpack.c.b16 %v352, %v351
  %v380 = vpack.c.b16 %v354, %v353
  %v381 = vpack.c.b16 %v356, %v355
  %v382 = vpack.c.b16 %v358, %v357
  %v383 = vpack.c.b16 %v360, %v359
  %v384 = vpack.c.b16 %v362, %v361
  %v385 = vpack.c.b16 %v364, %v363
  %v386 = vpack.c.b16 %v366, %v365
  %v387 = vpack.c.b16 %v368, %v367
  %v388 = vpack.c.b16 %v370, %v369
  %vm407 = vcmask 261120
  %v409 = vsel %vm407, %v261, 0
  %v412 = vsel %vm407, %v264, 0
  %v415 = vsel %vm407, %v267, 0
  %v418 = vsel %vm407, %v270, 0
  %v421 = vsel %vm407, %v273, 0
  %v424 = vsel %vm407, %v276, 0
  %v427 = vsel %vm407, %v279, 0
  %v430 = vsel %vm407, %v282, 0
  %432 = vmatpush.bf16.msra.mxu0 %v378
  %433 = vmatpush.bf16.msra.mxu0 %v377
  %434 = vmatpush.bf16.msra.mxu0 %v376
  %435 = vmatpush.bf16.msra.mxu0 %v375
  %436 = vmatpush.bf16.msra.mxu0 %v374
  %437 = vmatpush.bf16.msra.mxu0 %v373
  %438 = vmatpush.bf16.msra.mxu0 %v372
  %439 = vmatpush.bf16.msra.mxu0 %v371
  %440 = vmatmul.bf16.gmra.mxu0 %v259
  %v441 = vpop.f32.mrf.mxu0
  %v442 = vadd.f32 %v102, %v441
  %v443 = vpop.f32.mrf.mxu0
  %v444 = vadd.f32 %v107, %v443
  %445 = vmatmul.bf16.gmra.mxu0 %v262
  %v446 = vpop.f32.mrf.mxu0
  %v447 = vadd.f32 %v112, %v446
  %v448 = vpop.f32.mrf.mxu0
  %v449 = vadd.f32 %v117, %v448
  %450 = vmatmul.bf16.gmra.mxu0 %v265
  %v451 = vpop.f32.mrf.mxu0
  %v452 = vadd.f32 %v122, %v451
  %v453 = vpop.f32.mrf.mxu0
  %v454 = vadd.f32 %v127, %v453
  %455 = vmatmul.bf16.gmra.mxu0 %v268
  %v456 = vpop.f32.mrf.mxu0
  %v457 = vadd.f32 %v132, %v456
  %v458 = vpop.f32.mrf.mxu0
  %v459 = vadd.f32 %v137, %v458
  %460 = vmatmul.bf16.gmra.mxu0 %v271
  %v461 = vpop.f32.mrf.mxu0
  %v462 = vadd.f32 %v142, %v461
  %v463 = vpop.f32.mrf.mxu0
  %v464 = vadd.f32 %v147, %v463
  %465 = vmatmul.bf16.gmra.mxu0 %v274
  %v466 = vpop.f32.mrf.mxu0
  %v467 = vadd.f32 %v152, %v466
  %v468 = vpop.f32.mrf.mxu0
  %v469 = vadd.f32 %v157, %v468
  %470 = vmatmul.bf16.gmra.mxu0 %v277
  %v471 = vpop.f32.mrf.mxu0
  %v472 = vadd.f32 %v162, %v471
  %v473 = vpop.f32.mrf.mxu0
  %v474 = vadd.f32 %v167, %v473
  %475 = vmatmul.bf16.gmra.mxu0 %v280
  %v476 = vpop.f32.mrf.mxu0
  %v477 = vadd.f32 %v172, %v476
  %v478 = vpop.f32.mrf.mxu0
  %v479 = vadd.f32 %v177, %v478
  %480 = vdwg.mxu0
  %481 = vmatpush.bf16.msra.mxu0 %v386
  %482 = vmatpush.bf16.msra.mxu0 %v385
  %483 = vmatpush.bf16.msra.mxu0 %v384
  %484 = vmatpush.bf16.msra.mxu0 %v383
  %485 = vmatpush.bf16.msra.mxu0 %v382
  %486 = vmatpush.bf16.msra.mxu0 %v381
  %487 = vmatpush.bf16.msra.mxu0 %v380
  %488 = vmatpush.bf16.msra.mxu0 %v379
  %489 = vmatmul.bf16.gmra.mxu0 %v260
  %v490 = vpop.f32.mrf.mxu0
  %v491 = vadd.f32 %v442, %v490
  %v492 = vpop.f32.mrf.mxu0
  %v493 = vadd.f32 %v444, %v492
  %494 = vmatmul.bf16.gmra.mxu0 %v263
  %v495 = vpop.f32.mrf.mxu0
  %v496 = vadd.f32 %v447, %v495
  %v497 = vpop.f32.mrf.mxu0
  %v498 = vadd.f32 %v449, %v497
  %499 = vmatmul.bf16.gmra.mxu0 %v266
  %v500 = vpop.f32.mrf.mxu0
  %v501 = vadd.f32 %v452, %v500
  %v502 = vpop.f32.mrf.mxu0
  %v503 = vadd.f32 %v454, %v502
  %504 = vmatmul.bf16.gmra.mxu0 %v269
  %v505 = vpop.f32.mrf.mxu0
  %v506 = vadd.f32 %v457, %v505
  %v507 = vpop.f32.mrf.mxu0
  %v508 = vadd.f32 %v459, %v507
  %509 = vmatmul.bf16.gmra.mxu0 %v272
  %v510 = vpop.f32.mrf.mxu0
  %v511 = vadd.f32 %v462, %v510
  %v512 = vpop.f32.mrf.mxu0
  %v513 = vadd.f32 %v464, %v512
  %514 = vmatmul.bf16.gmra.mxu0 %v275
  %v515 = vpop.f32.mrf.mxu0
  %v516 = vadd.f32 %v467, %v515
  %v517 = vpop.f32.mrf.mxu0
  %v518 = vadd.f32 %v469, %v517
  %519 = vmatmul.bf16.gmra.mxu0 %v278
  %v520 = vpop.f32.mrf.mxu0
  %v521 = vadd.f32 %v472, %v520
  %v522 = vpop.f32.mrf.mxu0
  %v523 = vadd.f32 %v474, %v522
  %524 = vmatmul.bf16.gmra.mxu0 %v281
  %v525 = vpop.f32.mrf.mxu0
  %v526 = vadd.f32 %v477, %v525
  %v527 = vpop.f32.mrf.mxu0
  %v528 = vadd.f32 %v479, %v527
  %529 = vdwg.mxu0
  %530 = vmatpush.bf16.msra.mxu0 0
  %531 = vmatpush.bf16.msra.mxu0 0
  %532 = vmatpush.bf16.msra.mxu0 0
  %533 = vmatpush.bf16.msra.mxu0 0
  %534 = vmatpush.bf16.msra.mxu0 0
  %535 = vmatpush.bf16.msra.mxu0 0
  %536 = vmatpush.bf16.msra.mxu0 %v388
  %537 = vmatpush.bf16.msra.mxu0 %v387
  %538 = vmatmul.bf16.gmra.mxu0 %v409
  %v539 = vpop.f32.mrf.mxu0
  %v540 = vadd.f32 %v491, %v539
  %v541 = vpop.f32.mrf.mxu0
  %v542 = vadd.f32 %v493, %v541
  %543 = vmatmul.bf16.gmra.mxu0 %v412
  %v544 = vpop.f32.mrf.mxu0
  %v545 = vadd.f32 %v496, %v544
  %v546 = vpop.f32.mrf.mxu0
  %v547 = vadd.f32 %v498, %v546
  %548 = vmatmul.bf16.gmra.mxu0 %v415
  %v549 = vpop.f32.mrf.mxu0
  %v550 = vadd.f32 %v501, %v549
  %v551 = vpop.f32.mrf.mxu0
  %v552 = vadd.f32 %v503, %v551
  %553 = vmatmul.bf16.gmra.mxu0 %v418
  %v554 = vpop.f32.mrf.mxu0
  %v555 = vadd.f32 %v506, %v554
  %v556 = vpop.f32.mrf.mxu0
  %v557 = vadd.f32 %v508, %v556
  %558 = vmatmul.bf16.gmra.mxu0 %v421
  %v559 = vpop.f32.mrf.mxu0
  %v560 = vadd.f32 %v511, %v559
  %v561 = vpop.f32.mrf.mxu0
  %v562 = vadd.f32 %v513, %v561
  %563 = vmatmul.bf16.gmra.mxu0 %v424
  %v564 = vpop.f32.mrf.mxu0
  %v565 = vadd.f32 %v516, %v564
  %v566 = vpop.f32.mrf.mxu0
  %v567 = vadd.f32 %v518, %v566
  %568 = vmatmul.bf16.gmra.mxu0 %v427
  %v569 = vpop.f32.mrf.mxu0
  %v570 = vadd.f32 %v521, %v569
  %v571 = vpop.f32.mrf.mxu0
  %v572 = vadd.f32 %v523, %v571
  %573 = vmatmul.bf16.gmra.mxu0 %v430
  %v574 = vpop.f32.mrf.mxu0
  %v575 = vadd.f32 %v526, %v574
  %v576 = vpop.f32.mrf.mxu0
  %v577 = vadd.f32 %v528, %v576
  %578 = vdwg.mxu0
  %v579 = vlaneseq
  %v580 = vshrl.u32 %v579, 7
  %v581 = vadd.s32 %v580, 8
  %v582 = vadd.s32 %v580, 16
  %v583 = vadd.s32 %v580, 24
  %v584 = vadd.s32 %v580, 32
  %v585 = vadd.s32 %v580, 40
  %v586 = vadd.s32 %v580, 48
  %v587 = vadd.s32 %v580, 56
  %v588 = vadd.s32 %v580, 64
  %v589 = vadd.s32 %v580, 72
  %v590 = vadd.s32 %v580, 80
  %v591 = vadd.s32 %v580, 88
  %v592 = vadd.s32 %v580, 96
  %v593 = vadd.s32 %v580, 104
  %v594 = vadd.s32 %v580, 112
  %v595 = vadd.s32 %v580, 120
  %vm596 = vcmp.lt.s32.totalorder %v580, 64
  %vm597 = vcmp.lt.s32.totalorder %v581, 64
  %vm598 = vcmp.lt.s32.totalorder %v582, 64
  %vm599 = vcmp.lt.s32.totalorder %v583, 64
  %vm600 = vcmp.lt.s32.totalorder %v584, 64
  %vm601 = vcmp.lt.s32.totalorder %v585, 64
  %vm602 = vcmp.lt.s32.totalorder %v586, 64
  %vm603 = vcmp.lt.s32.totalorder %v587, 64
  %vm604 = vcmp.lt.s32.totalorder %v588, 64
  %vm605 = vcmp.lt.s32.totalorder %v589, 64
  %vm606 = vcmp.lt.s32.totalorder %v590, 64
  %vm607 = vcmp.lt.s32.totalorder %v591, 64
  %vm608 = vcmp.lt.s32.totalorder %v592, 64
  %vm609 = vcmp.lt.s32.totalorder %v593, 64
  %vm610 = vcmp.lt.s32.totalorder %v594, 64
  %vm611 = vcmp.lt.s32.totalorder %v595, 64
  %v612 = vmax.f32 %v540, 0.0
  %v613 = vmax.f32 %v542, 0.0
  %v614 = vmax.f32 %v545, 0.0
  %v615 = vmax.f32 %v547, 0.0
  %v616 = vmax.f32 %v550, 0.0
  %v617 = vmax.f32 %v552, 0.0
  %v618 = vmax.f32 %v555, 0.0
  %v619 = vmax.f32 %v557, 0.0
  %v620 = vmax.f32 %v560, 0.0
  %v621 = vmax.f32 %v562, 0.0
  %v622 = vmax.f32 %v565, 0.0
  %v623 = vmax.f32 %v567, 0.0
  %v624 = vmax.f32 %v570, 0.0
  %v625 = vmax.f32 %v572, 0.0
  %v626 = vmax.f32 %v575, 0.0
  %v627 = vmax.f32 %v577, 0.0
  %v628 = vsel %vm596, %v612, %v540
  %v629 = vsel %vm597, %v613, %v542
  %v630 = vsel %vm598, %v614, %v545
  %v631 = vsel %vm599, %v615, %v547
  %v632 = vsel %vm600, %v616, %v550
  %v633 = vsel %vm601, %v617, %v552
  %v634 = vsel %vm602, %v618, %v555
  %v635 = vsel %vm603, %v619, %v557
  %v636 = vsel %vm604, %v620, %v560
  %v637 = vsel %vm605, %v621, %v562
  %v638 = vsel %vm606, %v622, %v565
  %v639 = vsel %vm607, %v623, %v567
  %v640 = vsel %vm608, %v624, %v570
  %v641 = vsel %vm609, %v625, %v572
  %v642 = vsel %vm610, %v626, %v575
  %v643 = vsel %vm611, %v627, %v577
  %644 = vst [vmem:[%s3] sm:$0xff] %v628
  %645 = vst [vmem:[%s3 + $0x8] sm:$0xff] %v629
  %646 = vst [vmem:[%s3 + $0x10] sm:$0xff] %v630
  %647 = vst [vmem:[%s3 + $0x18] sm:$0xff] %v631
  %648 = vst [vmem:[%s3 + $0x20] sm:$0xff] %v632
  %649 = vst [vmem:[%s3 + $0x28] sm:$0xff] %v633
  %650 = vst [vmem:[%s3 + $0x30] sm:$0xff] %v634
  %651 = vst [vmem:[%s3 + $0x38] sm:$0xff] %v635
  %652 = vst [vmem:[%s3 + $0x40] sm:$0xff] %v636
  %653 = vst [vmem:[%s3 + $0x48] sm:$0xff] %v637
  %654 = vst [vmem:[%s3 + $0x50] sm:$0xff] %v638
  %655 = vst [vmem:[%s3 + $0x58] sm:$0xff] %v639
  %656 = vst [vmem:[%s3 + $0x60] sm:$0xff] %v640
  %657 = vst [vmem:[%s3 + $0x68] sm:$0xff] %v641
  %658 = vst [vmem:[%s3 + $0x70] sm:$0xff] %v642
  %659 = vst [vmem:[%s3 + $0x78] sm:$0xff] %v643
  // Predicated region
  $region14: #{_lambda_.33} parent=0 // pred_check
    _
  $region15: #{_lambda_.33} parent=0 // pred_check_branch
    %661 = sbr.rel (0) target = $region17
  $region16: #{_lambda_.33} parent=0 // pred_region
    _
  $region17: #{_lambda_.33} parent=0 // pred_fallthru
    _
  // Predicated region
  $region18: #{_lambda_.33} parent=0 // pred_check
    _
  $region19: #{_lambda_.33} parent=0 // pred_check_branch
    %663 = sbr.rel (0) target = $region21
  $region20: #{_lambda_.33} parent=0 // pred_region
    _
  $region21: #{_lambda_.33} parent=0 // pred_fallthru
    _

// kernel: _lambda_.34
$region0: #{_lambda_.34}
  #allocation0 [shape = 'u32[]', space=smem, size = 0x4, offset = 0x4, fixed_abs, tag = 'smem constant byte address 0x4 - core index']
  #allocation1 [shape = 'u32[72,128]{1,0:T(1,128)}', space=vmem, size = 0x9000, scoped, tag = 'internal scratch']
  %s0 = inlined_call_operand.vmem [shape: bf16[64,576], index: 0, kind: input, shape index: {}]
  %s1 = inlined_call_operand.vmem [shape: bf16[576,128], index: 1, kind: input, shape index: {}]
  %s2 = inlined_call_operand.vmem [shape: f32[64,1], index: 2, kind: input, shape index: {}]
  %s3 = inlined_call_operand.vmem [shape: f32[64,128], index: 3, kind: input, shape index: {}]
  %s4 = inlined_call_operand.vmem [shape: f32[64,128], index: 4, kind: output, shape index: {}]
  %s5 = sld [smem:[#allocation0]]
  $region26: #{_lambda_.34} parent=0
    _
  %s7 = ssub.s32 1, %s5
  %s8 = scalar_select 0, %s7, %s5
  // Predicated region
  $region2: #{_lambda_.34} parent=0 // pred_check
    _
  $region3: #{_lambda_.34} parent=0 // pred_check_branch
    %10 = sbr.rel (0) target = $region5
  $region4: #{_lambda_.34} parent=0 // pred_region
    _
  $region5: #{_lambda_.34} parent=0 // pred_fallthru
    _
  // Predicated region
  $region6: #{_lambda_.34} parent=0 // pred_check
    _
  $region7: #{_lambda_.34} parent=0 // pred_check_branch
    %12 = sbr.rel (0) target = $region9
  $region8: #{_lambda_.34} parent=0 // pred_region
    _
  $region9: #{_lambda_.34} parent=0 // pred_fallthru
    _
  // Predicated region
  $region10: #{_lambda_.34} parent=0 // pred_check
    _
  $region11: #{_lambda_.34} parent=0 // pred_check_branch
    %14 = sbr.rel (0) target = $region13
  $region12: #{_lambda_.34} parent=0 // pred_region
    _
  $region13: #{_lambda_.34} parent=0 // pred_fallthru
    _
  // Predicated region
  $region14: #{_lambda_.34} parent=0 // pred_check
    _
  $region15: #{_lambda_.34} parent=0 // pred_check_branch
    %16 = sbr.rel (0) target = $region17
  $region16: #{_lambda_.34} parent=0 // pred_region
    _
  $region17: #{_lambda_.34} parent=0 // pred_fallthru
    _
  %v18 = vld [vmem:[%s0] sm:$0xff]
  %v19 = vld [vmem:[%s0 + $0x8] sm:$0xff]
  %v20 = vld [vmem:[%s0 + $0x10] sm:$0xf]
  %v21 = vld [vmem:[%s0 + $0x14] sm:$0xff]
  %v22 = vld [vmem:[%s0 + $0x1c] sm:$0xff]
  %v23 = vld [vmem:[%s0 + $0x24] sm:$0xf]
  %v24 = vld [vmem:[%s0 + $0x28] sm:$0xff]
  %v25 = vld [vmem:[%s0 + $0x30] sm:$0xff]
  %v26 = vld [vmem:[%s0 + $0x38] sm:$0xf]
  %v27 = vld [vmem:[%s0 + $0x3c] sm:$0xff]
  %v28 = vld [vmem:[%s0 + $0x44] sm:$0xff]
  %v29 = vld [vmem:[%s0 + $0x4c] sm:$0xf]
  %v30 = vld [vmem:[%s0 + $0x50] sm:$0xff]
  %v31 = vld [vmem:[%s0 + $0x58] sm:$0xff]
  %v32 = vld [vmem:[%s0 + $0x60] sm:$0xf]
  %v33 = vld [vmem:[%s0 + $0x64] sm:$0xff]
  %v34 = vld [vmem:[%s0 + $0x6c] sm:$0xff]
  %v35 = vld [vmem:[%s0 + $0x74] sm:$0xf]
  %v36 = vld [vmem:[%s0 + $0x78] sm:$0xff]
  %v37 = vld [vmem:[%s0 + $0x80] sm:$0xff]
  %v38 = vld [vmem:[%s0 + $0x88] sm:$0xf]
  %v39 = vld [vmem:[%s0 + $0x8c] sm:$0xff]
  %v40 = vld [vmem:[%s0 + $0x94] sm:$0xff]
  %v41 = vld [vmem:[%s0 + $0x9c] sm:$0xf]
  %v42 = vld [vmem:[%s1] sm:$0xf]
  %v43 = vld [vmem:[%s1 + $0x4] sm:$0xf]
  %v44 = vld [vmem:[%s1 + $0x8] sm:$0xf]
  %v45 = vld [vmem:[%s1 + $0xc] sm:$0xf]
  %v46 = vld [vmem:[%s1 + $0x10] sm:$0xf]
  %v47 = vld [vmem:[%s1 + $0x14] sm:$0xf]
  %v48 = vld [vmem:[%s1 + $0x18] sm:$0xf]
  %v49 = vld [vmem:[%s1 + $0x1c] sm:$0xf]
  %v50 = vld [vmem:[%s1 + $0x20] sm:$0xf]
  %v51 = vld [vmem:[%s1 + $0x24] sm:$0xf]
  %v52 = vld [vmem:[%s1 + $0x28] sm:$0xf]
  %v53 = vld [vmem:[%s1 + $0x2c] sm:$0xf]
  %v54 = vld [vmem:[%s1 + $0x30] sm:$0xf]
  %v55 = vld [vmem:[%s1 + $0x34] sm:$0xf]
  %v56 = vld [vmem:[%s1 + $0x38] sm:$0xf]
  %v57 = vld [vmem:[%s1 + $0x3c] sm:$0xf]
  %v58 = vld [vmem:[%s1 + $0x40] sm:$0xf]
  %v59 = vld [vmem:[%s1 + $0x44] sm:$0xf]
  %v60 = vld [vmem:[%s1 + $0x48] sm:$0xf]
  %v61 = vld [vmem:[%s1 + $0x4c] sm:$0xf]
  %v62 = vld [vmem:[%s1 + $0x50] sm:$0xf]
  %v63 = vld [vmem:[%s1 + $0x54] sm:$0xf]
  %v64 = vld [vmem:[%s1 + $0x58] sm:$0xf]
  %v65 = vld [vmem:[%s1 + $0x5c] sm:$0xf]
  %v66 = vld [vmem:[%s1 + $0x60] sm:$0xf]
  %v67 = vld [vmem:[%s1 + $0x64] sm:$0xf]
  %v68 = vld [vmem:[%s1 + $0x68] sm:$0xf]
  %v69 = vld [vmem:[%s1 + $0x6c] sm:$0xf]
  %v70 = vld [vmem:[%s1 + $0x70] sm:$0xf]
  %v71 = vld [vmem:[%s1 + $0x74] sm:$0xf]
  %v72 = vld [vmem:[%s1 + $0x78] sm:$0xf]
  %v73 = vld [vmem:[%s1 + $0x7c] sm:$0xf]
  %v74 = vld [vmem:[%s1 + $0x80] sm:$0xf]
  %v75 = vld [vmem:[%s1 + $0x84] sm:$0xf]
  %v76 = vld [vmem:[%s1 + $0x88] sm:$0xf]
  %v77 = vld [vmem:[%s1 + $0x8c] sm:$0xf]
  %v78 = vld [vmem:[%s1 + $0x90] sm:$0xf]
  %v79 = vld [vmem:[%s1 + $0x94] sm:$0xf]
  %v80 = vld [vmem:[%s1 + $0x98] sm:$0xf]
  %v81 = vld [vmem:[%s1 + $0x9c] sm:$0xf]
  %v82 = vld [vmem:[%s1 + $0xa0] sm:$0xf]
  %v83 = vld [vmem:[%s1 + $0xa4] sm:$0xf]
  %v84 = vld [vmem:[%s1 + $0xa8] sm:$0xf]
  %v85 = vld [vmem:[%s1 + $0xac] sm:$0xf]
  %v86 = vld [vmem:[%s1 + $0xb0] sm:$0xf]
  %v87 = vld [vmem:[%s1 + $0xb4] sm:$0xf]
  %v88 = vld [vmem:[%s1 + $0xb8] sm:$0xf]
  %v89 = vld [vmem:[%s1 + $0xbc] sm:$0xf]
  %v90 = vld [vmem:[%s1 + $0xc0] sm:$0xf]
  %v91 = vld [vmem:[%s1 + $0xc4] sm:$0xf]
  %v92 = vld [vmem:[%s1 + $0xc8] sm:$0xf]
  %v93 = vld [vmem:[%s1 + $0xcc] sm:$0xf]
  %v94 = vld [vmem:[%s1 + $0xd0] sm:$0xf]
  %v95 = vld [vmem:[%s1 + $0xd4] sm:$0xf]
  %v96 = vld [vmem:[%s1 + $0xd8] sm:$0xf]
  %v97 = vld [vmem:[%s1 + $0xdc] sm:$0xf]
  %v98 = vld [vmem:[%s1 + $0xe0] sm:$0xf]
  %v99 = vld [vmem:[%s1 + $0xe4] sm:$0xf]
  %v100 = vld [vmem:[%s1 + $0xe8] sm:$0xf]
  %v101 = vld [vmem:[%s1 + $0xec] sm:$0xf]
  %v102 = vld [vmem:[%s1 + $0xf0] sm:$0xf]
  %v103 = vld [vmem:[%s1 + $0xf4] sm:$0xf]
  %v104 = vld [vmem:[%s1 + $0xf8] sm:$0xf]
  %v105 = vld [vmem:[%s1 + $0xfc] sm:$0xf]
  %v106 = vld [vmem:[%s1 + $0x100] sm:$0xf]
  %v107 = vld [vmem:[%s1 + $0x104] sm:$0xf]
  %v108 = vld [vmem:[%s1 + $0x108] sm:$0xf]
  %v109 = vld [vmem:[%s1 + $0x10c] sm:$0xf]
  %v110 = vld [vmem:[%s1 + $0x110] sm:$0xf]
  %v111 = vld [vmem:[%s1 + $0x114] sm:$0xf]
  %v112 = vld [vmem:[%s1 + $0x118] sm:$0xf]
  %v113 = vld [vmem:[%s1 + $0x11c] sm:$0xf]
  %v114 = vld [vmem:[%s2] sm:$0xff]
  %v115 = vld [vmem:[%s2 + $0x8] sm:$0xff]
  %v116 = vld [vmem:[%s2 + $0x10] sm:$0xff]
  %v117 = vld [vmem:[%s2 + $0x18] sm:$0xff]
  %v118 = vld [vmem:[%s2 + $0x20] sm:$0xff]
  %v119 = vld [vmem:[%s2 + $0x28] sm:$0xff]
  %v120 = vld [vmem:[%s2 + $0x30] sm:$0xff]
  %v121 = vld [vmem:[%s2 + $0x38] sm:$0xff]
  %123 = vset.pattern.permute.xlu0 0
  %124 = vperm.xlu0 %123, %v114
  %v125 = vpop.permute.xlu0 %124
  %128 = vset.pattern.permute.xlu0 0
  %129 = vperm.xlu0 %128, %v115
  %v130 = vpop.permute.xlu0 %129
  %133 = vset.pattern.permute.xlu0 0
  %134 = vperm.xlu0 %133, %v116
  %v135 = vpop.permute.xlu0 %134
  %138 = vset.pattern.permute.xlu0 0
  %139 = vperm.xlu0 %138, %v117
  %v140 = vpop.permute.xlu0 %139
  %143 = vset.pattern.permute.xlu0 0
  %144 = vperm.xlu0 %143, %v118
  %v145 = vpop.permute.xlu0 %144
  %148 = vset.pattern.permute.xlu0 0
  %149 = vperm.xlu0 %148, %v119
  %v150 = vpop.permute.xlu0 %149
  %153 = vset.pattern.permute.xlu0 0
  %154 = vperm.xlu0 %153, %v120
  %v155 = vpop.permute.xlu0 %154
  %158 = vset.pattern.permute.xlu0 0
  %159 = vperm.xlu0 %158, %v121
  %v160 = vpop.permute.xlu0 %159
  %v186 = vunpack.c.l.b16 %v18
  %v187 = vunpack.c.h.b16 %v18
  %v188 = vunpack.c.l.b16 %v19
  %v189 = vunpack.c.h.b16 %v19
  %v190 = vunpack.c.l.b16 %v20
  %v191 = vunpack.c.l.b16 %v21
  %v192 = vunpack.c.h.b16 %v21
  %v193 = vunpack.c.l.b16 %v22
  %v194 = vunpack.c.h.b16 %v22
  %v195 = vunpack.c.l.b16 %v23
  %v196 = vunpack.c.l.b16 %v24
  %v197 = vunpack.c.h.b16 %v24
  %v198 = vunpack.c.l.b16 %v25
  %v199 = vunpack.c.h.b16 %v25
  %v200 = vunpack.c.l.b16 %v26
  %v201 = vunpack.c.l.b16 %v27
  %v202 = vunpack.c.h.b16 %v27
  %v203 = vunpack.c.l.b16 %v28
  %v204 = vunpack.c.h.b16 %v28
  %v205 = vunpack.c.l.b16 %v29
  %v206 = vunpack.c.l.b16 %v30
  %v207 = vunpack.c.h.b16 %v30
  %v208 = vunpack.c.l.b16 %v31
  %v209 = vunpack.c.h.b16 %v31
  %v210 = vunpack.c.l.b16 %v32
  %v211 = vunpack.c.l.b16 %v33
  %v212 = vunpack.c.h.b16 %v33
  %v213 = vunpack.c.l.b16 %v34
  %v214 = vunpack.c.h.b16 %v34
  %v215 = vunpack.c.l.b16 %v35
  %v216 = vunpack.c.l.b16 %v36
  %v217 = vunpack.c.h.b16 %v36
  %v218 = vunpack.c.l.b16 %v37
  %v219 = vunpack.c.h.b16 %v37
  %v220 = vunpack.c.l.b16 %v38
  %v221 = vunpack.c.l.b16 %v39
  %v222 = vunpack.c.h.b16 %v39
  %v223 = vunpack.c.l.b16 %v40
  %v224 = vunpack.c.h.b16 %v40
  %v225 = vunpack.c.l.b16 %v41
  %v226 = vpack.c.b16 %v191, %v186
  %v227 = vpack.c.b16 %v192, %v187
  %v228 = vpack.c.b16 %v193, %v188
  %v229 = vpack.c.b16 %v194, %v189
  %v230 = vpack.c.b16 %v195, %v190
  %v231 = vpack.c.b16 %v201, %v196
  %v232 = vpack.c.b16 %v202, %v197
  %v233 = vpack.c.b16 %v203, %v198
  %v234 = vpack.c.b16 %v204, %v199
  %v235 = vpack.c.b16 %v205, %v200
  %v236 = vpack.c.b16 %v211, %v206
  %v237 = vpack.c.b16 %v212, %v207
  %v238 = vpack.c.b16 %v213, %v208
  %v239 = vpack.c.b16 %v214, %v209
  %v240 = vpack.c.b16 %v215, %v210
  %v241 = vpack.c.b16 %v221, %v216
  %v242 = vpack.c.b16 %v222, %v217
  %v243 = vpack.c.b16 %v223, %v218
  %v244 = vpack.c.b16 %v224, %v219
  %v245 = vpack.c.b16 %v225, %v220
  %v334 = vunpack.c.l.b16 %v42
  %v335 = vunpack.c.l.b16 %v43
  %v336 = vunpack.c.l.b16 %v44
  %v337 = vunpack.c.l.b16 %v45
  %v338 = vunpack.c.l.b16 %v46
  %v339 = vunpack.c.l.b16 %v47
  %v340 = vunpack.c.l.b16 %v48
  %v341 = vunpack.c.l.b16 %v49
  %v342 = vunpack.c.l.b16 %v50
  %v343 = vunpack.c.l.b16 %v51
  %v344 = vunpack.c.l.b16 %v52
  %v345 = vunpack.c.l.b16 %v53
  %v346 = vunpack.c.l.b16 %v54
  %v347 = vunpack.c.l.b16 %v55
  %v348 = vunpack.c.l.b16 %v56
  %v349 = vunpack.c.l.b16 %v57
  %v350 = vunpack.c.l.b16 %v58
  %v351 = vunpack.c.l.b16 %v59
  %v352 = vunpack.c.l.b16 %v60
  %v353 = vunpack.c.l.b16 %v61
  %v354 = vunpack.c.l.b16 %v62
  %v355 = vunpack.c.l.b16 %v63
  %v356 = vunpack.c.l.b16 %v64
  %v357 = vunpack.c.l.b16 %v65
  %v358 = vunpack.c.l.b16 %v66
  %v359 = vunpack.c.l.b16 %v67
  %v360 = vunpack.c.l.b16 %v68
  %v361 = vunpack.c.l.b16 %v69
  %v362 = vunpack.c.l.b16 %v70
  %v363 = vunpack.c.l.b16 %v71
  %v364 = vunpack.c.l.b16 %v72
  %v365 = vunpack.c.l.b16 %v73
  %v366 = vunpack.c.l.b16 %v74
  %v367 = vunpack.c.l.b16 %v75
  %v368 = vunpack.c.l.b16 %v76
  %v369 = vunpack.c.l.b16 %v77
  %v370 = vunpack.c.l.b16 %v78
  %v371 = vunpack.c.l.b16 %v79
  %v372 = vunpack.c.l.b16 %v80
  %v373 = vunpack.c.l.b16 %v81
  %v374 = vunpack.c.l.b16 %v82
  %v375 = vunpack.c.l.b16 %v83
  %v376 = vunpack.c.l.b16 %v84
  %v377 = vunpack.c.l.b16 %v85
  %v378 = vunpack.c.l.b16 %v86
  %v379 = vunpack.c.l.b16 %v87
  %v380 = vunpack.c.l.b16 %v88
  %v381 = vunpack.c.l.b16 %v89
  %v382 = vunpack.c.l.b16 %v90
  %v383 = vunpack.c.l.b16 %v91
  %v384 = vunpack.c.l.b16 %v92
  %v385 = vunpack.c.l.b16 %v93
  %v386 = vunpack.c.l.b16 %v94
  %v387 = vunpack.c.l.b16 %v95
  %v388 = vunpack.c.l.b16 %v96
  %v389 = vunpack.c.l.b16 %v97
  %v390 = vunpack.c.l.b16 %v98
  %v391 = vunpack.c.l.b16 %v99
  %v392 = vunpack.c.l.b16 %v100
  %v393 = vunpack.c.l.b16 %v101
  %v394 = vunpack.c.l.b16 %v102
  %v395 = vunpack.c.l.b16 %v103
  %v396 = vunpack.c.l.b16 %v104
  %v397 = vunpack.c.l.b16 %v105
  %v398 = vunpack.c.l.b16 %v106
  %v399 = vunpack.c.l.b16 %v107
  %v400 = vunpack.c.l.b16 %v108
  %v401 = vunpack.c.l.b16 %v109
  %v402 = vunpack.c.l.b16 %v110
  %v403 = vunpack.c.l.b16 %v111
  %v404 = vunpack.c.l.b16 %v112
  %v405 = vunpack.c.l.b16 %v113
  %v406 = vpack.c.b16 %v335, %v334
  %v407 = vpack.c.b16 %v337, %v336
  %v408 = vpack.c.b16 %v339, %v338
  %v409 = vpack.c.b16 %v341, %v340
  %v410 = vpack.c.b16 %v343, %v342
  %v411 = vpack.c.b16 %v345, %v344
  %v412 = vpack.c.b16 %v347, %v346
  %v413 = vpack.c.b16 %v349, %v348
  %v414 = vpack.c.b16 %v351, %v350
  %v415 = vpack.c.b16 %v353, %v352
  %v416 = vpack.c.b16 %v355, %v354
  %v417 = vpack.c.b16 %v357, %v356
  %v418 = vpack.c.b16 %v359, %v358
  %v419 = vpack.c.b16 %v361, %v360
  %v420 = vpack.c.b16 %v363, %v362
  %v421 = vpack.c.b16 %v365, %v364
  %v422 = vpack.c.b16 %v367, %v366
  %v423 = vpack.c.b16 %v369, %v368
  %v424 = vpack.c.b16 %v371, %v370
  %v425 = vpack.c.b16 %v373, %v372
  %v426 = vpack.c.b16 %v375, %v374
  %v427 = vpack.c.b16 %v377, %v376
  %v428 = vpack.c.b16 %v379, %v378
  %v429 = vpack.c.b16 %v381, %v380
  %v430 = vpack.c.b16 %v383, %v382
  %v431 = vpack.c.b16 %v385, %v384
  %v432 = vpack.c.b16 %v387, %v386
  %v433 = vpack.c.b16 %v389, %v388
  %v434 = vpack.c.b16 %v391, %v390
  %v435 = vpack.c.b16 %v393, %v392
  %v436 = vpack.c.b16 %v395, %v394
  %v437 = vpack.c.b16 %v397, %v396
  %v438 = vpack.c.b16 %v399, %v398
  %v439 = vpack.c.b16 %v401, %v400
  %v440 = vpack.c.b16 %v403, %v402
  %v441 = vpack.c.b16 %v405, %v404
  %vm478 = vcmask 523264
  %v480 = vsel %vm478, %v230, 0
  %v483 = vsel %vm478, %v235, 0
  %v486 = vsel %vm478, %v240, 0
  %v489 = vsel %vm478, %v245, 0
  %491 = vmatpush.bf16.msra.mxu0 %v413
  %492 = vmatpush.bf16.msra.mxu0 %v412
  %493 = vmatpush.bf16.msra.mxu0 %v411
  %494 = vmatpush.bf16.msra.mxu0 %v410
  %495 = vmatpush.bf16.msra.mxu0 %v409
  %496 = vmatpush.bf16.msra.mxu0 %v408
  %497 = vmatpush.bf16.msra.mxu0 %v407
  %498 = vmatpush.bf16.msra.mxu0 %v406
  %499 = vmatmul.bf16.gmra.mxu0 %v226
  %v500 = vpop.f32.mrf.mxu0
  %v501 = vadd.f32 %v125, %v500
  %v502 = vpop.f32.mrf.mxu0
  %v503 = vadd.f32 %v130, %v502
  %504 = vmatmul.bf16.gmra.mxu0 %v231
  %v505 = vpop.f32.mrf.mxu0
  %v506 = vadd.f32 %v135, %v505
  %v507 = vpop.f32.mrf.mxu0
  %v508 = vadd.f32 %v140, %v507
  %509 = vmatmul.bf16.gmra.mxu0 %v236
  %v510 = vpop.f32.mrf.mxu0
  %v511 = vadd.f32 %v145, %v510
  %v512 = vpop.f32.mrf.mxu0
  %v513 = vadd.f32 %v150, %v512
  %514 = vmatmul.bf16.gmra.mxu0 %v241
  %v515 = vpop.f32.mrf.mxu0
  %v516 = vadd.f32 %v155, %v515
  %v517 = vpop.f32.mrf.mxu0
  %v518 = vadd.f32 %v160, %v517
  %519 = vdwg.mxu0
  %520 = vmatpush.bf16.msra.mxu0 %v421
  %521 = vmatpush.bf16.msra.mxu0 %v420
  %522 = vmatpush.bf16.msra.mxu0 %v419
  %523 = vmatpush.bf16.msra.mxu0 %v418
  %524 = vmatpush.bf16.msra.mxu0 %v417
  %525 = vmatpush.bf16.msra.mxu0 %v416
  %526 = vmatpush.bf16.msra.mxu0 %v415
  %527 = vmatpush.bf16.msra.mxu0 %v414
  %528 = vmatmul.bf16.gmra.mxu0 %v227
  %v529 = vpop.f32.mrf.mxu0
  %v530 = vadd.f32 %v501, %v529
  %v531 = vpop.f32.mrf.mxu0
  %v532 = vadd.f32 %v503, %v531
  %533 = vmatmul.bf16.gmra.mxu0 %v232
  %v534 = vpop.f32.mrf.mxu0
  %v535 = vadd.f32 %v506, %v534
  %v536 = vpop.f32.mrf.mxu0
  %v537 = vadd.f32 %v508, %v536
  %538 = vmatmul.bf16.gmra.mxu0 %v237
  %v539 = vpop.f32.mrf.mxu0
  %v540 = vadd.f32 %v511, %v539
  %v541 = vpop.f32.mrf.mxu0
  %v542 = vadd.f32 %v513, %v541
  %543 = vmatmul.bf16.gmra.mxu0 %v242
  %v544 = vpop.f32.mrf.mxu0
  %v545 = vadd.f32 %v516, %v544
  %v546 = vpop.f32.mrf.mxu0
  %v547 = vadd.f32 %v518, %v546
  %548 = vdwg.mxu0
  %549 = vmatpush.bf16.msra.mxu0 %v429
  %550 = vmatpush.bf16.msra.mxu0 %v428
  %551 = vmatpush.bf16.msra.mxu0 %v427
  %552 = vmatpush.bf16.msra.mxu0 %v426
  %553 = vmatpush.bf16.msra.mxu0 %v425
  %554 = vmatpush.bf16.msra.mxu0 %v424
  %555 = vmatpush.bf16.msra.mxu0 %v423
  %556 = vmatpush.bf16.msra.mxu0 %v422
  %557 = vmatmul.bf16.gmra.mxu0 %v228
  %v558 = vpop.f32.mrf.mxu0
  %v559 = vadd.f32 %v530, %v558
  %v560 = vpop.f32.mrf.mxu0
  %v561 = vadd.f32 %v532, %v560
  %562 = vmatmul.bf16.gmra.mxu0 %v233
  %v563 = vpop.f32.mrf.mxu0
  %v564 = vadd.f32 %v535, %v563
  %v565 = vpop.f32.mrf.mxu0
  %v566 = vadd.f32 %v537, %v565
  %567 = vmatmul.bf16.gmra.mxu0 %v238
  %v568 = vpop.f32.mrf.mxu0
  %v569 = vadd.f32 %v540, %v568
  %v570 = vpop.f32.mrf.mxu0
  %v571 = vadd.f32 %v542, %v570
  %572 = vmatmul.bf16.gmra.mxu0 %v243
  %v573 = vpop.f32.mrf.mxu0
  %v574 = vadd.f32 %v545, %v573
  %v575 = vpop.f32.mrf.mxu0
  %v576 = vadd.f32 %v547, %v575
  %577 = vdwg.mxu0
  %578 = vmatpush.bf16.msra.mxu0 %v437
  %579 = vmatpush.bf16.msra.mxu0 %v436
  %580 = vmatpush.bf16.msra.mxu0 %v435
  %581 = vmatpush.bf16.msra.mxu0 %v434
  %582 = vmatpush.bf16.msra.mxu0 %v433
  %583 = vmatpush.bf16.msra.mxu0 %v432
  %584 = vmatpush.bf16.msra.mxu0 %v431
  %585 = vmatpush.bf16.msra.mxu0 %v430
  %586 = vmatmul.bf16.gmra.mxu0 %v229
  %v587 = vpop.f32.mrf.mxu0
  %v588 = vadd.f32 %v559, %v587
  %v589 = vpop.f32.mrf.mxu0
  %v590 = vadd.f32 %v561, %v589
  %591 = vmatmul.bf16.gmra.mxu0 %v234
  %v592 = vpop.f32.mrf.mxu0
  %v593 = vadd.f32 %v564, %v592
  %v594 = vpop.f32.mrf.mxu0
  %v595 = vadd.f32 %v566, %v594
  %596 = vmatmul.bf16.gmra.mxu0 %v239
  %v597 = vpop.f32.mrf.mxu0
  %v598 = vadd.f32 %v569, %v597
  %v599 = vpop.f32.mrf.mxu0
  %v600 = vadd.f32 %v571, %v599
  %601 = vmatmul.bf16.gmra.mxu0 %v244
  %v602 = vpop.f32.mrf.mxu0
  %v603 = vadd.f32 %v574, %v602
  %v604 = vpop.f32.mrf.mxu0
  %v605 = vadd.f32 %v576, %v604
  %606 = vdwg.mxu0
  %607 = vmatpush.bf16.msra.mxu0 0
  %608 = vmatpush.bf16.msra.mxu0 0
  %609 = vmatpush.bf16.msra.mxu0 0
  %610 = vmatpush.bf16.msra.mxu0 0
  %611 = vmatpush.bf16.msra.mxu0 %v441
  %612 = vmatpush.bf16.msra.mxu0 %v440
  %613 = vmatpush.bf16.msra.mxu0 %v439
  %614 = vmatpush.bf16.msra.mxu0 %v438
  %615 = vmatmul.bf16.gmra.mxu0 %v480
  %v616 = vpop.f32.mrf.mxu0
  %v617 = vadd.f32 %v588, %v616
  %v618 = vpop.f32.mrf.mxu0
  %v619 = vadd.f32 %v590, %v618
  %620 = vmatmul.bf16.gmra.mxu0 %v483
  %v621 = vpop.f32.mrf.mxu0
  %v622 = vadd.f32 %v593, %v621
  %v623 = vpop.f32.mrf.mxu0
  %v624 = vadd.f32 %v595, %v623
  %625 = vmatmul.bf16.gmra.mxu0 %v486
  %v626 = vpop.f32.mrf.mxu0
  %v627 = vadd.f32 %v598, %v626
  %v628 = vpop.f32.mrf.mxu0
  %v629 = vadd.f32 %v600, %v628
  %630 = vmatmul.bf16.gmra.mxu0 %v489
  %v631 = vpop.f32.mrf.mxu0
  %v632 = vadd.f32 %v603, %v631
  %v633 = vpop.f32.mrf.mxu0
  %v634 = vadd.f32 %v605, %v633
  %635 = vdwg.mxu0
  %v636 = vld [vmem:[%s3] sm:$0xff]
  %v637 = vld [vmem:[%s3 + $0x8] sm:$0xff]
  %v638 = vld [vmem:[%s3 + $0x10] sm:$0xff]
  %v639 = vld [vmem:[%s3 + $0x18] sm:$0xff]
  %v640 = vld [vmem:[%s3 + $0x20] sm:$0xff]
  %v641 = vld [vmem:[%s3 + $0x28] sm:$0xff]
  %v642 = vld [vmem:[%s3 + $0x30] sm:$0xff]
  %v643 = vld [vmem:[%s3 + $0x38] sm:$0xff]
  %v644 = vadd.f32 %v617, %v636
  %v645 = vadd.f32 %v619, %v637
  %v646 = vadd.f32 %v622, %v638
  %v647 = vadd.f32 %v624, %v639
  %v648 = vadd.f32 %v627, %v640
  %v649 = vadd.f32 %v629, %v641
  %v650 = vadd.f32 %v632, %v642
  %v651 = vadd.f32 %v634, %v643
  %v652 = vmax.f32 %v644, 0.0
  %v653 = vmax.f32 %v645, 0.0
  %v654 = vmax.f32 %v646, 0.0
  %v655 = vmax.f32 %v647, 0.0
  %v656 = vmax.f32 %v648, 0.0
  %v657 = vmax.f32 %v649, 0.0
  %v658 = vmax.f32 %v650, 0.0
  %v659 = vmax.f32 %v651, 0.0
  %660 = vst [vmem:[%s4] sm:$0xff] %v652
  %661 = vst [vmem:[%s4 + $0x8] sm:$0xff] %v653
  %662 = vst [vmem:[%s4 + $0x10] sm:$0xff] %v654
  %663 = vst [vmem:[%s4 + $0x18] sm:$0xff] %v655
  %664 = vst [vmem:[%s4 + $0x20] sm:$0xff] %v656
  %665 = vst [vmem:[%s4 + $0x28] sm:$0xff] %v657
  %666 = vst [vmem:[%s4 + $0x30] sm:$0xff] %v658
  %667 = vst [vmem:[%s4 + $0x38] sm:$0xff] %v659
  // Predicated region
  $region18: #{_lambda_.34} parent=0 // pred_check
    _
  $region19: #{_lambda_.34} parent=0 // pred_check_branch
    %669 = sbr.rel (0) target = $region21
  $region20: #{_lambda_.34} parent=0 // pred_region
    _
  $region21: #{_lambda_.34} parent=0 // pred_fallthru
    _
  // Predicated region
  $region22: #{_lambda_.34} parent=0 // pred_check
    _
  $region23: #{_lambda_.34} parent=0 // pred_check_branch
    %671 = sbr.rel (0) target = $region25
  $region24: #{_lambda_.34} parent=0 // pred_region
    _
  $region25: #{_lambda_.34} parent=0 // pred_fallthru
    _

// kernel: _lambda_.35
$region0: #{_lambda_.35}
  #allocation0 [shape = 'u32[]', space=smem, size = 0x4, offset = 0x4, fixed_abs, tag = 'smem constant byte address 0x4 - core index']
  #allocation1 [shape = 'u32[72,128]{1,0:T(1,128)}', space=vmem, size = 0x9000, scoped, tag = 'internal scratch']
  %s0 = inlined_call_operand.vmem [shape: bf16[64,576], index: 0, kind: input, shape index: {}]
  %s1 = inlined_call_operand.vmem [shape: bf16[576,128], index: 1, kind: input, shape index: {}]
  %s2 = inlined_call_operand.vmem [shape: f32[64,1], index: 2, kind: input, shape index: {}]
  %s3 = inlined_call_operand.vmem [shape: f32[64,128], index: 3, kind: output, shape index: {}]
  %s4 = sld [smem:[#allocation0]]
  $region22: #{_lambda_.35} parent=0
    _
  %s6 = ssub.s32 1, %s4
  %s7 = scalar_select 0, %s6, %s4
  // Predicated region
  $region2: #{_lambda_.35} parent=0 // pred_check
    _
  $region3: #{_lambda_.35} parent=0 // pred_check_branch
    %9 = sbr.rel (0) target = $region5
  $region4: #{_lambda_.35} parent=0 // pred_region
    _
  $region5: #{_lambda_.35} parent=0 // pred_fallthru
    _
  // Predicated region
  $region6: #{_lambda_.35} parent=0 // pred_check
    _
  $region7: #{_lambda_.35} parent=0 // pred_check_branch
    %11 = sbr.rel (0) target = $region9
  $region8: #{_lambda_.35} parent=0 // pred_region
    _
  $region9: #{_lambda_.35} parent=0 // pred_fallthru
    _
  // Predicated region
  $region10: #{_lambda_.35} parent=0 // pred_check
    _
  $region11: #{_lambda_.35} parent=0 // pred_check_branch
    %13 = sbr.rel (0) target = $region13
  $region12: #{_lambda_.35} parent=0 // pred_region
    _
  $region13: #{_lambda_.35} parent=0 // pred_fallthru
    _
  %v15 = vld [vmem:[%s0] sm:$0xff]
  %v16 = vld [vmem:[%s0 + $0x8] sm:$0xff]
  %v17 = vld [vmem:[%s0 + $0x10] sm:$0xf]
  %v18 = vld [vmem:[%s0 + $0x14] sm:$0xff]
  %v19 = vld [vmem:[%s0 + $0x1c] sm:$0xff]
  %v20 = vld [vmem:[%s0 + $0x24] sm:$0xf]
  %v21 = vld [vmem:[%s0 + $0x28] sm:$0xff]
  %v22 = vld [vmem:[%s0 + $0x30] sm:$0xff]
  %v23 = vld [vmem:[%s0 + $0x38] sm:$0xf]
  %v24 = vld [vmem:[%s0 + $0x3c] sm:$0xff]
  %v25 = vld [vmem:[%s0 + $0x44] sm:$0xff]
  %v26 = vld [vmem:[%s0 + $0x4c] sm:$0xf]
  %v27 = vld [vmem:[%s0 + $0x50] sm:$0xff]
  %v28 = vld [vmem:[%s0 + $0x58] sm:$0xff]
  %v29 = vld [vmem:[%s0 + $0x60] sm:$0xf]
  %v30 = vld [vmem:[%s0 + $0x64] sm:$0xff]
  %v31 = vld [vmem:[%s0 + $0x6c] sm:$0xff]
  %v32 = vld [vmem:[%s0 + $0x74] sm:$0xf]
  %v33 = vld [vmem:[%s0 + $0x78] sm:$0xff]
  %v34 = vld [vmem:[%s0 + $0x80] sm:$0xff]
  %v35 = vld [vmem:[%s0 + $0x88] sm:$0xf]
  %v36 = vld [vmem:[%s0 + $0x8c] sm:$0xff]
  %v37 = vld [vmem:[%s0 + $0x94] sm:$0xff]
  %v38 = vld [vmem:[%s0 + $0x9c] sm:$0xf]
  %v39 = vld [vmem:[%s1] sm:$0xf]
  %v40 = vld [vmem:[%s1 + $0x4] sm:$0xf]
  %v41 = vld [vmem:[%s1 + $0x8] sm:$0xf]
  %v42 = vld [vmem:[%s1 + $0xc] sm:$0xf]
  %v43 = vld [vmem:[%s1 + $0x10] sm:$0xf]
  %v44 = vld [vmem:[%s1 + $0x14] sm:$0xf]
  %v45 = vld [vmem:[%s1 + $0x18] sm:$0xf]
  %v46 = vld [vmem:[%s1 + $0x1c] sm:$0xf]
  %v47 = vld [vmem:[%s1 + $0x20] sm:$0xf]
  %v48 = vld [vmem:[%s1 + $0x24] sm:$0xf]
  %v49 = vld [vmem:[%s1 + $0x28] sm:$0xf]
  %v50 = vld [vmem:[%s1 + $0x2c] sm:$0xf]
  %v51 = vld [vmem:[%s1 + $0x30] sm:$0xf]
  %v52 = vld [vmem:[%s1 + $0x34] sm:$0xf]
  %v53 = vld [vmem:[%s1 + $0x38] sm:$0xf]
  %v54 = vld [vmem:[%s1 + $0x3c] sm:$0xf]
  %v55 = vld [vmem:[%s1 + $0x40] sm:$0xf]
  %v56 = vld [vmem:[%s1 + $0x44] sm:$0xf]
  %v57 = vld [vmem:[%s1 + $0x48] sm:$0xf]
  %v58 = vld [vmem:[%s1 + $0x4c] sm:$0xf]
  %v59 = vld [vmem:[%s1 + $0x50] sm:$0xf]
  %v60 = vld [vmem:[%s1 + $0x54] sm:$0xf]
  %v61 = vld [vmem:[%s1 + $0x58] sm:$0xf]
  %v62 = vld [vmem:[%s1 + $0x5c] sm:$0xf]
  %v63 = vld [vmem:[%s1 + $0x60] sm:$0xf]
  %v64 = vld [vmem:[%s1 + $0x64] sm:$0xf]
  %v65 = vld [vmem:[%s1 + $0x68] sm:$0xf]
  %v66 = vld [vmem:[%s1 + $0x6c] sm:$0xf]
  %v67 = vld [vmem:[%s1 + $0x70] sm:$0xf]
  %v68 = vld [vmem:[%s1 + $0x74] sm:$0xf]
  %v69 = vld [vmem:[%s1 + $0x78] sm:$0xf]
  %v70 = vld [vmem:[%s1 + $0x7c] sm:$0xf]
  %v71 = vld [vmem:[%s1 + $0x80] sm:$0xf]
  %v72 = vld [vmem:[%s1 + $0x84] sm:$0xf]
  %v73 = vld [vmem:[%s1 + $0x88] sm:$0xf]
  %v74 = vld [vmem:[%s1 + $0x8c] sm:$0xf]
  %v75 = vld [vmem:[%s1 + $0x90] sm:$0xf]
  %v76 = vld [vmem:[%s1 + $0x94] sm:$0xf]
  %v77 = vld [vmem:[%s1 + $0x98] sm:$0xf]
  %v78 = vld [vmem:[%s1 + $0x9c] sm:$0xf]
  %v79 = vld [vmem:[%s1 + $0xa0] sm:$0xf]
  %v80 = vld [vmem:[%s1 + $0xa4] sm:$0xf]
  %v81 = vld [vmem:[%s1 + $0xa8] sm:$0xf]
  %v82 = vld [vmem:[%s1 + $0xac] sm:$0xf]
  %v83 = vld [vmem:[%s1 + $0xb0] sm:$0xf]
  %v84 = vld [vmem:[%s1 + $0xb4] sm:$0xf]
  %v85 = vld [vmem:[%s1 + $0xb8] sm:$0xf]
  %v86 = vld [vmem:[%s1 + $0xbc] sm:$0xf]
  %v87 = vld [vmem:[%s1 + $0xc0] sm:$0xf]
  %v88 = vld [vmem:[%s1 + $0xc4] sm:$0xf]
  %v89 = vld [vmem:[%s1 + $0xc8] sm:$0xf]
  %v90 = vld [vmem:[%s1 + $0xcc] sm:$0xf]
  %v91 = vld [vmem:[%s1 + $0xd0] sm:$0xf]
  %v92 = vld [vmem:[%s1 + $0xd4] sm:$0xf]
  %v93 = vld [vmem:[%s1 + $0xd8] sm:$0xf]
  %v94 = vld [vmem:[%s1 + $0xdc] sm:$0xf]
  %v95 = vld [vmem:[%s1 + $0xe0] sm:$0xf]
  %v96 = vld [vmem:[%s1 + $0xe4] sm:$0xf]
  %v97 = vld [vmem:[%s1 + $0xe8] sm:$0xf]
  %v98 = vld [vmem:[%s1 + $0xec] sm:$0xf]
  %v99 = vld [vmem:[%s1 + $0xf0] sm:$0xf]
  %v100 = vld [vmem:[%s1 + $0xf4] sm:$0xf]
  %v101 = vld [vmem:[%s1 + $0xf8] sm:$0xf]
  %v102 = vld [vmem:[%s1 + $0xfc] sm:$0xf]
  %v103 = vld [vmem:[%s1 + $0x100] sm:$0xf]
  %v104 = vld [vmem:[%s1 + $0x104] sm:$0xf]
  %v105 = vld [vmem:[%s1 + $0x108] sm:$0xf]
  %v106 = vld [vmem:[%s1 + $0x10c] sm:$0xf]
  %v107 = vld [vmem:[%s1 + $0x110] sm:$0xf]
  %v108 = vld [vmem:[%s1 + $0x114] sm:$0xf]
  %v109 = vld [vmem:[%s1 + $0x118] sm:$0xf]
  %v110 = vld [vmem:[%s1 + $0x11c] sm:$0xf]
  %v111 = vld [vmem:[%s2] sm:$0xff]
  %v112 = vld [vmem:[%s2 + $0x8] sm:$0xff]
  %v113 = vld [vmem:[%s2 + $0x10] sm:$0xff]
  %v114 = vld [vmem:[%s2 + $0x18] sm:$0xff]
  %v115 = vld [vmem:[%s2 + $0x20] sm:$0xff]
  %v116 = vld [vmem:[%s2 + $0x28] sm:$0xff]
  %v117 = vld [vmem:[%s2 + $0x30] sm:$0xff]
  %v118 = vld [vmem:[%s2 + $0x38] sm:$0xff]
  %120 = vset.pattern.permute.xlu0 0
  %121 = vperm.xlu0 %120, %v111
  %v122 = vpop.permute.xlu0 %121
  %125 = vset.pattern.permute.xlu0 0
  %126 = vperm.xlu0 %125, %v112
  %v127 = vpop.permute.xlu0 %126
  %130 = vset.pattern.permute.xlu0 0
  %131 = vperm.xlu0 %130, %v113
  %v132 = vpop.permute.xlu0 %131
  %135 = vset.pattern.permute.xlu0 0
  %136 = vperm.xlu0 %135, %v114
  %v137 = vpop.permute.xlu0 %136
  %140 = vset.pattern.permute.xlu0 0
  %141 = vperm.xlu0 %140, %v115
  %v142 = vpop.permute.xlu0 %141
  %145 = vset.pattern.permute.xlu0 0
  %146 = vperm.xlu0 %145, %v116
  %v147 = vpop.permute.xlu0 %146
  %150 = vset.pattern.permute.xlu0 0
  %151 = vperm.xlu0 %150, %v117
  %v152 = vpop.permute.xlu0 %151
  %155 = vset.pattern.permute.xlu0 0
  %156 = vperm.xlu0 %155, %v118
  %v157 = vpop.permute.xlu0 %156
  %v183 = vunpack.c.l.b16 %v15
  %v184 = vunpack.c.h.b16 %v15
  %v185 = vunpack.c.l.b16 %v16
  %v186 = vunpack.c.h.b16 %v16
  %v187 = vunpack.c.l.b16 %v17
  %v188 = vunpack.c.l.b16 %v18
  %v189 = vunpack.c.h.b16 %v18
  %v190 = vunpack.c.l.b16 %v19
  %v191 = vunpack.c.h.b16 %v19
  %v192 = vunpack.c.l.b16 %v20
  %v193 = vunpack.c.l.b16 %v21
  %v194 = vunpack.c.h.b16 %v21
  %v195 = vunpack.c.l.b16 %v22
  %v196 = vunpack.c.h.b16 %v22
  %v197 = vunpack.c.l.b16 %v23
  %v198 = vunpack.c.l.b16 %v24
  %v199 = vunpack.c.h.b16 %v24
  %v200 = vunpack.c.l.b16 %v25
  %v201 = vunpack.c.h.b16 %v25
  %v202 = vunpack.c.l.b16 %v26
  %v203 = vunpack.c.l.b16 %v27
  %v204 = vunpack.c.h.b16 %v27
  %v205 = vunpack.c.l.b16 %v28
  %v206 = vunpack.c.h.b16 %v28
  %v207 = vunpack.c.l.b16 %v29
  %v208 = vunpack.c.l.b16 %v30
  %v209 = vunpack.c.h.b16 %v30
  %v210 = vunpack.c.l.b16 %v31
  %v211 = vunpack.c.h.b16 %v31
  %v212 = vunpack.c.l.b16 %v32
  %v213 = vunpack.c.l.b16 %v33
  %v214 = vunpack.c.h.b16 %v33
  %v215 = vunpack.c.l.b16 %v34
  %v216 = vunpack.c.h.b16 %v34
  %v217 = vunpack.c.l.b16 %v35
  %v218 = vunpack.c.l.b16 %v36
  %v219 = vunpack.c.h.b16 %v36
  %v220 = vunpack.c.l.b16 %v37
  %v221 = vunpack.c.h.b16 %v37
  %v222 = vunpack.c.l.b16 %v38
  %v223 = vpack.c.b16 %v188, %v183
  %v224 = vpack.c.b16 %v189, %v184
  %v225 = vpack.c.b16 %v190, %v185
  %v226 = vpack.c.b16 %v191, %v186
  %v227 = vpack.c.b16 %v192, %v187
  %v228 = vpack.c.b16 %v198, %v193
  %v229 = vpack.c.b16 %v199, %v194
  %v230 = vpack.c.b16 %v200, %v195
  %v231 = vpack.c.b16 %v201, %v196
  %v232 = vpack.c.b16 %v202, %v197
  %v233 = vpack.c.b16 %v208, %v203
  %v234 = vpack.c.b16 %v209, %v204
  %v235 = vpack.c.b16 %v210, %v205
  %v236 = vpack.c.b16 %v211, %v206
  %v237 = vpack.c.b16 %v212, %v207
  %v238 = vpack.c.b16 %v218, %v213
  %v239 = vpack.c.b16 %v219, %v214
  %v240 = vpack.c.b16 %v220, %v215
  %v241 = vpack.c.b16 %v221, %v216
  %v242 = vpack.c.b16 %v222, %v217
  %v331 = vunpack.c.l.b16 %v39
  %v332 = vunpack.c.l.b16 %v40
  %v333 = vunpack.c.l.b16 %v41
  %v334 = vunpack.c.l.b16 %v42
  %v335 = vunpack.c.l.b16 %v43
  %v336 = vunpack.c.l.b16 %v44
  %v337 = vunpack.c.l.b16 %v45
  %v338 = vunpack.c.l.b16 %v46
  %v339 = vunpack.c.l.b16 %v47
  %v340 = vunpack.c.l.b16 %v48
  %v341 = vunpack.c.l.b16 %v49
  %v342 = vunpack.c.l.b16 %v50
  %v343 = vunpack.c.l.b16 %v51
  %v344 = vunpack.c.l.b16 %v52
  %v345 = vunpack.c.l.b16 %v53
  %v346 = vunpack.c.l.b16 %v54
  %v347 = vunpack.c.l.b16 %v55
  %v348 = vunpack.c.l.b16 %v56
  %v349 = vunpack.c.l.b16 %v57
  %v350 = vunpack.c.l.b16 %v58
  %v351 = vunpack.c.l.b16 %v59
  %v352 = vunpack.c.l.b16 %v60
  %v353 = vunpack.c.l.b16 %v61
  %v354 = vunpack.c.l.b16 %v62
  %v355 = vunpack.c.l.b16 %v63
  %v356 = vunpack.c.l.b16 %v64
  %v357 = vunpack.c.l.b16 %v65
  %v358 = vunpack.c.l.b16 %v66
  %v359 = vunpack.c.l.b16 %v67
  %v360 = vunpack.c.l.b16 %v68
  %v361 = vunpack.c.l.b16 %v69
  %v362 = vunpack.c.l.b16 %v70
  %v363 = vunpack.c.l.b16 %v71
  %v364 = vunpack.c.l.b16 %v72
  %v365 = vunpack.c.l.b16 %v73
  %v366 = vunpack.c.l.b16 %v74
  %v367 = vunpack.c.l.b16 %v75
  %v368 = vunpack.c.l.b16 %v76
  %v369 = vunpack.c.l.b16 %v77
  %v370 = vunpack.c.l.b16 %v78
  %v371 = vunpack.c.l.b16 %v79
  %v372 = vunpack.c.l.b16 %v80
  %v373 = vunpack.c.l.b16 %v81
  %v374 = vunpack.c.l.b16 %v82
  %v375 = vunpack.c.l.b16 %v83
  %v376 = vunpack.c.l.b16 %v84
  %v377 = vunpack.c.l.b16 %v85
  %v378 = vunpack.c.l.b16 %v86
  %v379 = vunpack.c.l.b16 %v87
  %v380 = vunpack.c.l.b16 %v88
  %v381 = vunpack.c.l.b16 %v89
  %v382 = vunpack.c.l.b16 %v90
  %v383 = vunpack.c.l.b16 %v91
  %v384 = vunpack.c.l.b16 %v92
  %v385 = vunpack.c.l.b16 %v93
  %v386 = vunpack.c.l.b16 %v94
  %v387 = vunpack.c.l.b16 %v95
  %v388 = vunpack.c.l.b16 %v96
  %v389 = vunpack.c.l.b16 %v97
  %v390 = vunpack.c.l.b16 %v98
  %v391 = vunpack.c.l.b16 %v99
  %v392 = vunpack.c.l.b16 %v100
  %v393 = vunpack.c.l.b16 %v101
  %v394 = vunpack.c.l.b16 %v102
  %v395 = vunpack.c.l.b16 %v103
  %v396 = vunpack.c.l.b16 %v104
  %v397 = vunpack.c.l.b16 %v105
  %v398 = vunpack.c.l.b16 %v106
  %v399 = vunpack.c.l.b16 %v107
  %v400 = vunpack.c.l.b16 %v108
  %v401 = vunpack.c.l.b16 %v109
  %v402 = vunpack.c.l.b16 %v110
  %v403 = vpack.c.b16 %v332, %v331
  %v404 = vpack.c.b16 %v334, %v333
  %v405 = vpack.c.b16 %v336, %v335
  %v406 = vpack.c.b16 %v338, %v337
  %v407 = vpack.c.b16 %v340, %v339
  %v408 = vpack.c.b16 %v342, %v341
  %v409 = vpack.c.b16 %v344, %v343
  %v410 = vpack.c.b16 %v346, %v345
  %v411 = vpack.c.b16 %v348, %v347
  %v412 = vpack.c.b16 %v350, %v349
  %v413 = vpack.c.b16 %v352, %v351
  %v414 = vpack.c.b16 %v354, %v353
  %v415 = vpack.c.b16 %v356, %v355
  %v416 = vpack.c.b16 %v358, %v357
  %v417 = vpack.c.b16 %v360, %v359
  %v418 = vpack.c.b16 %v362, %v361
  %v419 = vpack.c.b16 %v364, %v363
  %v420 = vpack.c.b16 %v366, %v365
  %v421 = vpack.c.b16 %v368, %v367
  %v422 = vpack.c.b16 %v370, %v369
  %v423 = vpack.c.b16 %v372, %v371
  %v424 = vpack.c.b16 %v374, %v373
  %v425 = vpack.c.b16 %v376, %v375
  %v426 = vpack.c.b16 %v378, %v377
  %v427 = vpack.c.b16 %v380, %v379
  %v428 = vpack.c.b16 %v382, %v381
  %v429 = vpack.c.b16 %v384, %v383
  %v430 = vpack.c.b16 %v386, %v385
  %v431 = vpack.c.b16 %v388, %v387
  %v432 = vpack.c.b16 %v390, %v389
  %v433 = vpack.c.b16 %v392, %v391
  %v434 = vpack.c.b16 %v394, %v393
  %v435 = vpack.c.b16 %v396, %v395
  %v436 = vpack.c.b16 %v398, %v397
  %v437 = vpack.c.b16 %v400, %v399
  %v438 = vpack.c.b16 %v402, %v401
  %vm475 = vcmask 523264
  %v477 = vsel %vm475, %v227, 0
  %v480 = vsel %vm475, %v232, 0
  %v483 = vsel %vm475, %v237, 0
  %v486 = vsel %vm475, %v242, 0
  %488 = vmatpush.bf16.msra.mxu0 %v410
  %489 = vmatpush.bf16.msra.mxu0 %v409
  %490 = vmatpush.bf16.msra.mxu0 %v408
  %491 = vmatpush.bf16.msra.mxu0 %v407
  %492 = vmatpush.bf16.msra.mxu0 %v406
  %493 = vmatpush.bf16.msra.mxu0 %v405
  %494 = vmatpush.bf16.msra.mxu0 %v404
  %495 = vmatpush.bf16.msra.mxu0 %v403
  %496 = vmatmul.bf16.gmra.mxu0 %v223
  %v497 = vpop.f32.mrf.mxu0
  %v498 = vadd.f32 %v122, %v497
  %v499 = vpop.f32.mrf.mxu0
  %v500 = vadd.f32 %v127, %v499
  %501 = vmatmul.bf16.gmra.mxu0 %v228
  %v502 = vpop.f32.mrf.mxu0
  %v503 = vadd.f32 %v132, %v502
  %v504 = vpop.f32.mrf.mxu0
  %v505 = vadd.f32 %v137, %v504
  %506 = vmatmul.bf16.gmra.mxu0 %v233
  %v507 = vpop.f32.mrf.mxu0
  %v508 = vadd.f32 %v142, %v507
  %v509 = vpop.f32.mrf.mxu0
  %v510 = vadd.f32 %v147, %v509
  %511 = vmatmul.bf16.gmra.mxu0 %v238
  %v512 = vpop.f32.mrf.mxu0
  %v513 = vadd.f32 %v152, %v512
  %v514 = vpop.f32.mrf.mxu0
  %v515 = vadd.f32 %v157, %v514
  %516 = vdwg.mxu0
  %517 = vmatpush.bf16.msra.mxu0 %v418
  %518 = vmatpush.bf16.msra.mxu0 %v417
  %519 = vmatpush.bf16.msra.mxu0 %v416
  %520 = vmatpush.bf16.msra.mxu0 %v415
  %521 = vmatpush.bf16.msra.mxu0 %v414
  %522 = vmatpush.bf16.msra.mxu0 %v413
  %523 = vmatpush.bf16.msra.mxu0 %v412
  %524 = vmatpush.bf16.msra.mxu0 %v411
  %525 = vmatmul.bf16.gmra.mxu0 %v224
  %v526 = vpop.f32.mrf.mxu0
  %v527 = vadd.f32 %v498, %v526
  %v528 = vpop.f32.mrf.mxu0
  %v529 = vadd.f32 %v500, %v528
  %530 = vmatmul.bf16.gmra.mxu0 %v229
  %v531 = vpop.f32.mrf.mxu0
  %v532 = vadd.f32 %v503, %v531
  %v533 = vpop.f32.mrf.mxu0
  %v534 = vadd.f32 %v505, %v533
  %535 = vmatmul.bf16.gmra.mxu0 %v234
  %v536 = vpop.f32.mrf.mxu0
  %v537 = vadd.f32 %v508, %v536
  %v538 = vpop.f32.mrf.mxu0
  %v539 = vadd.f32 %v510, %v538
  %540 = vmatmul.bf16.gmra.mxu0 %v239
  %v541 = vpop.f32.mrf.mxu0
  %v542 = vadd.f32 %v513, %v541
  %v543 = vpop.f32.mrf.mxu0
  %v544 = vadd.f32 %v515, %v543
  %545 = vdwg.mxu0
  %546 = vmatpush.bf16.msra.mxu0 %v426
  %547 = vmatpush.bf16.msra.mxu0 %v425
  %548 = vmatpush.bf16.msra.mxu0 %v424
  %549 = vmatpush.bf16.msra.mxu0 %v423
  %550 = vmatpush.bf16.msra.mxu0 %v422
  %551 = vmatpush.bf16.msra.mxu0 %v421
  %552 = vmatpush.bf16.msra.mxu0 %v420
  %553 = vmatpush.bf16.msra.mxu0 %v419
  %554 = vmatmul.bf16.gmra.mxu0 %v225
  %v555 = vpop.f32.mrf.mxu0
  %v556 = vadd.f32 %v527, %v555
  %v557 = vpop.f32.mrf.mxu0
  %v558 = vadd.f32 %v529, %v557
  %559 = vmatmul.bf16.gmra.mxu0 %v230
  %v560 = vpop.f32.mrf.mxu0
  %v561 = vadd.f32 %v532, %v560
  %v562 = vpop.f32.mrf.mxu0
  %v563 = vadd.f32 %v534, %v562
  %564 = vmatmul.bf16.gmra.mxu0 %v235
  %v565 = vpop.f32.mrf.mxu0
  %v566 = vadd.f32 %v537, %v565
  %v567 = vpop.f32.mrf.mxu0
  %v568 = vadd.f32 %v539, %v567
  %569 = vmatmul.bf16.gmra.mxu0 %v240
  %v570 = vpop.f32.mrf.mxu0
  %v571 = vadd.f32 %v542, %v570
  %v572 = vpop.f32.mrf.mxu0
  %v573 = vadd.f32 %v544, %v572
  %574 = vdwg.mxu0
  %575 = vmatpush.bf16.msra.mxu0 %v434
  %576 = vmatpush.bf16.msra.mxu0 %v433
  %577 = vmatpush.bf16.msra.mxu0 %v432
  %578 = vmatpush.bf16.msra.mxu0 %v431
  %579 = vmatpush.bf16.msra.mxu0 %v430
  %580 = vmatpush.bf16.msra.mxu0 %v429
  %581 = vmatpush.bf16.msra.mxu0 %v428
  %582 = vmatpush.bf16.msra.mxu0 %v427
  %583 = vmatmul.bf16.gmra.mxu0 %v226
  %v584 = vpop.f32.mrf.mxu0
  %v585 = vadd.f32 %v556, %v584
  %v586 = vpop.f32.mrf.mxu0
  %v587 = vadd.f32 %v558, %v586
  %588 = vmatmul.bf16.gmra.mxu0 %v231
  %v589 = vpop.f32.mrf.mxu0
  %v590 = vadd.f32 %v561, %v589
  %v591 = vpop.f32.mrf.mxu0
  %v592 = vadd.f32 %v563, %v591
  %593 = vmatmul.bf16.gmra.mxu0 %v236
  %v594 = vpop.f32.mrf.mxu0
  %v595 = vadd.f32 %v566, %v594
  %v596 = vpop.f32.mrf.mxu0
  %v597 = vadd.f32 %v568, %v596
  %598 = vmatmul.bf16.gmra.mxu0 %v241
  %v599 = vpop.f32.mrf.mxu0
  %v600 = vadd.f32 %v571, %v599
  %v601 = vpop.f32.mrf.mxu0
  %v602 = vadd.f32 %v573, %v601
  %603 = vdwg.mxu0
  %604 = vmatpush.bf16.msra.mxu0 0
  %605 = vmatpush.bf16.msra.mxu0 0
  %606 = vmatpush.bf16.msra.mxu0 0
  %607 = vmatpush.bf16.msra.mxu0 0
  %608 = vmatpush.bf16.msra.mxu0 %v438
  %609 = vmatpush.bf16.msra.mxu0 %v437
  %610 = vmatpush.bf16.msra.mxu0 %v436
  %611 = vmatpush.bf16.msra.mxu0 %v435
  %612 = vmatmul.bf16.gmra.mxu0 %v477
  %v613 = vpop.f32.mrf.mxu0
  %v614 = vadd.f32 %v585, %v613
  %v615 = vpop.f32.mrf.mxu0
  %v616 = vadd.f32 %v587, %v615
  %617 = vmatmul.bf16.gmra.mxu0 %v480
  %v618 = vpop.f32.mrf.mxu0
  %v619 = vadd.f32 %v590, %v618
  %v620 = vpop.f32.mrf.mxu0
  %v621 = vadd.f32 %v592, %v620
  %622 = vmatmul.bf16.gmra.mxu0 %v483
  %v623 = vpop.f32.mrf.mxu0
  %v624 = vadd.f32 %v595, %v623
  %v625 = vpop.f32.mrf.mxu0
  %v626 = vadd.f32 %v597, %v625
  %627 = vmatmul.bf16.gmra.mxu0 %v486
  %v628 = vpop.f32.mrf.mxu0
  %v629 = vadd.f32 %v600, %v628
  %v630 = vpop.f32.mrf.mxu0
  %v631 = vadd.f32 %v602, %v630
  %632 = vdwg.mxu0
  %v633 = vmax.f32 %v614, 0.0
  %v634 = vmax.f32 %v616, 0.0
  %v635 = vmax.f32 %v619, 0.0
  %v636 = vmax.f32 %v621, 0.0
  %v637 = vmax.f32 %v624, 0.0
  %v638 = vmax.f32 %v626, 0.0
  %v639 = vmax.f32 %v629, 0.0
  %v640 = vmax.f32 %v631, 0.0
  %641 = vst [vmem:[%s3] sm:$0xff] %v633
  %642 = vst [vmem:[%s3 + $0x8] sm:$0xff] %v634
  %643 = vst [vmem:[%s3 + $0x10] sm:$0xff] %v635
  %644 = vst [vmem:[%s3 + $0x18] sm:$0xff] %v636
  %645 = vst [vmem:[%s3 + $0x20] sm:$0xff] %v637
  %646 = vst [vmem:[%s3 + $0x28] sm:$0xff] %v638
  %647 = vst [vmem:[%s3 + $0x30] sm:$0xff] %v639
  %648 = vst [vmem:[%s3 + $0x38] sm:$0xff] %v640
  // Predicated region
  $region14: #{_lambda_.35} parent=0 // pred_check
    _
  $region15: #{_lambda_.35} parent=0 // pred_check_branch
    %650 = sbr.rel (0) target = $region17
  $region16: #{_lambda_.35} parent=0 // pred_region
    _
  $region17: #{_lambda_.35} parent=0 // pred_fallthru
    _
  // Predicated region
  $region18: #{_lambda_.35} parent=0 // pred_check
    _
  $region19: #{_lambda_.35} parent=0 // pred_check_branch
    %652 = sbr.rel (0) target = $region21
  $region20: #{_lambda_.35} parent=0 // pred_region
    _
  $region21: #{_lambda_.35} parent=0 // pred_fallthru
    _

// kernel: _lambda_.37
$region0: #{_lambda_.37}
  #allocation0 [shape = 'u32[]', space=smem, size = 0x4, offset = 0x4, fixed_abs, tag = 'smem constant byte address 0x4 - core index']
  #allocation1 [shape = 'u32[72,128]{1,0:T(1,128)}', space=vmem, size = 0x9000, scoped, tag = 'internal scratch']
  %s0 = inlined_call_operand.vmem [shape: f32[16,1,128], index: 0, kind: input, shape index: {}]
  %s1 = inlined_call_operand.vmem [shape: f32[1,128], index: 1, kind: output, shape index: {}]
  %s2 = sld [smem:[#allocation0]]
  $region14: #{_lambda_.37} parent=0
    _
  %s4 = ssub.s32 1, %s2
  %s5 = scalar_select 0, %s4, %s2
  // Predicated region
  $region2: #{_lambda_.37} parent=0 // pred_check
    _
  $region3: #{_lambda_.37} parent=0 // pred_check_branch
    %7 = sbr.rel (0) target = $region5
  $region4: #{_lambda_.37} parent=0 // pred_region
    _
  $region5: #{_lambda_.37} parent=0 // pred_fallthru
    _
  %v8 = vld [vmem:[%s0] sm:$0x1]
  %s9 = scalar_lea.vmem %s0, 1
  %v10 = vld [vmem:[%s9] sm:$0x1]
  %v11 = vadd.f32 %v8, %v10
  %s12 = scalar_lea.vmem %s0, 2
  %v13 = vld [vmem:[%s12] sm:$0x1]
  %v14 = vadd.f32 %v11, %v13
  %s15 = scalar_lea.vmem %s0, 3
  %v16 = vld [vmem:[%s15] sm:$0x1]
  %v17 = vadd.f32 %v14, %v16
  %s18 = scalar_lea.vmem %s0, 4
  %v19 = vld [vmem:[%s18] sm:$0x1]
  %v20 = vadd.f32 %v17, %v19
  %s21 = scalar_lea.vmem %s0, 5
  %v22 = vld [vmem:[%s21] sm:$0x1]
  %v23 = vadd.f32 %v20, %v22
  %s24 = scalar_lea.vmem %s0, 6
  %v25 = vld [vmem:[%s24] sm:$0x1]
  %v26 = vadd.f32 %v23, %v25
  %s27 = scalar_lea.vmem %s0, 7
  %v28 = vld [vmem:[%s27] sm:$0x1]
  %v29 = vadd.f32 %v26, %v28
  %s30 = scalar_lea.vmem %s0, 8
  %v31 = vld [vmem:[%s30] sm:$0x1]
  %v32 = vadd.f32 %v29, %v31
  %s33 = scalar_lea.vmem %s0, 9
  %v34 = vld [vmem:[%s33] sm:$0x1]
  %v35 = vadd.f32 %v32, %v34
  %s36 = scalar_lea.vmem %s0, 10
  %v37 = vld [vmem:[%s36] sm:$0x1]
  %v38 = vadd.f32 %v35, %v37
  %s39 = scalar_lea.vmem %s0, 11
  %v40 = vld [vmem:[%s39] sm:$0x1]
  %v41 = vadd.f32 %v38, %v40
  %s42 = scalar_lea.vmem %s0, 12
  %v43 = vld [vmem:[%s42] sm:$0x1]
  %v44 = vadd.f32 %v41, %v43
  %s45 = scalar_lea.vmem %s0, 13
  %v46 = vld [vmem:[%s45] sm:$0x1]
  %v47 = vadd.f32 %v44, %v46
  %s48 = scalar_lea.vmem %s0, 14
  %v49 = vld [vmem:[%s48] sm:$0x1]
  %v50 = vadd.f32 %v47, %v49
  %s51 = scalar_lea.vmem %s0, 15
  %v52 = vld [vmem:[%s51] sm:$0x1]
  %v53 = vadd.f32 %v50, %v52
  %v54 = vmul.f32 %v53, 0.0625
  %55 = vst [vmem:[%s1] sm:$0x1] %v54
  // Predicated region
  $region6: #{_lambda_.37} parent=0 // pred_check
    _
  $region7: #{_lambda_.37} parent=0 // pred_check_branch
    %57 = sbr.rel (0) target = $region9
  $region8: #{_lambda_.37} parent=0 // pred_region
    _
  $region9: #{_lambda_.37} parent=0 // pred_fallthru
    _
  // Predicated region
  $region10: #{_lambda_.37} parent=0 // pred_check
    _
  $region11: #{_lambda_.37} parent=0 // pred_check_branch
    %59 = sbr.rel (0) target = $region13
  $region12: #{_lambda_.37} parent=0 // pred_region
    _
  $region13: #{_lambda_.37} parent=0 // pred_fallthru
    _

</llo_original>
